<compile_context>
chip_gen: v7x
topology: tpu7x:2x2x1
jax: 0.10.0
libtpu: 0.0.40
codegen_flags: <defaults>
</compile_context>

<pallas_src>
import numpy as np
import jax
import jax.numpy as jnp
from jax.experimental import pallas as pl
from jax.experimental.pallas import tpu as pltpu


def make_params(key, *, num_nodes, in_dim, hid, out_dim, K, length, n_poi):
    """Deterministic synthetic parameters matching the module's __init__ shapes."""
    ks = jax.random.split(key, 10)
    C = in_dim + hid
    f32 = jnp.float32
    return {
        # supports[0]: externally supplied adjacency (synthetic, nonnegative)
        "support": jax.random.uniform(ks[0], (num_nodes, num_nodes), f32),
        # self.h ~ U(0, 1e-4)
        "h_adj": jax.random.uniform(ks[1], (num_nodes, num_nodes), f32, 0.0, 1e-4),
        # gcn_conv_hop.conv1 = Conv1d(K*(in_dim+hid), 4*hid, 1)
        "w_gcn": jax.random.normal(ks[2], (4 * hid, K * C), f32) / np.sqrt(K * C),
        "b_gcn": 0.01 * jax.random.normal(ks[3], (4 * hid,), f32),
        # Cross_P query conv: Conv2d(hid, hid, (1, length))   (assumed Cross_P)
        "w_q": jax.random.normal(ks[4], (hid, hid, length), f32) / np.sqrt(hid * length),
        "b_q": 0.01 * jax.random.normal(ks[5], (hid,), f32),
        # conv1 = Conv2d(hid, out_dim, (1, length))
        "w_c1": jax.random.normal(ks[6], (out_dim, hid, length), f32) / np.sqrt(hid * length),
        "b_c1": 0.01 * jax.random.normal(ks[7], (out_dim,), f32),
        # masks[1] = poi (node x category counts), masks[2] = poi_vec (category embeddings)
        "poi": jax.random.uniform(ks[8], (num_nodes, n_poi), f32),
        "poi_vec": jax.random.normal(ks[9], (n_poi, hid), f32),
    }


def prepare_params(params):
    """One-time parameter re-layout.  Kept OUT of the per-call jitted forward: every
    op here is an extra XLA kernel + HBM round trip at toy shapes (review item)."""
    f32 = jnp.float32
    K = 3                                      # Chebyshev order hard-coded by the model
    wg = params["w_gcn"].astype(f32)
    G = wg.shape[0]                            # 4 * dilation_channels
    Cout = G // 4
    C = wg.shape[1] // K
    Cin = C - Cout
    assert Cin == 1, "optimized x-path assumes in_dim == 1 (the model default)"
    Dout = params["w_c1"].shape[0]
    bn_scale = float(1.0 / np.sqrt(1.0 + 1e-5))   # BatchNorm2d(affine=False), eval mode

    # gcn_conv_hop.conv1 flattens the K*C input axis channel-major / cheb-minor (.view order).
    wg3 = wg.reshape(G, C, K)
    wx = jnp.transpose(wg3[:, :Cin, :], (2, 1, 0)).reshape(K, G)    # (K, G)   (Cin == 1)
    wh = jnp.transpose(wg3[:, Cin:, :], (2, 1, 0))                  # (K, Cout, G)

    # Chebyshev T2 = 2*A^2 - I fold: w0' = w0 - w2, w1' = w1, w2' = 2*w2  (exact).
    wx_f = jnp.stack([wx[0] - wx[2], wx[1], 2.0 * wx[2]], axis=0) * bn_scale   # (3, G)
    wh_f = jnp.concatenate([wh[0] - wh[2], wh[1], 2.0 * wh[2]], axis=0)        # (3*Cout, G)

    # Pre-scale the j-gate (tanh) columns by 2 so ONE tanh(0.5*gates) over the full
    # 128-lane gate tensor gives  j = tanh(g_j)  and  i/f/o = 0.5*(t+1) = sigmoid(g).
    gscale = jnp.concatenate([jnp.ones((Cout,), f32), jnp.full((Cout,), 2.0, f32),
                              jnp.ones((2 * Cout,), f32)])
    wx_f = wx_f * gscale[None, :]
    wh_f = wh_f * gscale[None, :]
    bg = (params["b_gcn"].astype(f32) * gscale).reshape(1, G)

    # Fused epilogue weight: [Cross_P query conv | conv1] share one accumulator.
    wqt = jnp.transpose(params["w_q"].astype(f32), (2, 1, 0))       # (T, Cout, Cout)
    wct = jnp.transpose(params["w_c1"].astype(f32), (2, 1, 0))      # (T, Cout, Dout)
    wqc = jnp.concatenate([wqt, wct], axis=-1)                      # (T, Cout, Cout + Dout)

    return {
        "h_adj": params["h_adj"].astype(f32),        # (N, N) -- no block-diagonal kron
        "support": params["support"].astype(f32),    # (N, N)
        "wx": wx_f, "wh": wh_f, "bg": bg, "wqc": wqc,
        "bq": params["b_q"].astype(f32).reshape(1, Cout),
        "bc": params["b_c1"].astype(f32).reshape(1, Dout),
        "pvT": params["poi_vec"].astype(f32).T,      # (Cout, P)
        "poi": params["poi"].astype(f32),            # (N, P)
    }


def pogcrnn_forward(x, pp):
    B, Cin, N, T = x.shape
    assert Cin == 1, "optimized kernel assumes in_dim == 1"
    Cout = pp["wqc"].shape[1]
    Dout = pp["bc"].shape[1]
    P = pp["pvT"].shape[1]
    G = 4 * Cout
    f32 = jnp.float32
    inv_sqrt_d = float(1.0 / np.sqrt(Cout))

    # Only per-call input glue: drop the size-1 channel axis.  (B, N, T) already puts
    # nodes on sublanes / time on lanes -- no transpose needed.
    x_bnt = x[:, 0, :, :].astype(f32)

    # ============================= fused per-batch kernel =============================
    def kernel(x_ref, hadj_ref, sup_ref, wx_ref, wh_ref, bg_ref, wqc_ref,
               bq_ref, pvT_ref, poi_ref, bc_ref,
               out_ref, dist_ref, gate_ref, hc_ref):
        # ---- adjacency (tiny, recomputed per batch step so it stays core-local under
        #      "parallel" semantics): A = h + supports[0], row-normalised.
        #      Dropout(0.5) on A is identity in eval mode.
        a_raw = hadj_ref[...] + sup_ref[...]                                 # (N, N)
        inv_rs = pl.reciprocal(jnp.sum(a_raw, axis=1, keepdims=True) + 1e-4,
                               approx=False)                                 # EUP, no VPU divide
        a_n = a_raw * inv_rs                                                 # diag(1/rowsum) @ A
        a2 = jnp.dot(a_n, a_n, preferred_element_type=f32)                   # A^2 (Cheb T2), hoisted

        # ---- x-side Chebyshev path hoisted out of the time loop (Cin == 1).
        xmat = x_ref[...]                                                    # (N, T)
        px1 = jnp.dot(a_n, xmat, preferred_element_type=f32)                 # A   @ x, all T at once
        px2 = jnp.dot(a2, xmat, preferred_element_type=f32)                  # A^2 @ x, all T at once

        wxv = wx_ref[...]                                                    # (3, G)
        wx0 = wxv[0:1, :]
        wx1 = wxv[1:2, :]
        wx2 = wxv[2:3, :]
        whv = wh_ref[...]                                                    # (3*Cout, G)
        bgr = bg_ref[...]                                                    # (1, G)

        h = jnp.zeros((N, Cout), f32)
        c = jnp.zeros((N, Cout), f32)
        acc = jnp.zeros((N, Cout + Dout), f32)   # fused [Cross_P query | conv1] accumulator

        # T is small & static: full unroll keeps the recurrence in one basic block.
        for t in range(T):
            # x gate contribution: rank-1 broadcast-multiplies (VPU) -- the old
            # contract-dim-1 MXU matmuls are gone.
            gx = (xmat[:, t:t + 1] * wx0
                  + px1[:, t:t + 1] * wx1
                  + px2[:, t:t + 1] * wx2)                                   # (N, G)
            # h gate contribution: ONE fused matmul over [h | A h | A^2 h].
            hc_ref[:, 0:Cout] = h
            hc_ref[:, Cout:2 * Cout] = jnp.dot(a_n, h, preferred_element_type=f32)
            hc_ref[:, 2 * Cout:3 * Cout] = jnp.dot(a2, h, preferred_element_type=f32)
            gates = gx + jnp.dot(hc_ref[...], whv, preferred_element_type=f32) + bgr  # (N, 4*Cout)
            # One full-lane tanh (EUP); j columns were pre-scaled by 2 wrapper-side.
            tg = jnp.tanh(0.5 * gates)
            i_g = 0.5 * (tg[:, 0:Cout] + 1.0)
            j_g = tg[:, Cout:2 * Cout]
            f_g = 0.5 * (tg[:, 2 * Cout:3 * Cout] + 1.0)
            o_g = 0.5 * (tg[:, 3 * Cout:4 * Cout] + 1.0)
            c = c * f_g + i_g * j_g
            h = jnp.tanh(c) * o_g
            # Fused epilogue time contraction (y is never materialised).
            acc = acc + jnp.dot(h, wqc_ref[t], preferred_element_type=f32)

        # --------- Cross_P POI attention + gating + conv1 epilogue (fused) ----------
        q = acc[:, 0:Cout] + bq_ref[...]                                     # (N, Cout)
        scores = jnp.dot(q, pvT_ref[...], preferred_element_type=f32) * inv_sqrt_d   # (N, P)
        m = jnp.max(scores, axis=1, keepdims=True)
        e = jnp.exp(scores - m)
        dist = e * pl.reciprocal(jnp.sum(e, axis=1, keepdims=True), approx=True)
        gate = 0.5 * (jnp.tanh(0.5 * jnp.sum(dist * poi_ref[...], axis=1,
                                             keepdims=True)) + 1.0)          # sigmoid, (N, 1)
        # y <- y*(gate+1): gate acts on the (non-contracted) node axis, so it hoists
        # out of the conv1 time contraction exactly.
        out_ref[...] = acc[:, Cout:] * (gate + 1.0) + bc_ref[...]
        dist_ref[...] = dist
        gate_ref[...] = gate

    shared2 = lambda b: (0, 0)
    # Blocked BlockSpecs are VMEM-resident by default; whole working set is << 1 MiB.
    out, dist, gate = pl.pallas_call(
        kernel,
        grid=(B,),
        out_shape=(
            jax.ShapeDtypeStruct((B, N, Dout), f32),
            jax.ShapeDtypeStruct((B, N, P), f32),
            jax.ShapeDtypeStruct((B, N, 1), f32),
        ),
        in_specs=[
            pl.BlockSpec((None, N, T), lambda b: (b, 0, 0)),               # x, per batch
            pl.BlockSpec((N, N), shared2),                                 # h (adjacency param)
            pl.BlockSpec((N, N), shared2),                                 # supports[0]
            pl.BlockSpec((3, G), shared2),                                 # x gate weights (cheb)
            pl.BlockSpec((3 * Cout, G), shared2),                          # h gate weights (cheb-concat)
            pl.BlockSpec((1, G), shared2),                                 # gate bias
            pl.BlockSpec((T, Cout, Cout + Dout), lambda b: (0, 0, 0)),     # fused epilogue weight
            pl.BlockSpec((1, Cout), shared2),                              # query-conv bias
            pl.BlockSpec((Cout, P), shared2),                              # poi_vec^T
            pl.BlockSpec((N, P), shared2),                                 # poi counts
            pl.BlockSpec((1, Dout), shared2),                              # conv1 bias
        ],
        out_specs=(
            pl.BlockSpec((None, N, Dout), lambda b: (b, 0, 0)),
            pl.BlockSpec((None, N, P), lambda b: (b, 0, 0)),
            pl.BlockSpec((None, N, 1), lambda b: (b, 0, 0)),
        ),
        scratch_shapes=[pltpu.VMEM((N, 3 * Cout), jnp.float32)],           # [h | A h | A^2 h]
        compiler_params=pltpu.CompilerParams(
            # batches never interact (block-diagonal A): on v7x the grid steps can be
            # sharded across the two TensorCores.
            dimension_semantics=("parallel",)),
    )(x_bnt, pp["h_adj"], pp["support"], pp["wx"], pp["wh"], pp["bg"], pp["wqc"],
      pp["bq"], pp["pvT"], pp["poi"], pp["bc"])

    # -------------------- tiny output re-layouts back to NCHW -----------------------
    x_out = jnp.transpose(out, (0, 2, 1))[..., None]        # (B, Dout, N, 1)
    dist = jnp.transpose(dist, (0, 2, 1))                   # (B, P, N)
    poi_gate = jnp.transpose(gate, (0, 2, 1))[..., None]    # (B, 1, N, 1)
    return x_out, dist, poi_gate


if __name__ == "__main__":
    B, Cin, N, T = 2, 1, 16, 12          # batch, in_dim, num_nodes, length
    Cout, Dout, K, P = 32, 12, 3, 8      # dilation_channels, out_dim, cheb order, #POI categories

    key = jax.random.PRNGKey(0)
    k_x, k_p = jax.random.split(key)
    x = jax.random.normal(k_x, (B, Cin, N, T), dtype=jnp.float32)
    params = make_params(k_p, num_nodes=N, in_dim=Cin, hid=Cout,
                         out_dim=Dout, K=K, length=T, n_poi=P)
    prepped = prepare_params(params)     # one-time re-layout (outside the jitted forward)

    fwd = jax.jit(pogcrnn_forward)
    x_out, dist, poi = fwd(x, prepped)
    jax.block_until_ready((x_out, dist, poi))

    assert x_out.shape == (B, Dout, N, 1), x_out.shape
    assert dist.shape == (B, P, N), dist.shape
    assert poi.shape == (B, 1, N, 1), poi.shape
    assert bool(jnp.all(jnp.isfinite(x_out)))
    assert bool(jnp.all(jnp.isfinite(dist)))
    assert bool(jnp.all(jnp.isfinite(poi)))
    print("KERNEL_OK")
</pallas_src>

<mosaic_0001>
module attributes {stable_mosaic.version = 11 : i64} {
  func.func @kernel(%arg0: i32, %arg1: memref<1x16x12xf32, #tpu.memory_space<vmem>>, %arg2: memref<16x16xf32, #tpu.memory_space<vmem>>, %arg3: memref<16x16xf32, #tpu.memory_space<vmem>>, %arg4: memref<3x128xf32, #tpu.memory_space<vmem>>, %arg5: memref<96x128xf32, #tpu.memory_space<vmem>>, %arg6: memref<1x128xf32, #tpu.memory_space<vmem>>, %arg7: memref<12x32x44xf32, #tpu.memory_space<vmem>>, %arg8: memref<1x32xf32, #tpu.memory_space<vmem>>, %arg9: memref<32x8xf32, #tpu.memory_space<vmem>>, %arg10: memref<16x8xf32, #tpu.memory_space<vmem>>, %arg11: memref<1x12xf32, #tpu.memory_space<vmem>>, %arg12: memref<1x16x12xf32, #tpu.memory_space<vmem>>, %arg13: memref<1x16x8xf32, #tpu.memory_space<vmem>>, %arg14: memref<1x16x1xf32, #tpu.memory_space<vmem>>, %arg15: memref<16x96xf32, #tpu.memory_space<vmem>>) attributes {dimension_semantics = [#tpu.dimension_semantics<parallel>], iteration_bounds = array<i64: 2>, scalar_prefetch = 0 : i64, scratch_operands = 1 : i64, tpu.core_type = #tpu.core_type<tc>, window_params = [{transform_indices = @transform_0, window_bounds = array<i64: 1, 16, 12>}, {pipeline_mode = #tpu.pipeline_mode<synchronous>, transform_indices = @transform_1, window_bounds = array<i64: 16, 16>}, {pipeline_mode = #tpu.pipeline_mode<synchronous>, transform_indices = @transform_2, window_bounds = array<i64: 16, 16>}, {pipeline_mode = #tpu.pipeline_mode<synchronous>, transform_indices = @transform_3, window_bounds = array<i64: 3, 128>}, {pipeline_mode = #tpu.pipeline_mode<synchronous>, transform_indices = @transform_4, window_bounds = array<i64: 96, 128>}, {pipeline_mode = #tpu.pipeline_mode<synchronous>, transform_indices = @transform_5, window_bounds = array<i64: 1, 128>}, {pipeline_mode = #tpu.pipeline_mode<synchronous>, transform_indices = @transform_6, window_bounds = array<i64: 12, 32, 44>}, {pipeline_mode = #tpu.pipeline_mode<synchronous>, transform_indices = @transform_7, window_bounds = array<i64: 1, 32>}, {pipeline_mode = #tpu.pipeline_mode<synchronous>, transform_indices = @transform_8, window_bounds = array<i64: 32, 8>}, {pipeline_mode = #tpu.pipeline_mode<synchronous>, transform_indices = @transform_9, window_bounds = array<i64: 16, 8>}, {pipeline_mode = #tpu.pipeline_mode<synchronous>, transform_indices = @transform_10, window_bounds = array<i64: 1, 12>}, {transform_indices = @transform_11, window_bounds = array<i64: 1, 16, 12>}, {transform_indices = @transform_12, window_bounds = array<i64: 1, 16, 8>}, {transform_indices = @transform_13, window_bounds = array<i64: 1, 16, 1>}]} {
    %c0 = arith.constant 0 : index
    %c0_0 = arith.constant 0 : index
    %0 = vector.load %arg2[%c0, %c0_0] : memref<16x16xf32, #tpu.memory_space<vmem>>, vector<16x16xf32>
    %c0_1 = arith.constant 0 : index
    %c0_2 = arith.constant 0 : index
    %1 = vector.load %arg3[%c0_1, %c0_2] : memref<16x16xf32, #tpu.memory_space<vmem>>, vector<16x16xf32>
    %2 = arith.addf %0, %1 : vector<16x16xf32>
    %cst = arith.constant dense<0.000000e+00> : vector<16xf32>
    %3 = vector.multi_reduction <add>, %2, %cst [1] : vector<16x16xf32> to vector<16xf32>
    %4 = vector.shape_cast %3 : vector<16xf32> to vector<16x1xf32>
    %cst_3 = arith.constant 9.99999974E-5 : f32
    %5 = vector.broadcast %cst_3 : f32 to vector<16x1xf32>
    %6 = arith.addf %4, %5 : vector<16x1xf32>
    %7 = tpu.reciprocal %6 : vector<16x1xf32> -> vector<16x1xf32>
    %8 = vector.broadcast %7 : vector<16x1xf32> to vector<16x16xf32>
    %9 = arith.mulf %2, %8 : vector<16x16xf32>
    %cst_4 = arith.constant dense<0.000000e+00> : vector<16x16xf32>
    %10 = tpu.matmul %9, %9, %cst_4 {dimension_numbers = #tpu.dot_dimension_numbers<[1], [0], [0], [1], [0, 0, 1, 1], [], []>} : vector<16x16xf32>, vector<16x16xf32>, vector<16x16xf32> -> vector<16x16xf32>
    %c0_5 = arith.constant 0 : index
    %c0_6 = arith.constant 0 : index
    %c0_7 = arith.constant 0 : index
    %11 = vector.load %arg1[%c0_5, %c0_6, %c0_7] : memref<1x16x12xf32, #tpu.memory_space<vmem>>, vector<1x16x12xf32>
    %12 = vector.shape_cast %11 : vector<1x16x12xf32> to vector<16x12xf32>
    %cst_8 = arith.constant dense<0.000000e+00> : vector<16x12xf32>
    %13 = tpu.matmul %9, %12, %cst_8 {dimension_numbers = #tpu.dot_dimension_numbers<[1], [0], [0], [1], [0, 0, 1, 1], [], []>} : vector<16x16xf32>, vector<16x12xf32>, vector<16x12xf32> -> vector<16x12xf32>
    %cst_9 = arith.constant dense<0.000000e+00> : vector<16x12xf32>
    %14 = tpu.matmul %10, %12, %cst_9 {dimension_numbers = #tpu.dot_dimension_numbers<[1], [0], [0], [1], [0, 0, 1, 1], [], []>} : vector<16x16xf32>, vector<16x12xf32>, vector<16x12xf32> -> vector<16x12xf32>
    %c0_10 = arith.constant 0 : index
    %c0_11 = arith.constant 0 : index
    %15 = vector.load %arg4[%c0_10, %c0_11] : memref<3x128xf32, #tpu.memory_space<vmem>>, vector<3x128xf32>
    %16 = vector.extract_strided_slice %15 {offsets = [0, 0], sizes = [1, 128], strides = [1, 1]} : vector<3x128xf32> to vector<1x128xf32>
    %17 = vector.extract_strided_slice %15 {offsets = [1, 0], sizes = [1, 128], strides = [1, 1]} : vector<3x128xf32> to vector<1x128xf32>
    %18 = vector.extract_strided_slice %15 {offsets = [2, 0], sizes = [1, 128], strides = [1, 1]} : vector<3x128xf32> to vector<1x128xf32>
    %c0_12 = arith.constant 0 : index
    %c0_13 = arith.constant 0 : index
    %19 = vector.load %arg5[%c0_12, %c0_13] : memref<96x128xf32, #tpu.memory_space<vmem>>, vector<96x128xf32>
    %c0_14 = arith.constant 0 : index
    %c0_15 = arith.constant 0 : index
    %20 = vector.load %arg6[%c0_14, %c0_15] : memref<1x128xf32, #tpu.memory_space<vmem>>, vector<1x128xf32>
    %cst_16 = arith.constant 0.000000e+00 : f32
    %21 = vector.broadcast %cst_16 : f32 to vector<16x32xf32>
    %cst_17 = arith.constant 0.000000e+00 : f32
    %22 = vector.broadcast %cst_17 : f32 to vector<16x32xf32>
    %cst_18 = arith.constant 0.000000e+00 : f32
    %23 = vector.broadcast %cst_18 : f32 to vector<16x44xf32>
    %24 = vector.extract_strided_slice %12 {offsets = [0, 0], sizes = [16, 1], strides = [1, 1]} : vector<16x12xf32> to vector<16x1xf32>
    %25 = vector.broadcast %24 : vector<16x1xf32> to vector<16x128xf32>
    %26 = vector.broadcast %16 : vector<1x128xf32> to vector<16x128xf32>
    %27 = arith.mulf %25, %26 : vector<16x128xf32>
    %28 = vector.extract_strided_slice %13 {offsets = [0, 0], sizes = [16, 1], strides = [1, 1]} : vector<16x12xf32> to vector<16x1xf32>
    %29 = vector.broadcast %28 : vector<16x1xf32> to vector<16x128xf32>
    %30 = vector.broadcast %17 : vector<1x128xf32> to vector<16x128xf32>
    %31 = arith.mulf %29, %30 : vector<16x128xf32>
    %32 = arith.addf %27, %31 : vector<16x128xf32>
    %33 = vector.extract_strided_slice %14 {offsets = [0, 0], sizes = [16, 1], strides = [1, 1]} : vector<16x12xf32> to vector<16x1xf32>
    %34 = vector.broadcast %33 : vector<16x1xf32> to vector<16x128xf32>
    %35 = vector.broadcast %18 : vector<1x128xf32> to vector<16x128xf32>
    %36 = arith.mulf %34, %35 : vector<16x128xf32>
    %37 = arith.addf %32, %36 : vector<16x128xf32>
    %c0_19 = arith.constant 0 : index
    %c0_20 = arith.constant 0 : index
    %38 = vector.load %arg15[%c0_19, %c0_20] : memref<16x96xf32, #tpu.memory_space<vmem>>, vector<16x32xf32>
    tpu.vector_store %arg15[%c0_19, %c0_20], %21 {strides = array<i32>} : memref<16x96xf32, #tpu.memory_space<vmem>>, vector<16x32xf32>,
    %cst_21 = arith.constant dense<0.000000e+00> : vector<16x32xf32>
    %39 = tpu.matmul %9, %21, %cst_21 {dimension_numbers = #tpu.dot_dimension_numbers<[1], [0], [0], [1], [0, 0, 1, 1], [], []>} : vector<16x16xf32>, vector<16x32xf32>, vector<16x32xf32> -> vector<16x32xf32>
    %c0_22 = arith.constant 0 : index
    %c32 = arith.constant 32 : index
    %40 = vector.load %arg15[%c0_22, %c32] : memref<16x96xf32, #tpu.memory_space<vmem>>, vector<16x32xf32>
    tpu.vector_store %arg15[%c0_22, %c32], %39 {strides = array<i32>} : memref<16x96xf32, #tpu.memory_space<vmem>>, vector<16x32xf32>,
    %cst_23 = arith.constant dense<0.000000e+00> : vector<16x32xf32>
    %41 = tpu.matmul %10, %21, %cst_23 {dimension_numbers = #tpu.dot_dimension_numbers<[1], [0], [0], [1], [0, 0, 1, 1], [], []>} : vector<16x16xf32>, vector<16x32xf32>, vector<16x32xf32> -> vector<16x32xf32>
    %c0_24 = arith.constant 0 : index
    %c64 = arith.constant 64 : index
    %42 = vector.load %arg15[%c0_24, %c64] : memref<16x96xf32, #tpu.memory_space<vmem>>, vector<16x32xf32>
    tpu.vector_store %arg15[%c0_24, %c64], %41 {strides = array<i32>} : memref<16x96xf32, #tpu.memory_space<vmem>>, vector<16x32xf32>,
    %c0_25 = arith.constant 0 : index
    %c0_26 = arith.constant 0 : index
    %43 = vector.load %arg15[%c0_25, %c0_26] : memref<16x96xf32, #tpu.memory_space<vmem>>, vector<16x96xf32>
    %cst_27 = arith.constant dense<0.000000e+00> : vector<16x128xf32>
    %44 = tpu.matmul %43, %19, %cst_27 {dimension_numbers = #tpu.dot_dimension_numbers<[1], [0], [0], [1], [0, 0, 1, 1], [], []>} : vector<16x96xf32>, vector<96x128xf32>, vector<16x128xf32> -> vector<16x128xf32>
    %45 = arith.addf %37, %44 : vector<16x128xf32>
    %46 = vector.broadcast %20 : vector<1x128xf32> to vector<16x128xf32>
    %47 = arith.addf %45, %46 : vector<16x128xf32>
    %cst_28 = arith.constant 5.000000e-01 : f32
    %48 = vector.broadcast %cst_28 : f32 to vector<16x128xf32>
    %49 = arith.mulf %48, %47 : vector<16x128xf32>
    %50 = math.tanh %49 : vector<16x128xf32>
    %51 = vector.extract_strided_slice %50 {offsets = [0, 0], sizes = [16, 32], strides = [1, 1]} : vector<16x128xf32> to vector<16x32xf32>
    %cst_29 = arith.constant 1.000000e+00 : f32
    %52 = vector.broadcast %cst_29 : f32 to vector<16x32xf32>
    %53 = arith.addf %51, %52 : vector<16x32xf32>
    %cst_30 = arith.constant 5.000000e-01 : f32
    %54 = vector.broadcast %cst_30 : f32 to vector<16x32xf32>
    %55 = arith.mulf %54, %53 : vector<16x32xf32>
    %56 = vector.extract_strided_slice %50 {offsets = [0, 32], sizes = [16, 32], strides = [1, 1]} : vector<16x128xf32> to vector<16x32xf32>
    %57 = vector.extract_strided_slice %50 {offsets = [0, 64], sizes = [16, 32], strides = [1, 1]} : vector<16x128xf32> to vector<16x32xf32>
    %cst_31 = arith.constant 1.000000e+00 : f32
    %58 = vector.broadcast %cst_31 : f32 to vector<16x32xf32>
    %59 = arith.addf %57, %58 : vector<16x32xf32>
    %cst_32 = arith.constant 5.000000e-01 : f32
    %60 = vector.broadcast %cst_32 : f32 to vector<16x32xf32>
    %61 = arith.mulf %60, %59 : vector<16x32xf32>
    %62 = vector.extract_strided_slice %50 {offsets = [0, 96], sizes = [16, 32], strides = [1, 1]} : vector<16x128xf32> to vector<16x32xf32>
    %cst_33 = arith.constant 1.000000e+00 : f32
    %63 = vector.broadcast %cst_33 : f32 to vector<16x32xf32>
    %64 = arith.addf %62, %63 : vector<16x32xf32>
    %cst_34 = arith.constant 5.000000e-01 : f32
    %65 = vector.broadcast %cst_34 : f32 to vector<16x32xf32>
    %66 = arith.mulf %65, %64 : vector<16x32xf32>
    %67 = arith.mulf %22, %61 : vector<16x32xf32>
    %68 = arith.mulf %55, %56 : vector<16x32xf32>
    %69 = arith.addf %67, %68 : vector<16x32xf32>
    %70 = math.tanh %69 : vector<16x32xf32>
    %71 = arith.mulf %70, %66 : vector<16x32xf32>
    %c0_35 = arith.constant 0 : index
    %c0_36 = arith.constant 0 : index
    %c0_37 = arith.constant 0 : index
    %72 = vector.load %arg7[%c0_35, %c0_36, %c0_37] : memref<12x32x44xf32, #tpu.memory_space<vmem>>, vector<1x32x44xf32>
    %73 = vector.shape_cast %72 : vector<1x32x44xf32> to vector<32x44xf32>
    %cst_38 = arith.constant dense<0.000000e+00> : vector<16x44xf32>
    %74 = tpu.matmul %71, %73, %cst_38 {dimension_numbers = #tpu.dot_dimension_numbers<[1], [0], [0], [1], [0, 0, 1, 1], [], []>} : vector<16x32xf32>, vector<32x44xf32>, vector<16x44xf32> -> vector<16x44xf32>
    %75 = arith.addf %23, %74 : vector<16x44xf32>
    %76 = vector.extract_strided_slice %12 {offsets = [0, 1], sizes = [16, 1], strides = [1, 1]} : vector<16x12xf32> to vector<16x1xf32>
    %77 = vector.broadcast %76 : vector<16x1xf32> to vector<16x128xf32>
    %78 = vector.broadcast %16 : vector<1x128xf32> to vector<16x128xf32>
    %79 = arith.mulf %77, %78 : vector<16x128xf32>
    %80 = vector.extract_strided_slice %13 {offsets = [0, 1], sizes = [16, 1], strides = [1, 1]} : vector<16x12xf32> to vector<16x1xf32>
    %81 = vector.broadcast %80 : vector<16x1xf32> to vector<16x128xf32>
    %82 = vector.broadcast %17 : vector<1x128xf32> to vector<16x128xf32>
    %83 = arith.mulf %81, %82 : vector<16x128xf32>
    %84 = arith.addf %79, %83 : vector<16x128xf32>
    %85 = vector.extract_strided_slice %14 {offsets = [0, 1], sizes = [16, 1], strides = [1, 1]} : vector<16x12xf32> to vector<16x1xf32>
    %86 = vector.broadcast %85 : vector<16x1xf32> to vector<16x128xf32>
    %87 = vector.broadcast %18 : vector<1x128xf32> to vector<16x128xf32>
    %88 = arith.mulf %86, %87 : vector<16x128xf32>
    %89 = arith.addf %84, %88 : vector<16x128xf32>
    %c0_39 = arith.constant 0 : index
    %c0_40 = arith.constant 0 : index
    %90 = vector.load %arg15[%c0_39, %c0_40] : memref<16x96xf32, #tpu.memory_space<vmem>>, vector<16x32xf32>
    tpu.vector_store %arg15[%c0_39, %c0_40], %71 {strides = array<i32>} : memref<16x96xf32, #tpu.memory_space<vmem>>, vector<16x32xf32>,
    %cst_41 = arith.constant dense<0.000000e+00> : vector<16x32xf32>
    %91 = tpu.matmul %9, %71, %cst_41 {dimension_numbers = #tpu.dot_dimension_numbers<[1], [0], [0], [1], [0, 0, 1, 1], [], []>} : vector<16x16xf32>, vector<16x32xf32>, vector<16x32xf32> -> vector<16x32xf32>
    %c0_42 = arith.constant 0 : index
    %c32_43 = arith.constant 32 : index
    %92 = vector.load %arg15[%c0_42, %c32_43] : memref<16x96xf32, #tpu.memory_space<vmem>>, vector<16x32xf32>
    tpu.vector_store %arg15[%c0_42, %c32_43], %91 {strides = array<i32>} : memref<16x96xf32, #tpu.memory_space<vmem>>, vector<16x32xf32>,
    %cst_44 = arith.constant dense<0.000000e+00> : vector<16x32xf32>
    %93 = tpu.matmul %10, %71, %cst_44 {dimension_numbers = #tpu.dot_dimension_numbers<[1], [0], [0], [1], [0, 0, 1, 1], [], []>} : vector<16x16xf32>, vector<16x32xf32>, vector<16x32xf32> -> vector<16x32xf32>
    %c0_45 = arith.constant 0 : index
    %c64_46 = arith.constant 64 : index
    %94 = vector.load %arg15[%c0_45, %c64_46] : memref<16x96xf32, #tpu.memory_space<vmem>>, vector<16x32xf32>
    tpu.vector_store %arg15[%c0_45, %c64_46], %93 {strides = array<i32>} : memref<16x96xf32, #tpu.memory_space<vmem>>, vector<16x32xf32>,
    %c0_47 = arith.constant 0 : index
    %c0_48 = arith.constant 0 : index
    %95 = vector.load %arg15[%c0_47, %c0_48] : memref<16x96xf32, #tpu.memory_space<vmem>>, vector<16x96xf32>
    %cst_49 = arith.constant dense<0.000000e+00> : vector<16x128xf32>
    %96 = tpu.matmul %95, %19, %cst_49 {dimension_numbers = #tpu.dot_dimension_numbers<[1], [0], [0], [1], [0, 0, 1, 1], [], []>} : vector<16x96xf32>, vector<96x128xf32>, vector<16x128xf32> -> vector<16x128xf32>
    %97 = arith.addf %89, %96 : vector<16x128xf32>
    %98 = vector.broadcast %20 : vector<1x128xf32> to vector<16x128xf32>
    %99 = arith.addf %97, %98 : vector<16x128xf32>
    %cst_50 = arith.constant 5.000000e-01 : f32
    %100 = vector.broadcast %cst_50 : f32 to vector<16x128xf32>
    %101 = arith.mulf %100, %99 : vector<16x128xf32>
    %102 = math.tanh %101 : vector<16x128xf32>
    %103 = vector.extract_strided_slice %102 {offsets = [0, 0], sizes = [16, 32], strides = [1, 1]} : vector<16x128xf32> to vector<16x32xf32>
    %cst_51 = arith.constant 1.000000e+00 : f32
    %104 = vector.broadcast %cst_51 : f32 to vector<16x32xf32>
    %105 = arith.addf %103, %104 : vector<16x32xf32>
    %cst_52 = arith.constant 5.000000e-01 : f32
    %106 = vector.broadcast %cst_52 : f32 to vector<16x32xf32>
    %107 = arith.mulf %106, %105 : vector<16x32xf32>
    %108 = vector.extract_strided_slice %102 {offsets = [0, 32], sizes = [16, 32], strides = [1, 1]} : vector<16x128xf32> to vector<16x32xf32>
    %109 = vector.extract_strided_slice %102 {offsets = [0, 64], sizes = [16, 32], strides = [1, 1]} : vector<16x128xf32> to vector<16x32xf32>
    %cst_53 = arith.constant 1.000000e+00 : f32
    %110 = vector.broadcast %cst_53 : f32 to vector<16x32xf32>
    %111 = arith.addf %109, %110 : vector<16x32xf32>
    %cst_54 = arith.constant 5.000000e-01 : f32
    %112 = vector.broadcast %cst_54 : f32 to vector<16x32xf32>
    %113 = arith.mulf %112, %111 : vector<16x32xf32>
    %114 = vector.extract_strided_slice %102 {offsets = [0, 96], sizes = [16, 32], strides = [1, 1]} : vector<16x128xf32> to vector<16x32xf32>
    %cst_55 = arith.constant 1.000000e+00 : f32
    %115 = vector.broadcast %cst_55 : f32 to vector<16x32xf32>
    %116 = arith.addf %114, %115 : vector<16x32xf32>
    %cst_56 = arith.constant 5.000000e-01 : f32
    %117 = vector.broadcast %cst_56 : f32 to vector<16x32xf32>
    %118 = arith.mulf %117, %116 : vector<16x32xf32>
    %119 = arith.mulf %69, %113 : vector<16x32xf32>
    %120 = arith.mulf %107, %108 : vector<16x32xf32>
    %121 = arith.addf %119, %120 : vector<16x32xf32>
    %122 = math.tanh %121 : vector<16x32xf32>
    %123 = arith.mulf %122, %118 : vector<16x32xf32>
    %c1 = arith.constant 1 : index
    %c0_57 = arith.constant 0 : index
    %c0_58 = arith.constant 0 : index
    %124 = vector.load %arg7[%c1, %c0_57, %c0_58] : memref<12x32x44xf32, #tpu.memory_space<vmem>>, vector<1x32x44xf32>
    %125 = vector.shape_cast %124 : vector<1x32x44xf32> to vector<32x44xf32>
    %cst_59 = arith.constant dense<0.000000e+00> : vector<16x44xf32>
    %126 = tpu.matmul %123, %125, %cst_59 {dimension_numbers = #tpu.dot_dimension_numbers<[1], [0], [0], [1], [0, 0, 1, 1], [], []>} : vector<16x32xf32>, vector<32x44xf32>, vector<16x44xf32> -> vector<16x44xf32>
    %127 = arith.addf %75, %126 : vector<16x44xf32>
    %128 = vector.extract_strided_slice %12 {offsets = [0, 2], sizes = [16, 1], strides = [1, 1]} : vector<16x12xf32> to vector<16x1xf32>
    %129 = vector.broadcast %128 : vector<16x1xf32> to vector<16x128xf32>
    %130 = vector.broadcast %16 : vector<1x128xf32> to vector<16x128xf32>
    %131 = arith.mulf %129, %130 : vector<16x128xf32>
    %132 = vector.extract_strided_slice %13 {offsets = [0, 2], sizes = [16, 1], strides = [1, 1]} : vector<16x12xf32> to vector<16x1xf32>
    %133 = vector.broadcast %132 : vector<16x1xf32> to vector<16x128xf32>
    %134 = vector.broadcast %17 : vector<1x128xf32> to vector<16x128xf32>
    %135 = arith.mulf %133, %134 : vector<16x128xf32>
    %136 = arith.addf %131, %135 : vector<16x128xf32>
    %137 = vector.extract_strided_slice %14 {offsets = [0, 2], sizes = [16, 1], strides = [1, 1]} : vector<16x12xf32> to vector<16x1xf32>
    %138 = vector.broadcast %137 : vector<16x1xf32> to vector<16x128xf32>
    %139 = vector.broadcast %18 : vector<1x128xf32> to vector<16x128xf32>
    %140 = arith.mulf %138, %139 : vector<16x128xf32>
    %141 = arith.addf %136, %140 : vector<16x128xf32>
    %c0_60 = arith.constant 0 : index
    %c0_61 = arith.constant 0 : index
    %142 = vector.load %arg15[%c0_60, %c0_61] : memref<16x96xf32, #tpu.memory_space<vmem>>, vector<16x32xf32>
    tpu.vector_store %arg15[%c0_60, %c0_61], %123 {strides = array<i32>} : memref<16x96xf32, #tpu.memory_space<vmem>>, vector<16x32xf32>,
    %cst_62 = arith.constant dense<0.000000e+00> : vector<16x32xf32>
    %143 = tpu.matmul %9, %123, %cst_62 {dimension_numbers = #tpu.dot_dimension_numbers<[1], [0], [0], [1], [0, 0, 1, 1], [], []>} : vector<16x16xf32>, vector<16x32xf32>, vector<16x32xf32> -> vector<16x32xf32>
    %c0_63 = arith.constant 0 : index
    %c32_64 = arith.constant 32 : index
    %144 = vector.load %arg15[%c0_63, %c32_64] : memref<16x96xf32, #tpu.memory_space<vmem>>, vector<16x32xf32>
    tpu.vector_store %arg15[%c0_63, %c32_64], %143 {strides = array<i32>} : memref<16x96xf32, #tpu.memory_space<vmem>>, vector<16x32xf32>,
    %cst_65 = arith.constant dense<0.000000e+00> : vector<16x32xf32>
    %145 = tpu.matmul %10, %123, %cst_65 {dimension_numbers = #tpu.dot_dimension_numbers<[1], [0], [0], [1], [0, 0, 1, 1], [], []>} : vector<16x16xf32>, vector<16x32xf32>, vector<16x32xf32> -> vector<16x32xf32>
    %c0_66 = arith.constant 0 : index
    %c64_67 = arith.constant 64 : index
    %146 = vector.load %arg15[%c0_66, %c64_67] : memref<16x96xf32, #tpu.memory_space<vmem>>, vector<16x32xf32>
    tpu.vector_store %arg15[%c0_66, %c64_67], %145 {strides = array<i32>} : memref<16x96xf32, #tpu.memory_space<vmem>>, vector<16x32xf32>,
    %c0_68 = arith.constant 0 : index
    %c0_69 = arith.constant 0 : index
    %147 = vector.load %arg15[%c0_68, %c0_69] : memref<16x96xf32, #tpu.memory_space<vmem>>, vector<16x96xf32>
    %cst_70 = arith.constant dense<0.000000e+00> : vector<16x128xf32>
    %148 = tpu.matmul %147, %19, %cst_70 {dimension_numbers = #tpu.dot_dimension_numbers<[1], [0], [0], [1], [0, 0, 1, 1], [], []>} : vector<16x96xf32>, vector<96x128xf32>, vector<16x128xf32> -> vector<16x128xf32>
    %149 = arith.addf %141, %148 : vector<16x128xf32>
    %150 = vector.broadcast %20 : vector<1x128xf32> to vector<16x128xf32>
    %151 = arith.addf %149, %150 : vector<16x128xf32>
    %cst_71 = arith.constant 5.000000e-01 : f32
    %152 = vector.broadcast %cst_71 : f32 to vector<16x128xf32>
    %153 = arith.mulf %152, %151 : vector<16x128xf32>
    %154 = math.tanh %153 : vector<16x128xf32>
    %155 = vector.extract_strided_slice %154 {offsets = [0, 0], sizes = [16, 32], strides = [1, 1]} : vector<16x128xf32> to vector<16x32xf32>
    %cst_72 = arith.constant 1.000000e+00 : f32
    %156 = vector.broadcast %cst_72 : f32 to vector<16x32xf32>
    %157 = arith.addf %155, %156 : vector<16x32xf32>
    %cst_73 = arith.constant 5.000000e-01 : f32
    %158 = vector.broadcast %cst_73 : f32 to vector<16x32xf32>
    %159 = arith.mulf %158, %157 : vector<16x32xf32>
    %160 = vector.extract_strided_slice %154 {offsets = [0, 32], sizes = [16, 32], strides = [1, 1]} : vector<16x128xf32> to vector<16x32xf32>
    %161 = vector.extract_strided_slice %154 {offsets = [0, 64], sizes = [16, 32], strides = [1, 1]} : vector<16x128xf32> to vector<16x32xf32>
    %cst_74 = arith.constant 1.000000e+00 : f32
    %162 = vector.broadcast %cst_74 : f32 to vector<16x32xf32>
    %163 = arith.addf %161, %162 : vector<16x32xf32>
    %cst_75 = arith.constant 5.000000e-01 : f32
    %164 = vector.broadcast %cst_75 : f32 to vector<16x32xf32>
    %165 = arith.mulf %164, %163 : vector<16x32xf32>
    %166 = vector.extract_strided_slice %154 {offsets = [0, 96], sizes = [16, 32], strides = [1, 1]} : vector<16x128xf32> to vector<16x32xf32>
    %cst_76 = arith.constant 1.000000e+00 : f32
    %167 = vector.broadcast %cst_76 : f32 to vector<16x32xf32>
    %168 = arith.addf %166, %167 : vector<16x32xf32>
    %cst_77 = arith.constant 5.000000e-01 : f32
    %169 = vector.broadcast %cst_77 : f32 to vector<16x32xf32>
    %170 = arith.mulf %169, %168 : vector<16x32xf32>
    %171 = arith.mulf %121, %165 : vector<16x32xf32>
    %172 = arith.mulf %159, %160 : vector<16x32xf32>
    %173 = arith.addf %171, %172 : vector<16x32xf32>
    %174 = math.tanh %173 : vector<16x32xf32>
    %175 = arith.mulf %174, %170 : vector<16x32xf32>
    %c2 = arith.constant 2 : index
    %c0_78 = arith.constant 0 : index
    %c0_79 = arith.constant 0 : index
    %176 = vector.load %arg7[%c2, %c0_78, %c0_79] : memref<12x32x44xf32, #tpu.memory_space<vmem>>, vector<1x32x44xf32>
    %177 = vector.shape_cast %176 : vector<1x32x44xf32> to vector<32x44xf32>
    %cst_80 = arith.constant dense<0.000000e+00> : vector<16x44xf32>
    %178 = tpu.matmul %175, %177, %cst_80 {dimension_numbers = #tpu.dot_dimension_numbers<[1], [0], [0], [1], [0, 0, 1, 1], [], []>} : vector<16x32xf32>, vector<32x44xf32>, vector<16x44xf32> -> vector<16x44xf32>
    %179 = arith.addf %127, %178 : vector<16x44xf32>
    %180 = vector.extract_strided_slice %12 {offsets = [0, 3], sizes = [16, 1], strides = [1, 1]} : vector<16x12xf32> to vector<16x1xf32>
    %181 = vector.broadcast %180 : vector<16x1xf32> to vector<16x128xf32>
    %182 = vector.broadcast %16 : vector<1x128xf32> to vector<16x128xf32>
    %183 = arith.mulf %181, %182 : vector<16x128xf32>
    %184 = vector.extract_strided_slice %13 {offsets = [0, 3], sizes = [16, 1], strides = [1, 1]} : vector<16x12xf32> to vector<16x1xf32>
    %185 = vector.broadcast %184 : vector<16x1xf32> to vector<16x128xf32>
    %186 = vector.broadcast %17 : vector<1x128xf32> to vector<16x128xf32>
    %187 = arith.mulf %185, %186 : vector<16x128xf32>
    %188 = arith.addf %183, %187 : vector<16x128xf32>
    %189 = vector.extract_strided_slice %14 {offsets = [0, 3], sizes = [16, 1], strides = [1, 1]} : vector<16x12xf32> to vector<16x1xf32>
    %190 = vector.broadcast %189 : vector<16x1xf32> to vector<16x128xf32>
    %191 = vector.broadcast %18 : vector<1x128xf32> to vector<16x128xf32>
    %192 = arith.mulf %190, %191 : vector<16x128xf32>
    %193 = arith.addf %188, %192 : vector<16x128xf32>
    %c0_81 = arith.constant 0 : index
    %c0_82 = arith.constant 0 : index
    %194 = vector.load %arg15[%c0_81, %c0_82] : memref<16x96xf32, #tpu.memory_space<vmem>>, vector<16x32xf32>
    tpu.vector_store %arg15[%c0_81, %c0_82], %175 {strides = array<i32>} : memref<16x96xf32, #tpu.memory_space<vmem>>, vector<16x32xf32>,
    %cst_83 = arith.constant dense<0.000000e+00> : vector<16x32xf32>
    %195 = tpu.matmul %9, %175, %cst_83 {dimension_numbers = #tpu.dot_dimension_numbers<[1], [0], [0], [1], [0, 0, 1, 1], [], []>} : vector<16x16xf32>, vector<16x32xf32>, vector<16x32xf32> -> vector<16x32xf32>
    %c0_84 = arith.constant 0 : index
    %c32_85 = arith.constant 32 : index
    %196 = vector.load %arg15[%c0_84, %c32_85] : memref<16x96xf32, #tpu.memory_space<vmem>>, vector<16x32xf32>
    tpu.vector_store %arg15[%c0_84, %c32_85], %195 {strides = array<i32>} : memref<16x96xf32, #tpu.memory_space<vmem>>, vector<16x32xf32>,
    %cst_86 = arith.constant dense<0.000000e+00> : vector<16x32xf32>
    %197 = tpu.matmul %10, %175, %cst_86 {dimension_numbers = #tpu.dot_dimension_numbers<[1], [0], [0], [1], [0, 0, 1, 1], [], []>} : vector<16x16xf32>, vector<16x32xf32>, vector<16x32xf32> -> vector<16x32xf32>
    %c0_87 = arith.constant 0 : index
    %c64_88 = arith.constant 64 : index
    %198 = vector.load %arg15[%c0_87, %c64_88] : memref<16x96xf32, #tpu.memory_space<vmem>>, vector<16x32xf32>
    tpu.vector_store %arg15[%c0_87, %c64_88], %197 {strides = array<i32>} : memref<16x96xf32, #tpu.memory_space<vmem>>, vector<16x32xf32>,
    %c0_89 = arith.constant 0 : index
    %c0_90 = arith.constant 0 : index
    %199 = vector.load %arg15[%c0_89, %c0_90] : memref<16x96xf32, #tpu.memory_space<vmem>>, vector<16x96xf32>
    %cst_91 = arith.constant dense<0.000000e+00> : vector<16x128xf32>
    %200 = tpu.matmul %199, %19, %cst_91 {dimension_numbers = #tpu.dot_dimension_numbers<[1], [0], [0], [1], [0, 0, 1, 1], [], []>} : vector<16x96xf32>, vector<96x128xf32>, vector<16x128xf32> -> vector<16x128xf32>
    %201 = arith.addf %193, %200 : vector<16x128xf32>
    %202 = vector.broadcast %20 : vector<1x128xf32> to vector<16x128xf32>
    %203 = arith.addf %201, %202 : vector<16x128xf32>
    %cst_92 = arith.constant 5.000000e-01 : f32
    %204 = vector.broadcast %cst_92 : f32 to vector<16x128xf32>
    %205 = arith.mulf %204, %203 : vector<16x128xf32>
    %206 = math.tanh %205 : vector<16x128xf32>
    %207 = vector.extract_strided_slice %206 {offsets = [0, 0], sizes = [16, 32], strides = [1, 1]} : vector<16x128xf32> to vector<16x32xf32>
    %cst_93 = arith.constant 1.000000e+00 : f32
    %208 = vector.broadcast %cst_93 : f32 to vector<16x32xf32>
    %209 = arith.addf %207, %208 : vector<16x32xf32>
    %cst_94 = arith.constant 5.000000e-01 : f32
    %210 = vector.broadcast %cst_94 : f32 to vector<16x32xf32>
    %211 = arith.mulf %210, %209 : vector<16x32xf32>
    %212 = vector.extract_strided_slice %206 {offsets = [0, 32], sizes = [16, 32], strides = [1, 1]} : vector<16x128xf32> to vector<16x32xf32>
    %213 = vector.extract_strided_slice %206 {offsets = [0, 64], sizes = [16, 32], strides = [1, 1]} : vector<16x128xf32> to vector<16x32xf32>
    %cst_95 = arith.constant 1.000000e+00 : f32
    %214 = vector.broadcast %cst_95 : f32 to vector<16x32xf32>
    %215 = arith.addf %213, %214 : vector<16x32xf32>
    %cst_96 = arith.constant 5.000000e-01 : f32
    %216 = vector.broadcast %cst_96 : f32 to vector<16x32xf32>
    %217 = arith.mulf %216, %215 : vector<16x32xf32>
    %218 = vector.extract_strided_slice %206 {offsets = [0, 96], sizes = [16, 32], strides = [1, 1]} : vector<16x128xf32> to vector<16x32xf32>
    %cst_97 = arith.constant 1.000000e+00 : f32
    %219 = vector.broadcast %cst_97 : f32 to vector<16x32xf32>
    %220 = arith.addf %218, %219 : vector<16x32xf32>
    %cst_98 = arith.constant 5.000000e-01 : f32
    %221 = vector.broadcast %cst_98 : f32 to vector<16x32xf32>
    %222 = arith.mulf %221, %220 : vector<16x32xf32>
    %223 = arith.mulf %173, %217 : vector<16x32xf32>
    %224 = arith.mulf %211, %212 : vector<16x32xf32>
    %225 = arith.addf %223, %224 : vector<16x32xf32>
    %226 = math.tanh %225 : vector<16x32xf32>
    %227 = arith.mulf %226, %222 : vector<16x32xf32>
    %c3 = arith.constant 3 : index
    %c0_99 = arith.constant 0 : index
    %c0_100 = arith.constant 0 : index
    %228 = vector.load %arg7[%c3, %c0_99, %c0_100] : memref<12x32x44xf32, #tpu.memory_space<vmem>>, vector<1x32x44xf32>
    %229 = vector.shape_cast %228 : vector<1x32x44xf32> to vector<32x44xf32>
    %cst_101 = arith.constant dense<0.000000e+00> : vector<16x44xf32>
    %230 = tpu.matmul %227, %229, %cst_101 {dimension_numbers = #tpu.dot_dimension_numbers<[1], [0], [0], [1], [0, 0, 1, 1], [], []>} : vector<16x32xf32>, vector<32x44xf32>, vector<16x44xf32> -> vector<16x44xf32>
    %231 = arith.addf %179, %230 : vector<16x44xf32>
    %232 = vector.extract_strided_slice %12 {offsets = [0, 4], sizes = [16, 1], strides = [1, 1]} : vector<16x12xf32> to vector<16x1xf32>
    %233 = vector.broadcast %232 : vector<16x1xf32> to vector<16x128xf32>
    %234 = vector.broadcast %16 : vector<1x128xf32> to vector<16x128xf32>
    %235 = arith.mulf %233, %234 : vector<16x128xf32>
    %236 = vector.extract_strided_slice %13 {offsets = [0, 4], sizes = [16, 1], strides = [1, 1]} : vector<16x12xf32> to vector<16x1xf32>
    %237 = vector.broadcast %236 : vector<16x1xf32> to vector<16x128xf32>
    %238 = vector.broadcast %17 : vector<1x128xf32> to vector<16x128xf32>
    %239 = arith.mulf %237, %238 : vector<16x128xf32>
    %240 = arith.addf %235, %239 : vector<16x128xf32>
    %241 = vector.extract_strided_slice %14 {offsets = [0, 4], sizes = [16, 1], strides = [1, 1]} : vector<16x12xf32> to vector<16x1xf32>
    %242 = vector.broadcast %241 : vector<16x1xf32> to vector<16x128xf32>
    %243 = vector.broadcast %18 : vector<1x128xf32> to vector<16x128xf32>
    %244 = arith.mulf %242, %243 : vector<16x128xf32>
    %245 = arith.addf %240, %244 : vector<16x128xf32>
    %c0_102 = arith.constant 0 : index
    %c0_103 = arith.constant 0 : index
    %246 = vector.load %arg15[%c0_102, %c0_103] : memref<16x96xf32, #tpu.memory_space<vmem>>, vector<16x32xf32>
    tpu.vector_store %arg15[%c0_102, %c0_103], %227 {strides = array<i32>} : memref<16x96xf32, #tpu.memory_space<vmem>>, vector<16x32xf32>,
    %cst_104 = arith.constant dense<0.000000e+00> : vector<16x32xf32>
    %247 = tpu.matmul %9, %227, %cst_104 {dimension_numbers = #tpu.dot_dimension_numbers<[1], [0], [0], [1], [0, 0, 1, 1], [], []>} : vector<16x16xf32>, vector<16x32xf32>, vector<16x32xf32> -> vector<16x32xf32>
    %c0_105 = arith.constant 0 : index
    %c32_106 = arith.constant 32 : index
    %248 = vector.load %arg15[%c0_105, %c32_106] : memref<16x96xf32, #tpu.memory_space<vmem>>, vector<16x32xf32>
    tpu.vector_store %arg15[%c0_105, %c32_106], %247 {strides = array<i32>} : memref<16x96xf32, #tpu.memory_space<vmem>>, vector<16x32xf32>,
    %cst_107 = arith.constant dense<0.000000e+00> : vector<16x32xf32>
    %249 = tpu.matmul %10, %227, %cst_107 {dimension_numbers = #tpu.dot_dimension_numbers<[1], [0], [0], [1], [0, 0, 1, 1], [], []>} : vector<16x16xf32>, vector<16x32xf32>, vector<16x32xf32> -> vector<16x32xf32>
    %c0_108 = arith.constant 0 : index
    %c64_109 = arith.constant 64 : index
    %250 = vector.load %arg15[%c0_108, %c64_109] : memref<16x96xf32, #tpu.memory_space<vmem>>, vector<16x32xf32>
    tpu.vector_store %arg15[%c0_108, %c64_109], %249 {strides = array<i32>} : memref<16x96xf32, #tpu.memory_space<vmem>>, vector<16x32xf32>,
    %c0_110 = arith.constant 0 : index
    %c0_111 = arith.constant 0 : index
    %251 = vector.load %arg15[%c0_110, %c0_111] : memref<16x96xf32, #tpu.memory_space<vmem>>, vector<16x96xf32>
    %cst_112 = arith.constant dense<0.000000e+00> : vector<16x128xf32>
    %252 = tpu.matmul %251, %19, %cst_112 {dimension_numbers = #tpu.dot_dimension_numbers<[1], [0], [0], [1], [0, 0, 1, 1], [], []>} : vector<16x96xf32>, vector<96x128xf32>, vector<16x128xf32> -> vector<16x128xf32>
    %253 = arith.addf %245, %252 : vector<16x128xf32>
    %254 = vector.broadcast %20 : vector<1x128xf32> to vector<16x128xf32>
    %255 = arith.addf %253, %254 : vector<16x128xf32>
    %cst_113 = arith.constant 5.000000e-01 : f32
    %256 = vector.broadcast %cst_113 : f32 to vector<16x128xf32>
    %257 = arith.mulf %256, %255 : vector<16x128xf32>
    %258 = math.tanh %257 : vector<16x128xf32>
    %259 = vector.extract_strided_slice %258 {offsets = [0, 0], sizes = [16, 32], strides = [1, 1]} : vector<16x128xf32> to vector<16x32xf32>
    %cst_114 = arith.constant 1.000000e+00 : f32
    %260 = vector.broadcast %cst_114 : f32 to vector<16x32xf32>
    %261 = arith.addf %259, %260 : vector<16x32xf32>
    %cst_115 = arith.constant 5.000000e-01 : f32
    %262 = vector.broadcast %cst_115 : f32 to vector<16x32xf32>
    %263 = arith.mulf %262, %261 : vector<16x32xf32>
    %264 = vector.extract_strided_slice %258 {offsets = [0, 32], sizes = [16, 32], strides = [1, 1]} : vector<16x128xf32> to vector<16x32xf32>
    %265 = vector.extract_strided_slice %258 {offsets = [0, 64], sizes = [16, 32], strides = [1, 1]} : vector<16x128xf32> to vector<16x32xf32>
    %cst_116 = arith.constant 1.000000e+00 : f32
    %266 = vector.broadcast %cst_116 : f32 to vector<16x32xf32>
    %267 = arith.addf %265, %266 : vector<16x32xf32>
    %cst_117 = arith.constant 5.000000e-01 : f32
    %268 = vector.broadcast %cst_117 : f32 to vector<16x32xf32>
    %269 = arith.mulf %268, %267 : vector<16x32xf32>
    %270 = vector.extract_strided_slice %258 {offsets = [0, 96], sizes = [16, 32], strides = [1, 1]} : vector<16x128xf32> to vector<16x32xf32>
    %cst_118 = arith.constant 1.000000e+00 : f32
    %271 = vector.broadcast %cst_118 : f32 to vector<16x32xf32>
    %272 = arith.addf %270, %271 : vector<16x32xf32>
    %cst_119 = arith.constant 5.000000e-01 : f32
    %273 = vector.broadcast %cst_119 : f32 to vector<16x32xf32>
    %274 = arith.mulf %273, %272 : vector<16x32xf32>
    %275 = arith.mulf %225, %269 : vector<16x32xf32>
    %276 = arith.mulf %263, %264 : vector<16x32xf32>
    %277 = arith.addf %275, %276 : vector<16x32xf32>
    %278 = math.tanh %277 : vector<16x32xf32>
    %279 = arith.mulf %278, %274 : vector<16x32xf32>
    %c4 = arith.constant 4 : index
    %c0_120 = arith.constant 0 : index
    %c0_121 = arith.constant 0 : index
    %280 = vector.load %arg7[%c4, %c0_120, %c0_121] : memref<12x32x44xf32, #tpu.memory_space<vmem>>, vector<1x32x44xf32>
    %281 = vector.shape_cast %280 : vector<1x32x44xf32> to vector<32x44xf32>
    %cst_122 = arith.constant dense<0.000000e+00> : vector<16x44xf32>
    %282 = tpu.matmul %279, %281, %cst_122 {dimension_numbers = #tpu.dot_dimension_numbers<[1], [0], [0], [1], [0, 0, 1, 1], [], []>} : vector<16x32xf32>, vector<32x44xf32>, vector<16x44xf32> -> vector<16x44xf32>
    %283 = arith.addf %231, %282 : vector<16x44xf32>
    %284 = vector.extract_strided_slice %12 {offsets = [0, 5], sizes = [16, 1], strides = [1, 1]} : vector<16x12xf32> to vector<16x1xf32>
    %285 = vector.broadcast %284 : vector<16x1xf32> to vector<16x128xf32>
    %286 = vector.broadcast %16 : vector<1x128xf32> to vector<16x128xf32>
    %287 = arith.mulf %285, %286 : vector<16x128xf32>
    %288 = vector.extract_strided_slice %13 {offsets = [0, 5], sizes = [16, 1], strides = [1, 1]} : vector<16x12xf32> to vector<16x1xf32>
    %289 = vector.broadcast %288 : vector<16x1xf32> to vector<16x128xf32>
    %290 = vector.broadcast %17 : vector<1x128xf32> to vector<16x128xf32>
    %291 = arith.mulf %289, %290 : vector<16x128xf32>
    %292 = arith.addf %287, %291 : vector<16x128xf32>
    %293 = vector.extract_strided_slice %14 {offsets = [0, 5], sizes = [16, 1], strides = [1, 1]} : vector<16x12xf32> to vector<16x1xf32>
    %294 = vector.broadcast %293 : vector<16x1xf32> to vector<16x128xf32>
    %295 = vector.broadcast %18 : vector<1x128xf32> to vector<16x128xf32>
    %296 = arith.mulf %294, %295 : vector<16x128xf32>
    %297 = arith.addf %292, %296 : vector<16x128xf32>
    %c0_123 = arith.constant 0 : index
    %c0_124 = arith.constant 0 : index
    %298 = vector.load %arg15[%c0_123, %c0_124] : memref<16x96xf32, #tpu.memory_space<vmem>>, vector<16x32xf32>
    tpu.vector_store %arg15[%c0_123, %c0_124], %279 {strides = array<i32>} : memref<16x96xf32, #tpu.memory_space<vmem>>, vector<16x32xf32>,
    %cst_125 = arith.constant dense<0.000000e+00> : vector<16x32xf32>
    %299 = tpu.matmul %9, %279, %cst_125 {dimension_numbers = #tpu.dot_dimension_numbers<[1], [0], [0], [1], [0, 0, 1, 1], [], []>} : vector<16x16xf32>, vector<16x32xf32>, vector<16x32xf32> -> vector<16x32xf32>
    %c0_126 = arith.constant 0 : index
    %c32_127 = arith.constant 32 : index
    %300 = vector.load %arg15[%c0_126, %c32_127] : memref<16x96xf32, #tpu.memory_space<vmem>>, vector<16x32xf32>
    tpu.vector_store %arg15[%c0_126, %c32_127], %299 {strides = array<i32>} : memref<16x96xf32, #tpu.memory_space<vmem>>, vector<16x32xf32>,
    %cst_128 = arith.constant dense<0.000000e+00> : vector<16x32xf32>
    %301 = tpu.matmul %10, %279, %cst_128 {dimension_numbers = #tpu.dot_dimension_numbers<[1], [0], [0], [1], [0, 0, 1, 1], [], []>} : vector<16x16xf32>, vector<16x32xf32>, vector<16x32xf32> -> vector<16x32xf32>
    %c0_129 = arith.constant 0 : index
    %c64_130 = arith.constant 64 : index
    %302 = vector.load %arg15[%c0_129, %c64_130] : memref<16x96xf32, #tpu.memory_space<vmem>>, vector<16x32xf32>
    tpu.vector_store %arg15[%c0_129, %c64_130], %301 {strides = array<i32>} : memref<16x96xf32, #tpu.memory_space<vmem>>, vector<16x32xf32>,
    %c0_131 = arith.constant 0 : index
    %c0_132 = arith.constant 0 : index
    %303 = vector.load %arg15[%c0_131, %c0_132] : memref<16x96xf32, #tpu.memory_space<vmem>>, vector<16x96xf32>
    %cst_133 = arith.constant dense<0.000000e+00> : vector<16x128xf32>
    %304 = tpu.matmul %303, %19, %cst_133 {dimension_numbers = #tpu.dot_dimension_numbers<[1], [0], [0], [1], [0, 0, 1, 1], [], []>} : vector<16x96xf32>, vector<96x128xf32>, vector<16x128xf32> -> vector<16x128xf32>
    %305 = arith.addf %297, %304 : vector<16x128xf32>
    %306 = vector.broadcast %20 : vector<1x128xf32> to vector<16x128xf32>
    %307 = arith.addf %305, %306 : vector<16x128xf32>
    %cst_134 = arith.constant 5.000000e-01 : f32
    %308 = vector.broadcast %cst_134 : f32 to vector<16x128xf32>
    %309 = arith.mulf %308, %307 : vector<16x128xf32>
    %310 = math.tanh %309 : vector<16x128xf32>
    %311 = vector.extract_strided_slice %310 {offsets = [0, 0], sizes = [16, 32], strides = [1, 1]} : vector<16x128xf32> to vector<16x32xf32>
    %cst_135 = arith.constant 1.000000e+00 : f32
    %312 = vector.broadcast %cst_135 : f32 to vector<16x32xf32>
    %313 = arith.addf %311, %312 : vector<16x32xf32>
    %cst_136 = arith.constant 5.000000e-01 : f32
    %314 = vector.broadcast %cst_136 : f32 to vector<16x32xf32>
    %315 = arith.mulf %314, %313 : vector<16x32xf32>
    %316 = vector.extract_strided_slice %310 {offsets = [0, 32], sizes = [16, 32], strides = [1, 1]} : vector<16x128xf32> to vector<16x32xf32>
    %317 = vector.extract_strided_slice %310 {offsets = [0, 64], sizes = [16, 32], strides = [1, 1]} : vector<16x128xf32> to vector<16x32xf32>
    %cst_137 = arith.constant 1.000000e+00 : f32
    %318 = vector.broadcast %cst_137 : f32 to vector<16x32xf32>
    %319 = arith.addf %317, %318 : vector<16x32xf32>
    %cst_138 = arith.constant 5.000000e-01 : f32
    %320 = vector.broadcast %cst_138 : f32 to vector<16x32xf32>
    %321 = arith.mulf %320, %319 : vector<16x32xf32>
    %322 = vector.extract_strided_slice %310 {offsets = [0, 96], sizes = [16, 32], strides = [1, 1]} : vector<16x128xf32> to vector<16x32xf32>
    %cst_139 = arith.constant 1.000000e+00 : f32
    %323 = vector.broadcast %cst_139 : f32 to vector<16x32xf32>
    %324 = arith.addf %322, %323 : vector<16x32xf32>
    %cst_140 = arith.constant 5.000000e-01 : f32
    %325 = vector.broadcast %cst_140 : f32 to vector<16x32xf32>
    %326 = arith.mulf %325, %324 : vector<16x32xf32>
    %327 = arith.mulf %277, %321 : vector<16x32xf32>
    %328 = arith.mulf %315, %316 : vector<16x32xf32>
    %329 = arith.addf %327, %328 : vector<16x32xf32>
    %330 = math.tanh %329 : vector<16x32xf32>
    %331 = arith.mulf %330, %326 : vector<16x32xf32>
    %c5 = arith.constant 5 : index
    %c0_141 = arith.constant 0 : index
    %c0_142 = arith.constant 0 : index
    %332 = vector.load %arg7[%c5, %c0_141, %c0_142] : memref<12x32x44xf32, #tpu.memory_space<vmem>>, vector<1x32x44xf32>
    %333 = vector.shape_cast %332 : vector<1x32x44xf32> to vector<32x44xf32>
    %cst_143 = arith.constant dense<0.000000e+00> : vector<16x44xf32>
    %334 = tpu.matmul %331, %333, %cst_143 {dimension_numbers = #tpu.dot_dimension_numbers<[1], [0], [0], [1], [0, 0, 1, 1], [], []>} : vector<16x32xf32>, vector<32x44xf32>, vector<16x44xf32> -> vector<16x44xf32>
    %335 = arith.addf %283, %334 : vector<16x44xf32>
    %336 = vector.extract_strided_slice %12 {offsets = [0, 6], sizes = [16, 1], strides = [1, 1]} : vector<16x12xf32> to vector<16x1xf32>
    %337 = vector.broadcast %336 : vector<16x1xf32> to vector<16x128xf32>
    %338 = vector.broadcast %16 : vector<1x128xf32> to vector<16x128xf32>
    %339 = arith.mulf %337, %338 : vector<16x128xf32>
    %340 = vector.extract_strided_slice %13 {offsets = [0, 6], sizes = [16, 1], strides = [1, 1]} : vector<16x12xf32> to vector<16x1xf32>
    %341 = vector.broadcast %340 : vector<16x1xf32> to vector<16x128xf32>
    %342 = vector.broadcast %17 : vector<1x128xf32> to vector<16x128xf32>
    %343 = arith.mulf %341, %342 : vector<16x128xf32>
    %344 = arith.addf %339, %343 : vector<16x128xf32>
    %345 = vector.extract_strided_slice %14 {offsets = [0, 6], sizes = [16, 1], strides = [1, 1]} : vector<16x12xf32> to vector<16x1xf32>
    %346 = vector.broadcast %345 : vector<16x1xf32> to vector<16x128xf32>
    %347 = vector.broadcast %18 : vector<1x128xf32> to vector<16x128xf32>
    %348 = arith.mulf %346, %347 : vector<16x128xf32>
    %349 = arith.addf %344, %348 : vector<16x128xf32>
    %c0_144 = arith.constant 0 : index
    %c0_145 = arith.constant 0 : index
    %350 = vector.load %arg15[%c0_144, %c0_145] : memref<16x96xf32, #tpu.memory_space<vmem>>, vector<16x32xf32>
    tpu.vector_store %arg15[%c0_144, %c0_145], %331 {strides = array<i32>} : memref<16x96xf32, #tpu.memory_space<vmem>>, vector<16x32xf32>,
    %cst_146 = arith.constant dense<0.000000e+00> : vector<16x32xf32>
    %351 = tpu.matmul %9, %331, %cst_146 {dimension_numbers = #tpu.dot_dimension_numbers<[1], [0], [0], [1], [0, 0, 1, 1], [], []>} : vector<16x16xf32>, vector<16x32xf32>, vector<16x32xf32> -> vector<16x32xf32>
    %c0_147 = arith.constant 0 : index
    %c32_148 = arith.constant 32 : index
    %352 = vector.load %arg15[%c0_147, %c32_148] : memref<16x96xf32, #tpu.memory_space<vmem>>, vector<16x32xf32>
    tpu.vector_store %arg15[%c0_147, %c32_148], %351 {strides = array<i32>} : memref<16x96xf32, #tpu.memory_space<vmem>>, vector<16x32xf32>,
    %cst_149 = arith.constant dense<0.000000e+00> : vector<16x32xf32>
    %353 = tpu.matmul %10, %331, %cst_149 {dimension_numbers = #tpu.dot_dimension_numbers<[1], [0], [0], [1], [0, 0, 1, 1], [], []>} : vector<16x16xf32>, vector<16x32xf32>, vector<16x32xf32> -> vector<16x32xf32>
    %c0_150 = arith.constant 0 : index
    %c64_151 = arith.constant 64 : index
    %354 = vector.load %arg15[%c0_150, %c64_151] : memref<16x96xf32, #tpu.memory_space<vmem>>, vector<16x32xf32>
    tpu.vector_store %arg15[%c0_150, %c64_151], %353 {strides = array<i32>} : memref<16x96xf32, #tpu.memory_space<vmem>>, vector<16x32xf32>,
    %c0_152 = arith.constant 0 : index
    %c0_153 = arith.constant 0 : index
    %355 = vector.load %arg15[%c0_152, %c0_153] : memref<16x96xf32, #tpu.memory_space<vmem>>, vector<16x96xf32>
    %cst_154 = arith.constant dense<0.000000e+00> : vector<16x128xf32>
    %356 = tpu.matmul %355, %19, %cst_154 {dimension_numbers = #tpu.dot_dimension_numbers<[1], [0], [0], [1], [0, 0, 1, 1], [], []>} : vector<16x96xf32>, vector<96x128xf32>, vector<16x128xf32> -> vector<16x128xf32>
    %357 = arith.addf %349, %356 : vector<16x128xf32>
    %358 = vector.broadcast %20 : vector<1x128xf32> to vector<16x128xf32>
    %359 = arith.addf %357, %358 : vector<16x128xf32>
    %cst_155 = arith.constant 5.000000e-01 : f32
    %360 = vector.broadcast %cst_155 : f32 to vector<16x128xf32>
    %361 = arith.mulf %360, %359 : vector<16x128xf32>
    %362 = math.tanh %361 : vector<16x128xf32>
    %363 = vector.extract_strided_slice %362 {offsets = [0, 0], sizes = [16, 32], strides = [1, 1]} : vector<16x128xf32> to vector<16x32xf32>
    %cst_156 = arith.constant 1.000000e+00 : f32
    %364 = vector.broadcast %cst_156 : f32 to vector<16x32xf32>
    %365 = arith.addf %363, %364 : vector<16x32xf32>
    %cst_157 = arith.constant 5.000000e-01 : f32
    %366 = vector.broadcast %cst_157 : f32 to vector<16x32xf32>
    %367 = arith.mulf %366, %365 : vector<16x32xf32>
    %368 = vector.extract_strided_slice %362 {offsets = [0, 32], sizes = [16, 32], strides = [1, 1]} : vector<16x128xf32> to vector<16x32xf32>
    %369 = vector.extract_strided_slice %362 {offsets = [0, 64], sizes = [16, 32], strides = [1, 1]} : vector<16x128xf32> to vector<16x32xf32>
    %cst_158 = arith.constant 1.000000e+00 : f32
    %370 = vector.broadcast %cst_158 : f32 to vector<16x32xf32>
    %371 = arith.addf %369, %370 : vector<16x32xf32>
    %cst_159 = arith.constant 5.000000e-01 : f32
    %372 = vector.broadcast %cst_159 : f32 to vector<16x32xf32>
    %373 = arith.mulf %372, %371 : vector<16x32xf32>
    %374 = vector.extract_strided_slice %362 {offsets = [0, 96], sizes = [16, 32], strides = [1, 1]} : vector<16x128xf32> to vector<16x32xf32>
    %cst_160 = arith.constant 1.000000e+00 : f32
    %375 = vector.broadcast %cst_160 : f32 to vector<16x32xf32>
    %376 = arith.addf %374, %375 : vector<16x32xf32>
    %cst_161 = arith.constant 5.000000e-01 : f32
    %377 = vector.broadcast %cst_161 : f32 to vector<16x32xf32>
    %378 = arith.mulf %377, %376 : vector<16x32xf32>
    %379 = arith.mulf %329, %373 : vector<16x32xf32>
    %380 = arith.mulf %367, %368 : vector<16x32xf32>
    %381 = arith.addf %379, %380 : vector<16x32xf32>
    %382 = math.tanh %381 : vector<16x32xf32>
    %383 = arith.mulf %382, %378 : vector<16x32xf32>
    %c6 = arith.constant 6 : index
    %c0_162 = arith.constant 0 : index
    %c0_163 = arith.constant 0 : index
    %384 = vector.load %arg7[%c6, %c0_162, %c0_163] : memref<12x32x44xf32, #tpu.memory_space<vmem>>, vector<1x32x44xf32>
    %385 = vector.shape_cast %384 : vector<1x32x44xf32> to vector<32x44xf32>
    %cst_164 = arith.constant dense<0.000000e+00> : vector<16x44xf32>
    %386 = tpu.matmul %383, %385, %cst_164 {dimension_numbers = #tpu.dot_dimension_numbers<[1], [0], [0], [1], [0, 0, 1, 1], [], []>} : vector<16x32xf32>, vector<32x44xf32>, vector<16x44xf32> -> vector<16x44xf32>
    %387 = arith.addf %335, %386 : vector<16x44xf32>
    %388 = vector.extract_strided_slice %12 {offsets = [0, 7], sizes = [16, 1], strides = [1, 1]} : vector<16x12xf32> to vector<16x1xf32>
    %389 = vector.broadcast %388 : vector<16x1xf32> to vector<16x128xf32>
    %390 = vector.broadcast %16 : vector<1x128xf32> to vector<16x128xf32>
    %391 = arith.mulf %389, %390 : vector<16x128xf32>
    %392 = vector.extract_strided_slice %13 {offsets = [0, 7], sizes = [16, 1], strides = [1, 1]} : vector<16x12xf32> to vector<16x1xf32>
    %393 = vector.broadcast %392 : vector<16x1xf32> to vector<16x128xf32>
    %394 = vector.broadcast %17 : vector<1x128xf32> to vector<16x128xf32>
    %395 = arith.mulf %393, %394 : vector<16x128xf32>
    %396 = arith.addf %391, %395 : vector<16x128xf32>
    %397 = vector.extract_strided_slice %14 {offsets = [0, 7], sizes = [16, 1], strides = [1, 1]} : vector<16x12xf32> to vector<16x1xf32>
    %398 = vector.broadcast %397 : vector<16x1xf32> to vector<16x128xf32>
    %399 = vector.broadcast %18 : vector<1x128xf32> to vector<16x128xf32>
    %400 = arith.mulf %398, %399 : vector<16x128xf32>
    %401 = arith.addf %396, %400 : vector<16x128xf32>
    %c0_165 = arith.constant 0 : index
    %c0_166 = arith.constant 0 : index
    %402 = vector.load %arg15[%c0_165, %c0_166] : memref<16x96xf32, #tpu.memory_space<vmem>>, vector<16x32xf32>
    tpu.vector_store %arg15[%c0_165, %c0_166], %383 {strides = array<i32>} : memref<16x96xf32, #tpu.memory_space<vmem>>, vector<16x32xf32>,
    %cst_167 = arith.constant dense<0.000000e+00> : vector<16x32xf32>
    %403 = tpu.matmul %9, %383, %cst_167 {dimension_numbers = #tpu.dot_dimension_numbers<[1], [0], [0], [1], [0, 0, 1, 1], [], []>} : vector<16x16xf32>, vector<16x32xf32>, vector<16x32xf32> -> vector<16x32xf32>
    %c0_168 = arith.constant 0 : index
    %c32_169 = arith.constant 32 : index
    %404 = vector.load %arg15[%c0_168, %c32_169] : memref<16x96xf32, #tpu.memory_space<vmem>>, vector<16x32xf32>
    tpu.vector_store %arg15[%c0_168, %c32_169], %403 {strides = array<i32>} : memref<16x96xf32, #tpu.memory_space<vmem>>, vector<16x32xf32>,
    %cst_170 = arith.constant dense<0.000000e+00> : vector<16x32xf32>
    %405 = tpu.matmul %10, %383, %cst_170 {dimension_numbers = #tpu.dot_dimension_numbers<[1], [0], [0], [1], [0, 0, 1, 1], [], []>} : vector<16x16xf32>, vector<16x32xf32>, vector<16x32xf32> -> vector<16x32xf32>
    %c0_171 = arith.constant 0 : index
    %c64_172 = arith.constant 64 : index
    %406 = vector.load %arg15[%c0_171, %c64_172] : memref<16x96xf32, #tpu.memory_space<vmem>>, vector<16x32xf32>
    tpu.vector_store %arg15[%c0_171, %c64_172], %405 {strides = array<i32>} : memref<16x96xf32, #tpu.memory_space<vmem>>, vector<16x32xf32>,
    %c0_173 = arith.constant 0 : index
    %c0_174 = arith.constant 0 : index
    %407 = vector.load %arg15[%c0_173, %c0_174] : memref<16x96xf32, #tpu.memory_space<vmem>>, vector<16x96xf32>
    %cst_175 = arith.constant dense<0.000000e+00> : vector<16x128xf32>
    %408 = tpu.matmul %407, %19, %cst_175 {dimension_numbers = #tpu.dot_dimension_numbers<[1], [0], [0], [1], [0, 0, 1, 1], [], []>} : vector<16x96xf32>, vector<96x128xf32>, vector<16x128xf32> -> vector<16x128xf32>
    %409 = arith.addf %401, %408 : vector<16x128xf32>
    %410 = vector.broadcast %20 : vector<1x128xf32> to vector<16x128xf32>
    %411 = arith.addf %409, %410 : vector<16x128xf32>
    %cst_176 = arith.constant 5.000000e-01 : f32
    %412 = vector.broadcast %cst_176 : f32 to vector<16x128xf32>
    %413 = arith.mulf %412, %411 : vector<16x128xf32>
    %414 = math.tanh %413 : vector<16x128xf32>
    %415 = vector.extract_strided_slice %414 {offsets = [0, 0], sizes = [16, 32], strides = [1, 1]} : vector<16x128xf32> to vector<16x32xf32>
    %cst_177 = arith.constant 1.000000e+00 : f32
    %416 = vector.broadcast %cst_177 : f32 to vector<16x32xf32>
    %417 = arith.addf %415, %416 : vector<16x32xf32>
    %cst_178 = arith.constant 5.000000e-01 : f32
    %418 = vector.broadcast %cst_178 : f32 to vector<16x32xf32>
    %419 = arith.mulf %418, %417 : vector<16x32xf32>
    %420 = vector.extract_strided_slice %414 {offsets = [0, 32], sizes = [16, 32], strides = [1, 1]} : vector<16x128xf32> to vector<16x32xf32>
    %421 = vector.extract_strided_slice %414 {offsets = [0, 64], sizes = [16, 32], strides = [1, 1]} : vector<16x128xf32> to vector<16x32xf32>
    %cst_179 = arith.constant 1.000000e+00 : f32
    %422 = vector.broadcast %cst_179 : f32 to vector<16x32xf32>
    %423 = arith.addf %421, %422 : vector<16x32xf32>
    %cst_180 = arith.constant 5.000000e-01 : f32
    %424 = vector.broadcast %cst_180 : f32 to vector<16x32xf32>
    %425 = arith.mulf %424, %423 : vector<16x32xf32>
    %426 = vector.extract_strided_slice %414 {offsets = [0, 96], sizes = [16, 32], strides = [1, 1]} : vector<16x128xf32> to vector<16x32xf32>
    %cst_181 = arith.constant 1.000000e+00 : f32
    %427 = vector.broadcast %cst_181 : f32 to vector<16x32xf32>
    %428 = arith.addf %426, %427 : vector<16x32xf32>
    %cst_182 = arith.constant 5.000000e-01 : f32
    %429 = vector.broadcast %cst_182 : f32 to vector<16x32xf32>
    %430 = arith.mulf %429, %428 : vector<16x32xf32>
    %431 = arith.mulf %381, %425 : vector<16x32xf32>
    %432 = arith.mulf %419, %420 : vector<16x32xf32>
    %433 = arith.addf %431, %432 : vector<16x32xf32>
    %434 = math.tanh %433 : vector<16x32xf32>
    %435 = arith.mulf %434, %430 : vector<16x32xf32>
    %c7 = arith.constant 7 : index
    %c0_183 = arith.constant 0 : index
    %c0_184 = arith.constant 0 : index
    %436 = vector.load %arg7[%c7, %c0_183, %c0_184] : memref<12x32x44xf32, #tpu.memory_space<vmem>>, vector<1x32x44xf32>
    %437 = vector.shape_cast %436 : vector<1x32x44xf32> to vector<32x44xf32>
    %cst_185 = arith.constant dense<0.000000e+00> : vector<16x44xf32>
    %438 = tpu.matmul %435, %437, %cst_185 {dimension_numbers = #tpu.dot_dimension_numbers<[1], [0], [0], [1], [0, 0, 1, 1], [], []>} : vector<16x32xf32>, vector<32x44xf32>, vector<16x44xf32> -> vector<16x44xf32>
    %439 = arith.addf %387, %438 : vector<16x44xf32>
    %440 = vector.extract_strided_slice %12 {offsets = [0, 8], sizes = [16, 1], strides = [1, 1]} : vector<16x12xf32> to vector<16x1xf32>
    %441 = vector.broadcast %440 : vector<16x1xf32> to vector<16x128xf32>
    %442 = vector.broadcast %16 : vector<1x128xf32> to vector<16x128xf32>
    %443 = arith.mulf %441, %442 : vector<16x128xf32>
    %444 = vector.extract_strided_slice %13 {offsets = [0, 8], sizes = [16, 1], strides = [1, 1]} : vector<16x12xf32> to vector<16x1xf32>
    %445 = vector.broadcast %444 : vector<16x1xf32> to vector<16x128xf32>
    %446 = vector.broadcast %17 : vector<1x128xf32> to vector<16x128xf32>
    %447 = arith.mulf %445, %446 : vector<16x128xf32>
    %448 = arith.addf %443, %447 : vector<16x128xf32>
    %449 = vector.extract_strided_slice %14 {offsets = [0, 8], sizes = [16, 1], strides = [1, 1]} : vector<16x12xf32> to vector<16x1xf32>
    %450 = vector.broadcast %449 : vector<16x1xf32> to vector<16x128xf32>
    %451 = vector.broadcast %18 : vector<1x128xf32> to vector<16x128xf32>
    %452 = arith.mulf %450, %451 : vector<16x128xf32>
    %453 = arith.addf %448, %452 : vector<16x128xf32>
    %c0_186 = arith.constant 0 : index
    %c0_187 = arith.constant 0 : index
    %454 = vector.load %arg15[%c0_186, %c0_187] : memref<16x96xf32, #tpu.memory_space<vmem>>, vector<16x32xf32>
    tpu.vector_store %arg15[%c0_186, %c0_187], %435 {strides = array<i32>} : memref<16x96xf32, #tpu.memory_space<vmem>>, vector<16x32xf32>,
    %cst_188 = arith.constant dense<0.000000e+00> : vector<16x32xf32>
    %455 = tpu.matmul %9, %435, %cst_188 {dimension_numbers = #tpu.dot_dimension_numbers<[1], [0], [0], [1], [0, 0, 1, 1], [], []>} : vector<16x16xf32>, vector<16x32xf32>, vector<16x32xf32> -> vector<16x32xf32>
    %c0_189 = arith.constant 0 : index
    %c32_190 = arith.constant 32 : index
    %456 = vector.load %arg15[%c0_189, %c32_190] : memref<16x96xf32, #tpu.memory_space<vmem>>, vector<16x32xf32>
    tpu.vector_store %arg15[%c0_189, %c32_190], %455 {strides = array<i32>} : memref<16x96xf32, #tpu.memory_space<vmem>>, vector<16x32xf32>,
    %cst_191 = arith.constant dense<0.000000e+00> : vector<16x32xf32>
    %457 = tpu.matmul %10, %435, %cst_191 {dimension_numbers = #tpu.dot_dimension_numbers<[1], [0], [0], [1], [0, 0, 1, 1], [], []>} : vector<16x16xf32>, vector<16x32xf32>, vector<16x32xf32> -> vector<16x32xf32>
    %c0_192 = arith.constant 0 : index
    %c64_193 = arith.constant 64 : index
    %458 = vector.load %arg15[%c0_192, %c64_193] : memref<16x96xf32, #tpu.memory_space<vmem>>, vector<16x32xf32>
    tpu.vector_store %arg15[%c0_192, %c64_193], %457 {strides = array<i32>} : memref<16x96xf32, #tpu.memory_space<vmem>>, vector<16x32xf32>,
    %c0_194 = arith.constant 0 : index
    %c0_195 = arith.constant 0 : index
    %459 = vector.load %arg15[%c0_194, %c0_195] : memref<16x96xf32, #tpu.memory_space<vmem>>, vector<16x96xf32>
    %cst_196 = arith.constant dense<0.000000e+00> : vector<16x128xf32>
    %460 = tpu.matmul %459, %19, %cst_196 {dimension_numbers = #tpu.dot_dimension_numbers<[1], [0], [0], [1], [0, 0, 1, 1], [], []>} : vector<16x96xf32>, vector<96x128xf32>, vector<16x128xf32> -> vector<16x128xf32>
    %461 = arith.addf %453, %460 : vector<16x128xf32>
    %462 = vector.broadcast %20 : vector<1x128xf32> to vector<16x128xf32>
    %463 = arith.addf %461, %462 : vector<16x128xf32>
    %cst_197 = arith.constant 5.000000e-01 : f32
    %464 = vector.broadcast %cst_197 : f32 to vector<16x128xf32>
    %465 = arith.mulf %464, %463 : vector<16x128xf32>
    %466 = math.tanh %465 : vector<16x128xf32>
    %467 = vector.extract_strided_slice %466 {offsets = [0, 0], sizes = [16, 32], strides = [1, 1]} : vector<16x128xf32> to vector<16x32xf32>
    %cst_198 = arith.constant 1.000000e+00 : f32
    %468 = vector.broadcast %cst_198 : f32 to vector<16x32xf32>
    %469 = arith.addf %467, %468 : vector<16x32xf32>
    %cst_199 = arith.constant 5.000000e-01 : f32
    %470 = vector.broadcast %cst_199 : f32 to vector<16x32xf32>
    %471 = arith.mulf %470, %469 : vector<16x32xf32>
    %472 = vector.extract_strided_slice %466 {offsets = [0, 32], sizes = [16, 32], strides = [1, 1]} : vector<16x128xf32> to vector<16x32xf32>
    %473 = vector.extract_strided_slice %466 {offsets = [0, 64], sizes = [16, 32], strides = [1, 1]} : vector<16x128xf32> to vector<16x32xf32>
    %cst_200 = arith.constant 1.000000e+00 : f32
    %474 = vector.broadcast %cst_200 : f32 to vector<16x32xf32>
    %475 = arith.addf %473, %474 : vector<16x32xf32>
    %cst_201 = arith.constant 5.000000e-01 : f32
    %476 = vector.broadcast %cst_201 : f32 to vector<16x32xf32>
    %477 = arith.mulf %476, %475 : vector<16x32xf32>
    %478 = vector.extract_strided_slice %466 {offsets = [0, 96], sizes = [16, 32], strides = [1, 1]} : vector<16x128xf32> to vector<16x32xf32>
    %cst_202 = arith.constant 1.000000e+00 : f32
    %479 = vector.broadcast %cst_202 : f32 to vector<16x32xf32>
    %480 = arith.addf %478, %479 : vector<16x32xf32>
    %cst_203 = arith.constant 5.000000e-01 : f32
    %481 = vector.broadcast %cst_203 : f32 to vector<16x32xf32>
    %482 = arith.mulf %481, %480 : vector<16x32xf32>
    %483 = arith.mulf %433, %477 : vector<16x32xf32>
    %484 = arith.mulf %471, %472 : vector<16x32xf32>
    %485 = arith.addf %483, %484 : vector<16x32xf32>
    %486 = math.tanh %485 : vector<16x32xf32>
    %487 = arith.mulf %486, %482 : vector<16x32xf32>
    %c8 = arith.constant 8 : index
    %c0_204 = arith.constant 0 : index
    %c0_205 = arith.constant 0 : index
    %488 = vector.load %arg7[%c8, %c0_204, %c0_205] : memref<12x32x44xf32, #tpu.memory_space<vmem>>, vector<1x32x44xf32>
    %489 = vector.shape_cast %488 : vector<1x32x44xf32> to vector<32x44xf32>
    %cst_206 = arith.constant dense<0.000000e+00> : vector<16x44xf32>
    %490 = tpu.matmul %487, %489, %cst_206 {dimension_numbers = #tpu.dot_dimension_numbers<[1], [0], [0], [1], [0, 0, 1, 1], [], []>} : vector<16x32xf32>, vector<32x44xf32>, vector<16x44xf32> -> vector<16x44xf32>
    %491 = arith.addf %439, %490 : vector<16x44xf32>
    %492 = vector.extract_strided_slice %12 {offsets = [0, 9], sizes = [16, 1], strides = [1, 1]} : vector<16x12xf32> to vector<16x1xf32>
    %493 = vector.broadcast %492 : vector<16x1xf32> to vector<16x128xf32>
    %494 = vector.broadcast %16 : vector<1x128xf32> to vector<16x128xf32>
    %495 = arith.mulf %493, %494 : vector<16x128xf32>
    %496 = vector.extract_strided_slice %13 {offsets = [0, 9], sizes = [16, 1], strides = [1, 1]} : vector<16x12xf32> to vector<16x1xf32>
    %497 = vector.broadcast %496 : vector<16x1xf32> to vector<16x128xf32>
    %498 = vector.broadcast %17 : vector<1x128xf32> to vector<16x128xf32>
    %499 = arith.mulf %497, %498 : vector<16x128xf32>
    %500 = arith.addf %495, %499 : vector<16x128xf32>
    %501 = vector.extract_strided_slice %14 {offsets = [0, 9], sizes = [16, 1], strides = [1, 1]} : vector<16x12xf32> to vector<16x1xf32>
    %502 = vector.broadcast %501 : vector<16x1xf32> to vector<16x128xf32>
    %503 = vector.broadcast %18 : vector<1x128xf32> to vector<16x128xf32>
    %504 = arith.mulf %502, %503 : vector<16x128xf32>
    %505 = arith.addf %500, %504 : vector<16x128xf32>
    %c0_207 = arith.constant 0 : index
    %c0_208 = arith.constant 0 : index
    %506 = vector.load %arg15[%c0_207, %c0_208] : memref<16x96xf32, #tpu.memory_space<vmem>>, vector<16x32xf32>
    tpu.vector_store %arg15[%c0_207, %c0_208], %487 {strides = array<i32>} : memref<16x96xf32, #tpu.memory_space<vmem>>, vector<16x32xf32>,
    %cst_209 = arith.constant dense<0.000000e+00> : vector<16x32xf32>
    %507 = tpu.matmul %9, %487, %cst_209 {dimension_numbers = #tpu.dot_dimension_numbers<[1], [0], [0], [1], [0, 0, 1, 1], [], []>} : vector<16x16xf32>, vector<16x32xf32>, vector<16x32xf32> -> vector<16x32xf32>
    %c0_210 = arith.constant 0 : index
    %c32_211 = arith.constant 32 : index
    %508 = vector.load %arg15[%c0_210, %c32_211] : memref<16x96xf32, #tpu.memory_space<vmem>>, vector<16x32xf32>
    tpu.vector_store %arg15[%c0_210, %c32_211], %507 {strides = array<i32>} : memref<16x96xf32, #tpu.memory_space<vmem>>, vector<16x32xf32>,
    %cst_212 = arith.constant dense<0.000000e+00> : vector<16x32xf32>
    %509 = tpu.matmul %10, %487, %cst_212 {dimension_numbers = #tpu.dot_dimension_numbers<[1], [0], [0], [1], [0, 0, 1, 1], [], []>} : vector<16x16xf32>, vector<16x32xf32>, vector<16x32xf32> -> vector<16x32xf32>
    %c0_213 = arith.constant 0 : index
    %c64_214 = arith.constant 64 : index
    %510 = vector.load %arg15[%c0_213, %c64_214] : memref<16x96xf32, #tpu.memory_space<vmem>>, vector<16x32xf32>
    tpu.vector_store %arg15[%c0_213, %c64_214], %509 {strides = array<i32>} : memref<16x96xf32, #tpu.memory_space<vmem>>, vector<16x32xf32>,
    %c0_215 = arith.constant 0 : index
    %c0_216 = arith.constant 0 : index
    %511 = vector.load %arg15[%c0_215, %c0_216] : memref<16x96xf32, #tpu.memory_space<vmem>>, vector<16x96xf32>
    %cst_217 = arith.constant dense<0.000000e+00> : vector<16x128xf32>
    %512 = tpu.matmul %511, %19, %cst_217 {dimension_numbers = #tpu.dot_dimension_numbers<[1], [0], [0], [1], [0, 0, 1, 1], [], []>} : vector<16x96xf32>, vector<96x128xf32>, vector<16x128xf32> -> vector<16x128xf32>
    %513 = arith.addf %505, %512 : vector<16x128xf32>
    %514 = vector.broadcast %20 : vector<1x128xf32> to vector<16x128xf32>
    %515 = arith.addf %513, %514 : vector<16x128xf32>
    %cst_218 = arith.constant 5.000000e-01 : f32
    %516 = vector.broadcast %cst_218 : f32 to vector<16x128xf32>
    %517 = arith.mulf %516, %515 : vector<16x128xf32>
    %518 = math.tanh %517 : vector<16x128xf32>
    %519 = vector.extract_strided_slice %518 {offsets = [0, 0], sizes = [16, 32], strides = [1, 1]} : vector<16x128xf32> to vector<16x32xf32>
    %cst_219 = arith.constant 1.000000e+00 : f32
    %520 = vector.broadcast %cst_219 : f32 to vector<16x32xf32>
    %521 = arith.addf %519, %520 : vector<16x32xf32>
    %cst_220 = arith.constant 5.000000e-01 : f32
    %522 = vector.broadcast %cst_220 : f32 to vector<16x32xf32>
    %523 = arith.mulf %522, %521 : vector<16x32xf32>
    %524 = vector.extract_strided_slice %518 {offsets = [0, 32], sizes = [16, 32], strides = [1, 1]} : vector<16x128xf32> to vector<16x32xf32>
    %525 = vector.extract_strided_slice %518 {offsets = [0, 64], sizes = [16, 32], strides = [1, 1]} : vector<16x128xf32> to vector<16x32xf32>
    %cst_221 = arith.constant 1.000000e+00 : f32
    %526 = vector.broadcast %cst_221 : f32 to vector<16x32xf32>
    %527 = arith.addf %525, %526 : vector<16x32xf32>
    %cst_222 = arith.constant 5.000000e-01 : f32
    %528 = vector.broadcast %cst_222 : f32 to vector<16x32xf32>
    %529 = arith.mulf %528, %527 : vector<16x32xf32>
    %530 = vector.extract_strided_slice %518 {offsets = [0, 96], sizes = [16, 32], strides = [1, 1]} : vector<16x128xf32> to vector<16x32xf32>
    %cst_223 = arith.constant 1.000000e+00 : f32
    %531 = vector.broadcast %cst_223 : f32 to vector<16x32xf32>
    %532 = arith.addf %530, %531 : vector<16x32xf32>
    %cst_224 = arith.constant 5.000000e-01 : f32
    %533 = vector.broadcast %cst_224 : f32 to vector<16x32xf32>
    %534 = arith.mulf %533, %532 : vector<16x32xf32>
    %535 = arith.mulf %485, %529 : vector<16x32xf32>
    %536 = arith.mulf %523, %524 : vector<16x32xf32>
    %537 = arith.addf %535, %536 : vector<16x32xf32>
    %538 = math.tanh %537 : vector<16x32xf32>
    %539 = arith.mulf %538, %534 : vector<16x32xf32>
    %c9 = arith.constant 9 : index
    %c0_225 = arith.constant 0 : index
    %c0_226 = arith.constant 0 : index
    %540 = vector.load %arg7[%c9, %c0_225, %c0_226] : memref<12x32x44xf32, #tpu.memory_space<vmem>>, vector<1x32x44xf32>
    %541 = vector.shape_cast %540 : vector<1x32x44xf32> to vector<32x44xf32>
    %cst_227 = arith.constant dense<0.000000e+00> : vector<16x44xf32>
    %542 = tpu.matmul %539, %541, %cst_227 {dimension_numbers = #tpu.dot_dimension_numbers<[1], [0], [0], [1], [0, 0, 1, 1], [], []>} : vector<16x32xf32>, vector<32x44xf32>, vector<16x44xf32> -> vector<16x44xf32>
    %543 = arith.addf %491, %542 : vector<16x44xf32>
    %544 = vector.extract_strided_slice %12 {offsets = [0, 10], sizes = [16, 1], strides = [1, 1]} : vector<16x12xf32> to vector<16x1xf32>
    %545 = vector.broadcast %544 : vector<16x1xf32> to vector<16x128xf32>
    %546 = vector.broadcast %16 : vector<1x128xf32> to vector<16x128xf32>
    %547 = arith.mulf %545, %546 : vector<16x128xf32>
    %548 = vector.extract_strided_slice %13 {offsets = [0, 10], sizes = [16, 1], strides = [1, 1]} : vector<16x12xf32> to vector<16x1xf32>
    %549 = vector.broadcast %548 : vector<16x1xf32> to vector<16x128xf32>
    %550 = vector.broadcast %17 : vector<1x128xf32> to vector<16x128xf32>
    %551 = arith.mulf %549, %550 : vector<16x128xf32>
    %552 = arith.addf %547, %551 : vector<16x128xf32>
    %553 = vector.extract_strided_slice %14 {offsets = [0, 10], sizes = [16, 1], strides = [1, 1]} : vector<16x12xf32> to vector<16x1xf32>
    %554 = vector.broadcast %553 : vector<16x1xf32> to vector<16x128xf32>
    %555 = vector.broadcast %18 : vector<1x128xf32> to vector<16x128xf32>
    %556 = arith.mulf %554, %555 : vector<16x128xf32>
    %557 = arith.addf %552, %556 : vector<16x128xf32>
    %c0_228 = arith.constant 0 : index
    %c0_229 = arith.constant 0 : index
    %558 = vector.load %arg15[%c0_228, %c0_229] : memref<16x96xf32, #tpu.memory_space<vmem>>, vector<16x32xf32>
    tpu.vector_store %arg15[%c0_228, %c0_229], %539 {strides = array<i32>} : memref<16x96xf32, #tpu.memory_space<vmem>>, vector<16x32xf32>,
    %cst_230 = arith.constant dense<0.000000e+00> : vector<16x32xf32>
    %559 = tpu.matmul %9, %539, %cst_230 {dimension_numbers = #tpu.dot_dimension_numbers<[1], [0], [0], [1], [0, 0, 1, 1], [], []>} : vector<16x16xf32>, vector<16x32xf32>, vector<16x32xf32> -> vector<16x32xf32>
    %c0_231 = arith.constant 0 : index
    %c32_232 = arith.constant 32 : index
    %560 = vector.load %arg15[%c0_231, %c32_232] : memref<16x96xf32, #tpu.memory_space<vmem>>, vector<16x32xf32>
    tpu.vector_store %arg15[%c0_231, %c32_232], %559 {strides = array<i32>} : memref<16x96xf32, #tpu.memory_space<vmem>>, vector<16x32xf32>,
    %cst_233 = arith.constant dense<0.000000e+00> : vector<16x32xf32>
    %561 = tpu.matmul %10, %539, %cst_233 {dimension_numbers = #tpu.dot_dimension_numbers<[1], [0], [0], [1], [0, 0, 1, 1], [], []>} : vector<16x16xf32>, vector<16x32xf32>, vector<16x32xf32> -> vector<16x32xf32>
    %c0_234 = arith.constant 0 : index
    %c64_235 = arith.constant 64 : index
    %562 = vector.load %arg15[%c0_234, %c64_235] : memref<16x96xf32, #tpu.memory_space<vmem>>, vector<16x32xf32>
    tpu.vector_store %arg15[%c0_234, %c64_235], %561 {strides = array<i32>} : memref<16x96xf32, #tpu.memory_space<vmem>>, vector<16x32xf32>,
    %c0_236 = arith.constant 0 : index
    %c0_237 = arith.constant 0 : index
    %563 = vector.load %arg15[%c0_236, %c0_237] : memref<16x96xf32, #tpu.memory_space<vmem>>, vector<16x96xf32>
    %cst_238 = arith.constant dense<0.000000e+00> : vector<16x128xf32>
    %564 = tpu.matmul %563, %19, %cst_238 {dimension_numbers = #tpu.dot_dimension_numbers<[1], [0], [0], [1], [0, 0, 1, 1], [], []>} : vector<16x96xf32>, vector<96x128xf32>, vector<16x128xf32> -> vector<16x128xf32>
    %565 = arith.addf %557, %564 : vector<16x128xf32>
    %566 = vector.broadcast %20 : vector<1x128xf32> to vector<16x128xf32>
    %567 = arith.addf %565, %566 : vector<16x128xf32>
    %cst_239 = arith.constant 5.000000e-01 : f32
    %568 = vector.broadcast %cst_239 : f32 to vector<16x128xf32>
    %569 = arith.mulf %568, %567 : vector<16x128xf32>
    %570 = math.tanh %569 : vector<16x128xf32>
    %571 = vector.extract_strided_slice %570 {offsets = [0, 0], sizes = [16, 32], strides = [1, 1]} : vector<16x128xf32> to vector<16x32xf32>
    %cst_240 = arith.constant 1.000000e+00 : f32
    %572 = vector.broadcast %cst_240 : f32 to vector<16x32xf32>
    %573 = arith.addf %571, %572 : vector<16x32xf32>
    %cst_241 = arith.constant 5.000000e-01 : f32
    %574 = vector.broadcast %cst_241 : f32 to vector<16x32xf32>
    %575 = arith.mulf %574, %573 : vector<16x32xf32>
    %576 = vector.extract_strided_slice %570 {offsets = [0, 32], sizes = [16, 32], strides = [1, 1]} : vector<16x128xf32> to vector<16x32xf32>
    %577 = vector.extract_strided_slice %570 {offsets = [0, 64], sizes = [16, 32], strides = [1, 1]} : vector<16x128xf32> to vector<16x32xf32>
    %cst_242 = arith.constant 1.000000e+00 : f32
    %578 = vector.broadcast %cst_242 : f32 to vector<16x32xf32>
    %579 = arith.addf %577, %578 : vector<16x32xf32>
    %cst_243 = arith.constant 5.000000e-01 : f32
    %580 = vector.broadcast %cst_243 : f32 to vector<16x32xf32>
    %581 = arith.mulf %580, %579 : vector<16x32xf32>
    %582 = vector.extract_strided_slice %570 {offsets = [0, 96], sizes = [16, 32], strides = [1, 1]} : vector<16x128xf32> to vector<16x32xf32>
    %cst_244 = arith.constant 1.000000e+00 : f32
    %583 = vector.broadcast %cst_244 : f32 to vector<16x32xf32>
    %584 = arith.addf %582, %583 : vector<16x32xf32>
    %cst_245 = arith.constant 5.000000e-01 : f32
    %585 = vector.broadcast %cst_245 : f32 to vector<16x32xf32>
    %586 = arith.mulf %585, %584 : vector<16x32xf32>
    %587 = arith.mulf %537, %581 : vector<16x32xf32>
    %588 = arith.mulf %575, %576 : vector<16x32xf32>
    %589 = arith.addf %587, %588 : vector<16x32xf32>
    %590 = math.tanh %589 : vector<16x32xf32>
    %591 = arith.mulf %590, %586 : vector<16x32xf32>
    %c10 = arith.constant 10 : index
    %c0_246 = arith.constant 0 : index
    %c0_247 = arith.constant 0 : index
    %592 = vector.load %arg7[%c10, %c0_246, %c0_247] : memref<12x32x44xf32, #tpu.memory_space<vmem>>, vector<1x32x44xf32>
    %593 = vector.shape_cast %592 : vector<1x32x44xf32> to vector<32x44xf32>
    %cst_248 = arith.constant dense<0.000000e+00> : vector<16x44xf32>
    %594 = tpu.matmul %591, %593, %cst_248 {dimension_numbers = #tpu.dot_dimension_numbers<[1], [0], [0], [1], [0, 0, 1, 1], [], []>} : vector<16x32xf32>, vector<32x44xf32>, vector<16x44xf32> -> vector<16x44xf32>
    %595 = arith.addf %543, %594 : vector<16x44xf32>
    %596 = vector.extract_strided_slice %12 {offsets = [0, 11], sizes = [16, 1], strides = [1, 1]} : vector<16x12xf32> to vector<16x1xf32>
    %597 = vector.broadcast %596 : vector<16x1xf32> to vector<16x128xf32>
    %598 = vector.broadcast %16 : vector<1x128xf32> to vector<16x128xf32>
    %599 = arith.mulf %597, %598 : vector<16x128xf32>
    %600 = vector.extract_strided_slice %13 {offsets = [0, 11], sizes = [16, 1], strides = [1, 1]} : vector<16x12xf32> to vector<16x1xf32>
    %601 = vector.broadcast %600 : vector<16x1xf32> to vector<16x128xf32>
    %602 = vector.broadcast %17 : vector<1x128xf32> to vector<16x128xf32>
    %603 = arith.mulf %601, %602 : vector<16x128xf32>
    %604 = arith.addf %599, %603 : vector<16x128xf32>
    %605 = vector.extract_strided_slice %14 {offsets = [0, 11], sizes = [16, 1], strides = [1, 1]} : vector<16x12xf32> to vector<16x1xf32>
    %606 = vector.broadcast %605 : vector<16x1xf32> to vector<16x128xf32>
    %607 = vector.broadcast %18 : vector<1x128xf32> to vector<16x128xf32>
    %608 = arith.mulf %606, %607 : vector<16x128xf32>
    %609 = arith.addf %604, %608 : vector<16x128xf32>
    %c0_249 = arith.constant 0 : index
    %c0_250 = arith.constant 0 : index
    %610 = vector.load %arg15[%c0_249, %c0_250] : memref<16x96xf32, #tpu.memory_space<vmem>>, vector<16x32xf32>
    tpu.vector_store %arg15[%c0_249, %c0_250], %591 {strides = array<i32>} : memref<16x96xf32, #tpu.memory_space<vmem>>, vector<16x32xf32>,
    %cst_251 = arith.constant dense<0.000000e+00> : vector<16x32xf32>
    %611 = tpu.matmul %9, %591, %cst_251 {dimension_numbers = #tpu.dot_dimension_numbers<[1], [0], [0], [1], [0, 0, 1, 1], [], []>} : vector<16x16xf32>, vector<16x32xf32>, vector<16x32xf32> -> vector<16x32xf32>
    %c0_252 = arith.constant 0 : index
    %c32_253 = arith.constant 32 : index
    %612 = vector.load %arg15[%c0_252, %c32_253] : memref<16x96xf32, #tpu.memory_space<vmem>>, vector<16x32xf32>
    tpu.vector_store %arg15[%c0_252, %c32_253], %611 {strides = array<i32>} : memref<16x96xf32, #tpu.memory_space<vmem>>, vector<16x32xf32>,
    %cst_254 = arith.constant dense<0.000000e+00> : vector<16x32xf32>
    %613 = tpu.matmul %10, %591, %cst_254 {dimension_numbers = #tpu.dot_dimension_numbers<[1], [0], [0], [1], [0, 0, 1, 1], [], []>} : vector<16x16xf32>, vector<16x32xf32>, vector<16x32xf32> -> vector<16x32xf32>
    %c0_255 = arith.constant 0 : index
    %c64_256 = arith.constant 64 : index
    %614 = vector.load %arg15[%c0_255, %c64_256] : memref<16x96xf32, #tpu.memory_space<vmem>>, vector<16x32xf32>
    tpu.vector_store %arg15[%c0_255, %c64_256], %613 {strides = array<i32>} : memref<16x96xf32, #tpu.memory_space<vmem>>, vector<16x32xf32>,
    %c0_257 = arith.constant 0 : index
    %c0_258 = arith.constant 0 : index
    %615 = vector.load %arg15[%c0_257, %c0_258] : memref<16x96xf32, #tpu.memory_space<vmem>>, vector<16x96xf32>
    %cst_259 = arith.constant dense<0.000000e+00> : vector<16x128xf32>
    %616 = tpu.matmul %615, %19, %cst_259 {dimension_numbers = #tpu.dot_dimension_numbers<[1], [0], [0], [1], [0, 0, 1, 1], [], []>} : vector<16x96xf32>, vector<96x128xf32>, vector<16x128xf32> -> vector<16x128xf32>
    %617 = arith.addf %609, %616 : vector<16x128xf32>
    %618 = vector.broadcast %20 : vector<1x128xf32> to vector<16x128xf32>
    %619 = arith.addf %617, %618 : vector<16x128xf32>
    %cst_260 = arith.constant 5.000000e-01 : f32
    %620 = vector.broadcast %cst_260 : f32 to vector<16x128xf32>
    %621 = arith.mulf %620, %619 : vector<16x128xf32>
    %622 = math.tanh %621 : vector<16x128xf32>
    %623 = vector.extract_strided_slice %622 {offsets = [0, 0], sizes = [16, 32], strides = [1, 1]} : vector<16x128xf32> to vector<16x32xf32>
    %cst_261 = arith.constant 1.000000e+00 : f32
    %624 = vector.broadcast %cst_261 : f32 to vector<16x32xf32>
    %625 = arith.addf %623, %624 : vector<16x32xf32>
    %cst_262 = arith.constant 5.000000e-01 : f32
    %626 = vector.broadcast %cst_262 : f32 to vector<16x32xf32>
    %627 = arith.mulf %626, %625 : vector<16x32xf32>
    %628 = vector.extract_strided_slice %622 {offsets = [0, 32], sizes = [16, 32], strides = [1, 1]} : vector<16x128xf32> to vector<16x32xf32>
    %629 = vector.extract_strided_slice %622 {offsets = [0, 64], sizes = [16, 32], strides = [1, 1]} : vector<16x128xf32> to vector<16x32xf32>
    %cst_263 = arith.constant 1.000000e+00 : f32
    %630 = vector.broadcast %cst_263 : f32 to vector<16x32xf32>
    %631 = arith.addf %629, %630 : vector<16x32xf32>
    %cst_264 = arith.constant 5.000000e-01 : f32
    %632 = vector.broadcast %cst_264 : f32 to vector<16x32xf32>
    %633 = arith.mulf %632, %631 : vector<16x32xf32>
    %634 = vector.extract_strided_slice %622 {offsets = [0, 96], sizes = [16, 32], strides = [1, 1]} : vector<16x128xf32> to vector<16x32xf32>
    %cst_265 = arith.constant 1.000000e+00 : f32
    %635 = vector.broadcast %cst_265 : f32 to vector<16x32xf32>
    %636 = arith.addf %634, %635 : vector<16x32xf32>
    %cst_266 = arith.constant 5.000000e-01 : f32
    %637 = vector.broadcast %cst_266 : f32 to vector<16x32xf32>
    %638 = arith.mulf %637, %636 : vector<16x32xf32>
    %639 = arith.mulf %589, %633 : vector<16x32xf32>
    %640 = arith.mulf %627, %628 : vector<16x32xf32>
    %641 = arith.addf %639, %640 : vector<16x32xf32>
    %642 = math.tanh %641 : vector<16x32xf32>
    %643 = arith.mulf %642, %638 : vector<16x32xf32>
    %c11 = arith.constant 11 : index
    %c0_267 = arith.constant 0 : index
    %c0_268 = arith.constant 0 : index
    %644 = vector.load %arg7[%c11, %c0_267, %c0_268] : memref<12x32x44xf32, #tpu.memory_space<vmem>>, vector<1x32x44xf32>
    %645 = vector.shape_cast %644 : vector<1x32x44xf32> to vector<32x44xf32>
    %cst_269 = arith.constant dense<0.000000e+00> : vector<16x44xf32>
    %646 = tpu.matmul %643, %645, %cst_269 {dimension_numbers = #tpu.dot_dimension_numbers<[1], [0], [0], [1], [0, 0, 1, 1], [], []>} : vector<16x32xf32>, vector<32x44xf32>, vector<16x44xf32> -> vector<16x44xf32>
    %647 = arith.addf %595, %646 : vector<16x44xf32>
    %648 = vector.extract_strided_slice %647 {offsets = [0, 0], sizes = [16, 32], strides = [1, 1]} : vector<16x44xf32> to vector<16x32xf32>
    %c0_270 = arith.constant 0 : index
    %c0_271 = arith.constant 0 : index
    %649 = vector.load %arg8[%c0_270, %c0_271] : memref<1x32xf32, #tpu.memory_space<vmem>>, vector<1x32xf32>
    %650 = vector.broadcast %649 : vector<1x32xf32> to vector<16x32xf32>
    %651 = arith.addf %648, %650 : vector<16x32xf32>
    %c0_272 = arith.constant 0 : index
    %c0_273 = arith.constant 0 : index
    %652 = vector.load %arg9[%c0_272, %c0_273] : memref<32x8xf32, #tpu.memory_space<vmem>>, vector<32x8xf32>
    %cst_274 = arith.constant dense<0.000000e+00> : vector<16x8xf32>
    %653 = tpu.matmul %651, %652, %cst_274 {dimension_numbers = #tpu.dot_dimension_numbers<[1], [0], [0], [1], [0, 0, 1, 1], [], []>} : vector<16x32xf32>, vector<32x8xf32>, vector<16x8xf32> -> vector<16x8xf32>
    %cst_275 = arith.constant 0.176776692 : f32
    %654 = vector.broadcast %cst_275 : f32 to vector<16x8xf32>
    %655 = arith.mulf %653, %654 : vector<16x8xf32>
    %cst_276 = arith.constant dense<0xFF800000> : vector<16xf32>
    %656 = vector.multi_reduction <maximumf>, %655, %cst_276 [1] : vector<16x8xf32> to vector<16xf32>
    %657 = vector.shape_cast %656 : vector<16xf32> to vector<16x1xf32>
    %658 = vector.broadcast %657 : vector<16x1xf32> to vector<16x8xf32>
    %659 = arith.subf %655, %658 : vector<16x8xf32>
    %660 = math.exp %659 : vector<16x8xf32>
    %cst_277 = arith.constant dense<0.000000e+00> : vector<16xf32>
    %661 = vector.multi_reduction <add>, %660, %cst_277 [1] : vector<16x8xf32> to vector<16xf32>
    %662 = vector.shape_cast %661 : vector<16xf32> to vector<16x1xf32>
    %663 = tpu.reciprocal %662 {approx = true} : vector<16x1xf32> -> vector<16x1xf32>
    %664 = vector.broadcast %663 : vector<16x1xf32> to vector<16x8xf32>
    %665 = arith.mulf %660, %664 : vector<16x8xf32>
    %c0_278 = arith.constant 0 : index
    %c0_279 = arith.constant 0 : index
    %666 = vector.load %arg10[%c0_278, %c0_279] : memref<16x8xf32, #tpu.memory_space<vmem>>, vector<16x8xf32>
    %667 = arith.mulf %665, %666 : vector<16x8xf32>
    %cst_280 = arith.constant dense<0.000000e+00> : vector<16xf32>
    %668 = vector.multi_reduction <add>, %667, %cst_280 [1] : vector<16x8xf32> to vector<16xf32>
    %669 = vector.shape_cast %668 : vector<16xf32> to vector<16x1xf32>
    %cst_281 = arith.constant 5.000000e-01 : f32
    %670 = vector.broadcast %cst_281 : f32 to vector<16x1xf32>
    %671 = arith.mulf %670, %669 : vector<16x1xf32>
    %672 = math.tanh %671 : vector<16x1xf32>
    %cst_282 = arith.constant 1.000000e+00 : f32
    %673 = vector.broadcast %cst_282 : f32 to vector<16x1xf32>
    %674 = arith.addf %672, %673 : vector<16x1xf32>
    %cst_283 = arith.constant 5.000000e-01 : f32
    %675 = vector.broadcast %cst_283 : f32 to vector<16x1xf32>
    %676 = arith.mulf %675, %674 : vector<16x1xf32>
    %677 = vector.extract_strided_slice %647 {offsets = [0, 32], sizes = [16, 12], strides = [1, 1]} : vector<16x44xf32> to vector<16x12xf32>
    %cst_284 = arith.constant 1.000000e+00 : f32
    %678 = vector.broadcast %cst_284 : f32 to vector<16x1xf32>
    %679 = arith.addf %676, %678 : vector<16x1xf32>
    %680 = vector.broadcast %679 : vector<16x1xf32> to vector<16x12xf32>
    %681 = arith.mulf %677, %680 : vector<16x12xf32>
    %c0_285 = arith.constant 0 : index
    %c0_286 = arith.constant 0 : index
    %682 = vector.load %arg11[%c0_285, %c0_286] : memref<1x12xf32, #tpu.memory_space<vmem>>, vector<1x12xf32>
    %683 = vector.broadcast %682 : vector<1x12xf32> to vector<16x12xf32>
    %684 = arith.addf %681, %683 : vector<16x12xf32>
    %c0_287 = arith.constant 0 : index
    %c0_288 = arith.constant 0 : index
    %c0_289 = arith.constant 0 : index
    %685 = vector.load %arg12[%c0_287, %c0_288, %c0_289] : memref<1x16x12xf32, #tpu.memory_space<vmem>>, vector<1x16x12xf32>
    %686 = vector.shape_cast %685 : vector<1x16x12xf32> to vector<16x12xf32>
    %687 = vector.shape_cast %684 : vector<16x12xf32> to vector<1x16x12xf32>
    tpu.vector_store %arg12[%c0_287, %c0_288, %c0_289], %687 {strides = array<i32>} : memref<1x16x12xf32, #tpu.memory_space<vmem>>, vector<1x16x12xf32>,
    %c0_290 = arith.constant 0 : index
    %c0_291 = arith.constant 0 : index
    %c0_292 = arith.constant 0 : index
    %688 = vector.load %arg13[%c0_290, %c0_291, %c0_292] : memref<1x16x8xf32, #tpu.memory_space<vmem>>, vector<1x16x8xf32>
    %689 = vector.shape_cast %688 : vector<1x16x8xf32> to vector<16x8xf32>
    %690 = vector.shape_cast %665 : vector<16x8xf32> to vector<1x16x8xf32>
    tpu.vector_store %arg13[%c0_290, %c0_291, %c0_292], %690 {strides = array<i32>} : memref<1x16x8xf32, #tpu.memory_space<vmem>>, vector<1x16x8xf32>,
    %c0_293 = arith.constant 0 : index
    %c0_294 = arith.constant 0 : index
    %c0_295 = arith.constant 0 : index
    %691 = vector.load %arg14[%c0_293, %c0_294, %c0_295] : memref<1x16x1xf32, #tpu.memory_space<vmem>>, vector<1x16x1xf32>
    %692 = vector.shape_cast %691 : vector<1x16x1xf32> to vector<16x1xf32>
    %693 = vector.shape_cast %676 : vector<16x1xf32> to vector<1x16x1xf32>
    tpu.vector_store %arg14[%c0_293, %c0_294, %c0_295], %693 {strides = array<i32>} : memref<1x16x1xf32, #tpu.memory_space<vmem>>, vector<1x16x1xf32>,
    return
  }
  func.func @transform_0(%arg0: i32) -> (i32, i32, i32) {
    %c0_i32 = arith.constant 0 : i32
    %c0_i32_0 = arith.constant 0 : i32
    %c0_i32_1 = arith.constant 0 : i32
    return %arg0, %c0_i32, %c0_i32_0 : i32, i32, i32
  }
  func.func @transform_1(%arg0: i32) -> (i32, i32) {
    %c0_i32 = arith.constant 0 : i32
    %c0_i32_0 = arith.constant 0 : i32
    %c0_i32_1 = arith.constant 0 : i32
    return %c0_i32, %c0_i32_0 : i32, i32
  }
  func.func @transform_2(%arg0: i32) -> (i32, i32) {
    %c0_i32 = arith.constant 0 : i32
    %c0_i32_0 = arith.constant 0 : i32
    %c0_i32_1 = arith.constant 0 : i32
    return %c0_i32, %c0_i32_0 : i32, i32
  }
  func.func @transform_3(%arg0: i32) -> (i32, i32) {
    %c0_i32 = arith.constant 0 : i32
    %c0_i32_0 = arith.constant 0 : i32
    %c0_i32_1 = arith.constant 0 : i32
    return %c0_i32, %c0_i32_0 : i32, i32
  }
  func.func @transform_4(%arg0: i32) -> (i32, i32) {
    %c0_i32 = arith.constant 0 : i32
    %c0_i32_0 = arith.constant 0 : i32
    %c0_i32_1 = arith.constant 0 : i32
    return %c0_i32, %c0_i32_0 : i32, i32
  }
  func.func @transform_5(%arg0: i32) -> (i32, i32) {
    %c0_i32 = arith.constant 0 : i32
    %c0_i32_0 = arith.constant 0 : i32
    %c0_i32_1 = arith.constant 0 : i32
    return %c0_i32, %c0_i32_0 : i32, i32
  }
  func.func @transform_6(%arg0: i32) -> (i32, i32, i32) {
    %c0_i32 = arith.constant 0 : i32
    %c0_i32_0 = arith.constant 0 : i32
    %c0_i32_1 = arith.constant 0 : i32
    %c0_i32_2 = arith.constant 0 : i32
    return %c0_i32, %c0_i32_0, %c0_i32_1 : i32, i32, i32
  }
  func.func @transform_7(%arg0: i32) -> (i32, i32) {
    %c0_i32 = arith.constant 0 : i32
    %c0_i32_0 = arith.constant 0 : i32
    %c0_i32_1 = arith.constant 0 : i32
    return %c0_i32, %c0_i32_0 : i32, i32
  }
  func.func @transform_8(%arg0: i32) -> (i32, i32) {
    %c0_i32 = arith.constant 0 : i32
    %c0_i32_0 = arith.constant 0 : i32
    %c0_i32_1 = arith.constant 0 : i32
    return %c0_i32, %c0_i32_0 : i32, i32
  }
  func.func @transform_9(%arg0: i32) -> (i32, i32) {
    %c0_i32 = arith.constant 0 : i32
    %c0_i32_0 = arith.constant 0 : i32
    %c0_i32_1 = arith.constant 0 : i32
    return %c0_i32, %c0_i32_0 : i32, i32
  }
  func.func @transform_10(%arg0: i32) -> (i32, i32) {
    %c0_i32 = arith.constant 0 : i32
    %c0_i32_0 = arith.constant 0 : i32
    %c0_i32_1 = arith.constant 0 : i32
    return %c0_i32, %c0_i32_0 : i32, i32
  }
  func.func @transform_11(%arg0: i32) -> (i32, i32, i32) {
    %c0_i32 = arith.constant 0 : i32
    %c0_i32_0 = arith.constant 0 : i32
    %c0_i32_1 = arith.constant 0 : i32
    return %arg0, %c0_i32, %c0_i32_0 : i32, i32, i32
  }
  func.func @transform_12(%arg0: i32) -> (i32, i32, i32) {
    %c0_i32 = arith.constant 0 : i32
    %c0_i32_0 = arith.constant 0 : i32
    %c0_i32_1 = arith.constant 0 : i32
    return %arg0, %c0_i32, %c0_i32_0 : i32, i32, i32
  }
  func.func @transform_13(%arg0: i32) -> (i32, i32, i32) {
    %c0_i32 = arith.constant 0 : i32
    %c0_i32_0 = arith.constant 0 : i32
    %c0_i32_1 = arith.constant 0 : i32
    return %arg0, %c0_i32, %c0_i32_0 : i32, i32, i32
  }
}

</mosaic_0001>

<llo_original>
// kernel: pogcrnn_forward.1
$region0: #{pogcrnn_forward.1}
  #allocation0 [shape = 'u32[]', space=smem, size = 0x4, offset = 0x4, fixed_abs, tag = 'smem constant byte address 0x4 - core index']
  #allocation1 [shape = 'u32[144,128]{1,0:T(1,128)}', space=vmem, size = 0x12000, scoped, tag = 'internal scratch']
  #allocation2 [shape = 'f32[16,96]{1,0:T(8,128)}', space=vmem, size = 0x2000, scoped, tag = 'scratch operand']
  %s0 = inlined_call_operand.vmem [shape: f32[2,16,12], index: 0, kind: input, shape index: {}]
  %s1 = inlined_call_operand.vmem [shape: f32[16,16], index: 1, kind: input, shape index: {}]
  %s2 = inlined_call_operand.vmem [shape: f32[16,16], index: 2, kind: input, shape index: {}]
  %s3 = inlined_call_operand.vmem [shape: f32[3,128], index: 3, kind: input, shape index: {}]
  %s4 = inlined_call_operand.vmem [shape: f32[96,128], index: 4, kind: input, shape index: {}]
  %s5 = inlined_call_operand.vmem [shape: f32[1,128], index: 5, kind: input, shape index: {}]
  %s6 = inlined_call_operand.hbm [shape: f32[12,32,44], index: 6, kind: input, shape index: {}]
  %s7 = inlined_call_operand.vmem [shape: f32[1,32], index: 7, kind: input, shape index: {}]
  %s8 = inlined_call_operand.vmem [shape: f32[32,8], index: 8, kind: input, shape index: {}]
  %s9 = inlined_call_operand.vmem [shape: f32[16,8], index: 9, kind: input, shape index: {}]
  %s10 = inlined_call_operand.vmem [shape: f32[1,12], index: 10, kind: input, shape index: {}]
  %s11 = inlined_call_operand.vmem [shape: f32[2,16,12], index: 11, kind: output, shape index: {0}]
  %s12 = inlined_call_operand.vmem [shape: f32[2,16,8], index: 12, kind: output, shape index: {1}]
  %s13 = inlined_call_operand.vmem [shape: f32[2,16,1], index: 13, kind: output, shape index: {2}]
  %14 = xla_tuple %s11, %s12, %s13
  %s15 = sld [smem:[#allocation0]]
  $region97: #{pogcrnn_forward.1} parent=0
    _
  %s17 = ssub.s32 1, %s15
  %s18 = scalar_select 0, %s17, %s15
  $region1: #{pogcrnn_forward.1} parent=0
    #allocation3 [shape = 'u8[196608]{0}', space=vmem, size = 0x30000, scoped, tag = 'input window, operand 6, single buffered']
    #allocation4 [shape = 's32[2]{0}', space=sflag, size = 0x8, scoped, tag = 'scoped memory for pogcrnn_forward.1']
    %19 = vsyncpa [#allocation4], 0
    loop: start=0, step=1, limit=4
    $region2: #{pogcrnn_forward.1} parent=1 // loop_pre_header
      _
    $region3: #{pogcrnn_forward.1} parent=1 // loop_header
      %s21 = sphi 0, %s25
      %p22 = scmp.ge.s32.totalorder %s21, 4
      %s31 = sphi 0, %s33
      %s34 = sphi 0, %s31
      %s35 = sphi 0, %s34
      %s51 = sphi 0, %s35
      %s55 = sphi 0, %s55
      %s57 = sphi 0, %s55
      %s58 = sphi 0, %s57
      %s72 = sphi 0, %s58
      %s76 = sphi 0, %s76
      %s78 = sphi 0, %s76
      %s79 = sphi 0, %s78
      %s93 = sphi 0, %s79
      %s97 = sphi 0, %s97
      %s99 = sphi 0, %s97
      %s100 = sphi 0, %s99
      %s114 = sphi 0, %s100
      %s118 = sphi 0, %s118
      %s120 = sphi 0, %s118
      %s121 = sphi 0, %s120
      %s135 = sphi 0, %s121
      %s139 = sphi 0, %s139
      %s141 = sphi 0, %s139
      %s142 = sphi 0, %s141
      %s156 = sphi 0, %s142
      %s160 = sphi 0, %s160
      %s162 = sphi 0, %s160
      %s163 = sphi 0, %s162
      %s177 = sphi 0, %s163
      %s181 = sphi 0, %s181
      %s183 = sphi 0, %s181
      %s184 = sphi 0, %s183
      %s198 = sphi 0, %s184
      %s202 = sphi 0, %s202
      %s204 = sphi 0, %s202
      %s205 = sphi 0, %s204
      %s219 = sphi 0, %s205
      %s223 = sphi 0, %s223
      %s225 = sphi 0, %s223
      %s226 = sphi 0, %s225
      %s240 = sphi 0, %s226
      %s244 = sphi 0, %s244
      %s246 = sphi 0, %s244
      %s247 = sphi 0, %s246
      %s261 = sphi 0, %s247
      %s267 = sphi 0, %s269
      %s270 = sphi 0, %s267
      %s271 = sphi 0, %s270
      %s287 = sphi 0, %s271
      %s293 = sphi 0, %s295
      %s296 = sphi 0, %s293
      %s297 = sphi 0, %s296
      %s313 = sphi 0, %s297
      %s319 = sphi 0, %s321
      %s322 = sphi 0, %s319
      %s323 = sphi 0, %s322
      %s339 = sphi 0, %s323
    $region4: #{pogcrnn_forward.1} parent=1 // loop_header_branch
      %24 = sbr.rel (%p22) target = $region8
    $region5: #{pogcrnn_forward.1} parent=1 // loop_body
      %s26 = ssub.s32 %s21, 1
      %s27 = ssub.s32 %s21, 2
      %s28 = sadd.s32 %s21, 1
      %s29 = ssub.s32 %s21, %s28
      %p30 = scmp.eq.s32.totalorder %s29, 0
      %s32 = sadd.s32 %s31, 1
      %s33 = scalar_select %p30, %s31, %s32
      %p36 = pneg %p30
      %p37 = scmp.eq.s32.totalorder %s21, 1
      %p38 = por %p36, %p37
      %p39 = scmp.ne.s32.totalorder %s31, %s34
      %p40 = scmp.eq.s32.totalorder %s21, 0
      %p41 = por %p39, %p40
      %p42 = scmp.ne.s32.totalorder %s31, %s34
      %p43 = scmp.eq.s32.totalorder %s26, 1
      %p44 = por %p42, %p43
      %p45 = scmp.ne.s32.totalorder %s34, %s35
      %p46 = scmp.eq.s32.totalorder %s26, 0
      %p47 = por %p45, %p46
      %p48 = scmp.ne.s32.totalorder %s34, %s35
      %p49 = scmp.eq.s32.totalorder %s27, 1
      %p50 = por %p48, %p49
      %p52 = scmp.ne.s32.totalorder %s35, %s51
      %p53 = scmp.eq.s32.totalorder %s27, 0
      %p54 = por %p52, %p53
      %s56 = sadd.s32 %s55, 1
      %p59 = scmp.eq.s32.totalorder %s21, 1
      %p60 = scmp.ne.s32.totalorder %s55, %s57
      %p61 = scmp.eq.s32.totalorder %s21, 0
      %p62 = por %p60, %p61
      %p63 = scmp.ne.s32.totalorder %s55, %s57
      %p64 = scmp.eq.s32.totalorder %s26, 1
      %p65 = por %p63, %p64
      %p66 = scmp.ne.s32.totalorder %s57, %s58
      %p67 = scmp.eq.s32.totalorder %s26, 0
      %p68 = por %p66, %p67
      %p69 = scmp.ne.s32.totalorder %s57, %s58
      %p70 = scmp.eq.s32.totalorder %s27, 1
      %p71 = por %p69, %p70
      %p73 = scmp.ne.s32.totalorder %s58, %s72
      %p74 = scmp.eq.s32.totalorder %s27, 0
      %p75 = por %p73, %p74
      %s77 = sadd.s32 %s76, 1
      %p80 = scmp.eq.s32.totalorder %s21, 1
      %p81 = scmp.ne.s32.totalorder %s76, %s78
      %p82 = scmp.eq.s32.totalorder %s21, 0
      %p83 = por %p81, %p82
      %p84 = scmp.ne.s32.totalorder %s76, %s78
      %p85 = scmp.eq.s32.totalorder %s26, 1
      %p86 = por %p84, %p85
      %p87 = scmp.ne.s32.totalorder %s78, %s79
      %p88 = scmp.eq.s32.totalorder %s26, 0
      %p89 = por %p87, %p88
      %p90 = scmp.ne.s32.totalorder %s78, %s79
      %p91 = scmp.eq.s32.totalorder %s27, 1
      %p92 = por %p90, %p91
      %p94 = scmp.ne.s32.totalorder %s79, %s93
      %p95 = scmp.eq.s32.totalorder %s27, 0
      %p96 = por %p94, %p95
      %s98 = sadd.s32 %s97, 1
      %p101 = scmp.eq.s32.totalorder %s21, 1
      %p102 = scmp.ne.s32.totalorder %s97, %s99
      %p103 = scmp.eq.s32.totalorder %s21, 0
      %p104 = por %p102, %p103
      %p105 = scmp.ne.s32.totalorder %s97, %s99
      %p106 = scmp.eq.s32.totalorder %s26, 1
      %p107 = por %p105, %p106
      %p108 = scmp.ne.s32.totalorder %s99, %s100
      %p109 = scmp.eq.s32.totalorder %s26, 0
      %p110 = por %p108, %p109
      %p111 = scmp.ne.s32.totalorder %s99, %s100
      %p112 = scmp.eq.s32.totalorder %s27, 1
      %p113 = por %p111, %p112
      %p115 = scmp.ne.s32.totalorder %s100, %s114
      %p116 = scmp.eq.s32.totalorder %s27, 0
      %p117 = por %p115, %p116
      %s119 = sadd.s32 %s118, 1
      %p122 = scmp.eq.s32.totalorder %s21, 1
      %p123 = scmp.ne.s32.totalorder %s118, %s120
      %p124 = scmp.eq.s32.totalorder %s21, 0
      %p125 = por %p123, %p124
      %p126 = scmp.ne.s32.totalorder %s118, %s120
      %p127 = scmp.eq.s32.totalorder %s26, 1
      %p128 = por %p126, %p127
      %p129 = scmp.ne.s32.totalorder %s120, %s121
      %p130 = scmp.eq.s32.totalorder %s26, 0
      %p131 = por %p129, %p130
      %p132 = scmp.ne.s32.totalorder %s120, %s121
      %p133 = scmp.eq.s32.totalorder %s27, 1
      %p134 = por %p132, %p133
      %p136 = scmp.ne.s32.totalorder %s121, %s135
      %p137 = scmp.eq.s32.totalorder %s27, 0
      %p138 = por %p136, %p137
      %s140 = sadd.s32 %s139, 1
      %p143 = scmp.eq.s32.totalorder %s21, 1
      %p144 = scmp.ne.s32.totalorder %s139, %s141
      %p145 = scmp.eq.s32.totalorder %s21, 0
      %p146 = por %p144, %p145
      %p147 = scmp.ne.s32.totalorder %s139, %s141
      %p148 = scmp.eq.s32.totalorder %s26, 1
      %p149 = por %p147, %p148
      %p150 = scmp.ne.s32.totalorder %s141, %s142
      %p151 = scmp.eq.s32.totalorder %s26, 0
      %p152 = por %p150, %p151
      %p153 = scmp.ne.s32.totalorder %s141, %s142
      %p154 = scmp.eq.s32.totalorder %s27, 1
      %p155 = por %p153, %p154
      %p157 = scmp.ne.s32.totalorder %s142, %s156
      %p158 = scmp.eq.s32.totalorder %s27, 0
      %p159 = por %p157, %p158
      %s161 = sadd.s32 %s160, 1
      %p164 = scmp.eq.s32.totalorder %s21, 1
      %p165 = scmp.ne.s32.totalorder %s160, %s162
      %p166 = scmp.eq.s32.totalorder %s21, 0
      %p167 = por %p165, %p166
      %p168 = scmp.ne.s32.totalorder %s160, %s162
      %p169 = scmp.eq.s32.totalorder %s26, 1
      %p170 = por %p168, %p169
      %p171 = scmp.ne.s32.totalorder %s162, %s163
      %p172 = scmp.eq.s32.totalorder %s26, 0
      %p173 = por %p171, %p172
      %p174 = scmp.ne.s32.totalorder %s162, %s163
      %p175 = scmp.eq.s32.totalorder %s27, 1
      %p176 = por %p174, %p175
      %p178 = scmp.ne.s32.totalorder %s163, %s177
      %p179 = scmp.eq.s32.totalorder %s27, 0
      %p180 = por %p178, %p179
      %s182 = sadd.s32 %s181, 1
      %p185 = scmp.eq.s32.totalorder %s21, 1
      %p186 = scmp.ne.s32.totalorder %s181, %s183
      %p187 = scmp.eq.s32.totalorder %s21, 0
      %p188 = por %p186, %p187
      %p189 = scmp.ne.s32.totalorder %s181, %s183
      %p190 = scmp.eq.s32.totalorder %s26, 1
      %p191 = por %p189, %p190
      %p192 = scmp.ne.s32.totalorder %s183, %s184
      %p193 = scmp.eq.s32.totalorder %s26, 0
      %p194 = por %p192, %p193
      %p195 = scmp.ne.s32.totalorder %s183, %s184
      %p196 = scmp.eq.s32.totalorder %s27, 1
      %p197 = por %p195, %p196
      %p199 = scmp.ne.s32.totalorder %s184, %s198
      %p200 = scmp.eq.s32.totalorder %s27, 0
      %p201 = por %p199, %p200
      %s203 = sadd.s32 %s202, 1
      %p206 = scmp.eq.s32.totalorder %s21, 1
      %p207 = scmp.ne.s32.totalorder %s202, %s204
      %p208 = scmp.eq.s32.totalorder %s21, 0
      %p209 = por %p207, %p208
      %p210 = scmp.ne.s32.totalorder %s202, %s204
      %p211 = scmp.eq.s32.totalorder %s26, 1
      %p212 = por %p210, %p211
      %p213 = scmp.ne.s32.totalorder %s204, %s205
      %p214 = scmp.eq.s32.totalorder %s26, 0
      %p215 = por %p213, %p214
      %p216 = scmp.ne.s32.totalorder %s204, %s205
      %p217 = scmp.eq.s32.totalorder %s27, 1
      %p218 = por %p216, %p217
      %p220 = scmp.ne.s32.totalorder %s205, %s219
      %p221 = scmp.eq.s32.totalorder %s27, 0
      %p222 = por %p220, %p221
      %s224 = sadd.s32 %s223, 1
      %p227 = scmp.eq.s32.totalorder %s21, 1
      %p228 = scmp.ne.s32.totalorder %s223, %s225
      %p229 = scmp.eq.s32.totalorder %s21, 0
      %p230 = por %p228, %p229
      %p231 = scmp.ne.s32.totalorder %s223, %s225
      %p232 = scmp.eq.s32.totalorder %s26, 1
      %p233 = por %p231, %p232
      %p234 = scmp.ne.s32.totalorder %s225, %s226
      %p235 = scmp.eq.s32.totalorder %s26, 0
      %p236 = por %p234, %p235
      %p237 = scmp.ne.s32.totalorder %s225, %s226
      %p238 = scmp.eq.s32.totalorder %s27, 1
      %p239 = por %p237, %p238
      %p241 = scmp.ne.s32.totalorder %s226, %s240
      %p242 = scmp.eq.s32.totalorder %s27, 0
      %p243 = por %p241, %p242
      %s245 = sadd.s32 %s244, 1
      %p248 = scmp.eq.s32.totalorder %s21, 1
      %p249 = scmp.ne.s32.totalorder %s244, %s246
      %p250 = scmp.eq.s32.totalorder %s21, 0
      %p251 = por %p249, %p250
      %p252 = scmp.ne.s32.totalorder %s244, %s246
      %p253 = scmp.eq.s32.totalorder %s26, 1
      %p254 = por %p252, %p253
      %p255 = scmp.ne.s32.totalorder %s246, %s247
      %p256 = scmp.eq.s32.totalorder %s26, 0
      %p257 = por %p255, %p256
      %p258 = scmp.ne.s32.totalorder %s246, %s247
      %p259 = scmp.eq.s32.totalorder %s27, 1
      %p260 = por %p258, %p259
      %p262 = scmp.ne.s32.totalorder %s247, %s261
      %p263 = scmp.eq.s32.totalorder %s27, 0
      %p264 = por %p262, %p263
      %s265 = ssub.s32 %s21, %s28
      %p266 = scmp.eq.s32.totalorder %s265, 0
      %s268 = sadd.s32 %s267, 1
      %s269 = scalar_select %p266, %s267, %s268
      %p272 = pneg %p266
      %p273 = scmp.eq.s32.totalorder %s21, 1
      %p274 = por %p272, %p273
      %p275 = scmp.ne.s32.totalorder %s267, %s270
      %p276 = scmp.eq.s32.totalorder %s21, 0
      %p277 = por %p275, %p276
      %p278 = scmp.ne.s32.totalorder %s267, %s270
      %p279 = scmp.eq.s32.totalorder %s26, 1
      %p280 = por %p278, %p279
      %p281 = scmp.ne.s32.totalorder %s270, %s271
      %p282 = scmp.eq.s32.totalorder %s26, 0
      %p283 = por %p281, %p282
      %p284 = scmp.ne.s32.totalorder %s270, %s271
      %p285 = scmp.eq.s32.totalorder %s27, 1
      %p286 = por %p284, %p285
      %p288 = scmp.ne.s32.totalorder %s271, %s287
      %p289 = scmp.eq.s32.totalorder %s27, 0
      %p290 = por %p288, %p289
      %s291 = ssub.s32 %s21, %s28
      %p292 = scmp.eq.s32.totalorder %s291, 0
      %s294 = sadd.s32 %s293, 1
      %s295 = scalar_select %p292, %s293, %s294
      %p298 = pneg %p292
      %p299 = scmp.eq.s32.totalorder %s21, 1
      %p300 = por %p298, %p299
      %p301 = scmp.ne.s32.totalorder %s293, %s296
      %p302 = scmp.eq.s32.totalorder %s21, 0
      %p303 = por %p301, %p302
      %p304 = scmp.ne.s32.totalorder %s293, %s296
      %p305 = scmp.eq.s32.totalorder %s26, 1
      %p306 = por %p304, %p305
      %p307 = scmp.ne.s32.totalorder %s296, %s297
      %p308 = scmp.eq.s32.totalorder %s26, 0
      %p309 = por %p307, %p308
      %p310 = scmp.ne.s32.totalorder %s296, %s297
      %p311 = scmp.eq.s32.totalorder %s27, 1
      %p312 = por %p310, %p311
      %p314 = scmp.ne.s32.totalorder %s297, %s313
      %p315 = scmp.eq.s32.totalorder %s27, 0
      %p316 = por %p314, %p315
      %s317 = ssub.s32 %s21, %s28
      %p318 = scmp.eq.s32.totalorder %s317, 0
      %s320 = sadd.s32 %s319, 1
      %s321 = scalar_select %p318, %s319, %s320
      %p324 = pneg %p318
      %p325 = scmp.eq.s32.totalorder %s21, 1
      %p326 = por %p324, %p325
      %p327 = scmp.ne.s32.totalorder %s319, %s322
      %p328 = scmp.eq.s32.totalorder %s21, 0
      %p329 = por %p327, %p328
      %p330 = scmp.ne.s32.totalorder %s319, %s322
      %p331 = scmp.eq.s32.totalorder %s26, 1
      %p332 = por %p330, %p331
      %p333 = scmp.ne.s32.totalorder %s322, %s323
      %p334 = scmp.eq.s32.totalorder %s26, 0
      %p335 = por %p333, %p334
      %p336 = scmp.ne.s32.totalorder %s322, %s323
      %p337 = scmp.eq.s32.totalorder %s27, 1
      %p338 = por %p336, %p337
      %p340 = scmp.ne.s32.totalorder %s323, %s339
      %p341 = scmp.eq.s32.totalorder %s27, 0
      %p342 = por %p340, %p341
      %p343 = scmp.le.s32.totalorder 1, %s21
      %p344 = scmp.lt.s32.totalorder %s21, 3
      %p345 = pnand %p343, %p344
      %p346 = pneg %p345
      // Predicated region
      $region9: #{pogcrnn_forward.1} parent=5 // pred_check
        _
      $region10: #{pogcrnn_forward.1} parent=5 // pred_check_branch
        %348 = sbr.rel (%p345) target = $region12
      $region11: #{pogcrnn_forward.1} parent=5 // pred_region
        %s349 = ssub.s32 %s21, 1
        // Predicated region
        $region13: #{pogcrnn_forward.1} parent=11 // pred_check
          %p350 = pneg %p68
        $region14: #{pogcrnn_forward.1} parent=11 // pred_check_branch
          %352 = sbr.rel (%p350) target = $region16
        $region15: #{pogcrnn_forward.1} parent=11 // pred_region
          _
        $region16: #{pogcrnn_forward.1} parent=11 // pred_fallthru
          _
        // Predicated region
        $region17: #{pogcrnn_forward.1} parent=11 // pred_check
          %p353 = pneg %p89
        $region18: #{pogcrnn_forward.1} parent=11 // pred_check_branch
          %355 = sbr.rel (%p353) target = $region20
        $region19: #{pogcrnn_forward.1} parent=11 // pred_region
          _
        $region20: #{pogcrnn_forward.1} parent=11 // pred_fallthru
          _
        // Predicated region
        $region21: #{pogcrnn_forward.1} parent=11 // pred_check
          %p356 = pneg %p110
        $region22: #{pogcrnn_forward.1} parent=11 // pred_check_branch
          %358 = sbr.rel (%p356) target = $region24
        $region23: #{pogcrnn_forward.1} parent=11 // pred_region
          _
        $region24: #{pogcrnn_forward.1} parent=11 // pred_fallthru
          _
        // Predicated region
        $region25: #{pogcrnn_forward.1} parent=11 // pred_check
          %p359 = pneg %p131
        $region26: #{pogcrnn_forward.1} parent=11 // pred_check_branch
          %361 = sbr.rel (%p359) target = $region28
        $region27: #{pogcrnn_forward.1} parent=11 // pred_region
          _
        $region28: #{pogcrnn_forward.1} parent=11 // pred_fallthru
          _
        // Predicated region
        $region29: #{pogcrnn_forward.1} parent=11 // pred_check
          %p362 = pneg %p152
        $region30: #{pogcrnn_forward.1} parent=11 // pred_check_branch
          %364 = sbr.rel (%p362) target = $region32
        $region31: #{pogcrnn_forward.1} parent=11 // pred_region
          _
        $region32: #{pogcrnn_forward.1} parent=11 // pred_fallthru
          _
        // Predicated region
        $region33: #{pogcrnn_forward.1} parent=11 // pred_check
          %p365 = pneg %p173
        $region34: #{pogcrnn_forward.1} parent=11 // pred_check_branch
          %367 = sbr.rel (%p365) target = $region36
        $region35: #{pogcrnn_forward.1} parent=11 // pred_region
          %s369 = ssub.s32 6144, 6144
          %370 = vsyncadd [#allocation4], %s369
          %s371 = sshll.u32 [#allocation3], 4
          %s372 = int_to_ptr.vmem [resolvable:$true] %s371
          %377 = dma.hbm_to_vmem [thread:$0]  %s6, 6144, %s372, [#allocation4], 128, 128, 8
        $region36: #{pogcrnn_forward.1} parent=11 // pred_fallthru
          _
        // Predicated region
        $region37: #{pogcrnn_forward.1} parent=11 // pred_check
          %p378 = pneg %p194
        $region38: #{pogcrnn_forward.1} parent=11 // pred_check_branch
          %380 = sbr.rel (%p378) target = $region40
        $region39: #{pogcrnn_forward.1} parent=11 // pred_region
          _
        $region40: #{pogcrnn_forward.1} parent=11 // pred_fallthru
          _
        // Predicated region
        $region41: #{pogcrnn_forward.1} parent=11 // pred_check
          %p381 = pneg %p215
        $region42: #{pogcrnn_forward.1} parent=11 // pred_check_branch
          %383 = sbr.rel (%p381) target = $region44
        $region43: #{pogcrnn_forward.1} parent=11 // pred_region
          _
        $region44: #{pogcrnn_forward.1} parent=11 // pred_fallthru
          _
        // Predicated region
        $region45: #{pogcrnn_forward.1} parent=11 // pred_check
          %p384 = pneg %p236
        $region46: #{pogcrnn_forward.1} parent=11 // pred_check_branch
          %386 = sbr.rel (%p384) target = $region48
        $region47: #{pogcrnn_forward.1} parent=11 // pred_region
          _
        $region48: #{pogcrnn_forward.1} parent=11 // pred_fallthru
          _
        // Predicated region
        $region49: #{pogcrnn_forward.1} parent=11 // pred_check
          %p387 = pneg %p257
        $region50: #{pogcrnn_forward.1} parent=11 // pred_check_branch
          %389 = sbr.rel (%p387) target = $region52
        $region51: #{pogcrnn_forward.1} parent=11 // pred_region
          _
        $region52: #{pogcrnn_forward.1} parent=11 // pred_fallthru
          _
      $region12: #{pogcrnn_forward.1} parent=5 // pred_fallthru
        _
      %p390 = scmp.lt.s32.totalorder %s21, 2
      // Predicated region
      $region53: #{pogcrnn_forward.1} parent=5 // pred_check
        %p391 = pneg %p390
      $region54: #{pogcrnn_forward.1} parent=5 // pred_check_branch
        %393 = sbr.rel (%p391) target = $region56
      $region55: #{pogcrnn_forward.1} parent=5 // pred_region
        // Predicated region
        $region57: #{pogcrnn_forward.1} parent=55 // pred_check
          %p394 = pneg %p41
        $region58: #{pogcrnn_forward.1} parent=55 // pred_check_branch
          %396 = sbr.rel (%p394) target = $region60
        $region59: #{pogcrnn_forward.1} parent=55 // pred_region
          %p397 = scmp.lt.s32.totalorder %s21, 1
          %s398 = scalar_select %p397, %s21, 1
          %s399 = smul.addr %s398, 2
          %s400 = smul.addr %s399, 8
          %s401 = scalar_lea.vmem %s0, %s400
        $region60: #{pogcrnn_forward.1} parent=55 // pred_fallthru
          _
      $region56: #{pogcrnn_forward.1} parent=5 // pred_fallthru
        _
      %p402 = scmp.le.s32.totalorder 1, %s21
      %p403 = scmp.lt.s32.totalorder %s21, 3
      %p404 = pnand %p402, %p403
      %p405 = pneg %p404
      // Predicated region
      $region61: #{pogcrnn_forward.1} parent=5 // pred_check
        _
      $region62: #{pogcrnn_forward.1} parent=5 // pred_check_branch
        %407 = sbr.rel (%p404) target = $region64
      $region63: #{pogcrnn_forward.1} parent=5 // pred_region
        %s408 = ssub.s32 %s21, 1
        // Predicated region
        $region65: #{pogcrnn_forward.1} parent=63 // pred_check
          %p409 = pneg %p173
        $region66: #{pogcrnn_forward.1} parent=63 // pred_check_branch
          %411 = sbr.rel (%p409) target = $region68
        $region67: #{pogcrnn_forward.1} parent=63 // pred_region
          %412 = dma.done [#allocation4], 6144
        $region68: #{pogcrnn_forward.1} parent=63 // pred_fallthru
          _
        %p413 = scmp.lt.s32.totalorder %s26, 1
        %s414 = scalar_select %p413, %s26, 1
        %s415 = smul.addr %s414, 2
        %s416 = smul.addr %s415, 8
        %s417 = scalar_lea.vmem %s0, %s416
        %p418 = pneg %p47
        %p419 = pneg %p44
        %p420 = pneg %p68
        %p421 = pneg %p65
        %p422 = pneg %p89
        %p423 = pneg %p86
        %p424 = pneg %p110
        %p425 = pneg %p107
        %p426 = pneg %p131
        %p427 = pneg %p128
        %p428 = pneg %p152
        %p429 = pneg %p149
        %p430 = pneg %p173
        %p431 = pneg %p170
        %p432 = pneg %p194
        %p433 = pneg %p191
        %p434 = pneg %p215
        %p435 = pneg %p212
        %p436 = pneg %p236
        %p437 = pneg %p233
        %p438 = pneg %p257
        %p439 = pneg %p254
        %p440 = pneg %p283
        %p441 = pneg %p280
        %p442 = scmp.lt.s32.totalorder %s26, 1
        %s443 = scalar_select %p442, %s26, 1
        %s444 = smul.addr %s443, 2
        %s445 = smul.addr %s444, 8
        %s446 = scalar_lea.vmem %s11, %s445
        %p447 = pneg %p309
        %p448 = pneg %p306
        %p449 = scmp.lt.s32.totalorder %s26, 1
        %s450 = scalar_select %p449, %s26, 1
        %s451 = smul.addr %s450, 2
        %s452 = smul.addr %s451, 8
        %s453 = scalar_lea.vmem %s12, %s452
        %p454 = pneg %p335
        %p455 = pneg %p332
        %p456 = scmp.lt.s32.totalorder %s26, 1
        %s457 = scalar_select %p456, %s26, 1
        %s458 = smul.addr %s457, 2
        %s459 = smul.addr %s458, 8
        %s460 = scalar_lea.vmem %s13, %s459
        %p461 = scmp.lt.s32.totalorder %s26, 1
        %s462 = scalar_select %p461, %s26, 1
        %s463 = smul.addr %s462, 2
        %s464 = smul.addr %s463, 8
        %s465 = scalar_lea.vmem %s0, %s464
        %p466 = scmp.lt.s32.totalorder %s26, 1
        %s467 = scalar_select %p466, %s26, 1
        %s468 = smul.addr %s467, 2
        %s469 = smul.addr %s468, 8
        %s470 = scalar_lea.vmem %s11, %s469
        %p471 = scmp.lt.s32.totalorder %s26, 1
        %s472 = scalar_select %p471, %s26, 1
        %s473 = smul.addr %s472, 2
        %s474 = smul.addr %s473, 8
        %s475 = scalar_lea.vmem %s12, %s474
        %p476 = scmp.lt.s32.totalorder %s26, 1
        %s477 = scalar_select %p476, %s26, 1
        %s478 = smul.addr %s477, 2
        %s479 = smul.addr %s478, 8
        %s480 = scalar_lea.vmem %s13, %s479
        %v481 = vld [vmem:[%s1] sm:$0xff]
        %v482 = vld [vmem:[%s1 + $0x8] sm:$0xff]
        %v483 = vld [vmem:[%s2] sm:$0xff]
        %v484 = vld [vmem:[%s2 + $0x8] sm:$0xff]
        %v485 = vadd.f32 %v481, %v483
        %v486 = vadd.f32 %v482, %v484
        %vm487 = vcmask 130048
        %v488 = vsel %vm487, %v485, 0.0
        %489 = vadd.xlane.f32.xlu0 %v488
        %v490 = vpop.xlane.xlu0 %489
        %v491 = vsel %vm487, %v486, 0.0
        %492 = vadd.xlane.f32.xlu0 %v491
        %v493 = vpop.xlane.xlu0 %492
        %v494 = vadd.f32 %v490, 0.0001
        %v495 = vadd.f32 %v493, 0.0001
        %v496 = vrcp.pop %v494
        %v497 = vrcp.pop %v495
        %v498 = vmul.f32 %v485, %v496
        %v499 = vmul.f32 %v486, %v497
        %v501 = vsel %vm487, %v498, 0
        %v504 = vsel %vm487, %v499, 0
        %506 = vmatprep.subr.mxu0 0.0
        %507 = vmatpush1.msra.mxu0 %v498
        %508 = vmatprep.subr.mxu0 0.0
        %509 = vmatpush1.msra.mxu0 %v499
        %510 = vmatprep.subr.mxu0 0.0
        %511 = vmatpush1.msra.mxu0 0.0
        %512 = vmatprep.subr.mxu0 0.0
        %513 = vmatpush1.msra.mxu0 0.0
        %514 = vmatprep.subr.mxu0 0.0
        %515 = vmatpush1.msra.mxu0 0.0
        %516 = vmatprep.subr.mxu0 0.0
        %517 = vmatpush1.msra.mxu0 0.0
        %518 = vmatprep.subr.mxu0 0.0
        %519 = vmatpush1.msra.mxu0 0.0
        %520 = vmatprep.subr.mxu0 0.0
        %521 = vmatpush1.msra.mxu0 0.0
        %522 = vmatprep.subr.mxu0 0.0
        %523 = vmatpush1.msra.mxu0 0.0
        %524 = vmatprep.subr.mxu0 0.0
        %525 = vmatpush1.msra.mxu0 0.0
        %526 = vmatprep.subr.mxu0 0.0
        %527 = vmatpush1.msra.mxu0 0.0
        %528 = vmatprep.subr.mxu0 0.0
        %529 = vmatpush1.msra.mxu0 0.0
        %530 = vmatprep.subr.mxu0 0.0
        %531 = vmatpush1.msra.mxu0 0.0
        %532 = vmatprep.subr.mxu0 0.0
        %533 = vmatpush1.msra.mxu0 0.0
        %534 = vmatprep.subr.mxu0 0.0
        %535 = vmatpush1.msra.mxu0 0.0
        %536 = vmatprep.subr.mxu0 0.0
        %537 = vmatpush1.msra.mxu0 0.0
        %538 = vmatprep.subr.mxu0 0.0
        %539 = vmatpush1.msra.mxu0 0.0
        %540 = vmatprep.subr.mxu0 0.0
        %541 = vmatpush1.msra.mxu0 0.0
        %542 = vmatprep.subr.mxu0 0.0
        %543 = vmatpush1.msra.mxu0 0.0
        %544 = vmatprep.subr.mxu0 0.0
        %545 = vmatpush1.msra.mxu0 0.0
        %546 = vmatprep.subr.mxu0 0.0
        %547 = vmatpush1.msra.mxu0 0.0
        %548 = vmatprep.subr.mxu0 0.0
        %549 = vmatpush1.msra.mxu0 0.0
        %550 = vmatprep.subr.mxu0 0.0
        %551 = vmatpush1.msra.mxu0 0.0
        %552 = vmatprep.subr.mxu0 0.0
        %553 = vmatpush1.msra.mxu0 0.0
        %554 = vmatprep.subr.mxu0 0.0
        %555 = vmatpush1.msra.mxu0 0.0
        %556 = vmatprep.subr.mxu0 0.0
        %557 = vmatpush1.msra.mxu0 0.0
        %558 = vmatprep.subr.mxu0 0.0
        %559 = vmatpush1.msra.mxu0 0.0
        %560 = vmatprep.subr.mxu0 0.0
        %561 = vmatpush1.msra.mxu0 0.0
        %562 = vmatprep.subr.mxu0 0.0
        %563 = vmatpush1.msra.mxu0 0.0
        %564 = vmatprep.subr.mxu0 0.0
        %565 = vmatpush1.msra.mxu0 0.0
        %566 = vmatprep.subr.mxu0 0.0
        %567 = vmatpush1.msra.mxu0 0.0
        %568 = vmatprep.subr.mxu0 0.0
        %569 = vmatpush1.msra.mxu0 0.0
        %570 = vmatprep.mubr.f32.mxu0 0.0
        %571 = vmatmul.mubr.f32.gmra.mrb[0].mxu0 %v501
        %v572 = vpop.f32.mrb[0].mxu0
        %v573 = vadd.f32 0.0, %v572
        %v574 = vpop.f32.mrb[0].mxu0
        %575 = vmatprep.mubr.f32.mxu0 0.0
        %576 = vmatmul.mubr.f32.gmra.mrb[0].mxu0 %v504
        %v577 = vpop.f32.mrb[0].mxu0
        %v578 = vadd.f32 0.0, %v577
        %v579 = vpop.f32.mrb[0].mxu0
        %580 = vdwg.mxu0
        %v581 = vld [vmem:[%s465] sm:$0xff]
        %v582 = vld [vmem:[%s465 + $0x8] sm:$0xff]
        %583 = vmatprep.subr.mxu0 0.0
        %584 = vmatpush1.msra.mxu0 %v581
        %585 = vmatprep.subr.mxu0 0.0
        %586 = vmatpush1.msra.mxu0 %v582
        %587 = vmatprep.subr.mxu0 0.0
        %588 = vmatpush1.msra.mxu0 0.0
        %589 = vmatprep.subr.mxu0 0.0
        %590 = vmatpush1.msra.mxu0 0.0
        %591 = vmatprep.subr.mxu0 0.0
        %592 = vmatpush1.msra.mxu0 0.0
        %593 = vmatprep.subr.mxu0 0.0
        %594 = vmatpush1.msra.mxu0 0.0
        %595 = vmatprep.subr.mxu0 0.0
        %596 = vmatpush1.msra.mxu0 0.0
        %597 = vmatprep.subr.mxu0 0.0
        %598 = vmatpush1.msra.mxu0 0.0
        %599 = vmatprep.subr.mxu0 0.0
        %600 = vmatpush1.msra.mxu0 0.0
        %601 = vmatprep.subr.mxu0 0.0
        %602 = vmatpush1.msra.mxu0 0.0
        %603 = vmatprep.subr.mxu0 0.0
        %604 = vmatpush1.msra.mxu0 0.0
        %605 = vmatprep.subr.mxu0 0.0
        %606 = vmatpush1.msra.mxu0 0.0
        %607 = vmatprep.subr.mxu0 0.0
        %608 = vmatpush1.msra.mxu0 0.0
        %609 = vmatprep.subr.mxu0 0.0
        %610 = vmatpush1.msra.mxu0 0.0
        %611 = vmatprep.subr.mxu0 0.0
        %612 = vmatpush1.msra.mxu0 0.0
        %613 = vmatprep.subr.mxu0 0.0
        %614 = vmatpush1.msra.mxu0 0.0
        %615 = vmatprep.subr.mxu0 0.0
        %616 = vmatpush1.msra.mxu0 0.0
        %617 = vmatprep.subr.mxu0 0.0
        %618 = vmatpush1.msra.mxu0 0.0
        %619 = vmatprep.subr.mxu0 0.0
        %620 = vmatpush1.msra.mxu0 0.0
        %621 = vmatprep.subr.mxu0 0.0
        %622 = vmatpush1.msra.mxu0 0.0
        %623 = vmatprep.subr.mxu0 0.0
        %624 = vmatpush1.msra.mxu0 0.0
        %625 = vmatprep.subr.mxu0 0.0
        %626 = vmatpush1.msra.mxu0 0.0
        %627 = vmatprep.subr.mxu0 0.0
        %628 = vmatpush1.msra.mxu0 0.0
        %629 = vmatprep.subr.mxu0 0.0
        %630 = vmatpush1.msra.mxu0 0.0
        %631 = vmatprep.subr.mxu0 0.0
        %632 = vmatpush1.msra.mxu0 0.0
        %633 = vmatprep.subr.mxu0 0.0
        %634 = vmatpush1.msra.mxu0 0.0
        %635 = vmatprep.subr.mxu0 0.0
        %636 = vmatpush1.msra.mxu0 0.0
        %637 = vmatprep.subr.mxu0 0.0
        %638 = vmatpush1.msra.mxu0 0.0
        %639 = vmatprep.subr.mxu0 0.0
        %640 = vmatpush1.msra.mxu0 0.0
        %641 = vmatprep.subr.mxu0 0.0
        %642 = vmatpush1.msra.mxu0 0.0
        %643 = vmatprep.subr.mxu0 0.0
        %644 = vmatpush1.msra.mxu0 0.0
        %645 = vmatprep.subr.mxu0 0.0
        %646 = vmatpush1.msra.mxu0 0.0
        %647 = vmatprep.mubr.f32.mxu0 0.0
        %648 = vmatmul.mubr.f32.gmra.mrb[0].mxu0 %v501
        %v649 = vpop.f32.mrb[0].mxu0
        %v650 = vadd.f32 0.0, %v649
        %v651 = vpop.f32.mrb[0].mxu0
        %652 = vmatprep.mubr.f32.mxu0 0.0
        %653 = vmatmul.mubr.f32.gmra.mrb[0].mxu0 %v504
        %v654 = vpop.f32.mrb[0].mxu0
        %v655 = vadd.f32 0.0, %v654
        %v656 = vpop.f32.mrb[0].mxu0
        %657 = vdwg.mxu0
        %v659 = vsel %vm487, %v573, 0
        %v662 = vsel %vm487, %v578, 0
        %664 = vmatprep.subr.mxu0 0.0
        %665 = vmatpush1.msra.mxu0 %v581
        %666 = vmatprep.subr.mxu0 0.0
        %667 = vmatpush1.msra.mxu0 %v582
        %668 = vmatprep.subr.mxu0 0.0
        %669 = vmatpush1.msra.mxu0 0.0
        %670 = vmatprep.subr.mxu0 0.0
        %671 = vmatpush1.msra.mxu0 0.0
        %672 = vmatprep.subr.mxu0 0.0
        %673 = vmatpush1.msra.mxu0 0.0
        %674 = vmatprep.subr.mxu0 0.0
        %675 = vmatpush1.msra.mxu0 0.0
        %676 = vmatprep.subr.mxu0 0.0
        %677 = vmatpush1.msra.mxu0 0.0
        %678 = vmatprep.subr.mxu0 0.0
        %679 = vmatpush1.msra.mxu0 0.0
        %680 = vmatprep.subr.mxu0 0.0
        %681 = vmatpush1.msra.mxu0 0.0
        %682 = vmatprep.subr.mxu0 0.0
        %683 = vmatpush1.msra.mxu0 0.0
        %684 = vmatprep.subr.mxu0 0.0
        %685 = vmatpush1.msra.mxu0 0.0
        %686 = vmatprep.subr.mxu0 0.0
        %687 = vmatpush1.msra.mxu0 0.0
        %688 = vmatprep.subr.mxu0 0.0
        %689 = vmatpush1.msra.mxu0 0.0
        %690 = vmatprep.subr.mxu0 0.0
        %691 = vmatpush1.msra.mxu0 0.0
        %692 = vmatprep.subr.mxu0 0.0
        %693 = vmatpush1.msra.mxu0 0.0
        %694 = vmatprep.subr.mxu0 0.0
        %695 = vmatpush1.msra.mxu0 0.0
        %696 = vmatprep.subr.mxu0 0.0
        %697 = vmatpush1.msra.mxu0 0.0
        %698 = vmatprep.subr.mxu0 0.0
        %699 = vmatpush1.msra.mxu0 0.0
        %700 = vmatprep.subr.mxu0 0.0
        %701 = vmatpush1.msra.mxu0 0.0
        %702 = vmatprep.subr.mxu0 0.0
        %703 = vmatpush1.msra.mxu0 0.0
        %704 = vmatprep.subr.mxu0 0.0
        %705 = vmatpush1.msra.mxu0 0.0
        %706 = vmatprep.subr.mxu0 0.0
        %707 = vmatpush1.msra.mxu0 0.0
        %708 = vmatprep.subr.mxu0 0.0
        %709 = vmatpush1.msra.mxu0 0.0
        %710 = vmatprep.subr.mxu0 0.0
        %711 = vmatpush1.msra.mxu0 0.0
        %712 = vmatprep.subr.mxu0 0.0
        %713 = vmatpush1.msra.mxu0 0.0
        %714 = vmatprep.subr.mxu0 0.0
        %715 = vmatpush1.msra.mxu0 0.0
        %716 = vmatprep.subr.mxu0 0.0
        %717 = vmatpush1.msra.mxu0 0.0
        %718 = vmatprep.subr.mxu0 0.0
        %719 = vmatpush1.msra.mxu0 0.0
        %720 = vmatprep.subr.mxu0 0.0
        %721 = vmatpush1.msra.mxu0 0.0
        %722 = vmatprep.subr.mxu0 0.0
        %723 = vmatpush1.msra.mxu0 0.0
        %724 = vmatprep.subr.mxu0 0.0
        %725 = vmatpush1.msra.mxu0 0.0
        %726 = vmatprep.subr.mxu0 0.0
        %727 = vmatpush1.msra.mxu0 0.0
        %728 = vmatprep.mubr.f32.mxu0 0.0
        %729 = vmatmul.mubr.f32.gmra.mrb[0].mxu0 %v659
        %v730 = vpop.f32.mrb[0].mxu0
        %v731 = vadd.f32 0.0, %v730
        %v732 = vpop.f32.mrb[0].mxu0
        %733 = vmatprep.mubr.f32.mxu0 0.0
        %734 = vmatmul.mubr.f32.gmra.mrb[0].mxu0 %v662
        %v735 = vpop.f32.mrb[0].mxu0
        %v736 = vadd.f32 0.0, %v735
        %v737 = vpop.f32.mrb[0].mxu0
        %738 = vdwg.mxu0
        %v739 = vld [vmem:[%s3] sm:$0x7]
        %v740 = vld [vmem:[%s4] sm:$0xff]
        %v741 = vld [vmem:[%s4 + $0x8] sm:$0xff]
        %v742 = vld [vmem:[%s4 + $0x10] sm:$0xff]
        %v743 = vld [vmem:[%s4 + $0x18] sm:$0xff]
        %v744 = vld [vmem:[%s4 + $0x20] sm:$0xff]
        %v745 = vld [vmem:[%s4 + $0x28] sm:$0xff]
        %v746 = vld [vmem:[%s4 + $0x30] sm:$0xff]
        %v747 = vld [vmem:[%s4 + $0x38] sm:$0xff]
        %v748 = vld [vmem:[%s4 + $0x40] sm:$0xff]
        %v749 = vld [vmem:[%s4 + $0x48] sm:$0xff]
        %v750 = vld [vmem:[%s4 + $0x50] sm:$0xff]
        %v751 = vld [vmem:[%s4 + $0x58] sm:$0xff]
        %v752 = vld [vmem:[%s5] sm:$0x1]
        %754 = vset.pattern.permute.xlu0 0
        %755 = vperm.xlu0 %754, %v581
        %v756 = vpop.permute.xlu0 %755
        %759 = vset.pattern.permute.xlu0 0
        %760 = vperm.xlu0 %759, %v582
        %v761 = vpop.permute.xlu0 %760
        %v763 = vlaneseq
        %v764 = vshrl.u32 %v763, 7
        %v765 = vsub.s32 0, %v764
        %v766 = vrot.slane %v739, %v765
        %v767 = vmul.f32 %v756, %v766
        %v768 = vmul.f32 %v761, %v766
        %770 = vset.pattern.permute.xlu0 0
        %771 = vperm.xlu0 %770, %v650
        %v772 = vpop.permute.xlu0 %771
        %775 = vset.pattern.permute.xlu0 0
        %776 = vperm.xlu0 %775, %v655
        %v777 = vpop.permute.xlu0 %776
        %v779 = vlaneseq
        %v780 = vshrl.u32 %v779, 7
        %v781 = vsub.s32 1, %v780
        %v782 = vrot.slane %v739, %v781
        %v783 = vmul.f32 %v772, %v782
        %v784 = vmul.f32 %v777, %v782
        %v785 = vadd.f32 %v767, %v783
        %v786 = vadd.f32 %v768, %v784
        %788 = vset.pattern.permute.xlu0 0
        %789 = vperm.xlu0 %788, %v731
        %v790 = vpop.permute.xlu0 %789
        %793 = vset.pattern.permute.xlu0 0
        %794 = vperm.xlu0 %793, %v736
        %v795 = vpop.permute.xlu0 %794
        %v797 = vlaneseq
        %v798 = vshrl.u32 %v797, 7
        %v799 = vsub.s32 2, %v798
        %v800 = vrot.slane %v739, %v799
        %v801 = vmul.f32 %v790, %v800
        %v802 = vmul.f32 %v795, %v800
        %v803 = vadd.f32 %v785, %v801
        %v804 = vadd.f32 %v786, %v802
        %vm805 = vcmask 261120
        %806 = vst.msk [vmem:[#allocation2] sm:$0xff] %vm805, 0.0
        %807 = vst.msk [vmem:[#allocation2 + $0x8] sm:$0xff] %vm805, 0.0
        %808 = vmatprep.subr.mxu0 0.0
        %809 = vmatpush1.msra.mxu0 0.0
        %810 = vmatprep.subr.mxu0 0.0
        %811 = vmatpush1.msra.mxu0 0.0
        %812 = vmatprep.subr.mxu0 0.0
        %813 = vmatpush1.msra.mxu0 0.0
        %814 = vmatprep.subr.mxu0 0.0
        %815 = vmatpush1.msra.mxu0 0.0
        %816 = vmatprep.subr.mxu0 0.0
        %817 = vmatpush1.msra.mxu0 0.0
        %818 = vmatprep.subr.mxu0 0.0
        %819 = vmatpush1.msra.mxu0 0.0
        %820 = vmatprep.subr.mxu0 0.0
        %821 = vmatpush1.msra.mxu0 0.0
        %822 = vmatprep.subr.mxu0 0.0
        %823 = vmatpush1.msra.mxu0 0.0
        %824 = vmatprep.subr.mxu0 0.0
        %825 = vmatpush1.msra.mxu0 0.0
        %826 = vmatprep.subr.mxu0 0.0
        %827 = vmatpush1.msra.mxu0 0.0
        %828 = vmatprep.subr.mxu0 0.0
        %829 = vmatpush1.msra.mxu0 0.0
        %830 = vmatprep.subr.mxu0 0.0
        %831 = vmatpush1.msra.mxu0 0.0
        %832 = vmatprep.subr.mxu0 0.0
        %833 = vmatpush1.msra.mxu0 0.0
        %834 = vmatprep.subr.mxu0 0.0
        %835 = vmatpush1.msra.mxu0 0.0
        %836 = vmatprep.subr.mxu0 0.0
        %837 = vmatpush1.msra.mxu0 0.0
        %838 = vmatprep.subr.mxu0 0.0
        %839 = vmatpush1.msra.mxu0 0.0
        %840 = vmatprep.subr.mxu0 0.0
        %841 = vmatpush1.msra.mxu0 0.0
        %842 = vmatprep.subr.mxu0 0.0
        %843 = vmatpush1.msra.mxu0 0.0
        %844 = vmatprep.subr.mxu0 0.0
        %845 = vmatpush1.msra.mxu0 0.0
        %846 = vmatprep.subr.mxu0 0.0
        %847 = vmatpush1.msra.mxu0 0.0
        %848 = vmatprep.subr.mxu0 0.0
        %849 = vmatpush1.msra.mxu0 0.0
        %850 = vmatprep.subr.mxu0 0.0
        %851 = vmatpush1.msra.mxu0 0.0
        %852 = vmatprep.subr.mxu0 0.0
        %853 = vmatpush1.msra.mxu0 0.0
        %854 = vmatprep.subr.mxu0 0.0
        %855 = vmatpush1.msra.mxu0 0.0
        %856 = vmatprep.subr.mxu0 0.0
        %857 = vmatpush1.msra.mxu0 0.0
        %858 = vmatprep.subr.mxu0 0.0
        %859 = vmatpush1.msra.mxu0 0.0
        %860 = vmatprep.subr.mxu0 0.0
        %861 = vmatpush1.msra.mxu0 0.0
        %862 = vmatprep.subr.mxu0 0.0
        %863 = vmatpush1.msra.mxu0 0.0
        %864 = vmatprep.subr.mxu0 0.0
        %865 = vmatpush1.msra.mxu0 0.0
        %866 = vmatprep.subr.mxu0 0.0
        %867 = vmatpush1.msra.mxu0 0.0
        %868 = vmatprep.subr.mxu0 0.0
        %869 = vmatpush1.msra.mxu0 0.0
        %870 = vmatprep.subr.mxu0 0.0
        %871 = vmatpush1.msra.mxu0 0.0
        %872 = vmatprep.mubr.f32.mxu0 0.0
        %873 = vmatmul.mubr.f32.gmra.mrb[0].mxu0 %v501
        %v874 = vpop.f32.mrb[0].mxu0
        %v875 = vadd.f32 0.0, %v874
        %v876 = vpop.f32.mrb[0].mxu0
        %877 = vmatprep.mubr.f32.mxu0 0.0
        %878 = vmatmul.mubr.f32.gmra.mrb[0].mxu0 %v504
        %v879 = vpop.f32.mrb[0].mxu0
        %v880 = vadd.f32 0.0, %v879
        %v881 = vpop.f32.mrb[0].mxu0
        %882 = vdwg.mxu0
        %885 = vrot.lane.b32.xlu0 %v875, 32
        %v886 = vpop.permute.xlu0 %885
        %887 = vrot.lane.b32.xlu0 %v880, 32
        %v888 = vpop.permute.xlu0 %887
        %vm891 = vcmask 523520
        %892 = vst.msk [vmem:[#allocation2] sm:$0xff] %vm891, %v886
        %893 = vst.msk [vmem:[#allocation2 + $0x8] sm:$0xff] %vm891, %v888
        %894 = vmatprep.subr.mxu0 0.0
        %895 = vmatpush1.msra.mxu0 0.0
        %896 = vmatprep.subr.mxu0 0.0
        %897 = vmatpush1.msra.mxu0 0.0
        %898 = vmatprep.subr.mxu0 0.0
        %899 = vmatpush1.msra.mxu0 0.0
        %900 = vmatprep.subr.mxu0 0.0
        %901 = vmatpush1.msra.mxu0 0.0
        %902 = vmatprep.subr.mxu0 0.0
        %903 = vmatpush1.msra.mxu0 0.0
        %904 = vmatprep.subr.mxu0 0.0
        %905 = vmatpush1.msra.mxu0 0.0
        %906 = vmatprep.subr.mxu0 0.0
        %907 = vmatpush1.msra.mxu0 0.0
        %908 = vmatprep.subr.mxu0 0.0
        %909 = vmatpush1.msra.mxu0 0.0
        %910 = vmatprep.subr.mxu0 0.0
        %911 = vmatpush1.msra.mxu0 0.0
        %912 = vmatprep.subr.mxu0 0.0
        %913 = vmatpush1.msra.mxu0 0.0
        %914 = vmatprep.subr.mxu0 0.0
        %915 = vmatpush1.msra.mxu0 0.0
        %916 = vmatprep.subr.mxu0 0.0
        %917 = vmatpush1.msra.mxu0 0.0
        %918 = vmatprep.subr.mxu0 0.0
        %919 = vmatpush1.msra.mxu0 0.0
        %920 = vmatprep.subr.mxu0 0.0
        %921 = vmatpush1.msra.mxu0 0.0
        %922 = vmatprep.subr.mxu0 0.0
        %923 = vmatpush1.msra.mxu0 0.0
        %924 = vmatprep.subr.mxu0 0.0
        %925 = vmatpush1.msra.mxu0 0.0
        %926 = vmatprep.subr.mxu0 0.0
        %927 = vmatpush1.msra.mxu0 0.0
        %928 = vmatprep.subr.mxu0 0.0
        %929 = vmatpush1.msra.mxu0 0.0
        %930 = vmatprep.subr.mxu0 0.0
        %931 = vmatpush1.msra.mxu0 0.0
        %932 = vmatprep.subr.mxu0 0.0
        %933 = vmatpush1.msra.mxu0 0.0
        %934 = vmatprep.subr.mxu0 0.0
        %935 = vmatpush1.msra.mxu0 0.0
        %936 = vmatprep.subr.mxu0 0.0
        %937 = vmatpush1.msra.mxu0 0.0
        %938 = vmatprep.subr.mxu0 0.0
        %939 = vmatpush1.msra.mxu0 0.0
        %940 = vmatprep.subr.mxu0 0.0
        %941 = vmatpush1.msra.mxu0 0.0
        %942 = vmatprep.subr.mxu0 0.0
        %943 = vmatpush1.msra.mxu0 0.0
        %944 = vmatprep.subr.mxu0 0.0
        %945 = vmatpush1.msra.mxu0 0.0
        %946 = vmatprep.subr.mxu0 0.0
        %947 = vmatpush1.msra.mxu0 0.0
        %948 = vmatprep.subr.mxu0 0.0
        %949 = vmatpush1.msra.mxu0 0.0
        %950 = vmatprep.subr.mxu0 0.0
        %951 = vmatpush1.msra.mxu0 0.0
        %952 = vmatprep.subr.mxu0 0.0
        %953 = vmatpush1.msra.mxu0 0.0
        %954 = vmatprep.subr.mxu0 0.0
        %955 = vmatpush1.msra.mxu0 0.0
        %956 = vmatprep.subr.mxu0 0.0
        %957 = vmatpush1.msra.mxu0 0.0
        %958 = vmatprep.mubr.f32.mxu0 0.0
        %959 = vmatmul.mubr.f32.gmra.mrb[0].mxu0 %v659
        %v960 = vpop.f32.mrb[0].mxu0
        %v961 = vadd.f32 0.0, %v960
        %v962 = vpop.f32.mrb[0].mxu0
        %963 = vmatprep.mubr.f32.mxu0 0.0
        %964 = vmatmul.mubr.f32.gmra.mrb[0].mxu0 %v662
        %v965 = vpop.f32.mrb[0].mxu0
        %v966 = vadd.f32 0.0, %v965
        %v967 = vpop.f32.mrb[0].mxu0
        %968 = vdwg.mxu0
        %971 = vrot.lane.b32.xlu0 %v961, 64
        %v972 = vpop.permute.xlu0 %971
        %973 = vrot.lane.b32.xlu0 %v966, 64
        %v974 = vpop.permute.xlu0 %973
        %vm977 = vcmask 785920
        %978 = vst.msk [vmem:[#allocation2] sm:$0xff] %vm977, %v972
        %979 = vst.msk [vmem:[#allocation2 + $0x8] sm:$0xff] %vm977, %v974
        %v980 = vld [vmem:[#allocation2] sm:$0xff]
        %v981 = vld [vmem:[#allocation2 + $0x8] sm:$0xff]
        %vm982 = vcmask 785408
        %v984 = vsel %vm982, %v980, 0
        %v987 = vsel %vm982, %v981, 0
        %989 = vmatprep.subr.mxu0 0.0
        %990 = vmatpush1.msra.mxu0 %v740
        %991 = vmatprep.subr.mxu0 0.0
        %992 = vmatpush1.msra.mxu0 %v741
        %993 = vmatprep.subr.mxu0 0.0
        %994 = vmatpush1.msra.mxu0 %v742
        %995 = vmatprep.subr.mxu0 0.0
        %996 = vmatpush1.msra.mxu0 %v743
        %997 = vmatprep.subr.mxu0 0.0
        %998 = vmatpush1.msra.mxu0 %v744
        %999 = vmatprep.subr.mxu0 0.0
        %1000 = vmatpush1.msra.mxu0 %v745
        %1001 = vmatprep.subr.mxu0 0.0
        %1002 = vmatpush1.msra.mxu0 %v746
        %1003 = vmatprep.subr.mxu0 0.0
        %1004 = vmatpush1.msra.mxu0 %v747
        %1005 = vmatprep.subr.mxu0 0.0
        %1006 = vmatpush1.msra.mxu0 %v748
        %1007 = vmatprep.subr.mxu0 0.0
        %1008 = vmatpush1.msra.mxu0 %v749
        %1009 = vmatprep.subr.mxu0 0.0
        %1010 = vmatpush1.msra.mxu0 %v750
        %1011 = vmatprep.subr.mxu0 0.0
        %1012 = vmatpush1.msra.mxu0 %v751
        %1013 = vmatprep.subr.mxu0 0.0
        %1014 = vmatpush1.msra.mxu0 0.0
        %1015 = vmatprep.subr.mxu0 0.0
        %1016 = vmatpush1.msra.mxu0 0.0
        %1017 = vmatprep.subr.mxu0 0.0
        %1018 = vmatpush1.msra.mxu0 0.0
        %1019 = vmatprep.subr.mxu0 0.0
        %1020 = vmatpush1.msra.mxu0 0.0
        %1021 = vmatprep.subr.mxu0 0.0
        %1022 = vmatpush1.msra.mxu0 0.0
        %1023 = vmatprep.subr.mxu0 0.0
        %1024 = vmatpush1.msra.mxu0 0.0
        %1025 = vmatprep.subr.mxu0 0.0
        %1026 = vmatpush1.msra.mxu0 0.0
        %1027 = vmatprep.subr.mxu0 0.0
        %1028 = vmatpush1.msra.mxu0 0.0
        %1029 = vmatprep.subr.mxu0 0.0
        %1030 = vmatpush1.msra.mxu0 0.0
        %1031 = vmatprep.subr.mxu0 0.0
        %1032 = vmatpush1.msra.mxu0 0.0
        %1033 = vmatprep.subr.mxu0 0.0
        %1034 = vmatpush1.msra.mxu0 0.0
        %1035 = vmatprep.subr.mxu0 0.0
        %1036 = vmatpush1.msra.mxu0 0.0
        %1037 = vmatprep.subr.mxu0 0.0
        %1038 = vmatpush1.msra.mxu0 0.0
        %1039 = vmatprep.subr.mxu0 0.0
        %1040 = vmatpush1.msra.mxu0 0.0
        %1041 = vmatprep.subr.mxu0 0.0
        %1042 = vmatpush1.msra.mxu0 0.0
        %1043 = vmatprep.subr.mxu0 0.0
        %1044 = vmatpush1.msra.mxu0 0.0
        %1045 = vmatprep.subr.mxu0 0.0
        %1046 = vmatpush1.msra.mxu0 0.0
        %1047 = vmatprep.subr.mxu0 0.0
        %1048 = vmatpush1.msra.mxu0 0.0
        %1049 = vmatprep.subr.mxu0 0.0
        %1050 = vmatpush1.msra.mxu0 0.0
        %1051 = vmatprep.subr.mxu0 0.0
        %1052 = vmatpush1.msra.mxu0 0.0
        %1053 = vmatprep.mubr.f32.mxu0 0.0
        %1054 = vmatmul.mubr.f32.gmra.mrb[0].mxu0 %v984
        %v1055 = vpop.f32.mrb[0].mxu0
        %v1056 = vadd.f32 0.0, %v1055
        %v1057 = vpop.f32.mrb[0].mxu0
        %1058 = vmatprep.mubr.f32.mxu0 0.0
        %1059 = vmatmul.mubr.f32.gmra.mrb[0].mxu0 %v987
        %v1060 = vpop.f32.mrb[0].mxu0
        %v1061 = vadd.f32 0.0, %v1060
        %v1062 = vpop.f32.mrb[0].mxu0
        %1063 = vdwg.mxu0
        %v1064 = vadd.f32 %v803, %v1056
        %v1065 = vadd.f32 %v804, %v1061
        %v1067 = vlaneseq
        %v1068 = vshrl.u32 %v1067, 7
        %v1069 = vsub.s32 0, %v1068
        %v1070 = vrot.slane %v752, %v1069
        %v1072 = vadd.f32 %v1064, %v1070
        %v1073 = vadd.f32 %v1065, %v1070
        %v1074 = vmul.f32 %v1072, 0.5
        %v1075 = vmul.f32 %v1073, 0.5
        %v1076 = vtanh.pop %v1074
        %v1077 = vtanh.pop %v1075
        %v1078 = vadd.f32 %v1076, 1.0
        %v1079 = vadd.f32 %v1077, 1.0
        %v1080 = vmul.f32 %v1078, 0.5
        %v1081 = vmul.f32 %v1079, 0.5
        %v1082 = vmul.f32 %v1080, 0.0
        %v1083 = vmul.f32 %v1081, 0.0
        %1086 = vrot.lane.b32.xlu0 %v1076, 96
        %v1087 = vpop.permute.xlu0 %1086
        %1088 = vrot.lane.b32.xlu0 %v1077, 96
        %v1089 = vpop.permute.xlu0 %1088
        %v1092 = vmul.f32 %v1080, %v1087
        %v1093 = vmul.f32 %v1081, %v1089
        %1096 = vrot.lane.b32.xlu0 %v1092, 64
        %v1097 = vpop.permute.xlu0 %1096
        %1098 = vrot.lane.b32.xlu0 %v1093, 64
        %v1099 = vpop.permute.xlu0 %1098
        %v1102 = vadd.f32 %v1082, %v1097
        %v1103 = vadd.f32 %v1083, %v1099
        %v1104 = vtanh.pop %v1102
        %v1105 = vtanh.pop %v1103
        %1108 = vrot.lane.b32.xlu0 %v1080, 96
        %v1109 = vpop.permute.xlu0 %1108
        %1110 = vrot.lane.b32.xlu0 %v1081, 96
        %v1111 = vpop.permute.xlu0 %1110
        %v1114 = vmul.f32 %v1104, %v1109
        %v1115 = vmul.f32 %v1105, %v1111
        %v1116 = vld [vmem:[#allocation3] sm:$0xff]
        %v1117 = vld [vmem:[#allocation3 + $0x8] sm:$0xff]
        %v1118 = vld [vmem:[#allocation3 + $0x10] sm:$0xff]
        %v1119 = vld [vmem:[#allocation3 + $0x18] sm:$0xff]
        %1120 = vset.pattern.permute.xlu0 1
        %1121 = vperm.xlu0 %1120, %v581
        %v1122 = vpop.permute.xlu0 %1121
        %1124 = vset.pattern.permute.xlu0 1
        %1125 = vperm.xlu0 %1124, %v582
        %v1126 = vpop.permute.xlu0 %1125
        %v1128 = vmul.f32 %v1122, %v766
        %v1129 = vmul.f32 %v1126, %v766
        %1130 = vset.pattern.permute.xlu0 1
        %1131 = vperm.xlu0 %1130, %v650
        %v1132 = vpop.permute.xlu0 %1131
        %1134 = vset.pattern.permute.xlu0 1
        %1135 = vperm.xlu0 %1134, %v655
        %v1136 = vpop.permute.xlu0 %1135
        %v1138 = vmul.f32 %v1132, %v782
        %v1139 = vmul.f32 %v1136, %v782
        %v1140 = vadd.f32 %v1128, %v1138
        %v1141 = vadd.f32 %v1129, %v1139
        %1142 = vset.pattern.permute.xlu0 1
        %1143 = vperm.xlu0 %1142, %v731
        %v1144 = vpop.permute.xlu0 %1143
        %1146 = vset.pattern.permute.xlu0 1
        %1147 = vperm.xlu0 %1146, %v736
        %v1148 = vpop.permute.xlu0 %1147
        %v1150 = vmul.f32 %v1144, %v800
        %v1151 = vmul.f32 %v1148, %v800
        %v1152 = vadd.f32 %v1140, %v1150
        %v1153 = vadd.f32 %v1141, %v1151
        %1156 = vrot.lane.b32.xlu0 %v1114, 64
        %v1157 = vpop.permute.xlu0 %1156
        %1158 = vrot.lane.b32.xlu0 %v1115, 64
        %v1159 = vpop.permute.xlu0 %1158
        %1162 = vst.msk [vmem:[#allocation2] sm:$0xff] %vm805, %v1157
        %1163 = vst.msk [vmem:[#allocation2 + $0x8] sm:$0xff] %vm805, %v1159
        %1164 = vmatprep.subr.mxu0 0.0
        %1165 = vmatpush1.msra.mxu0 %v1157
        %1166 = vmatprep.subr.mxu0 0.0
        %1167 = vmatpush1.msra.mxu0 %v1159
        %1168 = vmatprep.subr.mxu0 0.0
        %1169 = vmatpush1.msra.mxu0 0.0
        %1170 = vmatprep.subr.mxu0 0.0
        %1171 = vmatpush1.msra.mxu0 0.0
        %1172 = vmatprep.subr.mxu0 0.0
        %1173 = vmatpush1.msra.mxu0 0.0
        %1174 = vmatprep.subr.mxu0 0.0
        %1175 = vmatpush1.msra.mxu0 0.0
        %1176 = vmatprep.subr.mxu0 0.0
        %1177 = vmatpush1.msra.mxu0 0.0
        %1178 = vmatprep.subr.mxu0 0.0
        %1179 = vmatpush1.msra.mxu0 0.0
        %1180 = vmatprep.subr.mxu0 0.0
        %1181 = vmatpush1.msra.mxu0 0.0
        %1182 = vmatprep.subr.mxu0 0.0
        %1183 = vmatpush1.msra.mxu0 0.0
        %1184 = vmatprep.subr.mxu0 0.0
        %1185 = vmatpush1.msra.mxu0 0.0
        %1186 = vmatprep.subr.mxu0 0.0
        %1187 = vmatpush1.msra.mxu0 0.0
        %1188 = vmatprep.subr.mxu0 0.0
        %1189 = vmatpush1.msra.mxu0 0.0
        %1190 = vmatprep.subr.mxu0 0.0
        %1191 = vmatpush1.msra.mxu0 0.0
        %1192 = vmatprep.subr.mxu0 0.0
        %1193 = vmatpush1.msra.mxu0 0.0
        %1194 = vmatprep.subr.mxu0 0.0
        %1195 = vmatpush1.msra.mxu0 0.0
        %1196 = vmatprep.subr.mxu0 0.0
        %1197 = vmatpush1.msra.mxu0 0.0
        %1198 = vmatprep.subr.mxu0 0.0
        %1199 = vmatpush1.msra.mxu0 0.0
        %1200 = vmatprep.subr.mxu0 0.0
        %1201 = vmatpush1.msra.mxu0 0.0
        %1202 = vmatprep.subr.mxu0 0.0
        %1203 = vmatpush1.msra.mxu0 0.0
        %1204 = vmatprep.subr.mxu0 0.0
        %1205 = vmatpush1.msra.mxu0 0.0
        %1206 = vmatprep.subr.mxu0 0.0
        %1207 = vmatpush1.msra.mxu0 0.0
        %1208 = vmatprep.subr.mxu0 0.0
        %1209 = vmatpush1.msra.mxu0 0.0
        %1210 = vmatprep.subr.mxu0 0.0
        %1211 = vmatpush1.msra.mxu0 0.0
        %1212 = vmatprep.subr.mxu0 0.0
        %1213 = vmatpush1.msra.mxu0 0.0
        %1214 = vmatprep.subr.mxu0 0.0
        %1215 = vmatpush1.msra.mxu0 0.0
        %1216 = vmatprep.subr.mxu0 0.0
        %1217 = vmatpush1.msra.mxu0 0.0
        %1218 = vmatprep.subr.mxu0 0.0
        %1219 = vmatpush1.msra.mxu0 0.0
        %1220 = vmatprep.subr.mxu0 0.0
        %1221 = vmatpush1.msra.mxu0 0.0
        %1222 = vmatprep.subr.mxu0 0.0
        %1223 = vmatpush1.msra.mxu0 0.0
        %1224 = vmatprep.subr.mxu0 0.0
        %1225 = vmatpush1.msra.mxu0 0.0
        %1226 = vmatprep.subr.mxu0 0.0
        %1227 = vmatpush1.msra.mxu0 0.0
        %1228 = vmatprep.mubr.f32.mxu0 0.0
        %1229 = vmatmul.mubr.f32.gmra.mrb[0].mxu0 %v501
        %v1230 = vpop.f32.mrb[0].mxu0
        %v1231 = vadd.f32 0.0, %v1230
        %v1232 = vpop.f32.mrb[0].mxu0
        %1233 = vmatprep.mubr.f32.mxu0 0.0
        %1234 = vmatmul.mubr.f32.gmra.mrb[0].mxu0 %v504
        %v1235 = vpop.f32.mrb[0].mxu0
        %v1236 = vadd.f32 0.0, %v1235
        %v1237 = vpop.f32.mrb[0].mxu0
        %1238 = vdwg.mxu0
        %1241 = vrot.lane.b32.xlu0 %v1231, 32
        %v1242 = vpop.permute.xlu0 %1241
        %1243 = vrot.lane.b32.xlu0 %v1236, 32
        %v1244 = vpop.permute.xlu0 %1243
        %1247 = vst.msk [vmem:[#allocation2] sm:$0xff] %vm891, %v1242
        %1248 = vst.msk [vmem:[#allocation2 + $0x8] sm:$0xff] %vm891, %v1244
        %1249 = vmatprep.subr.mxu0 0.0
        %1250 = vmatpush1.msra.mxu0 %v1157
        %1251 = vmatprep.subr.mxu0 0.0
        %1252 = vmatpush1.msra.mxu0 %v1159
        %1253 = vmatprep.subr.mxu0 0.0
        %1254 = vmatpush1.msra.mxu0 0.0
        %1255 = vmatprep.subr.mxu0 0.0
        %1256 = vmatpush1.msra.mxu0 0.0
        %1257 = vmatprep.subr.mxu0 0.0
        %1258 = vmatpush1.msra.mxu0 0.0
        %1259 = vmatprep.subr.mxu0 0.0
        %1260 = vmatpush1.msra.mxu0 0.0
        %1261 = vmatprep.subr.mxu0 0.0
        %1262 = vmatpush1.msra.mxu0 0.0
        %1263 = vmatprep.subr.mxu0 0.0
        %1264 = vmatpush1.msra.mxu0 0.0
        %1265 = vmatprep.subr.mxu0 0.0
        %1266 = vmatpush1.msra.mxu0 0.0
        %1267 = vmatprep.subr.mxu0 0.0
        %1268 = vmatpush1.msra.mxu0 0.0
        %1269 = vmatprep.subr.mxu0 0.0
        %1270 = vmatpush1.msra.mxu0 0.0
        %1271 = vmatprep.subr.mxu0 0.0
        %1272 = vmatpush1.msra.mxu0 0.0
        %1273 = vmatprep.subr.mxu0 0.0
        %1274 = vmatpush1.msra.mxu0 0.0
        %1275 = vmatprep.subr.mxu0 0.0
        %1276 = vmatpush1.msra.mxu0 0.0
        %1277 = vmatprep.subr.mxu0 0.0
        %1278 = vmatpush1.msra.mxu0 0.0
        %1279 = vmatprep.subr.mxu0 0.0
        %1280 = vmatpush1.msra.mxu0 0.0
        %1281 = vmatprep.subr.mxu0 0.0
        %1282 = vmatpush1.msra.mxu0 0.0
        %1283 = vmatprep.subr.mxu0 0.0
        %1284 = vmatpush1.msra.mxu0 0.0
        %1285 = vmatprep.subr.mxu0 0.0
        %1286 = vmatpush1.msra.mxu0 0.0
        %1287 = vmatprep.subr.mxu0 0.0
        %1288 = vmatpush1.msra.mxu0 0.0
        %1289 = vmatprep.subr.mxu0 0.0
        %1290 = vmatpush1.msra.mxu0 0.0
        %1291 = vmatprep.subr.mxu0 0.0
        %1292 = vmatpush1.msra.mxu0 0.0
        %1293 = vmatprep.subr.mxu0 0.0
        %1294 = vmatpush1.msra.mxu0 0.0
        %1295 = vmatprep.subr.mxu0 0.0
        %1296 = vmatpush1.msra.mxu0 0.0
        %1297 = vmatprep.subr.mxu0 0.0
        %1298 = vmatpush1.msra.mxu0 0.0
        %1299 = vmatprep.subr.mxu0 0.0
        %1300 = vmatpush1.msra.mxu0 0.0
        %1301 = vmatprep.subr.mxu0 0.0
        %1302 = vmatpush1.msra.mxu0 0.0
        %1303 = vmatprep.subr.mxu0 0.0
        %1304 = vmatpush1.msra.mxu0 0.0
        %1305 = vmatprep.subr.mxu0 0.0
        %1306 = vmatpush1.msra.mxu0 0.0
        %1307 = vmatprep.subr.mxu0 0.0
        %1308 = vmatpush1.msra.mxu0 0.0
        %1309 = vmatprep.subr.mxu0 0.0
        %1310 = vmatpush1.msra.mxu0 0.0
        %1311 = vmatprep.subr.mxu0 0.0
        %1312 = vmatpush1.msra.mxu0 0.0
        %1313 = vmatprep.mubr.f32.mxu0 0.0
        %1314 = vmatmul.mubr.f32.gmra.mrb[0].mxu0 %v659
        %v1315 = vpop.f32.mrb[0].mxu0
        %v1316 = vadd.f32 0.0, %v1315
        %v1317 = vpop.f32.mrb[0].mxu0
        %1318 = vmatprep.mubr.f32.mxu0 0.0
        %1319 = vmatmul.mubr.f32.gmra.mrb[0].mxu0 %v662
        %v1320 = vpop.f32.mrb[0].mxu0
        %v1321 = vadd.f32 0.0, %v1320
        %v1322 = vpop.f32.mrb[0].mxu0
        %1323 = vdwg.mxu0
        %1326 = vrot.lane.b32.xlu0 %v1316, 64
        %v1327 = vpop.permute.xlu0 %1326
        %1328 = vrot.lane.b32.xlu0 %v1321, 64
        %v1329 = vpop.permute.xlu0 %1328
        %1332 = vst.msk [vmem:[#allocation2] sm:$0xff] %vm977, %v1327
        %1333 = vst.msk [vmem:[#allocation2 + $0x8] sm:$0xff] %vm977, %v1329
        %v1334 = vld [vmem:[#allocation2] sm:$0xff]
        %v1335 = vld [vmem:[#allocation2 + $0x8] sm:$0xff]
        %v1337 = vsel %vm982, %v1334, 0
        %v1340 = vsel %vm982, %v1335, 0
        %1342 = vmatprep.subr.mxu0 0.0
        %1343 = vmatpush1.msra.mxu0 %v740
        %1344 = vmatprep.subr.mxu0 0.0
        %1345 = vmatpush1.msra.mxu0 %v741
        %1346 = vmatprep.subr.mxu0 0.0
        %1347 = vmatpush1.msra.mxu0 %v742
        %1348 = vmatprep.subr.mxu0 0.0
        %1349 = vmatpush1.msra.mxu0 %v743
        %1350 = vmatprep.subr.mxu0 0.0
        %1351 = vmatpush1.msra.mxu0 %v744
        %1352 = vmatprep.subr.mxu0 0.0
        %1353 = vmatpush1.msra.mxu0 %v745
        %1354 = vmatprep.subr.mxu0 0.0
        %1355 = vmatpush1.msra.mxu0 %v746
        %1356 = vmatprep.subr.mxu0 0.0
        %1357 = vmatpush1.msra.mxu0 %v747
        %1358 = vmatprep.subr.mxu0 0.0
        %1359 = vmatpush1.msra.mxu0 %v748
        %1360 = vmatprep.subr.mxu0 0.0
        %1361 = vmatpush1.msra.mxu0 %v749
        %1362 = vmatprep.subr.mxu0 0.0
        %1363 = vmatpush1.msra.mxu0 %v750
        %1364 = vmatprep.subr.mxu0 0.0
        %1365 = vmatpush1.msra.mxu0 %v751
        %1366 = vmatprep.subr.mxu0 0.0
        %1367 = vmatpush1.msra.mxu0 0.0
        %1368 = vmatprep.subr.mxu0 0.0
        %1369 = vmatpush1.msra.mxu0 0.0
        %1370 = vmatprep.subr.mxu0 0.0
        %1371 = vmatpush1.msra.mxu0 0.0
        %1372 = vmatprep.subr.mxu0 0.0
        %1373 = vmatpush1.msra.mxu0 0.0
        %1374 = vmatprep.subr.mxu0 0.0
        %1375 = vmatpush1.msra.mxu0 0.0
        %1376 = vmatprep.subr.mxu0 0.0
        %1377 = vmatpush1.msra.mxu0 0.0
        %1378 = vmatprep.subr.mxu0 0.0
        %1379 = vmatpush1.msra.mxu0 0.0
        %1380 = vmatprep.subr.mxu0 0.0
        %1381 = vmatpush1.msra.mxu0 0.0
        %1382 = vmatprep.subr.mxu0 0.0
        %1383 = vmatpush1.msra.mxu0 0.0
        %1384 = vmatprep.subr.mxu0 0.0
        %1385 = vmatpush1.msra.mxu0 0.0
        %1386 = vmatprep.subr.mxu0 0.0
        %1387 = vmatpush1.msra.mxu0 0.0
        %1388 = vmatprep.subr.mxu0 0.0
        %1389 = vmatpush1.msra.mxu0 0.0
        %1390 = vmatprep.subr.mxu0 0.0
        %1391 = vmatpush1.msra.mxu0 0.0
        %1392 = vmatprep.subr.mxu0 0.0
        %1393 = vmatpush1.msra.mxu0 0.0
        %1394 = vmatprep.subr.mxu0 0.0
        %1395 = vmatpush1.msra.mxu0 0.0
        %1396 = vmatprep.subr.mxu0 0.0
        %1397 = vmatpush1.msra.mxu0 0.0
        %1398 = vmatprep.subr.mxu0 0.0
        %1399 = vmatpush1.msra.mxu0 0.0
        %1400 = vmatprep.subr.mxu0 0.0
        %1401 = vmatpush1.msra.mxu0 0.0
        %1402 = vmatprep.subr.mxu0 0.0
        %1403 = vmatpush1.msra.mxu0 0.0
        %1404 = vmatprep.subr.mxu0 0.0
        %1405 = vmatpush1.msra.mxu0 0.0
        %1406 = vmatprep.mubr.f32.mxu0 0.0
        %1407 = vmatmul.mubr.f32.gmra.mrb[0].mxu0 %v1337
        %v1408 = vpop.f32.mrb[0].mxu0
        %v1409 = vadd.f32 0.0, %v1408
        %v1410 = vpop.f32.mrb[0].mxu0
        %1411 = vmatprep.mubr.f32.mxu0 0.0
        %1412 = vmatmul.mubr.f32.gmra.mrb[0].mxu0 %v1340
        %v1413 = vpop.f32.mrb[0].mxu0
        %v1414 = vadd.f32 0.0, %v1413
        %v1415 = vpop.f32.mrb[0].mxu0
        %1416 = vdwg.mxu0
        %v1417 = vadd.f32 %v1152, %v1409
        %v1418 = vadd.f32 %v1153, %v1414
        %v1419 = vadd.f32 %v1417, %v1070
        %v1420 = vadd.f32 %v1418, %v1070
        %v1421 = vmul.f32 %v1419, 0.5
        %v1422 = vmul.f32 %v1420, 0.5
        %v1423 = vtanh.pop %v1421
        %v1424 = vtanh.pop %v1422
        %v1425 = vadd.f32 %v1423, 1.0
        %v1426 = vadd.f32 %v1424, 1.0
        %v1427 = vmul.f32 %v1425, 0.5
        %v1428 = vmul.f32 %v1426, 0.5
        %v1429 = vmul.f32 %v1102, %v1427
        %v1430 = vmul.f32 %v1103, %v1428
        %1433 = vrot.lane.b32.xlu0 %v1423, 96
        %v1434 = vpop.permute.xlu0 %1433
        %1435 = vrot.lane.b32.xlu0 %v1424, 96
        %v1436 = vpop.permute.xlu0 %1435
        %v1439 = vmul.f32 %v1427, %v1434
        %v1440 = vmul.f32 %v1428, %v1436
        %1443 = vrot.lane.b32.xlu0 %v1439, 64
        %v1444 = vpop.permute.xlu0 %1443
        %1445 = vrot.lane.b32.xlu0 %v1440, 64
        %v1446 = vpop.permute.xlu0 %1445
        %v1449 = vadd.f32 %v1429, %v1444
        %v1450 = vadd.f32 %v1430, %v1446
        %v1451 = vtanh.pop %v1449
        %v1452 = vtanh.pop %v1450
        %1455 = vrot.lane.b32.xlu0 %v1427, 96
        %v1456 = vpop.permute.xlu0 %1455
        %1457 = vrot.lane.b32.xlu0 %v1428, 96
        %v1458 = vpop.permute.xlu0 %1457
        %v1461 = vmul.f32 %v1451, %v1456
        %v1462 = vmul.f32 %v1452, %v1458
        %s1463 = scalar_lea.vmem [#allocation3], 32
        %v1464 = vld [vmem:[%s1463] sm:$0xff]
        %v1465 = vld [vmem:[%s1463 + $0x8] sm:$0xff]
        %v1466 = vld [vmem:[%s1463 + $0x10] sm:$0xff]
        %v1467 = vld [vmem:[%s1463 + $0x18] sm:$0xff]
        %1470 = vrot.lane.b32.xlu0 %v1461, 64
        %v1471 = vpop.permute.xlu0 %1470
        %1472 = vrot.lane.b32.xlu0 %v1462, 64
        %v1473 = vpop.permute.xlu0 %1472
        %v1474 = vsel %vm805, %v1471, 0
        %v1476 = vsel %vm805, %v1473, 0
        %1478 = vmatprep.subr.mxu0 0.0
        %1479 = vmatpush1.msra.mxu0 %v1464
        %1480 = vmatprep.subr.mxu0 0.0
        %1481 = vmatpush1.msra.mxu0 %v1465
        %1482 = vmatprep.subr.mxu0 0.0
        %1483 = vmatpush1.msra.mxu0 %v1466
        %1484 = vmatprep.subr.mxu0 0.0
        %1485 = vmatpush1.msra.mxu0 %v1467
        %1486 = vmatprep.subr.mxu0 0.0
        %1487 = vmatpush1.msra.mxu0 0.0
        %1488 = vmatprep.subr.mxu0 0.0
        %1489 = vmatpush1.msra.mxu0 0.0
        %1490 = vmatprep.subr.mxu0 0.0
        %1491 = vmatpush1.msra.mxu0 0.0
        %1492 = vmatprep.subr.mxu0 0.0
        %1493 = vmatpush1.msra.mxu0 0.0
        %1494 = vmatprep.subr.mxu0 0.0
        %1495 = vmatpush1.msra.mxu0 0.0
        %1496 = vmatprep.subr.mxu0 0.0
        %1497 = vmatpush1.msra.mxu0 0.0
        %1498 = vmatprep.subr.mxu0 0.0
        %1499 = vmatpush1.msra.mxu0 0.0
        %1500 = vmatprep.subr.mxu0 0.0
        %1501 = vmatpush1.msra.mxu0 0.0
        %1502 = vmatprep.subr.mxu0 0.0
        %1503 = vmatpush1.msra.mxu0 0.0
        %1504 = vmatprep.subr.mxu0 0.0
        %1505 = vmatpush1.msra.mxu0 0.0
        %1506 = vmatprep.subr.mxu0 0.0
        %1507 = vmatpush1.msra.mxu0 0.0
        %1508 = vmatprep.subr.mxu0 0.0
        %1509 = vmatpush1.msra.mxu0 0.0
        %1510 = vmatprep.subr.mxu0 0.0
        %1511 = vmatpush1.msra.mxu0 0.0
        %1512 = vmatprep.subr.mxu0 0.0
        %1513 = vmatpush1.msra.mxu0 0.0
        %1514 = vmatprep.subr.mxu0 0.0
        %1515 = vmatpush1.msra.mxu0 0.0
        %1516 = vmatprep.subr.mxu0 0.0
        %1517 = vmatpush1.msra.mxu0 0.0
        %1518 = vmatprep.subr.mxu0 0.0
        %1519 = vmatpush1.msra.mxu0 0.0
        %1520 = vmatprep.subr.mxu0 0.0
        %1521 = vmatpush1.msra.mxu0 0.0
        %1522 = vmatprep.subr.mxu0 0.0
        %1523 = vmatpush1.msra.mxu0 0.0
        %1524 = vmatprep.subr.mxu0 0.0
        %1525 = vmatpush1.msra.mxu0 0.0
        %1526 = vmatprep.subr.mxu0 0.0
        %1527 = vmatpush1.msra.mxu0 0.0
        %1528 = vmatprep.subr.mxu0 0.0
        %1529 = vmatpush1.msra.mxu0 0.0
        %1530 = vmatprep.subr.mxu0 0.0
        %1531 = vmatpush1.msra.mxu0 0.0
        %1532 = vmatprep.subr.mxu0 0.0
        %1533 = vmatpush1.msra.mxu0 0.0
        %1534 = vmatprep.subr.mxu0 0.0
        %1535 = vmatpush1.msra.mxu0 0.0
        %1536 = vmatprep.subr.mxu0 0.0
        %1537 = vmatpush1.msra.mxu0 0.0
        %1538 = vmatprep.subr.mxu0 0.0
        %1539 = vmatpush1.msra.mxu0 0.0
        %1540 = vmatprep.subr.mxu0 0.0
        %1541 = vmatpush1.msra.mxu0 0.0
        %1542 = vmatprep.mubr.f32.mxu0 0.0
        %1543 = vmatmul.mubr.f32.gmra.mrb[0].mxu0 %v1474
        %v1544 = vpop.f32.mrb[0].mxu0
        %v1545 = vadd.f32 0.0, %v1544
        %v1546 = vpop.f32.mrb[0].mxu0
        %1547 = vmatprep.mubr.f32.mxu0 0.0
        %1548 = vmatmul.mubr.f32.gmra.mrb[0].mxu0 %v1476
        %v1549 = vpop.f32.mrb[0].mxu0
        %v1550 = vadd.f32 0.0, %v1549
        %v1551 = vpop.f32.mrb[0].mxu0
        %1552 = vdwg.mxu0
        %v1553 = vsel %vm805, %v1157, 0
        %v1555 = vsel %vm805, %v1159, 0
        %1557 = vmatprep.subr.mxu0 0.0
        %1558 = vmatpush1.msra.mxu0 %v1116
        %1559 = vmatprep.subr.mxu0 0.0
        %1560 = vmatpush1.msra.mxu0 %v1117
        %1561 = vmatprep.subr.mxu0 0.0
        %1562 = vmatpush1.msra.mxu0 %v1118
        %1563 = vmatprep.subr.mxu0 0.0
        %1564 = vmatpush1.msra.mxu0 %v1119
        %1565 = vmatprep.subr.mxu0 0.0
        %1566 = vmatpush1.msra.mxu0 0.0
        %1567 = vmatprep.subr.mxu0 0.0
        %1568 = vmatpush1.msra.mxu0 0.0
        %1569 = vmatprep.subr.mxu0 0.0
        %1570 = vmatpush1.msra.mxu0 0.0
        %1571 = vmatprep.subr.mxu0 0.0
        %1572 = vmatpush1.msra.mxu0 0.0
        %1573 = vmatprep.subr.mxu0 0.0
        %1574 = vmatpush1.msra.mxu0 0.0
        %1575 = vmatprep.subr.mxu0 0.0
        %1576 = vmatpush1.msra.mxu0 0.0
        %1577 = vmatprep.subr.mxu0 0.0
        %1578 = vmatpush1.msra.mxu0 0.0
        %1579 = vmatprep.subr.mxu0 0.0
        %1580 = vmatpush1.msra.mxu0 0.0
        %1581 = vmatprep.subr.mxu0 0.0
        %1582 = vmatpush1.msra.mxu0 0.0
        %1583 = vmatprep.subr.mxu0 0.0
        %1584 = vmatpush1.msra.mxu0 0.0
        %1585 = vmatprep.subr.mxu0 0.0
        %1586 = vmatpush1.msra.mxu0 0.0
        %1587 = vmatprep.subr.mxu0 0.0
        %1588 = vmatpush1.msra.mxu0 0.0
        %1589 = vmatprep.subr.mxu0 0.0
        %1590 = vmatpush1.msra.mxu0 0.0
        %1591 = vmatprep.subr.mxu0 0.0
        %1592 = vmatpush1.msra.mxu0 0.0
        %1593 = vmatprep.subr.mxu0 0.0
        %1594 = vmatpush1.msra.mxu0 0.0
        %1595 = vmatprep.subr.mxu0 0.0
        %1596 = vmatpush1.msra.mxu0 0.0
        %1597 = vmatprep.subr.mxu0 0.0
        %1598 = vmatpush1.msra.mxu0 0.0
        %1599 = vmatprep.subr.mxu0 0.0
        %1600 = vmatpush1.msra.mxu0 0.0
        %1601 = vmatprep.subr.mxu0 0.0
        %1602 = vmatpush1.msra.mxu0 0.0
        %1603 = vmatprep.subr.mxu0 0.0
        %1604 = vmatpush1.msra.mxu0 0.0
        %1605 = vmatprep.subr.mxu0 0.0
        %1606 = vmatpush1.msra.mxu0 0.0
        %1607 = vmatprep.subr.mxu0 0.0
        %1608 = vmatpush1.msra.mxu0 0.0
        %1609 = vmatprep.subr.mxu0 0.0
        %1610 = vmatpush1.msra.mxu0 0.0
        %1611 = vmatprep.subr.mxu0 0.0
        %1612 = vmatpush1.msra.mxu0 0.0
        %1613 = vmatprep.subr.mxu0 0.0
        %1614 = vmatpush1.msra.mxu0 0.0
        %1615 = vmatprep.subr.mxu0 0.0
        %1616 = vmatpush1.msra.mxu0 0.0
        %1617 = vmatprep.subr.mxu0 0.0
        %1618 = vmatpush1.msra.mxu0 0.0
        %1619 = vmatprep.subr.mxu0 0.0
        %1620 = vmatpush1.msra.mxu0 0.0
        %1621 = vmatprep.mubr.f32.mxu0 0.0
        %1622 = vmatmul.mubr.f32.gmra.mrb[0].mxu0 %v1553
        %v1623 = vpop.f32.mrb[0].mxu0
        %v1624 = vadd.f32 %v1545, %v1623
        %v1625 = vpop.f32.mrb[0].mxu0
        %1626 = vmatprep.mubr.f32.mxu0 0.0
        %1627 = vmatmul.mubr.f32.gmra.mrb[0].mxu0 %v1555
        %v1628 = vpop.f32.mrb[0].mxu0
        %v1629 = vadd.f32 %v1550, %v1628
        %v1630 = vpop.f32.mrb[0].mxu0
        %1631 = vdwg.mxu0
        %1632 = vset.pattern.permute.xlu0 2
        %1633 = vperm.xlu0 %1632, %v581
        %v1634 = vpop.permute.xlu0 %1633
        %1636 = vset.pattern.permute.xlu0 2
        %1637 = vperm.xlu0 %1636, %v582
        %v1638 = vpop.permute.xlu0 %1637
        %v1640 = vmul.f32 %v1634, %v766
        %v1641 = vmul.f32 %v1638, %v766
        %1642 = vset.pattern.permute.xlu0 2
        %1643 = vperm.xlu0 %1642, %v650
        %v1644 = vpop.permute.xlu0 %1643
        %1646 = vset.pattern.permute.xlu0 2
        %1647 = vperm.xlu0 %1646, %v655
        %v1648 = vpop.permute.xlu0 %1647
        %v1650 = vmul.f32 %v1644, %v782
        %v1651 = vmul.f32 %v1648, %v782
        %v1652 = vadd.f32 %v1640, %v1650
        %v1653 = vadd.f32 %v1641, %v1651
        %1654 = vset.pattern.permute.xlu0 2
        %1655 = vperm.xlu0 %1654, %v731
        %v1656 = vpop.permute.xlu0 %1655
        %1658 = vset.pattern.permute.xlu0 2
        %1659 = vperm.xlu0 %1658, %v736
        %v1660 = vpop.permute.xlu0 %1659
        %v1662 = vmul.f32 %v1656, %v800
        %v1663 = vmul.f32 %v1660, %v800
        %v1664 = vadd.f32 %v1652, %v1662
        %v1665 = vadd.f32 %v1653, %v1663
        %1668 = vst.msk [vmem:[#allocation2] sm:$0xff] %vm805, %v1471
        %1669 = vst.msk [vmem:[#allocation2 + $0x8] sm:$0xff] %vm805, %v1473
        %1670 = vmatprep.subr.mxu0 0.0
        %1671 = vmatpush1.msra.mxu0 %v1471
        %1672 = vmatprep.subr.mxu0 0.0
        %1673 = vmatpush1.msra.mxu0 %v1473
        %1674 = vmatprep.subr.mxu0 0.0
        %1675 = vmatpush1.msra.mxu0 0.0
        %1676 = vmatprep.subr.mxu0 0.0
        %1677 = vmatpush1.msra.mxu0 0.0
        %1678 = vmatprep.subr.mxu0 0.0
        %1679 = vmatpush1.msra.mxu0 0.0
        %1680 = vmatprep.subr.mxu0 0.0
        %1681 = vmatpush1.msra.mxu0 0.0
        %1682 = vmatprep.subr.mxu0 0.0
        %1683 = vmatpush1.msra.mxu0 0.0
        %1684 = vmatprep.subr.mxu0 0.0
        %1685 = vmatpush1.msra.mxu0 0.0
        %1686 = vmatprep.subr.mxu0 0.0
        %1687 = vmatpush1.msra.mxu0 0.0
        %1688 = vmatprep.subr.mxu0 0.0
        %1689 = vmatpush1.msra.mxu0 0.0
        %1690 = vmatprep.subr.mxu0 0.0
        %1691 = vmatpush1.msra.mxu0 0.0
        %1692 = vmatprep.subr.mxu0 0.0
        %1693 = vmatpush1.msra.mxu0 0.0
        %1694 = vmatprep.subr.mxu0 0.0
        %1695 = vmatpush1.msra.mxu0 0.0
        %1696 = vmatprep.subr.mxu0 0.0
        %1697 = vmatpush1.msra.mxu0 0.0
        %1698 = vmatprep.subr.mxu0 0.0
        %1699 = vmatpush1.msra.mxu0 0.0
        %1700 = vmatprep.subr.mxu0 0.0
        %1701 = vmatpush1.msra.mxu0 0.0
        %1702 = vmatprep.subr.mxu0 0.0
        %1703 = vmatpush1.msra.mxu0 0.0
        %1704 = vmatprep.subr.mxu0 0.0
        %1705 = vmatpush1.msra.mxu0 0.0
        %1706 = vmatprep.subr.mxu0 0.0
        %1707 = vmatpush1.msra.mxu0 0.0
        %1708 = vmatprep.subr.mxu0 0.0
        %1709 = vmatpush1.msra.mxu0 0.0
        %1710 = vmatprep.subr.mxu0 0.0
        %1711 = vmatpush1.msra.mxu0 0.0
        %1712 = vmatprep.subr.mxu0 0.0
        %1713 = vmatpush1.msra.mxu0 0.0
        %1714 = vmatprep.subr.mxu0 0.0
        %1715 = vmatpush1.msra.mxu0 0.0
        %1716 = vmatprep.subr.mxu0 0.0
        %1717 = vmatpush1.msra.mxu0 0.0
        %1718 = vmatprep.subr.mxu0 0.0
        %1719 = vmatpush1.msra.mxu0 0.0
        %1720 = vmatprep.subr.mxu0 0.0
        %1721 = vmatpush1.msra.mxu0 0.0
        %1722 = vmatprep.subr.mxu0 0.0
        %1723 = vmatpush1.msra.mxu0 0.0
        %1724 = vmatprep.subr.mxu0 0.0
        %1725 = vmatpush1.msra.mxu0 0.0
        %1726 = vmatprep.subr.mxu0 0.0
        %1727 = vmatpush1.msra.mxu0 0.0
        %1728 = vmatprep.subr.mxu0 0.0
        %1729 = vmatpush1.msra.mxu0 0.0
        %1730 = vmatprep.subr.mxu0 0.0
        %1731 = vmatpush1.msra.mxu0 0.0
        %1732 = vmatprep.subr.mxu0 0.0
        %1733 = vmatpush1.msra.mxu0 0.0
        %1734 = vmatprep.mubr.f32.mxu0 0.0
        %1735 = vmatmul.mubr.f32.gmra.mrb[0].mxu0 %v501
        %v1736 = vpop.f32.mrb[0].mxu0
        %v1737 = vadd.f32 0.0, %v1736
        %v1738 = vpop.f32.mrb[0].mxu0
        %1739 = vmatprep.mubr.f32.mxu0 0.0
        %1740 = vmatmul.mubr.f32.gmra.mrb[0].mxu0 %v504
        %v1741 = vpop.f32.mrb[0].mxu0
        %v1742 = vadd.f32 0.0, %v1741
        %v1743 = vpop.f32.mrb[0].mxu0
        %1744 = vdwg.mxu0
        %1747 = vrot.lane.b32.xlu0 %v1737, 32
        %v1748 = vpop.permute.xlu0 %1747
        %1749 = vrot.lane.b32.xlu0 %v1742, 32
        %v1750 = vpop.permute.xlu0 %1749
        %1753 = vst.msk [vmem:[#allocation2] sm:$0xff] %vm891, %v1748
        %1754 = vst.msk [vmem:[#allocation2 + $0x8] sm:$0xff] %vm891, %v1750
        %1755 = vmatprep.subr.mxu0 0.0
        %1756 = vmatpush1.msra.mxu0 %v1471
        %1757 = vmatprep.subr.mxu0 0.0
        %1758 = vmatpush1.msra.mxu0 %v1473
        %1759 = vmatprep.subr.mxu0 0.0
        %1760 = vmatpush1.msra.mxu0 0.0
        %1761 = vmatprep.subr.mxu0 0.0
        %1762 = vmatpush1.msra.mxu0 0.0
        %1763 = vmatprep.subr.mxu0 0.0
        %1764 = vmatpush1.msra.mxu0 0.0
        %1765 = vmatprep.subr.mxu0 0.0
        %1766 = vmatpush1.msra.mxu0 0.0
        %1767 = vmatprep.subr.mxu0 0.0
        %1768 = vmatpush1.msra.mxu0 0.0
        %1769 = vmatprep.subr.mxu0 0.0
        %1770 = vmatpush1.msra.mxu0 0.0
        %1771 = vmatprep.subr.mxu0 0.0
        %1772 = vmatpush1.msra.mxu0 0.0
        %1773 = vmatprep.subr.mxu0 0.0
        %1774 = vmatpush1.msra.mxu0 0.0
        %1775 = vmatprep.subr.mxu0 0.0
        %1776 = vmatpush1.msra.mxu0 0.0
        %1777 = vmatprep.subr.mxu0 0.0
        %1778 = vmatpush1.msra.mxu0 0.0
        %1779 = vmatprep.subr.mxu0 0.0
        %1780 = vmatpush1.msra.mxu0 0.0
        %1781 = vmatprep.subr.mxu0 0.0
        %1782 = vmatpush1.msra.mxu0 0.0
        %1783 = vmatprep.subr.mxu0 0.0
        %1784 = vmatpush1.msra.mxu0 0.0
        %1785 = vmatprep.subr.mxu0 0.0
        %1786 = vmatpush1.msra.mxu0 0.0
        %1787 = vmatprep.subr.mxu0 0.0
        %1788 = vmatpush1.msra.mxu0 0.0
        %1789 = vmatprep.subr.mxu0 0.0
        %1790 = vmatpush1.msra.mxu0 0.0
        %1791 = vmatprep.subr.mxu0 0.0
        %1792 = vmatpush1.msra.mxu0 0.0
        %1793 = vmatprep.subr.mxu0 0.0
        %1794 = vmatpush1.msra.mxu0 0.0
        %1795 = vmatprep.subr.mxu0 0.0
        %1796 = vmatpush1.msra.mxu0 0.0
        %1797 = vmatprep.subr.mxu0 0.0
        %1798 = vmatpush1.msra.mxu0 0.0
        %1799 = vmatprep.subr.mxu0 0.0
        %1800 = vmatpush1.msra.mxu0 0.0
        %1801 = vmatprep.subr.mxu0 0.0
        %1802 = vmatpush1.msra.mxu0 0.0
        %1803 = vmatprep.subr.mxu0 0.0
        %1804 = vmatpush1.msra.mxu0 0.0
        %1805 = vmatprep.subr.mxu0 0.0
        %1806 = vmatpush1.msra.mxu0 0.0
        %1807 = vmatprep.subr.mxu0 0.0
        %1808 = vmatpush1.msra.mxu0 0.0
        %1809 = vmatprep.subr.mxu0 0.0
        %1810 = vmatpush1.msra.mxu0 0.0
        %1811 = vmatprep.subr.mxu0 0.0
        %1812 = vmatpush1.msra.mxu0 0.0
        %1813 = vmatprep.subr.mxu0 0.0
        %1814 = vmatpush1.msra.mxu0 0.0
        %1815 = vmatprep.subr.mxu0 0.0
        %1816 = vmatpush1.msra.mxu0 0.0
        %1817 = vmatprep.subr.mxu0 0.0
        %1818 = vmatpush1.msra.mxu0 0.0
        %1819 = vmatprep.mubr.f32.mxu0 0.0
        %1820 = vmatmul.mubr.f32.gmra.mrb[0].mxu0 %v659
        %v1821 = vpop.f32.mrb[0].mxu0
        %v1822 = vadd.f32 0.0, %v1821
        %v1823 = vpop.f32.mrb[0].mxu0
        %1824 = vmatprep.mubr.f32.mxu0 0.0
        %1825 = vmatmul.mubr.f32.gmra.mrb[0].mxu0 %v662
        %v1826 = vpop.f32.mrb[0].mxu0
        %v1827 = vadd.f32 0.0, %v1826
        %v1828 = vpop.f32.mrb[0].mxu0
        %1829 = vdwg.mxu0
        %1832 = vrot.lane.b32.xlu0 %v1822, 64
        %v1833 = vpop.permute.xlu0 %1832
        %1834 = vrot.lane.b32.xlu0 %v1827, 64
        %v1835 = vpop.permute.xlu0 %1834
        %1838 = vst.msk [vmem:[#allocation2] sm:$0xff] %vm977, %v1833
        %1839 = vst.msk [vmem:[#allocation2 + $0x8] sm:$0xff] %vm977, %v1835
        %v1840 = vld [vmem:[#allocation2] sm:$0xff]
        %v1841 = vld [vmem:[#allocation2 + $0x8] sm:$0xff]
        %v1843 = vsel %vm982, %v1840, 0
        %v1846 = vsel %vm982, %v1841, 0
        %1848 = vmatprep.subr.mxu0 0.0
        %1849 = vmatpush1.msra.mxu0 %v740
        %1850 = vmatprep.subr.mxu0 0.0
        %1851 = vmatpush1.msra.mxu0 %v741
        %1852 = vmatprep.subr.mxu0 0.0
        %1853 = vmatpush1.msra.mxu0 %v742
        %1854 = vmatprep.subr.mxu0 0.0
        %1855 = vmatpush1.msra.mxu0 %v743
        %1856 = vmatprep.subr.mxu0 0.0
        %1857 = vmatpush1.msra.mxu0 %v744
        %1858 = vmatprep.subr.mxu0 0.0
        %1859 = vmatpush1.msra.mxu0 %v745
        %1860 = vmatprep.subr.mxu0 0.0
        %1861 = vmatpush1.msra.mxu0 %v746
        %1862 = vmatprep.subr.mxu0 0.0
        %1863 = vmatpush1.msra.mxu0 %v747
        %1864 = vmatprep.subr.mxu0 0.0
        %1865 = vmatpush1.msra.mxu0 %v748
        %1866 = vmatprep.subr.mxu0 0.0
        %1867 = vmatpush1.msra.mxu0 %v749
        %1868 = vmatprep.subr.mxu0 0.0
        %1869 = vmatpush1.msra.mxu0 %v750
        %1870 = vmatprep.subr.mxu0 0.0
        %1871 = vmatpush1.msra.mxu0 %v751
        %1872 = vmatprep.subr.mxu0 0.0
        %1873 = vmatpush1.msra.mxu0 0.0
        %1874 = vmatprep.subr.mxu0 0.0
        %1875 = vmatpush1.msra.mxu0 0.0
        %1876 = vmatprep.subr.mxu0 0.0
        %1877 = vmatpush1.msra.mxu0 0.0
        %1878 = vmatprep.subr.mxu0 0.0
        %1879 = vmatpush1.msra.mxu0 0.0
        %1880 = vmatprep.subr.mxu0 0.0
        %1881 = vmatpush1.msra.mxu0 0.0
        %1882 = vmatprep.subr.mxu0 0.0
        %1883 = vmatpush1.msra.mxu0 0.0
        %1884 = vmatprep.subr.mxu0 0.0
        %1885 = vmatpush1.msra.mxu0 0.0
        %1886 = vmatprep.subr.mxu0 0.0
        %1887 = vmatpush1.msra.mxu0 0.0
        %1888 = vmatprep.subr.mxu0 0.0
        %1889 = vmatpush1.msra.mxu0 0.0
        %1890 = vmatprep.subr.mxu0 0.0
        %1891 = vmatpush1.msra.mxu0 0.0
        %1892 = vmatprep.subr.mxu0 0.0
        %1893 = vmatpush1.msra.mxu0 0.0
        %1894 = vmatprep.subr.mxu0 0.0
        %1895 = vmatpush1.msra.mxu0 0.0
        %1896 = vmatprep.subr.mxu0 0.0
        %1897 = vmatpush1.msra.mxu0 0.0
        %1898 = vmatprep.subr.mxu0 0.0
        %1899 = vmatpush1.msra.mxu0 0.0
        %1900 = vmatprep.subr.mxu0 0.0
        %1901 = vmatpush1.msra.mxu0 0.0
        %1902 = vmatprep.subr.mxu0 0.0
        %1903 = vmatpush1.msra.mxu0 0.0
        %1904 = vmatprep.subr.mxu0 0.0
        %1905 = vmatpush1.msra.mxu0 0.0
        %1906 = vmatprep.subr.mxu0 0.0
        %1907 = vmatpush1.msra.mxu0 0.0
        %1908 = vmatprep.subr.mxu0 0.0
        %1909 = vmatpush1.msra.mxu0 0.0
        %1910 = vmatprep.subr.mxu0 0.0
        %1911 = vmatpush1.msra.mxu0 0.0
        %1912 = vmatprep.mubr.f32.mxu0 0.0
        %1913 = vmatmul.mubr.f32.gmra.mrb[0].mxu0 %v1843
        %v1914 = vpop.f32.mrb[0].mxu0
        %v1915 = vadd.f32 0.0, %v1914
        %v1916 = vpop.f32.mrb[0].mxu0
        %1917 = vmatprep.mubr.f32.mxu0 0.0
        %1918 = vmatmul.mubr.f32.gmra.mrb[0].mxu0 %v1846
        %v1919 = vpop.f32.mrb[0].mxu0
        %v1920 = vadd.f32 0.0, %v1919
        %v1921 = vpop.f32.mrb[0].mxu0
        %1922 = vdwg.mxu0
        %v1923 = vadd.f32 %v1664, %v1915
        %v1924 = vadd.f32 %v1665, %v1920
        %v1925 = vadd.f32 %v1923, %v1070
        %v1926 = vadd.f32 %v1924, %v1070
        %v1927 = vmul.f32 %v1925, 0.5
        %v1928 = vmul.f32 %v1926, 0.5
        %v1929 = vtanh.pop %v1927
        %v1930 = vtanh.pop %v1928
        %v1931 = vadd.f32 %v1929, 1.0
        %v1932 = vadd.f32 %v1930, 1.0
        %v1933 = vmul.f32 %v1931, 0.5
        %v1934 = vmul.f32 %v1932, 0.5
        %v1935 = vmul.f32 %v1449, %v1933
        %v1936 = vmul.f32 %v1450, %v1934
        %1939 = vrot.lane.b32.xlu0 %v1929, 96
        %v1940 = vpop.permute.xlu0 %1939
        %1941 = vrot.lane.b32.xlu0 %v1930, 96
        %v1942 = vpop.permute.xlu0 %1941
        %v1945 = vmul.f32 %v1933, %v1940
        %v1946 = vmul.f32 %v1934, %v1942
        %1949 = vrot.lane.b32.xlu0 %v1945, 64
        %v1950 = vpop.permute.xlu0 %1949
        %1951 = vrot.lane.b32.xlu0 %v1946, 64
        %v1952 = vpop.permute.xlu0 %1951
        %v1955 = vadd.f32 %v1935, %v1950
        %v1956 = vadd.f32 %v1936, %v1952
        %v1957 = vtanh.pop %v1955
        %v1958 = vtanh.pop %v1956
        %1961 = vrot.lane.b32.xlu0 %v1933, 96
        %v1962 = vpop.permute.xlu0 %1961
        %1963 = vrot.lane.b32.xlu0 %v1934, 96
        %v1964 = vpop.permute.xlu0 %1963
        %v1967 = vmul.f32 %v1957, %v1962
        %v1968 = vmul.f32 %v1958, %v1964
        %s1969 = scalar_lea.vmem [#allocation3], 64
        %v1970 = vld [vmem:[%s1969] sm:$0xff]
        %v1971 = vld [vmem:[%s1969 + $0x8] sm:$0xff]
        %v1972 = vld [vmem:[%s1969 + $0x10] sm:$0xff]
        %v1973 = vld [vmem:[%s1969 + $0x18] sm:$0xff]
        %1976 = vrot.lane.b32.xlu0 %v1967, 64
        %v1977 = vpop.permute.xlu0 %1976
        %1978 = vrot.lane.b32.xlu0 %v1968, 64
        %v1979 = vpop.permute.xlu0 %1978
        %v1980 = vsel %vm805, %v1977, 0
        %v1982 = vsel %vm805, %v1979, 0
        %1984 = vmatprep.subr.mxu0 0.0
        %1985 = vmatpush1.msra.mxu0 %v1970
        %1986 = vmatprep.subr.mxu0 0.0
        %1987 = vmatpush1.msra.mxu0 %v1971
        %1988 = vmatprep.subr.mxu0 0.0
        %1989 = vmatpush1.msra.mxu0 %v1972
        %1990 = vmatprep.subr.mxu0 0.0
        %1991 = vmatpush1.msra.mxu0 %v1973
        %1992 = vmatprep.subr.mxu0 0.0
        %1993 = vmatpush1.msra.mxu0 0.0
        %1994 = vmatprep.subr.mxu0 0.0
        %1995 = vmatpush1.msra.mxu0 0.0
        %1996 = vmatprep.subr.mxu0 0.0
        %1997 = vmatpush1.msra.mxu0 0.0
        %1998 = vmatprep.subr.mxu0 0.0
        %1999 = vmatpush1.msra.mxu0 0.0
        %2000 = vmatprep.subr.mxu0 0.0
        %2001 = vmatpush1.msra.mxu0 0.0
        %2002 = vmatprep.subr.mxu0 0.0
        %2003 = vmatpush1.msra.mxu0 0.0
        %2004 = vmatprep.subr.mxu0 0.0
        %2005 = vmatpush1.msra.mxu0 0.0
        %2006 = vmatprep.subr.mxu0 0.0
        %2007 = vmatpush1.msra.mxu0 0.0
        %2008 = vmatprep.subr.mxu0 0.0
        %2009 = vmatpush1.msra.mxu0 0.0
        %2010 = vmatprep.subr.mxu0 0.0
        %2011 = vmatpush1.msra.mxu0 0.0
        %2012 = vmatprep.subr.mxu0 0.0
        %2013 = vmatpush1.msra.mxu0 0.0
        %2014 = vmatprep.subr.mxu0 0.0
        %2015 = vmatpush1.msra.mxu0 0.0
        %2016 = vmatprep.subr.mxu0 0.0
        %2017 = vmatpush1.msra.mxu0 0.0
        %2018 = vmatprep.subr.mxu0 0.0
        %2019 = vmatpush1.msra.mxu0 0.0
        %2020 = vmatprep.subr.mxu0 0.0
        %2021 = vmatpush1.msra.mxu0 0.0
        %2022 = vmatprep.subr.mxu0 0.0
        %2023 = vmatpush1.msra.mxu0 0.0
        %2024 = vmatprep.subr.mxu0 0.0
        %2025 = vmatpush1.msra.mxu0 0.0
        %2026 = vmatprep.subr.mxu0 0.0
        %2027 = vmatpush1.msra.mxu0 0.0
        %2028 = vmatprep.subr.mxu0 0.0
        %2029 = vmatpush1.msra.mxu0 0.0
        %2030 = vmatprep.subr.mxu0 0.0
        %2031 = vmatpush1.msra.mxu0 0.0
        %2032 = vmatprep.subr.mxu0 0.0
        %2033 = vmatpush1.msra.mxu0 0.0
        %2034 = vmatprep.subr.mxu0 0.0
        %2035 = vmatpush1.msra.mxu0 0.0
        %2036 = vmatprep.subr.mxu0 0.0
        %2037 = vmatpush1.msra.mxu0 0.0
        %2038 = vmatprep.subr.mxu0 0.0
        %2039 = vmatpush1.msra.mxu0 0.0
        %2040 = vmatprep.subr.mxu0 0.0
        %2041 = vmatpush1.msra.mxu0 0.0
        %2042 = vmatprep.subr.mxu0 0.0
        %2043 = vmatpush1.msra.mxu0 0.0
        %2044 = vmatprep.subr.mxu0 0.0
        %2045 = vmatpush1.msra.mxu0 0.0
        %2046 = vmatprep.subr.mxu0 0.0
        %2047 = vmatpush1.msra.mxu0 0.0
        %2048 = vmatprep.mubr.f32.mxu0 0.0
        %2049 = vmatmul.mubr.f32.gmra.mrb[0].mxu0 %v1980
        %v2050 = vpop.f32.mrb[0].mxu0
        %v2051 = vadd.f32 0.0, %v2050
        %v2052 = vpop.f32.mrb[0].mxu0
        %2053 = vmatprep.mubr.f32.mxu0 0.0
        %2054 = vmatmul.mubr.f32.gmra.mrb[0].mxu0 %v1982
        %v2055 = vpop.f32.mrb[0].mxu0
        %v2056 = vadd.f32 0.0, %v2055
        %v2057 = vpop.f32.mrb[0].mxu0
        %2058 = vdwg.mxu0
        %v2059 = vadd.f32 %v1624, %v2051
        %v2060 = vadd.f32 %v1629, %v2056
        %2061 = vset.pattern.permute.xlu0 3
        %2062 = vperm.xlu0 %2061, %v581
        %v2063 = vpop.permute.xlu0 %2062
        %2065 = vset.pattern.permute.xlu0 3
        %2066 = vperm.xlu0 %2065, %v582
        %v2067 = vpop.permute.xlu0 %2066
        %v2069 = vmul.f32 %v2063, %v766
        %v2070 = vmul.f32 %v2067, %v766
        %2071 = vset.pattern.permute.xlu0 3
        %2072 = vperm.xlu0 %2071, %v650
        %v2073 = vpop.permute.xlu0 %2072
        %2075 = vset.pattern.permute.xlu0 3
        %2076 = vperm.xlu0 %2075, %v655
        %v2077 = vpop.permute.xlu0 %2076
        %v2079 = vmul.f32 %v2073, %v782
        %v2080 = vmul.f32 %v2077, %v782
        %v2081 = vadd.f32 %v2069, %v2079
        %v2082 = vadd.f32 %v2070, %v2080
        %2083 = vset.pattern.permute.xlu0 3
        %2084 = vperm.xlu0 %2083, %v731
        %v2085 = vpop.permute.xlu0 %2084
        %2087 = vset.pattern.permute.xlu0 3
        %2088 = vperm.xlu0 %2087, %v736
        %v2089 = vpop.permute.xlu0 %2088
        %v2091 = vmul.f32 %v2085, %v800
        %v2092 = vmul.f32 %v2089, %v800
        %v2093 = vadd.f32 %v2081, %v2091
        %v2094 = vadd.f32 %v2082, %v2092
        %2097 = vst.msk [vmem:[#allocation2] sm:$0xff] %vm805, %v1977
        %2098 = vst.msk [vmem:[#allocation2 + $0x8] sm:$0xff] %vm805, %v1979
        %2099 = vmatprep.subr.mxu0 0.0
        %2100 = vmatpush1.msra.mxu0 %v1977
        %2101 = vmatprep.subr.mxu0 0.0
        %2102 = vmatpush1.msra.mxu0 %v1979
        %2103 = vmatprep.subr.mxu0 0.0
        %2104 = vmatpush1.msra.mxu0 0.0
        %2105 = vmatprep.subr.mxu0 0.0
        %2106 = vmatpush1.msra.mxu0 0.0
        %2107 = vmatprep.subr.mxu0 0.0
        %2108 = vmatpush1.msra.mxu0 0.0
        %2109 = vmatprep.subr.mxu0 0.0
        %2110 = vmatpush1.msra.mxu0 0.0
        %2111 = vmatprep.subr.mxu0 0.0
        %2112 = vmatpush1.msra.mxu0 0.0
        %2113 = vmatprep.subr.mxu0 0.0
        %2114 = vmatpush1.msra.mxu0 0.0
        %2115 = vmatprep.subr.mxu0 0.0
        %2116 = vmatpush1.msra.mxu0 0.0
        %2117 = vmatprep.subr.mxu0 0.0
        %2118 = vmatpush1.msra.mxu0 0.0
        %2119 = vmatprep.subr.mxu0 0.0
        %2120 = vmatpush1.msra.mxu0 0.0
        %2121 = vmatprep.subr.mxu0 0.0
        %2122 = vmatpush1.msra.mxu0 0.0
        %2123 = vmatprep.subr.mxu0 0.0
        %2124 = vmatpush1.msra.mxu0 0.0
        %2125 = vmatprep.subr.mxu0 0.0
        %2126 = vmatpush1.msra.mxu0 0.0
        %2127 = vmatprep.subr.mxu0 0.0
        %2128 = vmatpush1.msra.mxu0 0.0
        %2129 = vmatprep.subr.mxu0 0.0
        %2130 = vmatpush1.msra.mxu0 0.0
        %2131 = vmatprep.subr.mxu0 0.0
        %2132 = vmatpush1.msra.mxu0 0.0
        %2133 = vmatprep.subr.mxu0 0.0
        %2134 = vmatpush1.msra.mxu0 0.0
        %2135 = vmatprep.subr.mxu0 0.0
        %2136 = vmatpush1.msra.mxu0 0.0
        %2137 = vmatprep.subr.mxu0 0.0
        %2138 = vmatpush1.msra.mxu0 0.0
        %2139 = vmatprep.subr.mxu0 0.0
        %2140 = vmatpush1.msra.mxu0 0.0
        %2141 = vmatprep.subr.mxu0 0.0
        %2142 = vmatpush1.msra.mxu0 0.0
        %2143 = vmatprep.subr.mxu0 0.0
        %2144 = vmatpush1.msra.mxu0 0.0
        %2145 = vmatprep.subr.mxu0 0.0
        %2146 = vmatpush1.msra.mxu0 0.0
        %2147 = vmatprep.subr.mxu0 0.0
        %2148 = vmatpush1.msra.mxu0 0.0
        %2149 = vmatprep.subr.mxu0 0.0
        %2150 = vmatpush1.msra.mxu0 0.0
        %2151 = vmatprep.subr.mxu0 0.0
        %2152 = vmatpush1.msra.mxu0 0.0
        %2153 = vmatprep.subr.mxu0 0.0
        %2154 = vmatpush1.msra.mxu0 0.0
        %2155 = vmatprep.subr.mxu0 0.0
        %2156 = vmatpush1.msra.mxu0 0.0
        %2157 = vmatprep.subr.mxu0 0.0
        %2158 = vmatpush1.msra.mxu0 0.0
        %2159 = vmatprep.subr.mxu0 0.0
        %2160 = vmatpush1.msra.mxu0 0.0
        %2161 = vmatprep.subr.mxu0 0.0
        %2162 = vmatpush1.msra.mxu0 0.0
        %2163 = vmatprep.mubr.f32.mxu0 0.0
        %2164 = vmatmul.mubr.f32.gmra.mrb[0].mxu0 %v501
        %v2165 = vpop.f32.mrb[0].mxu0
        %v2166 = vadd.f32 0.0, %v2165
        %v2167 = vpop.f32.mrb[0].mxu0
        %2168 = vmatprep.mubr.f32.mxu0 0.0
        %2169 = vmatmul.mubr.f32.gmra.mrb[0].mxu0 %v504
        %v2170 = vpop.f32.mrb[0].mxu0
        %v2171 = vadd.f32 0.0, %v2170
        %v2172 = vpop.f32.mrb[0].mxu0
        %2173 = vdwg.mxu0
        %2176 = vrot.lane.b32.xlu0 %v2166, 32
        %v2177 = vpop.permute.xlu0 %2176
        %2178 = vrot.lane.b32.xlu0 %v2171, 32
        %v2179 = vpop.permute.xlu0 %2178
        %2182 = vst.msk [vmem:[#allocation2] sm:$0xff] %vm891, %v2177
        %2183 = vst.msk [vmem:[#allocation2 + $0x8] sm:$0xff] %vm891, %v2179
        %2184 = vmatprep.subr.mxu0 0.0
        %2185 = vmatpush1.msra.mxu0 %v1977
        %2186 = vmatprep.subr.mxu0 0.0
        %2187 = vmatpush1.msra.mxu0 %v1979
        %2188 = vmatprep.subr.mxu0 0.0
        %2189 = vmatpush1.msra.mxu0 0.0
        %2190 = vmatprep.subr.mxu0 0.0
        %2191 = vmatpush1.msra.mxu0 0.0
        %2192 = vmatprep.subr.mxu0 0.0
        %2193 = vmatpush1.msra.mxu0 0.0
        %2194 = vmatprep.subr.mxu0 0.0
        %2195 = vmatpush1.msra.mxu0 0.0
        %2196 = vmatprep.subr.mxu0 0.0
        %2197 = vmatpush1.msra.mxu0 0.0
        %2198 = vmatprep.subr.mxu0 0.0
        %2199 = vmatpush1.msra.mxu0 0.0
        %2200 = vmatprep.subr.mxu0 0.0
        %2201 = vmatpush1.msra.mxu0 0.0
        %2202 = vmatprep.subr.mxu0 0.0
        %2203 = vmatpush1.msra.mxu0 0.0
        %2204 = vmatprep.subr.mxu0 0.0
        %2205 = vmatpush1.msra.mxu0 0.0
        %2206 = vmatprep.subr.mxu0 0.0
        %2207 = vmatpush1.msra.mxu0 0.0
        %2208 = vmatprep.subr.mxu0 0.0
        %2209 = vmatpush1.msra.mxu0 0.0
        %2210 = vmatprep.subr.mxu0 0.0
        %2211 = vmatpush1.msra.mxu0 0.0
        %2212 = vmatprep.subr.mxu0 0.0
        %2213 = vmatpush1.msra.mxu0 0.0
        %2214 = vmatprep.subr.mxu0 0.0
        %2215 = vmatpush1.msra.mxu0 0.0
        %2216 = vmatprep.subr.mxu0 0.0
        %2217 = vmatpush1.msra.mxu0 0.0
        %2218 = vmatprep.subr.mxu0 0.0
        %2219 = vmatpush1.msra.mxu0 0.0
        %2220 = vmatprep.subr.mxu0 0.0
        %2221 = vmatpush1.msra.mxu0 0.0
        %2222 = vmatprep.subr.mxu0 0.0
        %2223 = vmatpush1.msra.mxu0 0.0
        %2224 = vmatprep.subr.mxu0 0.0
        %2225 = vmatpush1.msra.mxu0 0.0
        %2226 = vmatprep.subr.mxu0 0.0
        %2227 = vmatpush1.msra.mxu0 0.0
        %2228 = vmatprep.subr.mxu0 0.0
        %2229 = vmatpush1.msra.mxu0 0.0
        %2230 = vmatprep.subr.mxu0 0.0
        %2231 = vmatpush1.msra.mxu0 0.0
        %2232 = vmatprep.subr.mxu0 0.0
        %2233 = vmatpush1.msra.mxu0 0.0
        %2234 = vmatprep.subr.mxu0 0.0
        %2235 = vmatpush1.msra.mxu0 0.0
        %2236 = vmatprep.subr.mxu0 0.0
        %2237 = vmatpush1.msra.mxu0 0.0
        %2238 = vmatprep.subr.mxu0 0.0
        %2239 = vmatpush1.msra.mxu0 0.0
        %2240 = vmatprep.subr.mxu0 0.0
        %2241 = vmatpush1.msra.mxu0 0.0
        %2242 = vmatprep.subr.mxu0 0.0
        %2243 = vmatpush1.msra.mxu0 0.0
        %2244 = vmatprep.subr.mxu0 0.0
        %2245 = vmatpush1.msra.mxu0 0.0
        %2246 = vmatprep.subr.mxu0 0.0
        %2247 = vmatpush1.msra.mxu0 0.0
        %2248 = vmatprep.mubr.f32.mxu0 0.0
        %2249 = vmatmul.mubr.f32.gmra.mrb[0].mxu0 %v659
        %v2250 = vpop.f32.mrb[0].mxu0
        %v2251 = vadd.f32 0.0, %v2250
        %v2252 = vpop.f32.mrb[0].mxu0
        %2253 = vmatprep.mubr.f32.mxu0 0.0
        %2254 = vmatmul.mubr.f32.gmra.mrb[0].mxu0 %v662
        %v2255 = vpop.f32.mrb[0].mxu0
        %v2256 = vadd.f32 0.0, %v2255
        %v2257 = vpop.f32.mrb[0].mxu0
        %2258 = vdwg.mxu0
        %2261 = vrot.lane.b32.xlu0 %v2251, 64
        %v2262 = vpop.permute.xlu0 %2261
        %2263 = vrot.lane.b32.xlu0 %v2256, 64
        %v2264 = vpop.permute.xlu0 %2263
        %2267 = vst.msk [vmem:[#allocation2] sm:$0xff] %vm977, %v2262
        %2268 = vst.msk [vmem:[#allocation2 + $0x8] sm:$0xff] %vm977, %v2264
        %v2269 = vld [vmem:[#allocation2] sm:$0xff]
        %v2270 = vld [vmem:[#allocation2 + $0x8] sm:$0xff]
        %v2272 = vsel %vm982, %v2269, 0
        %v2275 = vsel %vm982, %v2270, 0
        %2277 = vmatprep.subr.mxu0 0.0
        %2278 = vmatpush1.msra.mxu0 %v740
        %2279 = vmatprep.subr.mxu0 0.0
        %2280 = vmatpush1.msra.mxu0 %v741
        %2281 = vmatprep.subr.mxu0 0.0
        %2282 = vmatpush1.msra.mxu0 %v742
        %2283 = vmatprep.subr.mxu0 0.0
        %2284 = vmatpush1.msra.mxu0 %v743
        %2285 = vmatprep.subr.mxu0 0.0
        %2286 = vmatpush1.msra.mxu0 %v744
        %2287 = vmatprep.subr.mxu0 0.0
        %2288 = vmatpush1.msra.mxu0 %v745
        %2289 = vmatprep.subr.mxu0 0.0
        %2290 = vmatpush1.msra.mxu0 %v746
        %2291 = vmatprep.subr.mxu0 0.0
        %2292 = vmatpush1.msra.mxu0 %v747
        %2293 = vmatprep.subr.mxu0 0.0
        %2294 = vmatpush1.msra.mxu0 %v748
        %2295 = vmatprep.subr.mxu0 0.0
        %2296 = vmatpush1.msra.mxu0 %v749
        %2297 = vmatprep.subr.mxu0 0.0
        %2298 = vmatpush1.msra.mxu0 %v750
        %2299 = vmatprep.subr.mxu0 0.0
        %2300 = vmatpush1.msra.mxu0 %v751
        %2301 = vmatprep.subr.mxu0 0.0
        %2302 = vmatpush1.msra.mxu0 0.0
        %2303 = vmatprep.subr.mxu0 0.0
        %2304 = vmatpush1.msra.mxu0 0.0
        %2305 = vmatprep.subr.mxu0 0.0
        %2306 = vmatpush1.msra.mxu0 0.0
        %2307 = vmatprep.subr.mxu0 0.0
        %2308 = vmatpush1.msra.mxu0 0.0
        %2309 = vmatprep.subr.mxu0 0.0
        %2310 = vmatpush1.msra.mxu0 0.0
        %2311 = vmatprep.subr.mxu0 0.0
        %2312 = vmatpush1.msra.mxu0 0.0
        %2313 = vmatprep.subr.mxu0 0.0
        %2314 = vmatpush1.msra.mxu0 0.0
        %2315 = vmatprep.subr.mxu0 0.0
        %2316 = vmatpush1.msra.mxu0 0.0
        %2317 = vmatprep.subr.mxu0 0.0
        %2318 = vmatpush1.msra.mxu0 0.0
        %2319 = vmatprep.subr.mxu0 0.0
        %2320 = vmatpush1.msra.mxu0 0.0
        %2321 = vmatprep.subr.mxu0 0.0
        %2322 = vmatpush1.msra.mxu0 0.0
        %2323 = vmatprep.subr.mxu0 0.0
        %2324 = vmatpush1.msra.mxu0 0.0
        %2325 = vmatprep.subr.mxu0 0.0
        %2326 = vmatpush1.msra.mxu0 0.0
        %2327 = vmatprep.subr.mxu0 0.0
        %2328 = vmatpush1.msra.mxu0 0.0
        %2329 = vmatprep.subr.mxu0 0.0
        %2330 = vmatpush1.msra.mxu0 0.0
        %2331 = vmatprep.subr.mxu0 0.0
        %2332 = vmatpush1.msra.mxu0 0.0
        %2333 = vmatprep.subr.mxu0 0.0
        %2334 = vmatpush1.msra.mxu0 0.0
        %2335 = vmatprep.subr.mxu0 0.0
        %2336 = vmatpush1.msra.mxu0 0.0
        %2337 = vmatprep.subr.mxu0 0.0
        %2338 = vmatpush1.msra.mxu0 0.0
        %2339 = vmatprep.subr.mxu0 0.0
        %2340 = vmatpush1.msra.mxu0 0.0
        %2341 = vmatprep.mubr.f32.mxu0 0.0
        %2342 = vmatmul.mubr.f32.gmra.mrb[0].mxu0 %v2272
        %v2343 = vpop.f32.mrb[0].mxu0
        %v2344 = vadd.f32 0.0, %v2343
        %v2345 = vpop.f32.mrb[0].mxu0
        %2346 = vmatprep.mubr.f32.mxu0 0.0
        %2347 = vmatmul.mubr.f32.gmra.mrb[0].mxu0 %v2275
        %v2348 = vpop.f32.mrb[0].mxu0
        %v2349 = vadd.f32 0.0, %v2348
        %v2350 = vpop.f32.mrb[0].mxu0
        %2351 = vdwg.mxu0
        %v2352 = vadd.f32 %v2093, %v2344
        %v2353 = vadd.f32 %v2094, %v2349
        %v2354 = vadd.f32 %v2352, %v1070
        %v2355 = vadd.f32 %v2353, %v1070
        %v2356 = vmul.f32 %v2354, 0.5
        %v2357 = vmul.f32 %v2355, 0.5
        %v2358 = vtanh.pop %v2356
        %v2359 = vtanh.pop %v2357
        %v2360 = vadd.f32 %v2358, 1.0
        %v2361 = vadd.f32 %v2359, 1.0
        %v2362 = vmul.f32 %v2360, 0.5
        %v2363 = vmul.f32 %v2361, 0.5
        %v2364 = vmul.f32 %v1955, %v2362
        %v2365 = vmul.f32 %v1956, %v2363
        %2368 = vrot.lane.b32.xlu0 %v2358, 96
        %v2369 = vpop.permute.xlu0 %2368
        %2370 = vrot.lane.b32.xlu0 %v2359, 96
        %v2371 = vpop.permute.xlu0 %2370
        %v2374 = vmul.f32 %v2362, %v2369
        %v2375 = vmul.f32 %v2363, %v2371
        %2378 = vrot.lane.b32.xlu0 %v2374, 64
        %v2379 = vpop.permute.xlu0 %2378
        %2380 = vrot.lane.b32.xlu0 %v2375, 64
        %v2381 = vpop.permute.xlu0 %2380
        %v2384 = vadd.f32 %v2364, %v2379
        %v2385 = vadd.f32 %v2365, %v2381
        %v2386 = vtanh.pop %v2384
        %v2387 = vtanh.pop %v2385
        %2390 = vrot.lane.b32.xlu0 %v2362, 96
        %v2391 = vpop.permute.xlu0 %2390
        %2392 = vrot.lane.b32.xlu0 %v2363, 96
        %v2393 = vpop.permute.xlu0 %2392
        %v2396 = vmul.f32 %v2386, %v2391
        %v2397 = vmul.f32 %v2387, %v2393
        %s2398 = scalar_lea.vmem [#allocation3], 96
        %v2399 = vld [vmem:[%s2398] sm:$0xff]
        %v2400 = vld [vmem:[%s2398 + $0x8] sm:$0xff]
        %v2401 = vld [vmem:[%s2398 + $0x10] sm:$0xff]
        %v2402 = vld [vmem:[%s2398 + $0x18] sm:$0xff]
        %2405 = vrot.lane.b32.xlu0 %v2396, 64
        %v2406 = vpop.permute.xlu0 %2405
        %2407 = vrot.lane.b32.xlu0 %v2397, 64
        %v2408 = vpop.permute.xlu0 %2407
        %v2409 = vsel %vm805, %v2406, 0
        %v2411 = vsel %vm805, %v2408, 0
        %2413 = vmatprep.subr.mxu0 0.0
        %2414 = vmatpush1.msra.mxu0 %v2399
        %2415 = vmatprep.subr.mxu0 0.0
        %2416 = vmatpush1.msra.mxu0 %v2400
        %2417 = vmatprep.subr.mxu0 0.0
        %2418 = vmatpush1.msra.mxu0 %v2401
        %2419 = vmatprep.subr.mxu0 0.0
        %2420 = vmatpush1.msra.mxu0 %v2402
        %2421 = vmatprep.subr.mxu0 0.0
        %2422 = vmatpush1.msra.mxu0 0.0
        %2423 = vmatprep.subr.mxu0 0.0
        %2424 = vmatpush1.msra.mxu0 0.0
        %2425 = vmatprep.subr.mxu0 0.0
        %2426 = vmatpush1.msra.mxu0 0.0
        %2427 = vmatprep.subr.mxu0 0.0
        %2428 = vmatpush1.msra.mxu0 0.0
        %2429 = vmatprep.subr.mxu0 0.0
        %2430 = vmatpush1.msra.mxu0 0.0
        %2431 = vmatprep.subr.mxu0 0.0
        %2432 = vmatpush1.msra.mxu0 0.0
        %2433 = vmatprep.subr.mxu0 0.0
        %2434 = vmatpush1.msra.mxu0 0.0
        %2435 = vmatprep.subr.mxu0 0.0
        %2436 = vmatpush1.msra.mxu0 0.0
        %2437 = vmatprep.subr.mxu0 0.0
        %2438 = vmatpush1.msra.mxu0 0.0
        %2439 = vmatprep.subr.mxu0 0.0
        %2440 = vmatpush1.msra.mxu0 0.0
        %2441 = vmatprep.subr.mxu0 0.0
        %2442 = vmatpush1.msra.mxu0 0.0
        %2443 = vmatprep.subr.mxu0 0.0
        %2444 = vmatpush1.msra.mxu0 0.0
        %2445 = vmatprep.subr.mxu0 0.0
        %2446 = vmatpush1.msra.mxu0 0.0
        %2447 = vmatprep.subr.mxu0 0.0
        %2448 = vmatpush1.msra.mxu0 0.0
        %2449 = vmatprep.subr.mxu0 0.0
        %2450 = vmatpush1.msra.mxu0 0.0
        %2451 = vmatprep.subr.mxu0 0.0
        %2452 = vmatpush1.msra.mxu0 0.0
        %2453 = vmatprep.subr.mxu0 0.0
        %2454 = vmatpush1.msra.mxu0 0.0
        %2455 = vmatprep.subr.mxu0 0.0
        %2456 = vmatpush1.msra.mxu0 0.0
        %2457 = vmatprep.subr.mxu0 0.0
        %2458 = vmatpush1.msra.mxu0 0.0
        %2459 = vmatprep.subr.mxu0 0.0
        %2460 = vmatpush1.msra.mxu0 0.0
        %2461 = vmatprep.subr.mxu0 0.0
        %2462 = vmatpush1.msra.mxu0 0.0
        %2463 = vmatprep.subr.mxu0 0.0
        %2464 = vmatpush1.msra.mxu0 0.0
        %2465 = vmatprep.subr.mxu0 0.0
        %2466 = vmatpush1.msra.mxu0 0.0
        %2467 = vmatprep.subr.mxu0 0.0
        %2468 = vmatpush1.msra.mxu0 0.0
        %2469 = vmatprep.subr.mxu0 0.0
        %2470 = vmatpush1.msra.mxu0 0.0
        %2471 = vmatprep.subr.mxu0 0.0
        %2472 = vmatpush1.msra.mxu0 0.0
        %2473 = vmatprep.subr.mxu0 0.0
        %2474 = vmatpush1.msra.mxu0 0.0
        %2475 = vmatprep.subr.mxu0 0.0
        %2476 = vmatpush1.msra.mxu0 0.0
        %2477 = vmatprep.mubr.f32.mxu0 0.0
        %2478 = vmatmul.mubr.f32.gmra.mrb[0].mxu0 %v2409
        %v2479 = vpop.f32.mrb[0].mxu0
        %v2480 = vadd.f32 0.0, %v2479
        %v2481 = vpop.f32.mrb[0].mxu0
        %2482 = vmatprep.mubr.f32.mxu0 0.0
        %2483 = vmatmul.mubr.f32.gmra.mrb[0].mxu0 %v2411
        %v2484 = vpop.f32.mrb[0].mxu0
        %v2485 = vadd.f32 0.0, %v2484
        %v2486 = vpop.f32.mrb[0].mxu0
        %2487 = vdwg.mxu0
        %v2488 = vadd.f32 %v2059, %v2480
        %v2489 = vadd.f32 %v2060, %v2485
        %2490 = vset.pattern.permute.xlu0 4
        %2491 = vperm.xlu0 %2490, %v581
        %v2492 = vpop.permute.xlu0 %2491
        %2494 = vset.pattern.permute.xlu0 4
        %2495 = vperm.xlu0 %2494, %v582
        %v2496 = vpop.permute.xlu0 %2495
        %v2498 = vmul.f32 %v2492, %v766
        %v2499 = vmul.f32 %v2496, %v766
        %2500 = vset.pattern.permute.xlu0 4
        %2501 = vperm.xlu0 %2500, %v650
        %v2502 = vpop.permute.xlu0 %2501
        %2504 = vset.pattern.permute.xlu0 4
        %2505 = vperm.xlu0 %2504, %v655
        %v2506 = vpop.permute.xlu0 %2505
        %v2508 = vmul.f32 %v2502, %v782
        %v2509 = vmul.f32 %v2506, %v782
        %v2510 = vadd.f32 %v2498, %v2508
        %v2511 = vadd.f32 %v2499, %v2509
        %2512 = vset.pattern.permute.xlu0 4
        %2513 = vperm.xlu0 %2512, %v731
        %v2514 = vpop.permute.xlu0 %2513
        %2516 = vset.pattern.permute.xlu0 4
        %2517 = vperm.xlu0 %2516, %v736
        %v2518 = vpop.permute.xlu0 %2517
        %v2520 = vmul.f32 %v2514, %v800
        %v2521 = vmul.f32 %v2518, %v800
        %v2522 = vadd.f32 %v2510, %v2520
        %v2523 = vadd.f32 %v2511, %v2521
        %2526 = vst.msk [vmem:[#allocation2] sm:$0xff] %vm805, %v2406
        %2527 = vst.msk [vmem:[#allocation2 + $0x8] sm:$0xff] %vm805, %v2408
        %2528 = vmatprep.subr.mxu0 0.0
        %2529 = vmatpush1.msra.mxu0 %v2406
        %2530 = vmatprep.subr.mxu0 0.0
        %2531 = vmatpush1.msra.mxu0 %v2408
        %2532 = vmatprep.subr.mxu0 0.0
        %2533 = vmatpush1.msra.mxu0 0.0
        %2534 = vmatprep.subr.mxu0 0.0
        %2535 = vmatpush1.msra.mxu0 0.0
        %2536 = vmatprep.subr.mxu0 0.0
        %2537 = vmatpush1.msra.mxu0 0.0
        %2538 = vmatprep.subr.mxu0 0.0
        %2539 = vmatpush1.msra.mxu0 0.0
        %2540 = vmatprep.subr.mxu0 0.0
        %2541 = vmatpush1.msra.mxu0 0.0
        %2542 = vmatprep.subr.mxu0 0.0
        %2543 = vmatpush1.msra.mxu0 0.0
        %2544 = vmatprep.subr.mxu0 0.0
        %2545 = vmatpush1.msra.mxu0 0.0
        %2546 = vmatprep.subr.mxu0 0.0
        %2547 = vmatpush1.msra.mxu0 0.0
        %2548 = vmatprep.subr.mxu0 0.0
        %2549 = vmatpush1.msra.mxu0 0.0
        %2550 = vmatprep.subr.mxu0 0.0
        %2551 = vmatpush1.msra.mxu0 0.0
        %2552 = vmatprep.subr.mxu0 0.0
        %2553 = vmatpush1.msra.mxu0 0.0
        %2554 = vmatprep.subr.mxu0 0.0
        %2555 = vmatpush1.msra.mxu0 0.0
        %2556 = vmatprep.subr.mxu0 0.0
        %2557 = vmatpush1.msra.mxu0 0.0
        %2558 = vmatprep.subr.mxu0 0.0
        %2559 = vmatpush1.msra.mxu0 0.0
        %2560 = vmatprep.subr.mxu0 0.0
        %2561 = vmatpush1.msra.mxu0 0.0
        %2562 = vmatprep.subr.mxu0 0.0
        %2563 = vmatpush1.msra.mxu0 0.0
        %2564 = vmatprep.subr.mxu0 0.0
        %2565 = vmatpush1.msra.mxu0 0.0
        %2566 = vmatprep.subr.mxu0 0.0
        %2567 = vmatpush1.msra.mxu0 0.0
        %2568 = vmatprep.subr.mxu0 0.0
        %2569 = vmatpush1.msra.mxu0 0.0
        %2570 = vmatprep.subr.mxu0 0.0
        %2571 = vmatpush1.msra.mxu0 0.0
        %2572 = vmatprep.subr.mxu0 0.0
        %2573 = vmatpush1.msra.mxu0 0.0
        %2574 = vmatprep.subr.mxu0 0.0
        %2575 = vmatpush1.msra.mxu0 0.0
        %2576 = vmatprep.subr.mxu0 0.0
        %2577 = vmatpush1.msra.mxu0 0.0
        %2578 = vmatprep.subr.mxu0 0.0
        %2579 = vmatpush1.msra.mxu0 0.0
        %2580 = vmatprep.subr.mxu0 0.0
        %2581 = vmatpush1.msra.mxu0 0.0
        %2582 = vmatprep.subr.mxu0 0.0
        %2583 = vmatpush1.msra.mxu0 0.0
        %2584 = vmatprep.subr.mxu0 0.0
        %2585 = vmatpush1.msra.mxu0 0.0
        %2586 = vmatprep.subr.mxu0 0.0
        %2587 = vmatpush1.msra.mxu0 0.0
        %2588 = vmatprep.subr.mxu0 0.0
        %2589 = vmatpush1.msra.mxu0 0.0
        %2590 = vmatprep.subr.mxu0 0.0
        %2591 = vmatpush1.msra.mxu0 0.0
        %2592 = vmatprep.mubr.f32.mxu0 0.0
        %2593 = vmatmul.mubr.f32.gmra.mrb[0].mxu0 %v501
        %v2594 = vpop.f32.mrb[0].mxu0
        %v2595 = vadd.f32 0.0, %v2594
        %v2596 = vpop.f32.mrb[0].mxu0
        %2597 = vmatprep.mubr.f32.mxu0 0.0
        %2598 = vmatmul.mubr.f32.gmra.mrb[0].mxu0 %v504
        %v2599 = vpop.f32.mrb[0].mxu0
        %v2600 = vadd.f32 0.0, %v2599
        %v2601 = vpop.f32.mrb[0].mxu0
        %2602 = vdwg.mxu0
        %2605 = vrot.lane.b32.xlu0 %v2595, 32
        %v2606 = vpop.permute.xlu0 %2605
        %2607 = vrot.lane.b32.xlu0 %v2600, 32
        %v2608 = vpop.permute.xlu0 %2607
        %2611 = vst.msk [vmem:[#allocation2] sm:$0xff] %vm891, %v2606
        %2612 = vst.msk [vmem:[#allocation2 + $0x8] sm:$0xff] %vm891, %v2608
        %2613 = vmatprep.subr.mxu0 0.0
        %2614 = vmatpush1.msra.mxu0 %v2406
        %2615 = vmatprep.subr.mxu0 0.0
        %2616 = vmatpush1.msra.mxu0 %v2408
        %2617 = vmatprep.subr.mxu0 0.0
        %2618 = vmatpush1.msra.mxu0 0.0
        %2619 = vmatprep.subr.mxu0 0.0
        %2620 = vmatpush1.msra.mxu0 0.0
        %2621 = vmatprep.subr.mxu0 0.0
        %2622 = vmatpush1.msra.mxu0 0.0
        %2623 = vmatprep.subr.mxu0 0.0
        %2624 = vmatpush1.msra.mxu0 0.0
        %2625 = vmatprep.subr.mxu0 0.0
        %2626 = vmatpush1.msra.mxu0 0.0
        %2627 = vmatprep.subr.mxu0 0.0
        %2628 = vmatpush1.msra.mxu0 0.0
        %2629 = vmatprep.subr.mxu0 0.0
        %2630 = vmatpush1.msra.mxu0 0.0
        %2631 = vmatprep.subr.mxu0 0.0
        %2632 = vmatpush1.msra.mxu0 0.0
        %2633 = vmatprep.subr.mxu0 0.0
        %2634 = vmatpush1.msra.mxu0 0.0
        %2635 = vmatprep.subr.mxu0 0.0
        %2636 = vmatpush1.msra.mxu0 0.0
        %2637 = vmatprep.subr.mxu0 0.0
        %2638 = vmatpush1.msra.mxu0 0.0
        %2639 = vmatprep.subr.mxu0 0.0
        %2640 = vmatpush1.msra.mxu0 0.0
        %2641 = vmatprep.subr.mxu0 0.0
        %2642 = vmatpush1.msra.mxu0 0.0
        %2643 = vmatprep.subr.mxu0 0.0
        %2644 = vmatpush1.msra.mxu0 0.0
        %2645 = vmatprep.subr.mxu0 0.0
        %2646 = vmatpush1.msra.mxu0 0.0
        %2647 = vmatprep.subr.mxu0 0.0
        %2648 = vmatpush1.msra.mxu0 0.0
        %2649 = vmatprep.subr.mxu0 0.0
        %2650 = vmatpush1.msra.mxu0 0.0
        %2651 = vmatprep.subr.mxu0 0.0
        %2652 = vmatpush1.msra.mxu0 0.0
        %2653 = vmatprep.subr.mxu0 0.0
        %2654 = vmatpush1.msra.mxu0 0.0
        %2655 = vmatprep.subr.mxu0 0.0
        %2656 = vmatpush1.msra.mxu0 0.0
        %2657 = vmatprep.subr.mxu0 0.0
        %2658 = vmatpush1.msra.mxu0 0.0
        %2659 = vmatprep.subr.mxu0 0.0
        %2660 = vmatpush1.msra.mxu0 0.0
        %2661 = vmatprep.subr.mxu0 0.0
        %2662 = vmatpush1.msra.mxu0 0.0
        %2663 = vmatprep.subr.mxu0 0.0
        %2664 = vmatpush1.msra.mxu0 0.0
        %2665 = vmatprep.subr.mxu0 0.0
        %2666 = vmatpush1.msra.mxu0 0.0
        %2667 = vmatprep.subr.mxu0 0.0
        %2668 = vmatpush1.msra.mxu0 0.0
        %2669 = vmatprep.subr.mxu0 0.0
        %2670 = vmatpush1.msra.mxu0 0.0
        %2671 = vmatprep.subr.mxu0 0.0
        %2672 = vmatpush1.msra.mxu0 0.0
        %2673 = vmatprep.subr.mxu0 0.0
        %2674 = vmatpush1.msra.mxu0 0.0
        %2675 = vmatprep.subr.mxu0 0.0
        %2676 = vmatpush1.msra.mxu0 0.0
        %2677 = vmatprep.mubr.f32.mxu0 0.0
        %2678 = vmatmul.mubr.f32.gmra.mrb[0].mxu0 %v659
        %v2679 = vpop.f32.mrb[0].mxu0
        %v2680 = vadd.f32 0.0, %v2679
        %v2681 = vpop.f32.mrb[0].mxu0
        %2682 = vmatprep.mubr.f32.mxu0 0.0
        %2683 = vmatmul.mubr.f32.gmra.mrb[0].mxu0 %v662
        %v2684 = vpop.f32.mrb[0].mxu0
        %v2685 = vadd.f32 0.0, %v2684
        %v2686 = vpop.f32.mrb[0].mxu0
        %2687 = vdwg.mxu0
        %2690 = vrot.lane.b32.xlu0 %v2680, 64
        %v2691 = vpop.permute.xlu0 %2690
        %2692 = vrot.lane.b32.xlu0 %v2685, 64
        %v2693 = vpop.permute.xlu0 %2692
        %2696 = vst.msk [vmem:[#allocation2] sm:$0xff] %vm977, %v2691
        %2697 = vst.msk [vmem:[#allocation2 + $0x8] sm:$0xff] %vm977, %v2693
        %v2698 = vld [vmem:[#allocation2] sm:$0xff]
        %v2699 = vld [vmem:[#allocation2 + $0x8] sm:$0xff]
        %v2701 = vsel %vm982, %v2698, 0
        %v2704 = vsel %vm982, %v2699, 0
        %2706 = vmatprep.subr.mxu0 0.0
        %2707 = vmatpush1.msra.mxu0 %v740
        %2708 = vmatprep.subr.mxu0 0.0
        %2709 = vmatpush1.msra.mxu0 %v741
        %2710 = vmatprep.subr.mxu0 0.0
        %2711 = vmatpush1.msra.mxu0 %v742
        %2712 = vmatprep.subr.mxu0 0.0
        %2713 = vmatpush1.msra.mxu0 %v743
        %2714 = vmatprep.subr.mxu0 0.0
        %2715 = vmatpush1.msra.mxu0 %v744
        %2716 = vmatprep.subr.mxu0 0.0
        %2717 = vmatpush1.msra.mxu0 %v745
        %2718 = vmatprep.subr.mxu0 0.0
        %2719 = vmatpush1.msra.mxu0 %v746
        %2720 = vmatprep.subr.mxu0 0.0
        %2721 = vmatpush1.msra.mxu0 %v747
        %2722 = vmatprep.subr.mxu0 0.0
        %2723 = vmatpush1.msra.mxu0 %v748
        %2724 = vmatprep.subr.mxu0 0.0
        %2725 = vmatpush1.msra.mxu0 %v749
        %2726 = vmatprep.subr.mxu0 0.0
        %2727 = vmatpush1.msra.mxu0 %v750
        %2728 = vmatprep.subr.mxu0 0.0
        %2729 = vmatpush1.msra.mxu0 %v751
        %2730 = vmatprep.subr.mxu0 0.0
        %2731 = vmatpush1.msra.mxu0 0.0
        %2732 = vmatprep.subr.mxu0 0.0
        %2733 = vmatpush1.msra.mxu0 0.0
        %2734 = vmatprep.subr.mxu0 0.0
        %2735 = vmatpush1.msra.mxu0 0.0
        %2736 = vmatprep.subr.mxu0 0.0
        %2737 = vmatpush1.msra.mxu0 0.0
        %2738 = vmatprep.subr.mxu0 0.0
        %2739 = vmatpush1.msra.mxu0 0.0
        %2740 = vmatprep.subr.mxu0 0.0
        %2741 = vmatpush1.msra.mxu0 0.0
        %2742 = vmatprep.subr.mxu0 0.0
        %2743 = vmatpush1.msra.mxu0 0.0
        %2744 = vmatprep.subr.mxu0 0.0
        %2745 = vmatpush1.msra.mxu0 0.0
        %2746 = vmatprep.subr.mxu0 0.0
        %2747 = vmatpush1.msra.mxu0 0.0
        %2748 = vmatprep.subr.mxu0 0.0
        %2749 = vmatpush1.msra.mxu0 0.0
        %2750 = vmatprep.subr.mxu0 0.0
        %2751 = vmatpush1.msra.mxu0 0.0
        %2752 = vmatprep.subr.mxu0 0.0
        %2753 = vmatpush1.msra.mxu0 0.0
        %2754 = vmatprep.subr.mxu0 0.0
        %2755 = vmatpush1.msra.mxu0 0.0
        %2756 = vmatprep.subr.mxu0 0.0
        %2757 = vmatpush1.msra.mxu0 0.0
        %2758 = vmatprep.subr.mxu0 0.0
        %2759 = vmatpush1.msra.mxu0 0.0
        %2760 = vmatprep.subr.mxu0 0.0
        %2761 = vmatpush1.msra.mxu0 0.0
        %2762 = vmatprep.subr.mxu0 0.0
        %2763 = vmatpush1.msra.mxu0 0.0
        %2764 = vmatprep.subr.mxu0 0.0
        %2765 = vmatpush1.msra.mxu0 0.0
        %2766 = vmatprep.subr.mxu0 0.0
        %2767 = vmatpush1.msra.mxu0 0.0
        %2768 = vmatprep.subr.mxu0 0.0
        %2769 = vmatpush1.msra.mxu0 0.0
        %2770 = vmatprep.mubr.f32.mxu0 0.0
        %2771 = vmatmul.mubr.f32.gmra.mrb[0].mxu0 %v2701
        %v2772 = vpop.f32.mrb[0].mxu0
        %v2773 = vadd.f32 0.0, %v2772
        %v2774 = vpop.f32.mrb[0].mxu0
        %2775 = vmatprep.mubr.f32.mxu0 0.0
        %2776 = vmatmul.mubr.f32.gmra.mrb[0].mxu0 %v2704
        %v2777 = vpop.f32.mrb[0].mxu0
        %v2778 = vadd.f32 0.0, %v2777
        %v2779 = vpop.f32.mrb[0].mxu0
        %2780 = vdwg.mxu0
        %v2781 = vadd.f32 %v2522, %v2773
        %v2782 = vadd.f32 %v2523, %v2778
        %v2783 = vadd.f32 %v2781, %v1070
        %v2784 = vadd.f32 %v2782, %v1070
        %v2785 = vmul.f32 %v2783, 0.5
        %v2786 = vmul.f32 %v2784, 0.5
        %v2787 = vtanh.pop %v2785
        %v2788 = vtanh.pop %v2786
        %v2789 = vadd.f32 %v2787, 1.0
        %v2790 = vadd.f32 %v2788, 1.0
        %v2791 = vmul.f32 %v2789, 0.5
        %v2792 = vmul.f32 %v2790, 0.5
        %v2793 = vmul.f32 %v2384, %v2791
        %v2794 = vmul.f32 %v2385, %v2792
        %2797 = vrot.lane.b32.xlu0 %v2787, 96
        %v2798 = vpop.permute.xlu0 %2797
        %2799 = vrot.lane.b32.xlu0 %v2788, 96
        %v2800 = vpop.permute.xlu0 %2799
        %v2803 = vmul.f32 %v2791, %v2798
        %v2804 = vmul.f32 %v2792, %v2800
        %2807 = vrot.lane.b32.xlu0 %v2803, 64
        %v2808 = vpop.permute.xlu0 %2807
        %2809 = vrot.lane.b32.xlu0 %v2804, 64
        %v2810 = vpop.permute.xlu0 %2809
        %v2813 = vadd.f32 %v2793, %v2808
        %v2814 = vadd.f32 %v2794, %v2810
        %v2815 = vtanh.pop %v2813
        %v2816 = vtanh.pop %v2814
        %2819 = vrot.lane.b32.xlu0 %v2791, 96
        %v2820 = vpop.permute.xlu0 %2819
        %2821 = vrot.lane.b32.xlu0 %v2792, 96
        %v2822 = vpop.permute.xlu0 %2821
        %v2825 = vmul.f32 %v2815, %v2820
        %v2826 = vmul.f32 %v2816, %v2822
        %s2827 = scalar_lea.vmem [#allocation3], 128
        %v2828 = vld [vmem:[%s2827] sm:$0xff]
        %v2829 = vld [vmem:[%s2827 + $0x8] sm:$0xff]
        %v2830 = vld [vmem:[%s2827 + $0x10] sm:$0xff]
        %v2831 = vld [vmem:[%s2827 + $0x18] sm:$0xff]
        %2834 = vrot.lane.b32.xlu0 %v2825, 64
        %v2835 = vpop.permute.xlu0 %2834
        %2836 = vrot.lane.b32.xlu0 %v2826, 64
        %v2837 = vpop.permute.xlu0 %2836
        %v2838 = vsel %vm805, %v2835, 0
        %v2840 = vsel %vm805, %v2837, 0
        %2842 = vmatprep.subr.mxu0 0.0
        %2843 = vmatpush1.msra.mxu0 %v2828
        %2844 = vmatprep.subr.mxu0 0.0
        %2845 = vmatpush1.msra.mxu0 %v2829
        %2846 = vmatprep.subr.mxu0 0.0
        %2847 = vmatpush1.msra.mxu0 %v2830
        %2848 = vmatprep.subr.mxu0 0.0
        %2849 = vmatpush1.msra.mxu0 %v2831
        %2850 = vmatprep.subr.mxu0 0.0
        %2851 = vmatpush1.msra.mxu0 0.0
        %2852 = vmatprep.subr.mxu0 0.0
        %2853 = vmatpush1.msra.mxu0 0.0
        %2854 = vmatprep.subr.mxu0 0.0
        %2855 = vmatpush1.msra.mxu0 0.0
        %2856 = vmatprep.subr.mxu0 0.0
        %2857 = vmatpush1.msra.mxu0 0.0
        %2858 = vmatprep.subr.mxu0 0.0
        %2859 = vmatpush1.msra.mxu0 0.0
        %2860 = vmatprep.subr.mxu0 0.0
        %2861 = vmatpush1.msra.mxu0 0.0
        %2862 = vmatprep.subr.mxu0 0.0
        %2863 = vmatpush1.msra.mxu0 0.0
        %2864 = vmatprep.subr.mxu0 0.0
        %2865 = vmatpush1.msra.mxu0 0.0
        %2866 = vmatprep.subr.mxu0 0.0
        %2867 = vmatpush1.msra.mxu0 0.0
        %2868 = vmatprep.subr.mxu0 0.0
        %2869 = vmatpush1.msra.mxu0 0.0
        %2870 = vmatprep.subr.mxu0 0.0
        %2871 = vmatpush1.msra.mxu0 0.0
        %2872 = vmatprep.subr.mxu0 0.0
        %2873 = vmatpush1.msra.mxu0 0.0
        %2874 = vmatprep.subr.mxu0 0.0
        %2875 = vmatpush1.msra.mxu0 0.0
        %2876 = vmatprep.subr.mxu0 0.0
        %2877 = vmatpush1.msra.mxu0 0.0
        %2878 = vmatprep.subr.mxu0 0.0
        %2879 = vmatpush1.msra.mxu0 0.0
        %2880 = vmatprep.subr.mxu0 0.0
        %2881 = vmatpush1.msra.mxu0 0.0
        %2882 = vmatprep.subr.mxu0 0.0
        %2883 = vmatpush1.msra.mxu0 0.0
        %2884 = vmatprep.subr.mxu0 0.0
        %2885 = vmatpush1.msra.mxu0 0.0
        %2886 = vmatprep.subr.mxu0 0.0
        %2887 = vmatpush1.msra.mxu0 0.0
        %2888 = vmatprep.subr.mxu0 0.0
        %2889 = vmatpush1.msra.mxu0 0.0
        %2890 = vmatprep.subr.mxu0 0.0
        %2891 = vmatpush1.msra.mxu0 0.0
        %2892 = vmatprep.subr.mxu0 0.0
        %2893 = vmatpush1.msra.mxu0 0.0
        %2894 = vmatprep.subr.mxu0 0.0
        %2895 = vmatpush1.msra.mxu0 0.0
        %2896 = vmatprep.subr.mxu0 0.0
        %2897 = vmatpush1.msra.mxu0 0.0
        %2898 = vmatprep.subr.mxu0 0.0
        %2899 = vmatpush1.msra.mxu0 0.0
        %2900 = vmatprep.subr.mxu0 0.0
        %2901 = vmatpush1.msra.mxu0 0.0
        %2902 = vmatprep.subr.mxu0 0.0
        %2903 = vmatpush1.msra.mxu0 0.0
        %2904 = vmatprep.subr.mxu0 0.0
        %2905 = vmatpush1.msra.mxu0 0.0
        %2906 = vmatprep.mubr.f32.mxu0 0.0
        %2907 = vmatmul.mubr.f32.gmra.mrb[0].mxu0 %v2838
        %v2908 = vpop.f32.mrb[0].mxu0
        %v2909 = vadd.f32 0.0, %v2908
        %v2910 = vpop.f32.mrb[0].mxu0
        %2911 = vmatprep.mubr.f32.mxu0 0.0
        %2912 = vmatmul.mubr.f32.gmra.mrb[0].mxu0 %v2840
        %v2913 = vpop.f32.mrb[0].mxu0
        %v2914 = vadd.f32 0.0, %v2913
        %v2915 = vpop.f32.mrb[0].mxu0
        %2916 = vdwg.mxu0
        %v2917 = vadd.f32 %v2488, %v2909
        %v2918 = vadd.f32 %v2489, %v2914
        %2919 = vset.pattern.permute.xlu0 5
        %2920 = vperm.xlu0 %2919, %v581
        %v2921 = vpop.permute.xlu0 %2920
        %2923 = vset.pattern.permute.xlu0 5
        %2924 = vperm.xlu0 %2923, %v582
        %v2925 = vpop.permute.xlu0 %2924
        %v2927 = vmul.f32 %v2921, %v766
        %v2928 = vmul.f32 %v2925, %v766
        %2929 = vset.pattern.permute.xlu0 5
        %2930 = vperm.xlu0 %2929, %v650
        %v2931 = vpop.permute.xlu0 %2930
        %2933 = vset.pattern.permute.xlu0 5
        %2934 = vperm.xlu0 %2933, %v655
        %v2935 = vpop.permute.xlu0 %2934
        %v2937 = vmul.f32 %v2931, %v782
        %v2938 = vmul.f32 %v2935, %v782
        %v2939 = vadd.f32 %v2927, %v2937
        %v2940 = vadd.f32 %v2928, %v2938
        %2941 = vset.pattern.permute.xlu0 5
        %2942 = vperm.xlu0 %2941, %v731
        %v2943 = vpop.permute.xlu0 %2942
        %2945 = vset.pattern.permute.xlu0 5
        %2946 = vperm.xlu0 %2945, %v736
        %v2947 = vpop.permute.xlu0 %2946
        %v2949 = vmul.f32 %v2943, %v800
        %v2950 = vmul.f32 %v2947, %v800
        %v2951 = vadd.f32 %v2939, %v2949
        %v2952 = vadd.f32 %v2940, %v2950
        %2955 = vst.msk [vmem:[#allocation2] sm:$0xff] %vm805, %v2835
        %2956 = vst.msk [vmem:[#allocation2 + $0x8] sm:$0xff] %vm805, %v2837
        %2957 = vmatprep.subr.mxu0 0.0
        %2958 = vmatpush1.msra.mxu0 %v2835
        %2959 = vmatprep.subr.mxu0 0.0
        %2960 = vmatpush1.msra.mxu0 %v2837
        %2961 = vmatprep.subr.mxu0 0.0
        %2962 = vmatpush1.msra.mxu0 0.0
        %2963 = vmatprep.subr.mxu0 0.0
        %2964 = vmatpush1.msra.mxu0 0.0
        %2965 = vmatprep.subr.mxu0 0.0
        %2966 = vmatpush1.msra.mxu0 0.0
        %2967 = vmatprep.subr.mxu0 0.0
        %2968 = vmatpush1.msra.mxu0 0.0
        %2969 = vmatprep.subr.mxu0 0.0
        %2970 = vmatpush1.msra.mxu0 0.0
        %2971 = vmatprep.subr.mxu0 0.0
        %2972 = vmatpush1.msra.mxu0 0.0
        %2973 = vmatprep.subr.mxu0 0.0
        %2974 = vmatpush1.msra.mxu0 0.0
        %2975 = vmatprep.subr.mxu0 0.0
        %2976 = vmatpush1.msra.mxu0 0.0
        %2977 = vmatprep.subr.mxu0 0.0
        %2978 = vmatpush1.msra.mxu0 0.0
        %2979 = vmatprep.subr.mxu0 0.0
        %2980 = vmatpush1.msra.mxu0 0.0
        %2981 = vmatprep.subr.mxu0 0.0
        %2982 = vmatpush1.msra.mxu0 0.0
        %2983 = vmatprep.subr.mxu0 0.0
        %2984 = vmatpush1.msra.mxu0 0.0
        %2985 = vmatprep.subr.mxu0 0.0
        %2986 = vmatpush1.msra.mxu0 0.0
        %2987 = vmatprep.subr.mxu0 0.0
        %2988 = vmatpush1.msra.mxu0 0.0
        %2989 = vmatprep.subr.mxu0 0.0
        %2990 = vmatpush1.msra.mxu0 0.0
        %2991 = vmatprep.subr.mxu0 0.0
        %2992 = vmatpush1.msra.mxu0 0.0
        %2993 = vmatprep.subr.mxu0 0.0
        %2994 = vmatpush1.msra.mxu0 0.0
        %2995 = vmatprep.subr.mxu0 0.0
        %2996 = vmatpush1.msra.mxu0 0.0
        %2997 = vmatprep.subr.mxu0 0.0
        %2998 = vmatpush1.msra.mxu0 0.0
        %2999 = vmatprep.subr.mxu0 0.0
        %3000 = vmatpush1.msra.mxu0 0.0
        %3001 = vmatprep.subr.mxu0 0.0
        %3002 = vmatpush1.msra.mxu0 0.0
        %3003 = vmatprep.subr.mxu0 0.0
        %3004 = vmatpush1.msra.mxu0 0.0
        %3005 = vmatprep.subr.mxu0 0.0
        %3006 = vmatpush1.msra.mxu0 0.0
        %3007 = vmatprep.subr.mxu0 0.0
        %3008 = vmatpush1.msra.mxu0 0.0
        %3009 = vmatprep.subr.mxu0 0.0
        %3010 = vmatpush1.msra.mxu0 0.0
        %3011 = vmatprep.subr.mxu0 0.0
        %3012 = vmatpush1.msra.mxu0 0.0
        %3013 = vmatprep.subr.mxu0 0.0
        %3014 = vmatpush1.msra.mxu0 0.0
        %3015 = vmatprep.subr.mxu0 0.0
        %3016 = vmatpush1.msra.mxu0 0.0
        %3017 = vmatprep.subr.mxu0 0.0
        %3018 = vmatpush1.msra.mxu0 0.0
        %3019 = vmatprep.subr.mxu0 0.0
        %3020 = vmatpush1.msra.mxu0 0.0
        %3021 = vmatprep.mubr.f32.mxu0 0.0
        %3022 = vmatmul.mubr.f32.gmra.mrb[0].mxu0 %v501
        %v3023 = vpop.f32.mrb[0].mxu0
        %v3024 = vadd.f32 0.0, %v3023
        %v3025 = vpop.f32.mrb[0].mxu0
        %3026 = vmatprep.mubr.f32.mxu0 0.0
        %3027 = vmatmul.mubr.f32.gmra.mrb[0].mxu0 %v504
        %v3028 = vpop.f32.mrb[0].mxu0
        %v3029 = vadd.f32 0.0, %v3028
        %v3030 = vpop.f32.mrb[0].mxu0
        %3031 = vdwg.mxu0
        %3034 = vrot.lane.b32.xlu0 %v3024, 32
        %v3035 = vpop.permute.xlu0 %3034
        %3036 = vrot.lane.b32.xlu0 %v3029, 32
        %v3037 = vpop.permute.xlu0 %3036
        %3040 = vst.msk [vmem:[#allocation2] sm:$0xff] %vm891, %v3035
        %3041 = vst.msk [vmem:[#allocation2 + $0x8] sm:$0xff] %vm891, %v3037
        %3042 = vmatprep.subr.mxu0 0.0
        %3043 = vmatpush1.msra.mxu0 %v2835
        %3044 = vmatprep.subr.mxu0 0.0
        %3045 = vmatpush1.msra.mxu0 %v2837
        %3046 = vmatprep.subr.mxu0 0.0
        %3047 = vmatpush1.msra.mxu0 0.0
        %3048 = vmatprep.subr.mxu0 0.0
        %3049 = vmatpush1.msra.mxu0 0.0
        %3050 = vmatprep.subr.mxu0 0.0
        %3051 = vmatpush1.msra.mxu0 0.0
        %3052 = vmatprep.subr.mxu0 0.0
        %3053 = vmatpush1.msra.mxu0 0.0
        %3054 = vmatprep.subr.mxu0 0.0
        %3055 = vmatpush1.msra.mxu0 0.0
        %3056 = vmatprep.subr.mxu0 0.0
        %3057 = vmatpush1.msra.mxu0 0.0
        %3058 = vmatprep.subr.mxu0 0.0
        %3059 = vmatpush1.msra.mxu0 0.0
        %3060 = vmatprep.subr.mxu0 0.0
        %3061 = vmatpush1.msra.mxu0 0.0
        %3062 = vmatprep.subr.mxu0 0.0
        %3063 = vmatpush1.msra.mxu0 0.0
        %3064 = vmatprep.subr.mxu0 0.0
        %3065 = vmatpush1.msra.mxu0 0.0
        %3066 = vmatprep.subr.mxu0 0.0
        %3067 = vmatpush1.msra.mxu0 0.0
        %3068 = vmatprep.subr.mxu0 0.0
        %3069 = vmatpush1.msra.mxu0 0.0
        %3070 = vmatprep.subr.mxu0 0.0
        %3071 = vmatpush1.msra.mxu0 0.0
        %3072 = vmatprep.subr.mxu0 0.0
        %3073 = vmatpush1.msra.mxu0 0.0
        %3074 = vmatprep.subr.mxu0 0.0
        %3075 = vmatpush1.msra.mxu0 0.0
        %3076 = vmatprep.subr.mxu0 0.0
        %3077 = vmatpush1.msra.mxu0 0.0
        %3078 = vmatprep.subr.mxu0 0.0
        %3079 = vmatpush1.msra.mxu0 0.0
        %3080 = vmatprep.subr.mxu0 0.0
        %3081 = vmatpush1.msra.mxu0 0.0
        %3082 = vmatprep.subr.mxu0 0.0
        %3083 = vmatpush1.msra.mxu0 0.0
        %3084 = vmatprep.subr.mxu0 0.0
        %3085 = vmatpush1.msra.mxu0 0.0
        %3086 = vmatprep.subr.mxu0 0.0
        %3087 = vmatpush1.msra.mxu0 0.0
        %3088 = vmatprep.subr.mxu0 0.0
        %3089 = vmatpush1.msra.mxu0 0.0
        %3090 = vmatprep.subr.mxu0 0.0
        %3091 = vmatpush1.msra.mxu0 0.0
        %3092 = vmatprep.subr.mxu0 0.0
        %3093 = vmatpush1.msra.mxu0 0.0
        %3094 = vmatprep.subr.mxu0 0.0
        %3095 = vmatpush1.msra.mxu0 0.0
        %3096 = vmatprep.subr.mxu0 0.0
        %3097 = vmatpush1.msra.mxu0 0.0
        %3098 = vmatprep.subr.mxu0 0.0
        %3099 = vmatpush1.msra.mxu0 0.0
        %3100 = vmatprep.subr.mxu0 0.0
        %3101 = vmatpush1.msra.mxu0 0.0
        %3102 = vmatprep.subr.mxu0 0.0
        %3103 = vmatpush1.msra.mxu0 0.0
        %3104 = vmatprep.subr.mxu0 0.0
        %3105 = vmatpush1.msra.mxu0 0.0
        %3106 = vmatprep.mubr.f32.mxu0 0.0
        %3107 = vmatmul.mubr.f32.gmra.mrb[0].mxu0 %v659
        %v3108 = vpop.f32.mrb[0].mxu0
        %v3109 = vadd.f32 0.0, %v3108
        %v3110 = vpop.f32.mrb[0].mxu0
        %3111 = vmatprep.mubr.f32.mxu0 0.0
        %3112 = vmatmul.mubr.f32.gmra.mrb[0].mxu0 %v662
        %v3113 = vpop.f32.mrb[0].mxu0
        %v3114 = vadd.f32 0.0, %v3113
        %v3115 = vpop.f32.mrb[0].mxu0
        %3116 = vdwg.mxu0
        %3119 = vrot.lane.b32.xlu0 %v3109, 64
        %v3120 = vpop.permute.xlu0 %3119
        %3121 = vrot.lane.b32.xlu0 %v3114, 64
        %v3122 = vpop.permute.xlu0 %3121
        %3125 = vst.msk [vmem:[#allocation2] sm:$0xff] %vm977, %v3120
        %3126 = vst.msk [vmem:[#allocation2 + $0x8] sm:$0xff] %vm977, %v3122
        %v3127 = vld [vmem:[#allocation2] sm:$0xff]
        %v3128 = vld [vmem:[#allocation2 + $0x8] sm:$0xff]
        %v3130 = vsel %vm982, %v3127, 0
        %v3133 = vsel %vm982, %v3128, 0
        %3135 = vmatprep.subr.mxu0 0.0
        %3136 = vmatpush1.msra.mxu0 %v740
        %3137 = vmatprep.subr.mxu0 0.0
        %3138 = vmatpush1.msra.mxu0 %v741
        %3139 = vmatprep.subr.mxu0 0.0
        %3140 = vmatpush1.msra.mxu0 %v742
        %3141 = vmatprep.subr.mxu0 0.0
        %3142 = vmatpush1.msra.mxu0 %v743
        %3143 = vmatprep.subr.mxu0 0.0
        %3144 = vmatpush1.msra.mxu0 %v744
        %3145 = vmatprep.subr.mxu0 0.0
        %3146 = vmatpush1.msra.mxu0 %v745
        %3147 = vmatprep.subr.mxu0 0.0
        %3148 = vmatpush1.msra.mxu0 %v746
        %3149 = vmatprep.subr.mxu0 0.0
        %3150 = vmatpush1.msra.mxu0 %v747
        %3151 = vmatprep.subr.mxu0 0.0
        %3152 = vmatpush1.msra.mxu0 %v748
        %3153 = vmatprep.subr.mxu0 0.0
        %3154 = vmatpush1.msra.mxu0 %v749
        %3155 = vmatprep.subr.mxu0 0.0
        %3156 = vmatpush1.msra.mxu0 %v750
        %3157 = vmatprep.subr.mxu0 0.0
        %3158 = vmatpush1.msra.mxu0 %v751
        %3159 = vmatprep.subr.mxu0 0.0
        %3160 = vmatpush1.msra.mxu0 0.0
        %3161 = vmatprep.subr.mxu0 0.0
        %3162 = vmatpush1.msra.mxu0 0.0
        %3163 = vmatprep.subr.mxu0 0.0
        %3164 = vmatpush1.msra.mxu0 0.0
        %3165 = vmatprep.subr.mxu0 0.0
        %3166 = vmatpush1.msra.mxu0 0.0
        %3167 = vmatprep.subr.mxu0 0.0
        %3168 = vmatpush1.msra.mxu0 0.0
        %3169 = vmatprep.subr.mxu0 0.0
        %3170 = vmatpush1.msra.mxu0 0.0
        %3171 = vmatprep.subr.mxu0 0.0
        %3172 = vmatpush1.msra.mxu0 0.0
        %3173 = vmatprep.subr.mxu0 0.0
        %3174 = vmatpush1.msra.mxu0 0.0
        %3175 = vmatprep.subr.mxu0 0.0
        %3176 = vmatpush1.msra.mxu0 0.0
        %3177 = vmatprep.subr.mxu0 0.0
        %3178 = vmatpush1.msra.mxu0 0.0
        %3179 = vmatprep.subr.mxu0 0.0
        %3180 = vmatpush1.msra.mxu0 0.0
        %3181 = vmatprep.subr.mxu0 0.0
        %3182 = vmatpush1.msra.mxu0 0.0
        %3183 = vmatprep.subr.mxu0 0.0
        %3184 = vmatpush1.msra.mxu0 0.0
        %3185 = vmatprep.subr.mxu0 0.0
        %3186 = vmatpush1.msra.mxu0 0.0
        %3187 = vmatprep.subr.mxu0 0.0
        %3188 = vmatpush1.msra.mxu0 0.0
        %3189 = vmatprep.subr.mxu0 0.0
        %3190 = vmatpush1.msra.mxu0 0.0
        %3191 = vmatprep.subr.mxu0 0.0
        %3192 = vmatpush1.msra.mxu0 0.0
        %3193 = vmatprep.subr.mxu0 0.0
        %3194 = vmatpush1.msra.mxu0 0.0
        %3195 = vmatprep.subr.mxu0 0.0
        %3196 = vmatpush1.msra.mxu0 0.0
        %3197 = vmatprep.subr.mxu0 0.0
        %3198 = vmatpush1.msra.mxu0 0.0
        %3199 = vmatprep.mubr.f32.mxu0 0.0
        %3200 = vmatmul.mubr.f32.gmra.mrb[0].mxu0 %v3130
        %v3201 = vpop.f32.mrb[0].mxu0
        %v3202 = vadd.f32 0.0, %v3201
        %v3203 = vpop.f32.mrb[0].mxu0
        %3204 = vmatprep.mubr.f32.mxu0 0.0
        %3205 = vmatmul.mubr.f32.gmra.mrb[0].mxu0 %v3133
        %v3206 = vpop.f32.mrb[0].mxu0
        %v3207 = vadd.f32 0.0, %v3206
        %v3208 = vpop.f32.mrb[0].mxu0
        %3209 = vdwg.mxu0
        %v3210 = vadd.f32 %v2951, %v3202
        %v3211 = vadd.f32 %v2952, %v3207
        %v3212 = vadd.f32 %v3210, %v1070
        %v3213 = vadd.f32 %v3211, %v1070
        %v3214 = vmul.f32 %v3212, 0.5
        %v3215 = vmul.f32 %v3213, 0.5
        %v3216 = vtanh.pop %v3214
        %v3217 = vtanh.pop %v3215
        %v3218 = vadd.f32 %v3216, 1.0
        %v3219 = vadd.f32 %v3217, 1.0
        %v3220 = vmul.f32 %v3218, 0.5
        %v3221 = vmul.f32 %v3219, 0.5
        %v3222 = vmul.f32 %v2813, %v3220
        %v3223 = vmul.f32 %v2814, %v3221
        %3226 = vrot.lane.b32.xlu0 %v3216, 96
        %v3227 = vpop.permute.xlu0 %3226
        %3228 = vrot.lane.b32.xlu0 %v3217, 96
        %v3229 = vpop.permute.xlu0 %3228
        %v3232 = vmul.f32 %v3220, %v3227
        %v3233 = vmul.f32 %v3221, %v3229
        %3236 = vrot.lane.b32.xlu0 %v3232, 64
        %v3237 = vpop.permute.xlu0 %3236
        %3238 = vrot.lane.b32.xlu0 %v3233, 64
        %v3239 = vpop.permute.xlu0 %3238
        %v3242 = vadd.f32 %v3222, %v3237
        %v3243 = vadd.f32 %v3223, %v3239
        %v3244 = vtanh.pop %v3242
        %v3245 = vtanh.pop %v3243
        %3248 = vrot.lane.b32.xlu0 %v3220, 96
        %v3249 = vpop.permute.xlu0 %3248
        %3250 = vrot.lane.b32.xlu0 %v3221, 96
        %v3251 = vpop.permute.xlu0 %3250
        %v3254 = vmul.f32 %v3244, %v3249
        %v3255 = vmul.f32 %v3245, %v3251
        %s3256 = scalar_lea.vmem [#allocation3], 160
        %v3257 = vld [vmem:[%s3256] sm:$0xff]
        %v3258 = vld [vmem:[%s3256 + $0x8] sm:$0xff]
        %v3259 = vld [vmem:[%s3256 + $0x10] sm:$0xff]
        %v3260 = vld [vmem:[%s3256 + $0x18] sm:$0xff]
        %3263 = vrot.lane.b32.xlu0 %v3254, 64
        %v3264 = vpop.permute.xlu0 %3263
        %3265 = vrot.lane.b32.xlu0 %v3255, 64
        %v3266 = vpop.permute.xlu0 %3265
        %v3267 = vsel %vm805, %v3264, 0
        %v3269 = vsel %vm805, %v3266, 0
        %3271 = vmatprep.subr.mxu0 0.0
        %3272 = vmatpush1.msra.mxu0 %v3257
        %3273 = vmatprep.subr.mxu0 0.0
        %3274 = vmatpush1.msra.mxu0 %v3258
        %3275 = vmatprep.subr.mxu0 0.0
        %3276 = vmatpush1.msra.mxu0 %v3259
        %3277 = vmatprep.subr.mxu0 0.0
        %3278 = vmatpush1.msra.mxu0 %v3260
        %3279 = vmatprep.subr.mxu0 0.0
        %3280 = vmatpush1.msra.mxu0 0.0
        %3281 = vmatprep.subr.mxu0 0.0
        %3282 = vmatpush1.msra.mxu0 0.0
        %3283 = vmatprep.subr.mxu0 0.0
        %3284 = vmatpush1.msra.mxu0 0.0
        %3285 = vmatprep.subr.mxu0 0.0
        %3286 = vmatpush1.msra.mxu0 0.0
        %3287 = vmatprep.subr.mxu0 0.0
        %3288 = vmatpush1.msra.mxu0 0.0
        %3289 = vmatprep.subr.mxu0 0.0
        %3290 = vmatpush1.msra.mxu0 0.0
        %3291 = vmatprep.subr.mxu0 0.0
        %3292 = vmatpush1.msra.mxu0 0.0
        %3293 = vmatprep.subr.mxu0 0.0
        %3294 = vmatpush1.msra.mxu0 0.0
        %3295 = vmatprep.subr.mxu0 0.0
        %3296 = vmatpush1.msra.mxu0 0.0
        %3297 = vmatprep.subr.mxu0 0.0
        %3298 = vmatpush1.msra.mxu0 0.0
        %3299 = vmatprep.subr.mxu0 0.0
        %3300 = vmatpush1.msra.mxu0 0.0
        %3301 = vmatprep.subr.mxu0 0.0
        %3302 = vmatpush1.msra.mxu0 0.0
        %3303 = vmatprep.subr.mxu0 0.0
        %3304 = vmatpush1.msra.mxu0 0.0
        %3305 = vmatprep.subr.mxu0 0.0
        %3306 = vmatpush1.msra.mxu0 0.0
        %3307 = vmatprep.subr.mxu0 0.0
        %3308 = vmatpush1.msra.mxu0 0.0
        %3309 = vmatprep.subr.mxu0 0.0
        %3310 = vmatpush1.msra.mxu0 0.0
        %3311 = vmatprep.subr.mxu0 0.0
        %3312 = vmatpush1.msra.mxu0 0.0
        %3313 = vmatprep.subr.mxu0 0.0
        %3314 = vmatpush1.msra.mxu0 0.0
        %3315 = vmatprep.subr.mxu0 0.0
        %3316 = vmatpush1.msra.mxu0 0.0
        %3317 = vmatprep.subr.mxu0 0.0
        %3318 = vmatpush1.msra.mxu0 0.0
        %3319 = vmatprep.subr.mxu0 0.0
        %3320 = vmatpush1.msra.mxu0 0.0
        %3321 = vmatprep.subr.mxu0 0.0
        %3322 = vmatpush1.msra.mxu0 0.0
        %3323 = vmatprep.subr.mxu0 0.0
        %3324 = vmatpush1.msra.mxu0 0.0
        %3325 = vmatprep.subr.mxu0 0.0
        %3326 = vmatpush1.msra.mxu0 0.0
        %3327 = vmatprep.subr.mxu0 0.0
        %3328 = vmatpush1.msra.mxu0 0.0
        %3329 = vmatprep.subr.mxu0 0.0
        %3330 = vmatpush1.msra.mxu0 0.0
        %3331 = vmatprep.subr.mxu0 0.0
        %3332 = vmatpush1.msra.mxu0 0.0
        %3333 = vmatprep.subr.mxu0 0.0
        %3334 = vmatpush1.msra.mxu0 0.0
        %3335 = vmatprep.mubr.f32.mxu0 0.0
        %3336 = vmatmul.mubr.f32.gmra.mrb[0].mxu0 %v3267
        %v3337 = vpop.f32.mrb[0].mxu0
        %v3338 = vadd.f32 0.0, %v3337
        %v3339 = vpop.f32.mrb[0].mxu0
        %3340 = vmatprep.mubr.f32.mxu0 0.0
        %3341 = vmatmul.mubr.f32.gmra.mrb[0].mxu0 %v3269
        %v3342 = vpop.f32.mrb[0].mxu0
        %v3343 = vadd.f32 0.0, %v3342
        %v3344 = vpop.f32.mrb[0].mxu0
        %3345 = vdwg.mxu0
        %v3346 = vadd.f32 %v2917, %v3338
        %v3347 = vadd.f32 %v2918, %v3343
        %3348 = vset.pattern.permute.xlu0 6
        %3349 = vperm.xlu0 %3348, %v581
        %v3350 = vpop.permute.xlu0 %3349
        %3352 = vset.pattern.permute.xlu0 6
        %3353 = vperm.xlu0 %3352, %v582
        %v3354 = vpop.permute.xlu0 %3353
        %v3356 = vmul.f32 %v3350, %v766
        %v3357 = vmul.f32 %v3354, %v766
        %3358 = vset.pattern.permute.xlu0 6
        %3359 = vperm.xlu0 %3358, %v650
        %v3360 = vpop.permute.xlu0 %3359
        %3362 = vset.pattern.permute.xlu0 6
        %3363 = vperm.xlu0 %3362, %v655
        %v3364 = vpop.permute.xlu0 %3363
        %v3366 = vmul.f32 %v3360, %v782
        %v3367 = vmul.f32 %v3364, %v782
        %v3368 = vadd.f32 %v3356, %v3366
        %v3369 = vadd.f32 %v3357, %v3367
        %3370 = vset.pattern.permute.xlu0 6
        %3371 = vperm.xlu0 %3370, %v731
        %v3372 = vpop.permute.xlu0 %3371
        %3374 = vset.pattern.permute.xlu0 6
        %3375 = vperm.xlu0 %3374, %v736
        %v3376 = vpop.permute.xlu0 %3375
        %v3378 = vmul.f32 %v3372, %v800
        %v3379 = vmul.f32 %v3376, %v800
        %v3380 = vadd.f32 %v3368, %v3378
        %v3381 = vadd.f32 %v3369, %v3379
        %3384 = vst.msk [vmem:[#allocation2] sm:$0xff] %vm805, %v3264
        %3385 = vst.msk [vmem:[#allocation2 + $0x8] sm:$0xff] %vm805, %v3266
        %3386 = vmatprep.subr.mxu0 0.0
        %3387 = vmatpush1.msra.mxu0 %v3264
        %3388 = vmatprep.subr.mxu0 0.0
        %3389 = vmatpush1.msra.mxu0 %v3266
        %3390 = vmatprep.subr.mxu0 0.0
        %3391 = vmatpush1.msra.mxu0 0.0
        %3392 = vmatprep.subr.mxu0 0.0
        %3393 = vmatpush1.msra.mxu0 0.0
        %3394 = vmatprep.subr.mxu0 0.0
        %3395 = vmatpush1.msra.mxu0 0.0
        %3396 = vmatprep.subr.mxu0 0.0
        %3397 = vmatpush1.msra.mxu0 0.0
        %3398 = vmatprep.subr.mxu0 0.0
        %3399 = vmatpush1.msra.mxu0 0.0
        %3400 = vmatprep.subr.mxu0 0.0
        %3401 = vmatpush1.msra.mxu0 0.0
        %3402 = vmatprep.subr.mxu0 0.0
        %3403 = vmatpush1.msra.mxu0 0.0
        %3404 = vmatprep.subr.mxu0 0.0
        %3405 = vmatpush1.msra.mxu0 0.0
        %3406 = vmatprep.subr.mxu0 0.0
        %3407 = vmatpush1.msra.mxu0 0.0
        %3408 = vmatprep.subr.mxu0 0.0
        %3409 = vmatpush1.msra.mxu0 0.0
        %3410 = vmatprep.subr.mxu0 0.0
        %3411 = vmatpush1.msra.mxu0 0.0
        %3412 = vmatprep.subr.mxu0 0.0
        %3413 = vmatpush1.msra.mxu0 0.0
        %3414 = vmatprep.subr.mxu0 0.0
        %3415 = vmatpush1.msra.mxu0 0.0
        %3416 = vmatprep.subr.mxu0 0.0
        %3417 = vmatpush1.msra.mxu0 0.0
        %3418 = vmatprep.subr.mxu0 0.0
        %3419 = vmatpush1.msra.mxu0 0.0
        %3420 = vmatprep.subr.mxu0 0.0
        %3421 = vmatpush1.msra.mxu0 0.0
        %3422 = vmatprep.subr.mxu0 0.0
        %3423 = vmatpush1.msra.mxu0 0.0
        %3424 = vmatprep.subr.mxu0 0.0
        %3425 = vmatpush1.msra.mxu0 0.0
        %3426 = vmatprep.subr.mxu0 0.0
        %3427 = vmatpush1.msra.mxu0 0.0
        %3428 = vmatprep.subr.mxu0 0.0
        %3429 = vmatpush1.msra.mxu0 0.0
        %3430 = vmatprep.subr.mxu0 0.0
        %3431 = vmatpush1.msra.mxu0 0.0
        %3432 = vmatprep.subr.mxu0 0.0
        %3433 = vmatpush1.msra.mxu0 0.0
        %3434 = vmatprep.subr.mxu0 0.0
        %3435 = vmatpush1.msra.mxu0 0.0
        %3436 = vmatprep.subr.mxu0 0.0
        %3437 = vmatpush1.msra.mxu0 0.0
        %3438 = vmatprep.subr.mxu0 0.0
        %3439 = vmatpush1.msra.mxu0 0.0
        %3440 = vmatprep.subr.mxu0 0.0
        %3441 = vmatpush1.msra.mxu0 0.0
        %3442 = vmatprep.subr.mxu0 0.0
        %3443 = vmatpush1.msra.mxu0 0.0
        %3444 = vmatprep.subr.mxu0 0.0
        %3445 = vmatpush1.msra.mxu0 0.0
        %3446 = vmatprep.subr.mxu0 0.0
        %3447 = vmatpush1.msra.mxu0 0.0
        %3448 = vmatprep.subr.mxu0 0.0
        %3449 = vmatpush1.msra.mxu0 0.0
        %3450 = vmatprep.mubr.f32.mxu0 0.0
        %3451 = vmatmul.mubr.f32.gmra.mrb[0].mxu0 %v501
        %v3452 = vpop.f32.mrb[0].mxu0
        %v3453 = vadd.f32 0.0, %v3452
        %v3454 = vpop.f32.mrb[0].mxu0
        %3455 = vmatprep.mubr.f32.mxu0 0.0
        %3456 = vmatmul.mubr.f32.gmra.mrb[0].mxu0 %v504
        %v3457 = vpop.f32.mrb[0].mxu0
        %v3458 = vadd.f32 0.0, %v3457
        %v3459 = vpop.f32.mrb[0].mxu0
        %3460 = vdwg.mxu0
        %3463 = vrot.lane.b32.xlu0 %v3453, 32
        %v3464 = vpop.permute.xlu0 %3463
        %3465 = vrot.lane.b32.xlu0 %v3458, 32
        %v3466 = vpop.permute.xlu0 %3465
        %3469 = vst.msk [vmem:[#allocation2] sm:$0xff] %vm891, %v3464
        %3470 = vst.msk [vmem:[#allocation2 + $0x8] sm:$0xff] %vm891, %v3466
        %3471 = vmatprep.subr.mxu0 0.0
        %3472 = vmatpush1.msra.mxu0 %v3264
        %3473 = vmatprep.subr.mxu0 0.0
        %3474 = vmatpush1.msra.mxu0 %v3266
        %3475 = vmatprep.subr.mxu0 0.0
        %3476 = vmatpush1.msra.mxu0 0.0
        %3477 = vmatprep.subr.mxu0 0.0
        %3478 = vmatpush1.msra.mxu0 0.0
        %3479 = vmatprep.subr.mxu0 0.0
        %3480 = vmatpush1.msra.mxu0 0.0
        %3481 = vmatprep.subr.mxu0 0.0
        %3482 = vmatpush1.msra.mxu0 0.0
        %3483 = vmatprep.subr.mxu0 0.0
        %3484 = vmatpush1.msra.mxu0 0.0
        %3485 = vmatprep.subr.mxu0 0.0
        %3486 = vmatpush1.msra.mxu0 0.0
        %3487 = vmatprep.subr.mxu0 0.0
        %3488 = vmatpush1.msra.mxu0 0.0
        %3489 = vmatprep.subr.mxu0 0.0
        %3490 = vmatpush1.msra.mxu0 0.0
        %3491 = vmatprep.subr.mxu0 0.0
        %3492 = vmatpush1.msra.mxu0 0.0
        %3493 = vmatprep.subr.mxu0 0.0
        %3494 = vmatpush1.msra.mxu0 0.0
        %3495 = vmatprep.subr.mxu0 0.0
        %3496 = vmatpush1.msra.mxu0 0.0
        %3497 = vmatprep.subr.mxu0 0.0
        %3498 = vmatpush1.msra.mxu0 0.0
        %3499 = vmatprep.subr.mxu0 0.0
        %3500 = vmatpush1.msra.mxu0 0.0
        %3501 = vmatprep.subr.mxu0 0.0
        %3502 = vmatpush1.msra.mxu0 0.0
        %3503 = vmatprep.subr.mxu0 0.0
        %3504 = vmatpush1.msra.mxu0 0.0
        %3505 = vmatprep.subr.mxu0 0.0
        %3506 = vmatpush1.msra.mxu0 0.0
        %3507 = vmatprep.subr.mxu0 0.0
        %3508 = vmatpush1.msra.mxu0 0.0
        %3509 = vmatprep.subr.mxu0 0.0
        %3510 = vmatpush1.msra.mxu0 0.0
        %3511 = vmatprep.subr.mxu0 0.0
        %3512 = vmatpush1.msra.mxu0 0.0
        %3513 = vmatprep.subr.mxu0 0.0
        %3514 = vmatpush1.msra.mxu0 0.0
        %3515 = vmatprep.subr.mxu0 0.0
        %3516 = vmatpush1.msra.mxu0 0.0
        %3517 = vmatprep.subr.mxu0 0.0
        %3518 = vmatpush1.msra.mxu0 0.0
        %3519 = vmatprep.subr.mxu0 0.0
        %3520 = vmatpush1.msra.mxu0 0.0
        %3521 = vmatprep.subr.mxu0 0.0
        %3522 = vmatpush1.msra.mxu0 0.0
        %3523 = vmatprep.subr.mxu0 0.0
        %3524 = vmatpush1.msra.mxu0 0.0
        %3525 = vmatprep.subr.mxu0 0.0
        %3526 = vmatpush1.msra.mxu0 0.0
        %3527 = vmatprep.subr.mxu0 0.0
        %3528 = vmatpush1.msra.mxu0 0.0
        %3529 = vmatprep.subr.mxu0 0.0
        %3530 = vmatpush1.msra.mxu0 0.0
        %3531 = vmatprep.subr.mxu0 0.0
        %3532 = vmatpush1.msra.mxu0 0.0
        %3533 = vmatprep.subr.mxu0 0.0
        %3534 = vmatpush1.msra.mxu0 0.0
        %3535 = vmatprep.mubr.f32.mxu0 0.0
        %3536 = vmatmul.mubr.f32.gmra.mrb[0].mxu0 %v659
        %v3537 = vpop.f32.mrb[0].mxu0
        %v3538 = vadd.f32 0.0, %v3537
        %v3539 = vpop.f32.mrb[0].mxu0
        %3540 = vmatprep.mubr.f32.mxu0 0.0
        %3541 = vmatmul.mubr.f32.gmra.mrb[0].mxu0 %v662
        %v3542 = vpop.f32.mrb[0].mxu0
        %v3543 = vadd.f32 0.0, %v3542
        %v3544 = vpop.f32.mrb[0].mxu0
        %3545 = vdwg.mxu0
        %3548 = vrot.lane.b32.xlu0 %v3538, 64
        %v3549 = vpop.permute.xlu0 %3548
        %3550 = vrot.lane.b32.xlu0 %v3543, 64
        %v3551 = vpop.permute.xlu0 %3550
        %3554 = vst.msk [vmem:[#allocation2] sm:$0xff] %vm977, %v3549
        %3555 = vst.msk [vmem:[#allocation2 + $0x8] sm:$0xff] %vm977, %v3551
        %v3556 = vld [vmem:[#allocation2] sm:$0xff]
        %v3557 = vld [vmem:[#allocation2 + $0x8] sm:$0xff]
        %v3559 = vsel %vm982, %v3556, 0
        %v3562 = vsel %vm982, %v3557, 0
        %3564 = vmatprep.subr.mxu0 0.0
        %3565 = vmatpush1.msra.mxu0 %v740
        %3566 = vmatprep.subr.mxu0 0.0
        %3567 = vmatpush1.msra.mxu0 %v741
        %3568 = vmatprep.subr.mxu0 0.0
        %3569 = vmatpush1.msra.mxu0 %v742
        %3570 = vmatprep.subr.mxu0 0.0
        %3571 = vmatpush1.msra.mxu0 %v743
        %3572 = vmatprep.subr.mxu0 0.0
        %3573 = vmatpush1.msra.mxu0 %v744
        %3574 = vmatprep.subr.mxu0 0.0
        %3575 = vmatpush1.msra.mxu0 %v745
        %3576 = vmatprep.subr.mxu0 0.0
        %3577 = vmatpush1.msra.mxu0 %v746
        %3578 = vmatprep.subr.mxu0 0.0
        %3579 = vmatpush1.msra.mxu0 %v747
        %3580 = vmatprep.subr.mxu0 0.0
        %3581 = vmatpush1.msra.mxu0 %v748
        %3582 = vmatprep.subr.mxu0 0.0
        %3583 = vmatpush1.msra.mxu0 %v749
        %3584 = vmatprep.subr.mxu0 0.0
        %3585 = vmatpush1.msra.mxu0 %v750
        %3586 = vmatprep.subr.mxu0 0.0
        %3587 = vmatpush1.msra.mxu0 %v751
        %3588 = vmatprep.subr.mxu0 0.0
        %3589 = vmatpush1.msra.mxu0 0.0
        %3590 = vmatprep.subr.mxu0 0.0
        %3591 = vmatpush1.msra.mxu0 0.0
        %3592 = vmatprep.subr.mxu0 0.0
        %3593 = vmatpush1.msra.mxu0 0.0
        %3594 = vmatprep.subr.mxu0 0.0
        %3595 = vmatpush1.msra.mxu0 0.0
        %3596 = vmatprep.subr.mxu0 0.0
        %3597 = vmatpush1.msra.mxu0 0.0
        %3598 = vmatprep.subr.mxu0 0.0
        %3599 = vmatpush1.msra.mxu0 0.0
        %3600 = vmatprep.subr.mxu0 0.0
        %3601 = vmatpush1.msra.mxu0 0.0
        %3602 = vmatprep.subr.mxu0 0.0
        %3603 = vmatpush1.msra.mxu0 0.0
        %3604 = vmatprep.subr.mxu0 0.0
        %3605 = vmatpush1.msra.mxu0 0.0
        %3606 = vmatprep.subr.mxu0 0.0
        %3607 = vmatpush1.msra.mxu0 0.0
        %3608 = vmatprep.subr.mxu0 0.0
        %3609 = vmatpush1.msra.mxu0 0.0
        %3610 = vmatprep.subr.mxu0 0.0
        %3611 = vmatpush1.msra.mxu0 0.0
        %3612 = vmatprep.subr.mxu0 0.0
        %3613 = vmatpush1.msra.mxu0 0.0
        %3614 = vmatprep.subr.mxu0 0.0
        %3615 = vmatpush1.msra.mxu0 0.0
        %3616 = vmatprep.subr.mxu0 0.0
        %3617 = vmatpush1.msra.mxu0 0.0
        %3618 = vmatprep.subr.mxu0 0.0
        %3619 = vmatpush1.msra.mxu0 0.0
        %3620 = vmatprep.subr.mxu0 0.0
        %3621 = vmatpush1.msra.mxu0 0.0
        %3622 = vmatprep.subr.mxu0 0.0
        %3623 = vmatpush1.msra.mxu0 0.0
        %3624 = vmatprep.subr.mxu0 0.0
        %3625 = vmatpush1.msra.mxu0 0.0
        %3626 = vmatprep.subr.mxu0 0.0
        %3627 = vmatpush1.msra.mxu0 0.0
        %3628 = vmatprep.mubr.f32.mxu0 0.0
        %3629 = vmatmul.mubr.f32.gmra.mrb[0].mxu0 %v3559
        %v3630 = vpop.f32.mrb[0].mxu0
        %v3631 = vadd.f32 0.0, %v3630
        %v3632 = vpop.f32.mrb[0].mxu0
        %3633 = vmatprep.mubr.f32.mxu0 0.0
        %3634 = vmatmul.mubr.f32.gmra.mrb[0].mxu0 %v3562
        %v3635 = vpop.f32.mrb[0].mxu0
        %v3636 = vadd.f32 0.0, %v3635
        %v3637 = vpop.f32.mrb[0].mxu0
        %3638 = vdwg.mxu0
        %v3639 = vadd.f32 %v3380, %v3631
        %v3640 = vadd.f32 %v3381, %v3636
        %v3641 = vadd.f32 %v3639, %v1070
        %v3642 = vadd.f32 %v3640, %v1070
        %v3643 = vmul.f32 %v3641, 0.5
        %v3644 = vmul.f32 %v3642, 0.5
        %v3645 = vtanh.pop %v3643
        %v3646 = vtanh.pop %v3644
        %v3647 = vadd.f32 %v3645, 1.0
        %v3648 = vadd.f32 %v3646, 1.0
        %v3649 = vmul.f32 %v3647, 0.5
        %v3650 = vmul.f32 %v3648, 0.5
        %v3651 = vmul.f32 %v3242, %v3649
        %v3652 = vmul.f32 %v3243, %v3650
        %3655 = vrot.lane.b32.xlu0 %v3645, 96
        %v3656 = vpop.permute.xlu0 %3655
        %3657 = vrot.lane.b32.xlu0 %v3646, 96
        %v3658 = vpop.permute.xlu0 %3657
        %v3661 = vmul.f32 %v3649, %v3656
        %v3662 = vmul.f32 %v3650, %v3658
        %3665 = vrot.lane.b32.xlu0 %v3661, 64
        %v3666 = vpop.permute.xlu0 %3665
        %3667 = vrot.lane.b32.xlu0 %v3662, 64
        %v3668 = vpop.permute.xlu0 %3667
        %v3671 = vadd.f32 %v3651, %v3666
        %v3672 = vadd.f32 %v3652, %v3668
        %v3673 = vtanh.pop %v3671
        %v3674 = vtanh.pop %v3672
        %3677 = vrot.lane.b32.xlu0 %v3649, 96
        %v3678 = vpop.permute.xlu0 %3677
        %3679 = vrot.lane.b32.xlu0 %v3650, 96
        %v3680 = vpop.permute.xlu0 %3679
        %v3683 = vmul.f32 %v3673, %v3678
        %v3684 = vmul.f32 %v3674, %v3680
        %s3685 = scalar_lea.vmem [#allocation3], 192
        %v3686 = vld [vmem:[%s3685] sm:$0xff]
        %v3687 = vld [vmem:[%s3685 + $0x8] sm:$0xff]
        %v3688 = vld [vmem:[%s3685 + $0x10] sm:$0xff]
        %v3689 = vld [vmem:[%s3685 + $0x18] sm:$0xff]
        %3692 = vrot.lane.b32.xlu0 %v3683, 64
        %v3693 = vpop.permute.xlu0 %3692
        %3694 = vrot.lane.b32.xlu0 %v3684, 64
        %v3695 = vpop.permute.xlu0 %3694
        %v3696 = vsel %vm805, %v3693, 0
        %v3698 = vsel %vm805, %v3695, 0
        %3700 = vmatprep.subr.mxu0 0.0
        %3701 = vmatpush1.msra.mxu0 %v3686
        %3702 = vmatprep.subr.mxu0 0.0
        %3703 = vmatpush1.msra.mxu0 %v3687
        %3704 = vmatprep.subr.mxu0 0.0
        %3705 = vmatpush1.msra.mxu0 %v3688
        %3706 = vmatprep.subr.mxu0 0.0
        %3707 = vmatpush1.msra.mxu0 %v3689
        %3708 = vmatprep.subr.mxu0 0.0
        %3709 = vmatpush1.msra.mxu0 0.0
        %3710 = vmatprep.subr.mxu0 0.0
        %3711 = vmatpush1.msra.mxu0 0.0
        %3712 = vmatprep.subr.mxu0 0.0
        %3713 = vmatpush1.msra.mxu0 0.0
        %3714 = vmatprep.subr.mxu0 0.0
        %3715 = vmatpush1.msra.mxu0 0.0
        %3716 = vmatprep.subr.mxu0 0.0
        %3717 = vmatpush1.msra.mxu0 0.0
        %3718 = vmatprep.subr.mxu0 0.0
        %3719 = vmatpush1.msra.mxu0 0.0
        %3720 = vmatprep.subr.mxu0 0.0
        %3721 = vmatpush1.msra.mxu0 0.0
        %3722 = vmatprep.subr.mxu0 0.0
        %3723 = vmatpush1.msra.mxu0 0.0
        %3724 = vmatprep.subr.mxu0 0.0
        %3725 = vmatpush1.msra.mxu0 0.0
        %3726 = vmatprep.subr.mxu0 0.0
        %3727 = vmatpush1.msra.mxu0 0.0
        %3728 = vmatprep.subr.mxu0 0.0
        %3729 = vmatpush1.msra.mxu0 0.0
        %3730 = vmatprep.subr.mxu0 0.0
        %3731 = vmatpush1.msra.mxu0 0.0
        %3732 = vmatprep.subr.mxu0 0.0
        %3733 = vmatpush1.msra.mxu0 0.0
        %3734 = vmatprep.subr.mxu0 0.0
        %3735 = vmatpush1.msra.mxu0 0.0
        %3736 = vmatprep.subr.mxu0 0.0
        %3737 = vmatpush1.msra.mxu0 0.0
        %3738 = vmatprep.subr.mxu0 0.0
        %3739 = vmatpush1.msra.mxu0 0.0
        %3740 = vmatprep.subr.mxu0 0.0
        %3741 = vmatpush1.msra.mxu0 0.0
        %3742 = vmatprep.subr.mxu0 0.0
        %3743 = vmatpush1.msra.mxu0 0.0
        %3744 = vmatprep.subr.mxu0 0.0
        %3745 = vmatpush1.msra.mxu0 0.0
        %3746 = vmatprep.subr.mxu0 0.0
        %3747 = vmatpush1.msra.mxu0 0.0
        %3748 = vmatprep.subr.mxu0 0.0
        %3749 = vmatpush1.msra.mxu0 0.0
        %3750 = vmatprep.subr.mxu0 0.0
        %3751 = vmatpush1.msra.mxu0 0.0
        %3752 = vmatprep.subr.mxu0 0.0
        %3753 = vmatpush1.msra.mxu0 0.0
        %3754 = vmatprep.subr.mxu0 0.0
        %3755 = vmatpush1.msra.mxu0 0.0
        %3756 = vmatprep.subr.mxu0 0.0
        %3757 = vmatpush1.msra.mxu0 0.0
        %3758 = vmatprep.subr.mxu0 0.0
        %3759 = vmatpush1.msra.mxu0 0.0
        %3760 = vmatprep.subr.mxu0 0.0
        %3761 = vmatpush1.msra.mxu0 0.0
        %3762 = vmatprep.subr.mxu0 0.0
        %3763 = vmatpush1.msra.mxu0 0.0
        %3764 = vmatprep.mubr.f32.mxu0 0.0
        %3765 = vmatmul.mubr.f32.gmra.mrb[0].mxu0 %v3696
        %v3766 = vpop.f32.mrb[0].mxu0
        %v3767 = vadd.f32 0.0, %v3766
        %v3768 = vpop.f32.mrb[0].mxu0
        %3769 = vmatprep.mubr.f32.mxu0 0.0
        %3770 = vmatmul.mubr.f32.gmra.mrb[0].mxu0 %v3698
        %v3771 = vpop.f32.mrb[0].mxu0
        %v3772 = vadd.f32 0.0, %v3771
        %v3773 = vpop.f32.mrb[0].mxu0
        %3774 = vdwg.mxu0
        %v3775 = vadd.f32 %v3346, %v3767
        %v3776 = vadd.f32 %v3347, %v3772
        %3777 = vset.pattern.permute.xlu0 7
        %3778 = vperm.xlu0 %3777, %v581
        %v3779 = vpop.permute.xlu0 %3778
        %3781 = vset.pattern.permute.xlu0 7
        %3782 = vperm.xlu0 %3781, %v582
        %v3783 = vpop.permute.xlu0 %3782
        %v3785 = vmul.f32 %v3779, %v766
        %v3786 = vmul.f32 %v3783, %v766
        %3787 = vset.pattern.permute.xlu0 7
        %3788 = vperm.xlu0 %3787, %v650
        %v3789 = vpop.permute.xlu0 %3788
        %3791 = vset.pattern.permute.xlu0 7
        %3792 = vperm.xlu0 %3791, %v655
        %v3793 = vpop.permute.xlu0 %3792
        %v3795 = vmul.f32 %v3789, %v782
        %v3796 = vmul.f32 %v3793, %v782
        %v3797 = vadd.f32 %v3785, %v3795
        %v3798 = vadd.f32 %v3786, %v3796
        %3799 = vset.pattern.permute.xlu0 7
        %3800 = vperm.xlu0 %3799, %v731
        %v3801 = vpop.permute.xlu0 %3800
        %3803 = vset.pattern.permute.xlu0 7
        %3804 = vperm.xlu0 %3803, %v736
        %v3805 = vpop.permute.xlu0 %3804
        %v3807 = vmul.f32 %v3801, %v800
        %v3808 = vmul.f32 %v3805, %v800
        %v3809 = vadd.f32 %v3797, %v3807
        %v3810 = vadd.f32 %v3798, %v3808
        %3813 = vst.msk [vmem:[#allocation2] sm:$0xff] %vm805, %v3693
        %3814 = vst.msk [vmem:[#allocation2 + $0x8] sm:$0xff] %vm805, %v3695
        %3815 = vmatprep.subr.mxu0 0.0
        %3816 = vmatpush1.msra.mxu0 %v3693
        %3817 = vmatprep.subr.mxu0 0.0
        %3818 = vmatpush1.msra.mxu0 %v3695
        %3819 = vmatprep.subr.mxu0 0.0
        %3820 = vmatpush1.msra.mxu0 0.0
        %3821 = vmatprep.subr.mxu0 0.0
        %3822 = vmatpush1.msra.mxu0 0.0
        %3823 = vmatprep.subr.mxu0 0.0
        %3824 = vmatpush1.msra.mxu0 0.0
        %3825 = vmatprep.subr.mxu0 0.0
        %3826 = vmatpush1.msra.mxu0 0.0
        %3827 = vmatprep.subr.mxu0 0.0
        %3828 = vmatpush1.msra.mxu0 0.0
        %3829 = vmatprep.subr.mxu0 0.0
        %3830 = vmatpush1.msra.mxu0 0.0
        %3831 = vmatprep.subr.mxu0 0.0
        %3832 = vmatpush1.msra.mxu0 0.0
        %3833 = vmatprep.subr.mxu0 0.0
        %3834 = vmatpush1.msra.mxu0 0.0
        %3835 = vmatprep.subr.mxu0 0.0
        %3836 = vmatpush1.msra.mxu0 0.0
        %3837 = vmatprep.subr.mxu0 0.0
        %3838 = vmatpush1.msra.mxu0 0.0
        %3839 = vmatprep.subr.mxu0 0.0
        %3840 = vmatpush1.msra.mxu0 0.0
        %3841 = vmatprep.subr.mxu0 0.0
        %3842 = vmatpush1.msra.mxu0 0.0
        %3843 = vmatprep.subr.mxu0 0.0
        %3844 = vmatpush1.msra.mxu0 0.0
        %3845 = vmatprep.subr.mxu0 0.0
        %3846 = vmatpush1.msra.mxu0 0.0
        %3847 = vmatprep.subr.mxu0 0.0
        %3848 = vmatpush1.msra.mxu0 0.0
        %3849 = vmatprep.subr.mxu0 0.0
        %3850 = vmatpush1.msra.mxu0 0.0
        %3851 = vmatprep.subr.mxu0 0.0
        %3852 = vmatpush1.msra.mxu0 0.0
        %3853 = vmatprep.subr.mxu0 0.0
        %3854 = vmatpush1.msra.mxu0 0.0
        %3855 = vmatprep.subr.mxu0 0.0
        %3856 = vmatpush1.msra.mxu0 0.0
        %3857 = vmatprep.subr.mxu0 0.0
        %3858 = vmatpush1.msra.mxu0 0.0
        %3859 = vmatprep.subr.mxu0 0.0
        %3860 = vmatpush1.msra.mxu0 0.0
        %3861 = vmatprep.subr.mxu0 0.0
        %3862 = vmatpush1.msra.mxu0 0.0
        %3863 = vmatprep.subr.mxu0 0.0
        %3864 = vmatpush1.msra.mxu0 0.0
        %3865 = vmatprep.subr.mxu0 0.0
        %3866 = vmatpush1.msra.mxu0 0.0
        %3867 = vmatprep.subr.mxu0 0.0
        %3868 = vmatpush1.msra.mxu0 0.0
        %3869 = vmatprep.subr.mxu0 0.0
        %3870 = vmatpush1.msra.mxu0 0.0
        %3871 = vmatprep.subr.mxu0 0.0
        %3872 = vmatpush1.msra.mxu0 0.0
        %3873 = vmatprep.subr.mxu0 0.0
        %3874 = vmatpush1.msra.mxu0 0.0
        %3875 = vmatprep.subr.mxu0 0.0
        %3876 = vmatpush1.msra.mxu0 0.0
        %3877 = vmatprep.subr.mxu0 0.0
        %3878 = vmatpush1.msra.mxu0 0.0
        %3879 = vmatprep.mubr.f32.mxu0 0.0
        %3880 = vmatmul.mubr.f32.gmra.mrb[0].mxu0 %v501
        %v3881 = vpop.f32.mrb[0].mxu0
        %v3882 = vadd.f32 0.0, %v3881
        %v3883 = vpop.f32.mrb[0].mxu0
        %3884 = vmatprep.mubr.f32.mxu0 0.0
        %3885 = vmatmul.mubr.f32.gmra.mrb[0].mxu0 %v504
        %v3886 = vpop.f32.mrb[0].mxu0
        %v3887 = vadd.f32 0.0, %v3886
        %v3888 = vpop.f32.mrb[0].mxu0
        %3889 = vdwg.mxu0
        %3892 = vrot.lane.b32.xlu0 %v3882, 32
        %v3893 = vpop.permute.xlu0 %3892
        %3894 = vrot.lane.b32.xlu0 %v3887, 32
        %v3895 = vpop.permute.xlu0 %3894
        %3898 = vst.msk [vmem:[#allocation2] sm:$0xff] %vm891, %v3893
        %3899 = vst.msk [vmem:[#allocation2 + $0x8] sm:$0xff] %vm891, %v3895
        %3900 = vmatprep.subr.mxu0 0.0
        %3901 = vmatpush1.msra.mxu0 %v3693
        %3902 = vmatprep.subr.mxu0 0.0
        %3903 = vmatpush1.msra.mxu0 %v3695
        %3904 = vmatprep.subr.mxu0 0.0
        %3905 = vmatpush1.msra.mxu0 0.0
        %3906 = vmatprep.subr.mxu0 0.0
        %3907 = vmatpush1.msra.mxu0 0.0
        %3908 = vmatprep.subr.mxu0 0.0
        %3909 = vmatpush1.msra.mxu0 0.0
        %3910 = vmatprep.subr.mxu0 0.0
        %3911 = vmatpush1.msra.mxu0 0.0
        %3912 = vmatprep.subr.mxu0 0.0
        %3913 = vmatpush1.msra.mxu0 0.0
        %3914 = vmatprep.subr.mxu0 0.0
        %3915 = vmatpush1.msra.mxu0 0.0
        %3916 = vmatprep.subr.mxu0 0.0
        %3917 = vmatpush1.msra.mxu0 0.0
        %3918 = vmatprep.subr.mxu0 0.0
        %3919 = vmatpush1.msra.mxu0 0.0
        %3920 = vmatprep.subr.mxu0 0.0
        %3921 = vmatpush1.msra.mxu0 0.0
        %3922 = vmatprep.subr.mxu0 0.0
        %3923 = vmatpush1.msra.mxu0 0.0
        %3924 = vmatprep.subr.mxu0 0.0
        %3925 = vmatpush1.msra.mxu0 0.0
        %3926 = vmatprep.subr.mxu0 0.0
        %3927 = vmatpush1.msra.mxu0 0.0
        %3928 = vmatprep.subr.mxu0 0.0
        %3929 = vmatpush1.msra.mxu0 0.0
        %3930 = vmatprep.subr.mxu0 0.0
        %3931 = vmatpush1.msra.mxu0 0.0
        %3932 = vmatprep.subr.mxu0 0.0
        %3933 = vmatpush1.msra.mxu0 0.0
        %3934 = vmatprep.subr.mxu0 0.0
        %3935 = vmatpush1.msra.mxu0 0.0
        %3936 = vmatprep.subr.mxu0 0.0
        %3937 = vmatpush1.msra.mxu0 0.0
        %3938 = vmatprep.subr.mxu0 0.0
        %3939 = vmatpush1.msra.mxu0 0.0
        %3940 = vmatprep.subr.mxu0 0.0
        %3941 = vmatpush1.msra.mxu0 0.0
        %3942 = vmatprep.subr.mxu0 0.0
        %3943 = vmatpush1.msra.mxu0 0.0
        %3944 = vmatprep.subr.mxu0 0.0
        %3945 = vmatpush1.msra.mxu0 0.0
        %3946 = vmatprep.subr.mxu0 0.0
        %3947 = vmatpush1.msra.mxu0 0.0
        %3948 = vmatprep.subr.mxu0 0.0
        %3949 = vmatpush1.msra.mxu0 0.0
        %3950 = vmatprep.subr.mxu0 0.0
        %3951 = vmatpush1.msra.mxu0 0.0
        %3952 = vmatprep.subr.mxu0 0.0
        %3953 = vmatpush1.msra.mxu0 0.0
        %3954 = vmatprep.subr.mxu0 0.0
        %3955 = vmatpush1.msra.mxu0 0.0
        %3956 = vmatprep.subr.mxu0 0.0
        %3957 = vmatpush1.msra.mxu0 0.0
        %3958 = vmatprep.subr.mxu0 0.0
        %3959 = vmatpush1.msra.mxu0 0.0
        %3960 = vmatprep.subr.mxu0 0.0
        %3961 = vmatpush1.msra.mxu0 0.0
        %3962 = vmatprep.subr.mxu0 0.0
        %3963 = vmatpush1.msra.mxu0 0.0
        %3964 = vmatprep.mubr.f32.mxu0 0.0
        %3965 = vmatmul.mubr.f32.gmra.mrb[0].mxu0 %v659
        %v3966 = vpop.f32.mrb[0].mxu0
        %v3967 = vadd.f32 0.0, %v3966
        %v3968 = vpop.f32.mrb[0].mxu0
        %3969 = vmatprep.mubr.f32.mxu0 0.0
        %3970 = vmatmul.mubr.f32.gmra.mrb[0].mxu0 %v662
        %v3971 = vpop.f32.mrb[0].mxu0
        %v3972 = vadd.f32 0.0, %v3971
        %v3973 = vpop.f32.mrb[0].mxu0
        %3974 = vdwg.mxu0
        %3977 = vrot.lane.b32.xlu0 %v3967, 64
        %v3978 = vpop.permute.xlu0 %3977
        %3979 = vrot.lane.b32.xlu0 %v3972, 64
        %v3980 = vpop.permute.xlu0 %3979
        %3983 = vst.msk [vmem:[#allocation2] sm:$0xff] %vm977, %v3978
        %3984 = vst.msk [vmem:[#allocation2 + $0x8] sm:$0xff] %vm977, %v3980
        %v3985 = vld [vmem:[#allocation2] sm:$0xff]
        %v3986 = vld [vmem:[#allocation2 + $0x8] sm:$0xff]
        %v3988 = vsel %vm982, %v3985, 0
        %v3991 = vsel %vm982, %v3986, 0
        %3993 = vmatprep.subr.mxu0 0.0
        %3994 = vmatpush1.msra.mxu0 %v740
        %3995 = vmatprep.subr.mxu0 0.0
        %3996 = vmatpush1.msra.mxu0 %v741
        %3997 = vmatprep.subr.mxu0 0.0
        %3998 = vmatpush1.msra.mxu0 %v742
        %3999 = vmatprep.subr.mxu0 0.0
        %4000 = vmatpush1.msra.mxu0 %v743
        %4001 = vmatprep.subr.mxu0 0.0
        %4002 = vmatpush1.msra.mxu0 %v744
        %4003 = vmatprep.subr.mxu0 0.0
        %4004 = vmatpush1.msra.mxu0 %v745
        %4005 = vmatprep.subr.mxu0 0.0
        %4006 = vmatpush1.msra.mxu0 %v746
        %4007 = vmatprep.subr.mxu0 0.0
        %4008 = vmatpush1.msra.mxu0 %v747
        %4009 = vmatprep.subr.mxu0 0.0
        %4010 = vmatpush1.msra.mxu0 %v748
        %4011 = vmatprep.subr.mxu0 0.0
        %4012 = vmatpush1.msra.mxu0 %v749
        %4013 = vmatprep.subr.mxu0 0.0
        %4014 = vmatpush1.msra.mxu0 %v750
        %4015 = vmatprep.subr.mxu0 0.0
        %4016 = vmatpush1.msra.mxu0 %v751
        %4017 = vmatprep.subr.mxu0 0.0
        %4018 = vmatpush1.msra.mxu0 0.0
        %4019 = vmatprep.subr.mxu0 0.0
        %4020 = vmatpush1.msra.mxu0 0.0
        %4021 = vmatprep.subr.mxu0 0.0
        %4022 = vmatpush1.msra.mxu0 0.0
        %4023 = vmatprep.subr.mxu0 0.0
        %4024 = vmatpush1.msra.mxu0 0.0
        %4025 = vmatprep.subr.mxu0 0.0
        %4026 = vmatpush1.msra.mxu0 0.0
        %4027 = vmatprep.subr.mxu0 0.0
        %4028 = vmatpush1.msra.mxu0 0.0
        %4029 = vmatprep.subr.mxu0 0.0
        %4030 = vmatpush1.msra.mxu0 0.0
        %4031 = vmatprep.subr.mxu0 0.0
        %4032 = vmatpush1.msra.mxu0 0.0
        %4033 = vmatprep.subr.mxu0 0.0
        %4034 = vmatpush1.msra.mxu0 0.0
        %4035 = vmatprep.subr.mxu0 0.0
        %4036 = vmatpush1.msra.mxu0 0.0
        %4037 = vmatprep.subr.mxu0 0.0
        %4038 = vmatpush1.msra.mxu0 0.0
        %4039 = vmatprep.subr.mxu0 0.0
        %4040 = vmatpush1.msra.mxu0 0.0
        %4041 = vmatprep.subr.mxu0 0.0
        %4042 = vmatpush1.msra.mxu0 0.0
        %4043 = vmatprep.subr.mxu0 0.0
        %4044 = vmatpush1.msra.mxu0 0.0
        %4045 = vmatprep.subr.mxu0 0.0
        %4046 = vmatpush1.msra.mxu0 0.0
        %4047 = vmatprep.subr.mxu0 0.0
        %4048 = vmatpush1.msra.mxu0 0.0
        %4049 = vmatprep.subr.mxu0 0.0
        %4050 = vmatpush1.msra.mxu0 0.0
        %4051 = vmatprep.subr.mxu0 0.0
        %4052 = vmatpush1.msra.mxu0 0.0
        %4053 = vmatprep.subr.mxu0 0.0
        %4054 = vmatpush1.msra.mxu0 0.0
        %4055 = vmatprep.subr.mxu0 0.0
        %4056 = vmatpush1.msra.mxu0 0.0
        %4057 = vmatprep.mubr.f32.mxu0 0.0
        %4058 = vmatmul.mubr.f32.gmra.mrb[0].mxu0 %v3988
        %v4059 = vpop.f32.mrb[0].mxu0
        %v4060 = vadd.f32 0.0, %v4059
        %v4061 = vpop.f32.mrb[0].mxu0
        %4062 = vmatprep.mubr.f32.mxu0 0.0
        %4063 = vmatmul.mubr.f32.gmra.mrb[0].mxu0 %v3991
        %v4064 = vpop.f32.mrb[0].mxu0
        %v4065 = vadd.f32 0.0, %v4064
        %v4066 = vpop.f32.mrb[0].mxu0
        %4067 = vdwg.mxu0
        %v4068 = vadd.f32 %v3809, %v4060
        %v4069 = vadd.f32 %v3810, %v4065
        %v4070 = vadd.f32 %v4068, %v1070
        %v4071 = vadd.f32 %v4069, %v1070
        %v4072 = vmul.f32 %v4070, 0.5
        %v4073 = vmul.f32 %v4071, 0.5
        %v4074 = vtanh.pop %v4072
        %v4075 = vtanh.pop %v4073
        %v4076 = vadd.f32 %v4074, 1.0
        %v4077 = vadd.f32 %v4075, 1.0
        %v4078 = vmul.f32 %v4076, 0.5
        %v4079 = vmul.f32 %v4077, 0.5
        %v4080 = vmul.f32 %v3671, %v4078
        %v4081 = vmul.f32 %v3672, %v4079
        %4084 = vrot.lane.b32.xlu0 %v4074, 96
        %v4085 = vpop.permute.xlu0 %4084
        %4086 = vrot.lane.b32.xlu0 %v4075, 96
        %v4087 = vpop.permute.xlu0 %4086
        %v4090 = vmul.f32 %v4078, %v4085
        %v4091 = vmul.f32 %v4079, %v4087
        %4094 = vrot.lane.b32.xlu0 %v4090, 64
        %v4095 = vpop.permute.xlu0 %4094
        %4096 = vrot.lane.b32.xlu0 %v4091, 64
        %v4097 = vpop.permute.xlu0 %4096
        %v4100 = vadd.f32 %v4080, %v4095
        %v4101 = vadd.f32 %v4081, %v4097
        %v4102 = vtanh.pop %v4100
        %v4103 = vtanh.pop %v4101
        %4106 = vrot.lane.b32.xlu0 %v4078, 96
        %v4107 = vpop.permute.xlu0 %4106
        %4108 = vrot.lane.b32.xlu0 %v4079, 96
        %v4109 = vpop.permute.xlu0 %4108
        %v4112 = vmul.f32 %v4102, %v4107
        %v4113 = vmul.f32 %v4103, %v4109
        %s4114 = scalar_lea.vmem [#allocation3], 224
        %v4115 = vld [vmem:[%s4114] sm:$0xff]
        %v4116 = vld [vmem:[%s4114 + $0x8] sm:$0xff]
        %v4117 = vld [vmem:[%s4114 + $0x10] sm:$0xff]
        %v4118 = vld [vmem:[%s4114 + $0x18] sm:$0xff]
        %4121 = vrot.lane.b32.xlu0 %v4112, 64
        %v4122 = vpop.permute.xlu0 %4121
        %4123 = vrot.lane.b32.xlu0 %v4113, 64
        %v4124 = vpop.permute.xlu0 %4123
        %v4125 = vsel %vm805, %v4122, 0
        %v4127 = vsel %vm805, %v4124, 0
        %4129 = vmatprep.subr.mxu0 0.0
        %4130 = vmatpush1.msra.mxu0 %v4115
        %4131 = vmatprep.subr.mxu0 0.0
        %4132 = vmatpush1.msra.mxu0 %v4116
        %4133 = vmatprep.subr.mxu0 0.0
        %4134 = vmatpush1.msra.mxu0 %v4117
        %4135 = vmatprep.subr.mxu0 0.0
        %4136 = vmatpush1.msra.mxu0 %v4118
        %4137 = vmatprep.subr.mxu0 0.0
        %4138 = vmatpush1.msra.mxu0 0.0
        %4139 = vmatprep.subr.mxu0 0.0
        %4140 = vmatpush1.msra.mxu0 0.0
        %4141 = vmatprep.subr.mxu0 0.0
        %4142 = vmatpush1.msra.mxu0 0.0
        %4143 = vmatprep.subr.mxu0 0.0
        %4144 = vmatpush1.msra.mxu0 0.0
        %4145 = vmatprep.subr.mxu0 0.0
        %4146 = vmatpush1.msra.mxu0 0.0
        %4147 = vmatprep.subr.mxu0 0.0
        %4148 = vmatpush1.msra.mxu0 0.0
        %4149 = vmatprep.subr.mxu0 0.0
        %4150 = vmatpush1.msra.mxu0 0.0
        %4151 = vmatprep.subr.mxu0 0.0
        %4152 = vmatpush1.msra.mxu0 0.0
        %4153 = vmatprep.subr.mxu0 0.0
        %4154 = vmatpush1.msra.mxu0 0.0
        %4155 = vmatprep.subr.mxu0 0.0
        %4156 = vmatpush1.msra.mxu0 0.0
        %4157 = vmatprep.subr.mxu0 0.0
        %4158 = vmatpush1.msra.mxu0 0.0
        %4159 = vmatprep.subr.mxu0 0.0
        %4160 = vmatpush1.msra.mxu0 0.0
        %4161 = vmatprep.subr.mxu0 0.0
        %4162 = vmatpush1.msra.mxu0 0.0
        %4163 = vmatprep.subr.mxu0 0.0
        %4164 = vmatpush1.msra.mxu0 0.0
        %4165 = vmatprep.subr.mxu0 0.0
        %4166 = vmatpush1.msra.mxu0 0.0
        %4167 = vmatprep.subr.mxu0 0.0
        %4168 = vmatpush1.msra.mxu0 0.0
        %4169 = vmatprep.subr.mxu0 0.0
        %4170 = vmatpush1.msra.mxu0 0.0
        %4171 = vmatprep.subr.mxu0 0.0
        %4172 = vmatpush1.msra.mxu0 0.0
        %4173 = vmatprep.subr.mxu0 0.0
        %4174 = vmatpush1.msra.mxu0 0.0
        %4175 = vmatprep.subr.mxu0 0.0
        %4176 = vmatpush1.msra.mxu0 0.0
        %4177 = vmatprep.subr.mxu0 0.0
        %4178 = vmatpush1.msra.mxu0 0.0
        %4179 = vmatprep.subr.mxu0 0.0
        %4180 = vmatpush1.msra.mxu0 0.0
        %4181 = vmatprep.subr.mxu0 0.0
        %4182 = vmatpush1.msra.mxu0 0.0
        %4183 = vmatprep.subr.mxu0 0.0
        %4184 = vmatpush1.msra.mxu0 0.0
        %4185 = vmatprep.subr.mxu0 0.0
        %4186 = vmatpush1.msra.mxu0 0.0
        %4187 = vmatprep.subr.mxu0 0.0
        %4188 = vmatpush1.msra.mxu0 0.0
        %4189 = vmatprep.subr.mxu0 0.0
        %4190 = vmatpush1.msra.mxu0 0.0
        %4191 = vmatprep.subr.mxu0 0.0
        %4192 = vmatpush1.msra.mxu0 0.0
        %4193 = vmatprep.mubr.f32.mxu0 0.0
        %4194 = vmatmul.mubr.f32.gmra.mrb[0].mxu0 %v4125
        %v4195 = vpop.f32.mrb[0].mxu0
        %v4196 = vadd.f32 0.0, %v4195
        %v4197 = vpop.f32.mrb[0].mxu0
        %4198 = vmatprep.mubr.f32.mxu0 0.0
        %4199 = vmatmul.mubr.f32.gmra.mrb[0].mxu0 %v4127
        %v4200 = vpop.f32.mrb[0].mxu0
        %v4201 = vadd.f32 0.0, %v4200
        %v4202 = vpop.f32.mrb[0].mxu0
        %4203 = vdwg.mxu0
        %v4204 = vadd.f32 %v3775, %v4196
        %v4205 = vadd.f32 %v3776, %v4201
        %4206 = vset.pattern.permute.xlu0 8
        %4207 = vperm.xlu0 %4206, %v581
        %v4208 = vpop.permute.xlu0 %4207
        %4210 = vset.pattern.permute.xlu0 8
        %4211 = vperm.xlu0 %4210, %v582
        %v4212 = vpop.permute.xlu0 %4211
        %v4214 = vmul.f32 %v4208, %v766
        %v4215 = vmul.f32 %v4212, %v766
        %4216 = vset.pattern.permute.xlu0 8
        %4217 = vperm.xlu0 %4216, %v650
        %v4218 = vpop.permute.xlu0 %4217
        %4220 = vset.pattern.permute.xlu0 8
        %4221 = vperm.xlu0 %4220, %v655
        %v4222 = vpop.permute.xlu0 %4221
        %v4224 = vmul.f32 %v4218, %v782
        %v4225 = vmul.f32 %v4222, %v782
        %v4226 = vadd.f32 %v4214, %v4224
        %v4227 = vadd.f32 %v4215, %v4225
        %4228 = vset.pattern.permute.xlu0 8
        %4229 = vperm.xlu0 %4228, %v731
        %v4230 = vpop.permute.xlu0 %4229
        %4232 = vset.pattern.permute.xlu0 8
        %4233 = vperm.xlu0 %4232, %v736
        %v4234 = vpop.permute.xlu0 %4233
        %v4236 = vmul.f32 %v4230, %v800
        %v4237 = vmul.f32 %v4234, %v800
        %v4238 = vadd.f32 %v4226, %v4236
        %v4239 = vadd.f32 %v4227, %v4237
        %4242 = vst.msk [vmem:[#allocation2] sm:$0xff] %vm805, %v4122
        %4243 = vst.msk [vmem:[#allocation2 + $0x8] sm:$0xff] %vm805, %v4124
        %4244 = vmatprep.subr.mxu0 0.0
        %4245 = vmatpush1.msra.mxu0 %v4122
        %4246 = vmatprep.subr.mxu0 0.0
        %4247 = vmatpush1.msra.mxu0 %v4124
        %4248 = vmatprep.subr.mxu0 0.0
        %4249 = vmatpush1.msra.mxu0 0.0
        %4250 = vmatprep.subr.mxu0 0.0
        %4251 = vmatpush1.msra.mxu0 0.0
        %4252 = vmatprep.subr.mxu0 0.0
        %4253 = vmatpush1.msra.mxu0 0.0
        %4254 = vmatprep.subr.mxu0 0.0
        %4255 = vmatpush1.msra.mxu0 0.0
        %4256 = vmatprep.subr.mxu0 0.0
        %4257 = vmatpush1.msra.mxu0 0.0
        %4258 = vmatprep.subr.mxu0 0.0
        %4259 = vmatpush1.msra.mxu0 0.0
        %4260 = vmatprep.subr.mxu0 0.0
        %4261 = vmatpush1.msra.mxu0 0.0
        %4262 = vmatprep.subr.mxu0 0.0
        %4263 = vmatpush1.msra.mxu0 0.0
        %4264 = vmatprep.subr.mxu0 0.0
        %4265 = vmatpush1.msra.mxu0 0.0
        %4266 = vmatprep.subr.mxu0 0.0
        %4267 = vmatpush1.msra.mxu0 0.0
        %4268 = vmatprep.subr.mxu0 0.0
        %4269 = vmatpush1.msra.mxu0 0.0
        %4270 = vmatprep.subr.mxu0 0.0
        %4271 = vmatpush1.msra.mxu0 0.0
        %4272 = vmatprep.subr.mxu0 0.0
        %4273 = vmatpush1.msra.mxu0 0.0
        %4274 = vmatprep.subr.mxu0 0.0
        %4275 = vmatpush1.msra.mxu0 0.0
        %4276 = vmatprep.subr.mxu0 0.0
        %4277 = vmatpush1.msra.mxu0 0.0
        %4278 = vmatprep.subr.mxu0 0.0
        %4279 = vmatpush1.msra.mxu0 0.0
        %4280 = vmatprep.subr.mxu0 0.0
        %4281 = vmatpush1.msra.mxu0 0.0
        %4282 = vmatprep.subr.mxu0 0.0
        %4283 = vmatpush1.msra.mxu0 0.0
        %4284 = vmatprep.subr.mxu0 0.0
        %4285 = vmatpush1.msra.mxu0 0.0
        %4286 = vmatprep.subr.mxu0 0.0
        %4287 = vmatpush1.msra.mxu0 0.0
        %4288 = vmatprep.subr.mxu0 0.0
        %4289 = vmatpush1.msra.mxu0 0.0
        %4290 = vmatprep.subr.mxu0 0.0
        %4291 = vmatpush1.msra.mxu0 0.0
        %4292 = vmatprep.subr.mxu0 0.0
        %4293 = vmatpush1.msra.mxu0 0.0
        %4294 = vmatprep.subr.mxu0 0.0
        %4295 = vmatpush1.msra.mxu0 0.0
        %4296 = vmatprep.subr.mxu0 0.0
        %4297 = vmatpush1.msra.mxu0 0.0
        %4298 = vmatprep.subr.mxu0 0.0
        %4299 = vmatpush1.msra.mxu0 0.0
        %4300 = vmatprep.subr.mxu0 0.0
        %4301 = vmatpush1.msra.mxu0 0.0
        %4302 = vmatprep.subr.mxu0 0.0
        %4303 = vmatpush1.msra.mxu0 0.0
        %4304 = vmatprep.subr.mxu0 0.0
        %4305 = vmatpush1.msra.mxu0 0.0
        %4306 = vmatprep.subr.mxu0 0.0
        %4307 = vmatpush1.msra.mxu0 0.0
        %4308 = vmatprep.mubr.f32.mxu0 0.0
        %4309 = vmatmul.mubr.f32.gmra.mrb[0].mxu0 %v501
        %v4310 = vpop.f32.mrb[0].mxu0
        %v4311 = vadd.f32 0.0, %v4310
        %v4312 = vpop.f32.mrb[0].mxu0
        %4313 = vmatprep.mubr.f32.mxu0 0.0
        %4314 = vmatmul.mubr.f32.gmra.mrb[0].mxu0 %v504
        %v4315 = vpop.f32.mrb[0].mxu0
        %v4316 = vadd.f32 0.0, %v4315
        %v4317 = vpop.f32.mrb[0].mxu0
        %4318 = vdwg.mxu0
        %4321 = vrot.lane.b32.xlu0 %v4311, 32
        %v4322 = vpop.permute.xlu0 %4321
        %4323 = vrot.lane.b32.xlu0 %v4316, 32
        %v4324 = vpop.permute.xlu0 %4323
        %4327 = vst.msk [vmem:[#allocation2] sm:$0xff] %vm891, %v4322
        %4328 = vst.msk [vmem:[#allocation2 + $0x8] sm:$0xff] %vm891, %v4324
        %4329 = vmatprep.subr.mxu0 0.0
        %4330 = vmatpush1.msra.mxu0 %v4122
        %4331 = vmatprep.subr.mxu0 0.0
        %4332 = vmatpush1.msra.mxu0 %v4124
        %4333 = vmatprep.subr.mxu0 0.0
        %4334 = vmatpush1.msra.mxu0 0.0
        %4335 = vmatprep.subr.mxu0 0.0
        %4336 = vmatpush1.msra.mxu0 0.0
        %4337 = vmatprep.subr.mxu0 0.0
        %4338 = vmatpush1.msra.mxu0 0.0
        %4339 = vmatprep.subr.mxu0 0.0
        %4340 = vmatpush1.msra.mxu0 0.0
        %4341 = vmatprep.subr.mxu0 0.0
        %4342 = vmatpush1.msra.mxu0 0.0
        %4343 = vmatprep.subr.mxu0 0.0
        %4344 = vmatpush1.msra.mxu0 0.0
        %4345 = vmatprep.subr.mxu0 0.0
        %4346 = vmatpush1.msra.mxu0 0.0
        %4347 = vmatprep.subr.mxu0 0.0
        %4348 = vmatpush1.msra.mxu0 0.0
        %4349 = vmatprep.subr.mxu0 0.0
        %4350 = vmatpush1.msra.mxu0 0.0
        %4351 = vmatprep.subr.mxu0 0.0
        %4352 = vmatpush1.msra.mxu0 0.0
        %4353 = vmatprep.subr.mxu0 0.0
        %4354 = vmatpush1.msra.mxu0 0.0
        %4355 = vmatprep.subr.mxu0 0.0
        %4356 = vmatpush1.msra.mxu0 0.0
        %4357 = vmatprep.subr.mxu0 0.0
        %4358 = vmatpush1.msra.mxu0 0.0
        %4359 = vmatprep.subr.mxu0 0.0
        %4360 = vmatpush1.msra.mxu0 0.0
        %4361 = vmatprep.subr.mxu0 0.0
        %4362 = vmatpush1.msra.mxu0 0.0
        %4363 = vmatprep.subr.mxu0 0.0
        %4364 = vmatpush1.msra.mxu0 0.0
        %4365 = vmatprep.subr.mxu0 0.0
        %4366 = vmatpush1.msra.mxu0 0.0
        %4367 = vmatprep.subr.mxu0 0.0
        %4368 = vmatpush1.msra.mxu0 0.0
        %4369 = vmatprep.subr.mxu0 0.0
        %4370 = vmatpush1.msra.mxu0 0.0
        %4371 = vmatprep.subr.mxu0 0.0
        %4372 = vmatpush1.msra.mxu0 0.0
        %4373 = vmatprep.subr.mxu0 0.0
        %4374 = vmatpush1.msra.mxu0 0.0
        %4375 = vmatprep.subr.mxu0 0.0
        %4376 = vmatpush1.msra.mxu0 0.0
        %4377 = vmatprep.subr.mxu0 0.0
        %4378 = vmatpush1.msra.mxu0 0.0
        %4379 = vmatprep.subr.mxu0 0.0
        %4380 = vmatpush1.msra.mxu0 0.0
        %4381 = vmatprep.subr.mxu0 0.0
        %4382 = vmatpush1.msra.mxu0 0.0
        %4383 = vmatprep.subr.mxu0 0.0
        %4384 = vmatpush1.msra.mxu0 0.0
        %4385 = vmatprep.subr.mxu0 0.0
        %4386 = vmatpush1.msra.mxu0 0.0
        %4387 = vmatprep.subr.mxu0 0.0
        %4388 = vmatpush1.msra.mxu0 0.0
        %4389 = vmatprep.subr.mxu0 0.0
        %4390 = vmatpush1.msra.mxu0 0.0
        %4391 = vmatprep.subr.mxu0 0.0
        %4392 = vmatpush1.msra.mxu0 0.0
        %4393 = vmatprep.mubr.f32.mxu0 0.0
        %4394 = vmatmul.mubr.f32.gmra.mrb[0].mxu0 %v659
        %v4395 = vpop.f32.mrb[0].mxu0
        %v4396 = vadd.f32 0.0, %v4395
        %v4397 = vpop.f32.mrb[0].mxu0
        %4398 = vmatprep.mubr.f32.mxu0 0.0
        %4399 = vmatmul.mubr.f32.gmra.mrb[0].mxu0 %v662
        %v4400 = vpop.f32.mrb[0].mxu0
        %v4401 = vadd.f32 0.0, %v4400
        %v4402 = vpop.f32.mrb[0].mxu0
        %4403 = vdwg.mxu0
        %4406 = vrot.lane.b32.xlu0 %v4396, 64
        %v4407 = vpop.permute.xlu0 %4406
        %4408 = vrot.lane.b32.xlu0 %v4401, 64
        %v4409 = vpop.permute.xlu0 %4408
        %4412 = vst.msk [vmem:[#allocation2] sm:$0xff] %vm977, %v4407
        %4413 = vst.msk [vmem:[#allocation2 + $0x8] sm:$0xff] %vm977, %v4409
        %v4414 = vld [vmem:[#allocation2] sm:$0xff]
        %v4415 = vld [vmem:[#allocation2 + $0x8] sm:$0xff]
        %v4417 = vsel %vm982, %v4414, 0
        %v4420 = vsel %vm982, %v4415, 0
        %4422 = vmatprep.subr.mxu0 0.0
        %4423 = vmatpush1.msra.mxu0 %v740
        %4424 = vmatprep.subr.mxu0 0.0
        %4425 = vmatpush1.msra.mxu0 %v741
        %4426 = vmatprep.subr.mxu0 0.0
        %4427 = vmatpush1.msra.mxu0 %v742
        %4428 = vmatprep.subr.mxu0 0.0
        %4429 = vmatpush1.msra.mxu0 %v743
        %4430 = vmatprep.subr.mxu0 0.0
        %4431 = vmatpush1.msra.mxu0 %v744
        %4432 = vmatprep.subr.mxu0 0.0
        %4433 = vmatpush1.msra.mxu0 %v745
        %4434 = vmatprep.subr.mxu0 0.0
        %4435 = vmatpush1.msra.mxu0 %v746
        %4436 = vmatprep.subr.mxu0 0.0
        %4437 = vmatpush1.msra.mxu0 %v747
        %4438 = vmatprep.subr.mxu0 0.0
        %4439 = vmatpush1.msra.mxu0 %v748
        %4440 = vmatprep.subr.mxu0 0.0
        %4441 = vmatpush1.msra.mxu0 %v749
        %4442 = vmatprep.subr.mxu0 0.0
        %4443 = vmatpush1.msra.mxu0 %v750
        %4444 = vmatprep.subr.mxu0 0.0
        %4445 = vmatpush1.msra.mxu0 %v751
        %4446 = vmatprep.subr.mxu0 0.0
        %4447 = vmatpush1.msra.mxu0 0.0
        %4448 = vmatprep.subr.mxu0 0.0
        %4449 = vmatpush1.msra.mxu0 0.0
        %4450 = vmatprep.subr.mxu0 0.0
        %4451 = vmatpush1.msra.mxu0 0.0
        %4452 = vmatprep.subr.mxu0 0.0
        %4453 = vmatpush1.msra.mxu0 0.0
        %4454 = vmatprep.subr.mxu0 0.0
        %4455 = vmatpush1.msra.mxu0 0.0
        %4456 = vmatprep.subr.mxu0 0.0
        %4457 = vmatpush1.msra.mxu0 0.0
        %4458 = vmatprep.subr.mxu0 0.0
        %4459 = vmatpush1.msra.mxu0 0.0
        %4460 = vmatprep.subr.mxu0 0.0
        %4461 = vmatpush1.msra.mxu0 0.0
        %4462 = vmatprep.subr.mxu0 0.0
        %4463 = vmatpush1.msra.mxu0 0.0
        %4464 = vmatprep.subr.mxu0 0.0
        %4465 = vmatpush1.msra.mxu0 0.0
        %4466 = vmatprep.subr.mxu0 0.0
        %4467 = vmatpush1.msra.mxu0 0.0
        %4468 = vmatprep.subr.mxu0 0.0
        %4469 = vmatpush1.msra.mxu0 0.0
        %4470 = vmatprep.subr.mxu0 0.0
        %4471 = vmatpush1.msra.mxu0 0.0
        %4472 = vmatprep.subr.mxu0 0.0
        %4473 = vmatpush1.msra.mxu0 0.0
        %4474 = vmatprep.subr.mxu0 0.0
        %4475 = vmatpush1.msra.mxu0 0.0
        %4476 = vmatprep.subr.mxu0 0.0
        %4477 = vmatpush1.msra.mxu0 0.0
        %4478 = vmatprep.subr.mxu0 0.0
        %4479 = vmatpush1.msra.mxu0 0.0
        %4480 = vmatprep.subr.mxu0 0.0
        %4481 = vmatpush1.msra.mxu0 0.0
        %4482 = vmatprep.subr.mxu0 0.0
        %4483 = vmatpush1.msra.mxu0 0.0
        %4484 = vmatprep.subr.mxu0 0.0
        %4485 = vmatpush1.msra.mxu0 0.0
        %4486 = vmatprep.mubr.f32.mxu0 0.0
        %4487 = vmatmul.mubr.f32.gmra.mrb[0].mxu0 %v4417
        %v4488 = vpop.f32.mrb[0].mxu0
        %v4489 = vadd.f32 0.0, %v4488
        %v4490 = vpop.f32.mrb[0].mxu0
        %4491 = vmatprep.mubr.f32.mxu0 0.0
        %4492 = vmatmul.mubr.f32.gmra.mrb[0].mxu0 %v4420
        %v4493 = vpop.f32.mrb[0].mxu0
        %v4494 = vadd.f32 0.0, %v4493
        %v4495 = vpop.f32.mrb[0].mxu0
        %4496 = vdwg.mxu0
        %v4497 = vadd.f32 %v4238, %v4489
        %v4498 = vadd.f32 %v4239, %v4494
        %v4499 = vadd.f32 %v4497, %v1070
        %v4500 = vadd.f32 %v4498, %v1070
        %v4501 = vmul.f32 %v4499, 0.5
        %v4502 = vmul.f32 %v4500, 0.5
        %v4503 = vtanh.pop %v4501
        %v4504 = vtanh.pop %v4502
        %v4505 = vadd.f32 %v4503, 1.0
        %v4506 = vadd.f32 %v4504, 1.0
        %v4507 = vmul.f32 %v4505, 0.5
        %v4508 = vmul.f32 %v4506, 0.5
        %v4509 = vmul.f32 %v4100, %v4507
        %v4510 = vmul.f32 %v4101, %v4508
        %4513 = vrot.lane.b32.xlu0 %v4503, 96
        %v4514 = vpop.permute.xlu0 %4513
        %4515 = vrot.lane.b32.xlu0 %v4504, 96
        %v4516 = vpop.permute.xlu0 %4515
        %v4519 = vmul.f32 %v4507, %v4514
        %v4520 = vmul.f32 %v4508, %v4516
        %4523 = vrot.lane.b32.xlu0 %v4519, 64
        %v4524 = vpop.permute.xlu0 %4523
        %4525 = vrot.lane.b32.xlu0 %v4520, 64
        %v4526 = vpop.permute.xlu0 %4525
        %v4529 = vadd.f32 %v4509, %v4524
        %v4530 = vadd.f32 %v4510, %v4526
        %v4531 = vtanh.pop %v4529
        %v4532 = vtanh.pop %v4530
        %4535 = vrot.lane.b32.xlu0 %v4507, 96
        %v4536 = vpop.permute.xlu0 %4535
        %4537 = vrot.lane.b32.xlu0 %v4508, 96
        %v4538 = vpop.permute.xlu0 %4537
        %v4541 = vmul.f32 %v4531, %v4536
        %v4542 = vmul.f32 %v4532, %v4538
        %s4543 = scalar_lea.vmem [#allocation3], 256
        %v4544 = vld [vmem:[%s4543] sm:$0xff]
        %v4545 = vld [vmem:[%s4543 + $0x8] sm:$0xff]
        %v4546 = vld [vmem:[%s4543 + $0x10] sm:$0xff]
        %v4547 = vld [vmem:[%s4543 + $0x18] sm:$0xff]
        %4550 = vrot.lane.b32.xlu0 %v4541, 64
        %v4551 = vpop.permute.xlu0 %4550
        %4552 = vrot.lane.b32.xlu0 %v4542, 64
        %v4553 = vpop.permute.xlu0 %4552
        %v4554 = vsel %vm805, %v4551, 0
        %v4556 = vsel %vm805, %v4553, 0
        %4558 = vmatprep.subr.mxu0 0.0
        %4559 = vmatpush1.msra.mxu0 %v4544
        %4560 = vmatprep.subr.mxu0 0.0
        %4561 = vmatpush1.msra.mxu0 %v4545
        %4562 = vmatprep.subr.mxu0 0.0
        %4563 = vmatpush1.msra.mxu0 %v4546
        %4564 = vmatprep.subr.mxu0 0.0
        %4565 = vmatpush1.msra.mxu0 %v4547
        %4566 = vmatprep.subr.mxu0 0.0
        %4567 = vmatpush1.msra.mxu0 0.0
        %4568 = vmatprep.subr.mxu0 0.0
        %4569 = vmatpush1.msra.mxu0 0.0
        %4570 = vmatprep.subr.mxu0 0.0
        %4571 = vmatpush1.msra.mxu0 0.0
        %4572 = vmatprep.subr.mxu0 0.0
        %4573 = vmatpush1.msra.mxu0 0.0
        %4574 = vmatprep.subr.mxu0 0.0
        %4575 = vmatpush1.msra.mxu0 0.0
        %4576 = vmatprep.subr.mxu0 0.0
        %4577 = vmatpush1.msra.mxu0 0.0
        %4578 = vmatprep.subr.mxu0 0.0
        %4579 = vmatpush1.msra.mxu0 0.0
        %4580 = vmatprep.subr.mxu0 0.0
        %4581 = vmatpush1.msra.mxu0 0.0
        %4582 = vmatprep.subr.mxu0 0.0
        %4583 = vmatpush1.msra.mxu0 0.0
        %4584 = vmatprep.subr.mxu0 0.0
        %4585 = vmatpush1.msra.mxu0 0.0
        %4586 = vmatprep.subr.mxu0 0.0
        %4587 = vmatpush1.msra.mxu0 0.0
        %4588 = vmatprep.subr.mxu0 0.0
        %4589 = vmatpush1.msra.mxu0 0.0
        %4590 = vmatprep.subr.mxu0 0.0
        %4591 = vmatpush1.msra.mxu0 0.0
        %4592 = vmatprep.subr.mxu0 0.0
        %4593 = vmatpush1.msra.mxu0 0.0
        %4594 = vmatprep.subr.mxu0 0.0
        %4595 = vmatpush1.msra.mxu0 0.0
        %4596 = vmatprep.subr.mxu0 0.0
        %4597 = vmatpush1.msra.mxu0 0.0
        %4598 = vmatprep.subr.mxu0 0.0
        %4599 = vmatpush1.msra.mxu0 0.0
        %4600 = vmatprep.subr.mxu0 0.0
        %4601 = vmatpush1.msra.mxu0 0.0
        %4602 = vmatprep.subr.mxu0 0.0
        %4603 = vmatpush1.msra.mxu0 0.0
        %4604 = vmatprep.subr.mxu0 0.0
        %4605 = vmatpush1.msra.mxu0 0.0
        %4606 = vmatprep.subr.mxu0 0.0
        %4607 = vmatpush1.msra.mxu0 0.0
        %4608 = vmatprep.subr.mxu0 0.0
        %4609 = vmatpush1.msra.mxu0 0.0
        %4610 = vmatprep.subr.mxu0 0.0
        %4611 = vmatpush1.msra.mxu0 0.0
        %4612 = vmatprep.subr.mxu0 0.0
        %4613 = vmatpush1.msra.mxu0 0.0
        %4614 = vmatprep.subr.mxu0 0.0
        %4615 = vmatpush1.msra.mxu0 0.0
        %4616 = vmatprep.subr.mxu0 0.0
        %4617 = vmatpush1.msra.mxu0 0.0
        %4618 = vmatprep.subr.mxu0 0.0
        %4619 = vmatpush1.msra.mxu0 0.0
        %4620 = vmatprep.subr.mxu0 0.0
        %4621 = vmatpush1.msra.mxu0 0.0
        %4622 = vmatprep.mubr.f32.mxu0 0.0
        %4623 = vmatmul.mubr.f32.gmra.mrb[0].mxu0 %v4554
        %v4624 = vpop.f32.mrb[0].mxu0
        %v4625 = vadd.f32 0.0, %v4624
        %v4626 = vpop.f32.mrb[0].mxu0
        %4627 = vmatprep.mubr.f32.mxu0 0.0
        %4628 = vmatmul.mubr.f32.gmra.mrb[0].mxu0 %v4556
        %v4629 = vpop.f32.mrb[0].mxu0
        %v4630 = vadd.f32 0.0, %v4629
        %v4631 = vpop.f32.mrb[0].mxu0
        %4632 = vdwg.mxu0
        %v4633 = vadd.f32 %v4204, %v4625
        %v4634 = vadd.f32 %v4205, %v4630
        %4635 = vset.pattern.permute.xlu0 9
        %4636 = vperm.xlu0 %4635, %v581
        %v4637 = vpop.permute.xlu0 %4636
        %4639 = vset.pattern.permute.xlu0 9
        %4640 = vperm.xlu0 %4639, %v582
        %v4641 = vpop.permute.xlu0 %4640
        %v4643 = vmul.f32 %v4637, %v766
        %v4644 = vmul.f32 %v4641, %v766
        %4645 = vset.pattern.permute.xlu0 9
        %4646 = vperm.xlu0 %4645, %v650
        %v4647 = vpop.permute.xlu0 %4646
        %4649 = vset.pattern.permute.xlu0 9
        %4650 = vperm.xlu0 %4649, %v655
        %v4651 = vpop.permute.xlu0 %4650
        %v4653 = vmul.f32 %v4647, %v782
        %v4654 = vmul.f32 %v4651, %v782
        %v4655 = vadd.f32 %v4643, %v4653
        %v4656 = vadd.f32 %v4644, %v4654
        %4657 = vset.pattern.permute.xlu0 9
        %4658 = vperm.xlu0 %4657, %v731
        %v4659 = vpop.permute.xlu0 %4658
        %4661 = vset.pattern.permute.xlu0 9
        %4662 = vperm.xlu0 %4661, %v736
        %v4663 = vpop.permute.xlu0 %4662
        %v4665 = vmul.f32 %v4659, %v800
        %v4666 = vmul.f32 %v4663, %v800
        %v4667 = vadd.f32 %v4655, %v4665
        %v4668 = vadd.f32 %v4656, %v4666
        %4671 = vst.msk [vmem:[#allocation2] sm:$0xff] %vm805, %v4551
        %4672 = vst.msk [vmem:[#allocation2 + $0x8] sm:$0xff] %vm805, %v4553
        %4673 = vmatprep.subr.mxu0 0.0
        %4674 = vmatpush1.msra.mxu0 %v4551
        %4675 = vmatprep.subr.mxu0 0.0
        %4676 = vmatpush1.msra.mxu0 %v4553
        %4677 = vmatprep.subr.mxu0 0.0
        %4678 = vmatpush1.msra.mxu0 0.0
        %4679 = vmatprep.subr.mxu0 0.0
        %4680 = vmatpush1.msra.mxu0 0.0
        %4681 = vmatprep.subr.mxu0 0.0
        %4682 = vmatpush1.msra.mxu0 0.0
        %4683 = vmatprep.subr.mxu0 0.0
        %4684 = vmatpush1.msra.mxu0 0.0
        %4685 = vmatprep.subr.mxu0 0.0
        %4686 = vmatpush1.msra.mxu0 0.0
        %4687 = vmatprep.subr.mxu0 0.0
        %4688 = vmatpush1.msra.mxu0 0.0
        %4689 = vmatprep.subr.mxu0 0.0
        %4690 = vmatpush1.msra.mxu0 0.0
        %4691 = vmatprep.subr.mxu0 0.0
        %4692 = vmatpush1.msra.mxu0 0.0
        %4693 = vmatprep.subr.mxu0 0.0
        %4694 = vmatpush1.msra.mxu0 0.0
        %4695 = vmatprep.subr.mxu0 0.0
        %4696 = vmatpush1.msra.mxu0 0.0
        %4697 = vmatprep.subr.mxu0 0.0
        %4698 = vmatpush1.msra.mxu0 0.0
        %4699 = vmatprep.subr.mxu0 0.0
        %4700 = vmatpush1.msra.mxu0 0.0
        %4701 = vmatprep.subr.mxu0 0.0
        %4702 = vmatpush1.msra.mxu0 0.0
        %4703 = vmatprep.subr.mxu0 0.0
        %4704 = vmatpush1.msra.mxu0 0.0
        %4705 = vmatprep.subr.mxu0 0.0
        %4706 = vmatpush1.msra.mxu0 0.0
        %4707 = vmatprep.subr.mxu0 0.0
        %4708 = vmatpush1.msra.mxu0 0.0
        %4709 = vmatprep.subr.mxu0 0.0
        %4710 = vmatpush1.msra.mxu0 0.0
        %4711 = vmatprep.subr.mxu0 0.0
        %4712 = vmatpush1.msra.mxu0 0.0
        %4713 = vmatprep.subr.mxu0 0.0
        %4714 = vmatpush1.msra.mxu0 0.0
        %4715 = vmatprep.subr.mxu0 0.0
        %4716 = vmatpush1.msra.mxu0 0.0
        %4717 = vmatprep.subr.mxu0 0.0
        %4718 = vmatpush1.msra.mxu0 0.0
        %4719 = vmatprep.subr.mxu0 0.0
        %4720 = vmatpush1.msra.mxu0 0.0
        %4721 = vmatprep.subr.mxu0 0.0
        %4722 = vmatpush1.msra.mxu0 0.0
        %4723 = vmatprep.subr.mxu0 0.0
        %4724 = vmatpush1.msra.mxu0 0.0
        %4725 = vmatprep.subr.mxu0 0.0
        %4726 = vmatpush1.msra.mxu0 0.0
        %4727 = vmatprep.subr.mxu0 0.0
        %4728 = vmatpush1.msra.mxu0 0.0
        %4729 = vmatprep.subr.mxu0 0.0
        %4730 = vmatpush1.msra.mxu0 0.0
        %4731 = vmatprep.subr.mxu0 0.0
        %4732 = vmatpush1.msra.mxu0 0.0
        %4733 = vmatprep.subr.mxu0 0.0
        %4734 = vmatpush1.msra.mxu0 0.0
        %4735 = vmatprep.subr.mxu0 0.0
        %4736 = vmatpush1.msra.mxu0 0.0
        %4737 = vmatprep.mubr.f32.mxu0 0.0
        %4738 = vmatmul.mubr.f32.gmra.mrb[0].mxu0 %v501
        %v4739 = vpop.f32.mrb[0].mxu0
        %v4740 = vadd.f32 0.0, %v4739
        %v4741 = vpop.f32.mrb[0].mxu0
        %4742 = vmatprep.mubr.f32.mxu0 0.0
        %4743 = vmatmul.mubr.f32.gmra.mrb[0].mxu0 %v504
        %v4744 = vpop.f32.mrb[0].mxu0
        %v4745 = vadd.f32 0.0, %v4744
        %v4746 = vpop.f32.mrb[0].mxu0
        %4747 = vdwg.mxu0
        %4750 = vrot.lane.b32.xlu0 %v4740, 32
        %v4751 = vpop.permute.xlu0 %4750
        %4752 = vrot.lane.b32.xlu0 %v4745, 32
        %v4753 = vpop.permute.xlu0 %4752
        %4756 = vst.msk [vmem:[#allocation2] sm:$0xff] %vm891, %v4751
        %4757 = vst.msk [vmem:[#allocation2 + $0x8] sm:$0xff] %vm891, %v4753
        %4758 = vmatprep.subr.mxu0 0.0
        %4759 = vmatpush1.msra.mxu0 %v4551
        %4760 = vmatprep.subr.mxu0 0.0
        %4761 = vmatpush1.msra.mxu0 %v4553
        %4762 = vmatprep.subr.mxu0 0.0
        %4763 = vmatpush1.msra.mxu0 0.0
        %4764 = vmatprep.subr.mxu0 0.0
        %4765 = vmatpush1.msra.mxu0 0.0
        %4766 = vmatprep.subr.mxu0 0.0
        %4767 = vmatpush1.msra.mxu0 0.0
        %4768 = vmatprep.subr.mxu0 0.0
        %4769 = vmatpush1.msra.mxu0 0.0
        %4770 = vmatprep.subr.mxu0 0.0
        %4771 = vmatpush1.msra.mxu0 0.0
        %4772 = vmatprep.subr.mxu0 0.0
        %4773 = vmatpush1.msra.mxu0 0.0
        %4774 = vmatprep.subr.mxu0 0.0
        %4775 = vmatpush1.msra.mxu0 0.0
        %4776 = vmatprep.subr.mxu0 0.0
        %4777 = vmatpush1.msra.mxu0 0.0
        %4778 = vmatprep.subr.mxu0 0.0
        %4779 = vmatpush1.msra.mxu0 0.0
        %4780 = vmatprep.subr.mxu0 0.0
        %4781 = vmatpush1.msra.mxu0 0.0
        %4782 = vmatprep.subr.mxu0 0.0
        %4783 = vmatpush1.msra.mxu0 0.0
        %4784 = vmatprep.subr.mxu0 0.0
        %4785 = vmatpush1.msra.mxu0 0.0
        %4786 = vmatprep.subr.mxu0 0.0
        %4787 = vmatpush1.msra.mxu0 0.0
        %4788 = vmatprep.subr.mxu0 0.0
        %4789 = vmatpush1.msra.mxu0 0.0
        %4790 = vmatprep.subr.mxu0 0.0
        %4791 = vmatpush1.msra.mxu0 0.0
        %4792 = vmatprep.subr.mxu0 0.0
        %4793 = vmatpush1.msra.mxu0 0.0
        %4794 = vmatprep.subr.mxu0 0.0
        %4795 = vmatpush1.msra.mxu0 0.0
        %4796 = vmatprep.subr.mxu0 0.0
        %4797 = vmatpush1.msra.mxu0 0.0
        %4798 = vmatprep.subr.mxu0 0.0
        %4799 = vmatpush1.msra.mxu0 0.0
        %4800 = vmatprep.subr.mxu0 0.0
        %4801 = vmatpush1.msra.mxu0 0.0
        %4802 = vmatprep.subr.mxu0 0.0
        %4803 = vmatpush1.msra.mxu0 0.0
        %4804 = vmatprep.subr.mxu0 0.0
        %4805 = vmatpush1.msra.mxu0 0.0
        %4806 = vmatprep.subr.mxu0 0.0
        %4807 = vmatpush1.msra.mxu0 0.0
        %4808 = vmatprep.subr.mxu0 0.0
        %4809 = vmatpush1.msra.mxu0 0.0
        %4810 = vmatprep.subr.mxu0 0.0
        %4811 = vmatpush1.msra.mxu0 0.0
        %4812 = vmatprep.subr.mxu0 0.0
        %4813 = vmatpush1.msra.mxu0 0.0
        %4814 = vmatprep.subr.mxu0 0.0
        %4815 = vmatpush1.msra.mxu0 0.0
        %4816 = vmatprep.subr.mxu0 0.0
        %4817 = vmatpush1.msra.mxu0 0.0
        %4818 = vmatprep.subr.mxu0 0.0
        %4819 = vmatpush1.msra.mxu0 0.0
        %4820 = vmatprep.subr.mxu0 0.0
        %4821 = vmatpush1.msra.mxu0 0.0
        %4822 = vmatprep.mubr.f32.mxu0 0.0
        %4823 = vmatmul.mubr.f32.gmra.mrb[0].mxu0 %v659
        %v4824 = vpop.f32.mrb[0].mxu0
        %v4825 = vadd.f32 0.0, %v4824
        %v4826 = vpop.f32.mrb[0].mxu0
        %4827 = vmatprep.mubr.f32.mxu0 0.0
        %4828 = vmatmul.mubr.f32.gmra.mrb[0].mxu0 %v662
        %v4829 = vpop.f32.mrb[0].mxu0
        %v4830 = vadd.f32 0.0, %v4829
        %v4831 = vpop.f32.mrb[0].mxu0
        %4832 = vdwg.mxu0
        %4835 = vrot.lane.b32.xlu0 %v4825, 64
        %v4836 = vpop.permute.xlu0 %4835
        %4837 = vrot.lane.b32.xlu0 %v4830, 64
        %v4838 = vpop.permute.xlu0 %4837
        %4841 = vst.msk [vmem:[#allocation2] sm:$0xff] %vm977, %v4836
        %4842 = vst.msk [vmem:[#allocation2 + $0x8] sm:$0xff] %vm977, %v4838
        %v4843 = vld [vmem:[#allocation2] sm:$0xff]
        %v4844 = vld [vmem:[#allocation2 + $0x8] sm:$0xff]
        %v4846 = vsel %vm982, %v4843, 0
        %v4849 = vsel %vm982, %v4844, 0
        %4851 = vmatprep.subr.mxu0 0.0
        %4852 = vmatpush1.msra.mxu0 %v740
        %4853 = vmatprep.subr.mxu0 0.0
        %4854 = vmatpush1.msra.mxu0 %v741
        %4855 = vmatprep.subr.mxu0 0.0
        %4856 = vmatpush1.msra.mxu0 %v742
        %4857 = vmatprep.subr.mxu0 0.0
        %4858 = vmatpush1.msra.mxu0 %v743
        %4859 = vmatprep.subr.mxu0 0.0
        %4860 = vmatpush1.msra.mxu0 %v744
        %4861 = vmatprep.subr.mxu0 0.0
        %4862 = vmatpush1.msra.mxu0 %v745
        %4863 = vmatprep.subr.mxu0 0.0
        %4864 = vmatpush1.msra.mxu0 %v746
        %4865 = vmatprep.subr.mxu0 0.0
        %4866 = vmatpush1.msra.mxu0 %v747
        %4867 = vmatprep.subr.mxu0 0.0
        %4868 = vmatpush1.msra.mxu0 %v748
        %4869 = vmatprep.subr.mxu0 0.0
        %4870 = vmatpush1.msra.mxu0 %v749
        %4871 = vmatprep.subr.mxu0 0.0
        %4872 = vmatpush1.msra.mxu0 %v750
        %4873 = vmatprep.subr.mxu0 0.0
        %4874 = vmatpush1.msra.mxu0 %v751
        %4875 = vmatprep.subr.mxu0 0.0
        %4876 = vmatpush1.msra.mxu0 0.0
        %4877 = vmatprep.subr.mxu0 0.0
        %4878 = vmatpush1.msra.mxu0 0.0
        %4879 = vmatprep.subr.mxu0 0.0
        %4880 = vmatpush1.msra.mxu0 0.0
        %4881 = vmatprep.subr.mxu0 0.0
        %4882 = vmatpush1.msra.mxu0 0.0
        %4883 = vmatprep.subr.mxu0 0.0
        %4884 = vmatpush1.msra.mxu0 0.0
        %4885 = vmatprep.subr.mxu0 0.0
        %4886 = vmatpush1.msra.mxu0 0.0
        %4887 = vmatprep.subr.mxu0 0.0
        %4888 = vmatpush1.msra.mxu0 0.0
        %4889 = vmatprep.subr.mxu0 0.0
        %4890 = vmatpush1.msra.mxu0 0.0
        %4891 = vmatprep.subr.mxu0 0.0
        %4892 = vmatpush1.msra.mxu0 0.0
        %4893 = vmatprep.subr.mxu0 0.0
        %4894 = vmatpush1.msra.mxu0 0.0
        %4895 = vmatprep.subr.mxu0 0.0
        %4896 = vmatpush1.msra.mxu0 0.0
        %4897 = vmatprep.subr.mxu0 0.0
        %4898 = vmatpush1.msra.mxu0 0.0
        %4899 = vmatprep.subr.mxu0 0.0
        %4900 = vmatpush1.msra.mxu0 0.0
        %4901 = vmatprep.subr.mxu0 0.0
        %4902 = vmatpush1.msra.mxu0 0.0
        %4903 = vmatprep.subr.mxu0 0.0
        %4904 = vmatpush1.msra.mxu0 0.0
        %4905 = vmatprep.subr.mxu0 0.0
        %4906 = vmatpush1.msra.mxu0 0.0
        %4907 = vmatprep.subr.mxu0 0.0
        %4908 = vmatpush1.msra.mxu0 0.0
        %4909 = vmatprep.subr.mxu0 0.0
        %4910 = vmatpush1.msra.mxu0 0.0
        %4911 = vmatprep.subr.mxu0 0.0
        %4912 = vmatpush1.msra.mxu0 0.0
        %4913 = vmatprep.subr.mxu0 0.0
        %4914 = vmatpush1.msra.mxu0 0.0
        %4915 = vmatprep.mubr.f32.mxu0 0.0
        %4916 = vmatmul.mubr.f32.gmra.mrb[0].mxu0 %v4846
        %v4917 = vpop.f32.mrb[0].mxu0
        %v4918 = vadd.f32 0.0, %v4917
        %v4919 = vpop.f32.mrb[0].mxu0
        %4920 = vmatprep.mubr.f32.mxu0 0.0
        %4921 = vmatmul.mubr.f32.gmra.mrb[0].mxu0 %v4849
        %v4922 = vpop.f32.mrb[0].mxu0
        %v4923 = vadd.f32 0.0, %v4922
        %v4924 = vpop.f32.mrb[0].mxu0
        %4925 = vdwg.mxu0
        %v4926 = vadd.f32 %v4667, %v4918
        %v4927 = vadd.f32 %v4668, %v4923
        %v4928 = vadd.f32 %v4926, %v1070
        %v4929 = vadd.f32 %v4927, %v1070
        %v4930 = vmul.f32 %v4928, 0.5
        %v4931 = vmul.f32 %v4929, 0.5
        %v4932 = vtanh.pop %v4930
        %v4933 = vtanh.pop %v4931
        %v4934 = vadd.f32 %v4932, 1.0
        %v4935 = vadd.f32 %v4933, 1.0
        %v4936 = vmul.f32 %v4934, 0.5
        %v4937 = vmul.f32 %v4935, 0.5
        %v4938 = vmul.f32 %v4529, %v4936
        %v4939 = vmul.f32 %v4530, %v4937
        %4942 = vrot.lane.b32.xlu0 %v4932, 96
        %v4943 = vpop.permute.xlu0 %4942
        %4944 = vrot.lane.b32.xlu0 %v4933, 96
        %v4945 = vpop.permute.xlu0 %4944
        %v4948 = vmul.f32 %v4936, %v4943
        %v4949 = vmul.f32 %v4937, %v4945
        %4952 = vrot.lane.b32.xlu0 %v4948, 64
        %v4953 = vpop.permute.xlu0 %4952
        %4954 = vrot.lane.b32.xlu0 %v4949, 64
        %v4955 = vpop.permute.xlu0 %4954
        %v4958 = vadd.f32 %v4938, %v4953
        %v4959 = vadd.f32 %v4939, %v4955
        %v4960 = vtanh.pop %v4958
        %v4961 = vtanh.pop %v4959
        %4964 = vrot.lane.b32.xlu0 %v4936, 96
        %v4965 = vpop.permute.xlu0 %4964
        %4966 = vrot.lane.b32.xlu0 %v4937, 96
        %v4967 = vpop.permute.xlu0 %4966
        %v4970 = vmul.f32 %v4960, %v4965
        %v4971 = vmul.f32 %v4961, %v4967
        %s4972 = scalar_lea.vmem [#allocation3], 288
        %v4973 = vld [vmem:[%s4972] sm:$0xff]
        %v4974 = vld [vmem:[%s4972 + $0x8] sm:$0xff]
        %v4975 = vld [vmem:[%s4972 + $0x10] sm:$0xff]
        %v4976 = vld [vmem:[%s4972 + $0x18] sm:$0xff]
        %4979 = vrot.lane.b32.xlu0 %v4970, 64
        %v4980 = vpop.permute.xlu0 %4979
        %4981 = vrot.lane.b32.xlu0 %v4971, 64
        %v4982 = vpop.permute.xlu0 %4981
        %v4983 = vsel %vm805, %v4980, 0
        %v4985 = vsel %vm805, %v4982, 0
        %4987 = vmatprep.subr.mxu0 0.0
        %4988 = vmatpush1.msra.mxu0 %v4973
        %4989 = vmatprep.subr.mxu0 0.0
        %4990 = vmatpush1.msra.mxu0 %v4974
        %4991 = vmatprep.subr.mxu0 0.0
        %4992 = vmatpush1.msra.mxu0 %v4975
        %4993 = vmatprep.subr.mxu0 0.0
        %4994 = vmatpush1.msra.mxu0 %v4976
        %4995 = vmatprep.subr.mxu0 0.0
        %4996 = vmatpush1.msra.mxu0 0.0
        %4997 = vmatprep.subr.mxu0 0.0
        %4998 = vmatpush1.msra.mxu0 0.0
        %4999 = vmatprep.subr.mxu0 0.0
        %5000 = vmatpush1.msra.mxu0 0.0
        %5001 = vmatprep.subr.mxu0 0.0
        %5002 = vmatpush1.msra.mxu0 0.0
        %5003 = vmatprep.subr.mxu0 0.0
        %5004 = vmatpush1.msra.mxu0 0.0
        %5005 = vmatprep.subr.mxu0 0.0
        %5006 = vmatpush1.msra.mxu0 0.0
        %5007 = vmatprep.subr.mxu0 0.0
        %5008 = vmatpush1.msra.mxu0 0.0
        %5009 = vmatprep.subr.mxu0 0.0
        %5010 = vmatpush1.msra.mxu0 0.0
        %5011 = vmatprep.subr.mxu0 0.0
        %5012 = vmatpush1.msra.mxu0 0.0
        %5013 = vmatprep.subr.mxu0 0.0
        %5014 = vmatpush1.msra.mxu0 0.0
        %5015 = vmatprep.subr.mxu0 0.0
        %5016 = vmatpush1.msra.mxu0 0.0
        %5017 = vmatprep.subr.mxu0 0.0
        %5018 = vmatpush1.msra.mxu0 0.0
        %5019 = vmatprep.subr.mxu0 0.0
        %5020 = vmatpush1.msra.mxu0 0.0
        %5021 = vmatprep.subr.mxu0 0.0
        %5022 = vmatpush1.msra.mxu0 0.0
        %5023 = vmatprep.subr.mxu0 0.0
        %5024 = vmatpush1.msra.mxu0 0.0
        %5025 = vmatprep.subr.mxu0 0.0
        %5026 = vmatpush1.msra.mxu0 0.0
        %5027 = vmatprep.subr.mxu0 0.0
        %5028 = vmatpush1.msra.mxu0 0.0
        %5029 = vmatprep.subr.mxu0 0.0
        %5030 = vmatpush1.msra.mxu0 0.0
        %5031 = vmatprep.subr.mxu0 0.0
        %5032 = vmatpush1.msra.mxu0 0.0
        %5033 = vmatprep.subr.mxu0 0.0
        %5034 = vmatpush1.msra.mxu0 0.0
        %5035 = vmatprep.subr.mxu0 0.0
        %5036 = vmatpush1.msra.mxu0 0.0
        %5037 = vmatprep.subr.mxu0 0.0
        %5038 = vmatpush1.msra.mxu0 0.0
        %5039 = vmatprep.subr.mxu0 0.0
        %5040 = vmatpush1.msra.mxu0 0.0
        %5041 = vmatprep.subr.mxu0 0.0
        %5042 = vmatpush1.msra.mxu0 0.0
        %5043 = vmatprep.subr.mxu0 0.0
        %5044 = vmatpush1.msra.mxu0 0.0
        %5045 = vmatprep.subr.mxu0 0.0
        %5046 = vmatpush1.msra.mxu0 0.0
        %5047 = vmatprep.subr.mxu0 0.0
        %5048 = vmatpush1.msra.mxu0 0.0
        %5049 = vmatprep.subr.mxu0 0.0
        %5050 = vmatpush1.msra.mxu0 0.0
        %5051 = vmatprep.mubr.f32.mxu0 0.0
        %5052 = vmatmul.mubr.f32.gmra.mrb[0].mxu0 %v4983
        %v5053 = vpop.f32.mrb[0].mxu0
        %v5054 = vadd.f32 0.0, %v5053
        %v5055 = vpop.f32.mrb[0].mxu0
        %5056 = vmatprep.mubr.f32.mxu0 0.0
        %5057 = vmatmul.mubr.f32.gmra.mrb[0].mxu0 %v4985
        %v5058 = vpop.f32.mrb[0].mxu0
        %v5059 = vadd.f32 0.0, %v5058
        %v5060 = vpop.f32.mrb[0].mxu0
        %5061 = vdwg.mxu0
        %v5062 = vadd.f32 %v4633, %v5054
        %v5063 = vadd.f32 %v4634, %v5059
        %5064 = vset.pattern.permute.xlu0 10
        %5065 = vperm.xlu0 %5064, %v581
        %v5066 = vpop.permute.xlu0 %5065
        %5068 = vset.pattern.permute.xlu0 10
        %5069 = vperm.xlu0 %5068, %v582
        %v5070 = vpop.permute.xlu0 %5069
        %v5072 = vmul.f32 %v5066, %v766
        %v5073 = vmul.f32 %v5070, %v766
        %5074 = vset.pattern.permute.xlu0 10
        %5075 = vperm.xlu0 %5074, %v650
        %v5076 = vpop.permute.xlu0 %5075
        %5078 = vset.pattern.permute.xlu0 10
        %5079 = vperm.xlu0 %5078, %v655
        %v5080 = vpop.permute.xlu0 %5079
        %v5082 = vmul.f32 %v5076, %v782
        %v5083 = vmul.f32 %v5080, %v782
        %v5084 = vadd.f32 %v5072, %v5082
        %v5085 = vadd.f32 %v5073, %v5083
        %5086 = vset.pattern.permute.xlu0 10
        %5087 = vperm.xlu0 %5086, %v731
        %v5088 = vpop.permute.xlu0 %5087
        %5090 = vset.pattern.permute.xlu0 10
        %5091 = vperm.xlu0 %5090, %v736
        %v5092 = vpop.permute.xlu0 %5091
        %v5094 = vmul.f32 %v5088, %v800
        %v5095 = vmul.f32 %v5092, %v800
        %v5096 = vadd.f32 %v5084, %v5094
        %v5097 = vadd.f32 %v5085, %v5095
        %5100 = vst.msk [vmem:[#allocation2] sm:$0xff] %vm805, %v4980
        %5101 = vst.msk [vmem:[#allocation2 + $0x8] sm:$0xff] %vm805, %v4982
        %5102 = vmatprep.subr.mxu0 0.0
        %5103 = vmatpush1.msra.mxu0 %v4980
        %5104 = vmatprep.subr.mxu0 0.0
        %5105 = vmatpush1.msra.mxu0 %v4982
        %5106 = vmatprep.subr.mxu0 0.0
        %5107 = vmatpush1.msra.mxu0 0.0
        %5108 = vmatprep.subr.mxu0 0.0
        %5109 = vmatpush1.msra.mxu0 0.0
        %5110 = vmatprep.subr.mxu0 0.0
        %5111 = vmatpush1.msra.mxu0 0.0
        %5112 = vmatprep.subr.mxu0 0.0
        %5113 = vmatpush1.msra.mxu0 0.0
        %5114 = vmatprep.subr.mxu0 0.0
        %5115 = vmatpush1.msra.mxu0 0.0
        %5116 = vmatprep.subr.mxu0 0.0
        %5117 = vmatpush1.msra.mxu0 0.0
        %5118 = vmatprep.subr.mxu0 0.0
        %5119 = vmatpush1.msra.mxu0 0.0
        %5120 = vmatprep.subr.mxu0 0.0
        %5121 = vmatpush1.msra.mxu0 0.0
        %5122 = vmatprep.subr.mxu0 0.0
        %5123 = vmatpush1.msra.mxu0 0.0
        %5124 = vmatprep.subr.mxu0 0.0
        %5125 = vmatpush1.msra.mxu0 0.0
        %5126 = vmatprep.subr.mxu0 0.0
        %5127 = vmatpush1.msra.mxu0 0.0
        %5128 = vmatprep.subr.mxu0 0.0
        %5129 = vmatpush1.msra.mxu0 0.0
        %5130 = vmatprep.subr.mxu0 0.0
        %5131 = vmatpush1.msra.mxu0 0.0
        %5132 = vmatprep.subr.mxu0 0.0
        %5133 = vmatpush1.msra.mxu0 0.0
        %5134 = vmatprep.subr.mxu0 0.0
        %5135 = vmatpush1.msra.mxu0 0.0
        %5136 = vmatprep.subr.mxu0 0.0
        %5137 = vmatpush1.msra.mxu0 0.0
        %5138 = vmatprep.subr.mxu0 0.0
        %5139 = vmatpush1.msra.mxu0 0.0
        %5140 = vmatprep.subr.mxu0 0.0
        %5141 = vmatpush1.msra.mxu0 0.0
        %5142 = vmatprep.subr.mxu0 0.0
        %5143 = vmatpush1.msra.mxu0 0.0
        %5144 = vmatprep.subr.mxu0 0.0
        %5145 = vmatpush1.msra.mxu0 0.0
        %5146 = vmatprep.subr.mxu0 0.0
        %5147 = vmatpush1.msra.mxu0 0.0
        %5148 = vmatprep.subr.mxu0 0.0
        %5149 = vmatpush1.msra.mxu0 0.0
        %5150 = vmatprep.subr.mxu0 0.0
        %5151 = vmatpush1.msra.mxu0 0.0
        %5152 = vmatprep.subr.mxu0 0.0
        %5153 = vmatpush1.msra.mxu0 0.0
        %5154 = vmatprep.subr.mxu0 0.0
        %5155 = vmatpush1.msra.mxu0 0.0
        %5156 = vmatprep.subr.mxu0 0.0
        %5157 = vmatpush1.msra.mxu0 0.0
        %5158 = vmatprep.subr.mxu0 0.0
        %5159 = vmatpush1.msra.mxu0 0.0
        %5160 = vmatprep.subr.mxu0 0.0
        %5161 = vmatpush1.msra.mxu0 0.0
        %5162 = vmatprep.subr.mxu0 0.0
        %5163 = vmatpush1.msra.mxu0 0.0
        %5164 = vmatprep.subr.mxu0 0.0
        %5165 = vmatpush1.msra.mxu0 0.0
        %5166 = vmatprep.mubr.f32.mxu0 0.0
        %5167 = vmatmul.mubr.f32.gmra.mrb[0].mxu0 %v501
        %v5168 = vpop.f32.mrb[0].mxu0
        %v5169 = vadd.f32 0.0, %v5168
        %v5170 = vpop.f32.mrb[0].mxu0
        %5171 = vmatprep.mubr.f32.mxu0 0.0
        %5172 = vmatmul.mubr.f32.gmra.mrb[0].mxu0 %v504
        %v5173 = vpop.f32.mrb[0].mxu0
        %v5174 = vadd.f32 0.0, %v5173
        %v5175 = vpop.f32.mrb[0].mxu0
        %5176 = vdwg.mxu0
        %5179 = vrot.lane.b32.xlu0 %v5169, 32
        %v5180 = vpop.permute.xlu0 %5179
        %5181 = vrot.lane.b32.xlu0 %v5174, 32
        %v5182 = vpop.permute.xlu0 %5181
        %5185 = vst.msk [vmem:[#allocation2] sm:$0xff] %vm891, %v5180
        %5186 = vst.msk [vmem:[#allocation2 + $0x8] sm:$0xff] %vm891, %v5182
        %5187 = vmatprep.subr.mxu0 0.0
        %5188 = vmatpush1.msra.mxu0 %v4980
        %5189 = vmatprep.subr.mxu0 0.0
        %5190 = vmatpush1.msra.mxu0 %v4982
        %5191 = vmatprep.subr.mxu0 0.0
        %5192 = vmatpush1.msra.mxu0 0.0
        %5193 = vmatprep.subr.mxu0 0.0
        %5194 = vmatpush1.msra.mxu0 0.0
        %5195 = vmatprep.subr.mxu0 0.0
        %5196 = vmatpush1.msra.mxu0 0.0
        %5197 = vmatprep.subr.mxu0 0.0
        %5198 = vmatpush1.msra.mxu0 0.0
        %5199 = vmatprep.subr.mxu0 0.0
        %5200 = vmatpush1.msra.mxu0 0.0
        %5201 = vmatprep.subr.mxu0 0.0
        %5202 = vmatpush1.msra.mxu0 0.0
        %5203 = vmatprep.subr.mxu0 0.0
        %5204 = vmatpush1.msra.mxu0 0.0
        %5205 = vmatprep.subr.mxu0 0.0
        %5206 = vmatpush1.msra.mxu0 0.0
        %5207 = vmatprep.subr.mxu0 0.0
        %5208 = vmatpush1.msra.mxu0 0.0
        %5209 = vmatprep.subr.mxu0 0.0
        %5210 = vmatpush1.msra.mxu0 0.0
        %5211 = vmatprep.subr.mxu0 0.0
        %5212 = vmatpush1.msra.mxu0 0.0
        %5213 = vmatprep.subr.mxu0 0.0
        %5214 = vmatpush1.msra.mxu0 0.0
        %5215 = vmatprep.subr.mxu0 0.0
        %5216 = vmatpush1.msra.mxu0 0.0
        %5217 = vmatprep.subr.mxu0 0.0
        %5218 = vmatpush1.msra.mxu0 0.0
        %5219 = vmatprep.subr.mxu0 0.0
        %5220 = vmatpush1.msra.mxu0 0.0
        %5221 = vmatprep.subr.mxu0 0.0
        %5222 = vmatpush1.msra.mxu0 0.0
        %5223 = vmatprep.subr.mxu0 0.0
        %5224 = vmatpush1.msra.mxu0 0.0
        %5225 = vmatprep.subr.mxu0 0.0
        %5226 = vmatpush1.msra.mxu0 0.0
        %5227 = vmatprep.subr.mxu0 0.0
        %5228 = vmatpush1.msra.mxu0 0.0
        %5229 = vmatprep.subr.mxu0 0.0
        %5230 = vmatpush1.msra.mxu0 0.0
        %5231 = vmatprep.subr.mxu0 0.0
        %5232 = vmatpush1.msra.mxu0 0.0
        %5233 = vmatprep.subr.mxu0 0.0
        %5234 = vmatpush1.msra.mxu0 0.0
        %5235 = vmatprep.subr.mxu0 0.0
        %5236 = vmatpush1.msra.mxu0 0.0
        %5237 = vmatprep.subr.mxu0 0.0
        %5238 = vmatpush1.msra.mxu0 0.0
        %5239 = vmatprep.subr.mxu0 0.0
        %5240 = vmatpush1.msra.mxu0 0.0
        %5241 = vmatprep.subr.mxu0 0.0
        %5242 = vmatpush1.msra.mxu0 0.0
        %5243 = vmatprep.subr.mxu0 0.0
        %5244 = vmatpush1.msra.mxu0 0.0
        %5245 = vmatprep.subr.mxu0 0.0
        %5246 = vmatpush1.msra.mxu0 0.0
        %5247 = vmatprep.subr.mxu0 0.0
        %5248 = vmatpush1.msra.mxu0 0.0
        %5249 = vmatprep.subr.mxu0 0.0
        %5250 = vmatpush1.msra.mxu0 0.0
        %5251 = vmatprep.mubr.f32.mxu0 0.0
        %5252 = vmatmul.mubr.f32.gmra.mrb[0].mxu0 %v659
        %v5253 = vpop.f32.mrb[0].mxu0
        %v5254 = vadd.f32 0.0, %v5253
        %v5255 = vpop.f32.mrb[0].mxu0
        %5256 = vmatprep.mubr.f32.mxu0 0.0
        %5257 = vmatmul.mubr.f32.gmra.mrb[0].mxu0 %v662
        %v5258 = vpop.f32.mrb[0].mxu0
        %v5259 = vadd.f32 0.0, %v5258
        %v5260 = vpop.f32.mrb[0].mxu0
        %5261 = vdwg.mxu0
        %5264 = vrot.lane.b32.xlu0 %v5254, 64
        %v5265 = vpop.permute.xlu0 %5264
        %5266 = vrot.lane.b32.xlu0 %v5259, 64
        %v5267 = vpop.permute.xlu0 %5266
        %5270 = vst.msk [vmem:[#allocation2] sm:$0xff] %vm977, %v5265
        %5271 = vst.msk [vmem:[#allocation2 + $0x8] sm:$0xff] %vm977, %v5267
        %v5272 = vld [vmem:[#allocation2] sm:$0xff]
        %v5273 = vld [vmem:[#allocation2 + $0x8] sm:$0xff]
        %v5275 = vsel %vm982, %v5272, 0
        %v5278 = vsel %vm982, %v5273, 0
        %5280 = vmatprep.subr.mxu0 0.0
        %5281 = vmatpush1.msra.mxu0 %v740
        %5282 = vmatprep.subr.mxu0 0.0
        %5283 = vmatpush1.msra.mxu0 %v741
        %5284 = vmatprep.subr.mxu0 0.0
        %5285 = vmatpush1.msra.mxu0 %v742
        %5286 = vmatprep.subr.mxu0 0.0
        %5287 = vmatpush1.msra.mxu0 %v743
        %5288 = vmatprep.subr.mxu0 0.0
        %5289 = vmatpush1.msra.mxu0 %v744
        %5290 = vmatprep.subr.mxu0 0.0
        %5291 = vmatpush1.msra.mxu0 %v745
        %5292 = vmatprep.subr.mxu0 0.0
        %5293 = vmatpush1.msra.mxu0 %v746
        %5294 = vmatprep.subr.mxu0 0.0
        %5295 = vmatpush1.msra.mxu0 %v747
        %5296 = vmatprep.subr.mxu0 0.0
        %5297 = vmatpush1.msra.mxu0 %v748
        %5298 = vmatprep.subr.mxu0 0.0
        %5299 = vmatpush1.msra.mxu0 %v749
        %5300 = vmatprep.subr.mxu0 0.0
        %5301 = vmatpush1.msra.mxu0 %v750
        %5302 = vmatprep.subr.mxu0 0.0
        %5303 = vmatpush1.msra.mxu0 %v751
        %5304 = vmatprep.subr.mxu0 0.0
        %5305 = vmatpush1.msra.mxu0 0.0
        %5306 = vmatprep.subr.mxu0 0.0
        %5307 = vmatpush1.msra.mxu0 0.0
        %5308 = vmatprep.subr.mxu0 0.0
        %5309 = vmatpush1.msra.mxu0 0.0
        %5310 = vmatprep.subr.mxu0 0.0
        %5311 = vmatpush1.msra.mxu0 0.0
        %5312 = vmatprep.subr.mxu0 0.0
        %5313 = vmatpush1.msra.mxu0 0.0
        %5314 = vmatprep.subr.mxu0 0.0
        %5315 = vmatpush1.msra.mxu0 0.0
        %5316 = vmatprep.subr.mxu0 0.0
        %5317 = vmatpush1.msra.mxu0 0.0
        %5318 = vmatprep.subr.mxu0 0.0
        %5319 = vmatpush1.msra.mxu0 0.0
        %5320 = vmatprep.subr.mxu0 0.0
        %5321 = vmatpush1.msra.mxu0 0.0
        %5322 = vmatprep.subr.mxu0 0.0
        %5323 = vmatpush1.msra.mxu0 0.0
        %5324 = vmatprep.subr.mxu0 0.0
        %5325 = vmatpush1.msra.mxu0 0.0
        %5326 = vmatprep.subr.mxu0 0.0
        %5327 = vmatpush1.msra.mxu0 0.0
        %5328 = vmatprep.subr.mxu0 0.0
        %5329 = vmatpush1.msra.mxu0 0.0
        %5330 = vmatprep.subr.mxu0 0.0
        %5331 = vmatpush1.msra.mxu0 0.0
        %5332 = vmatprep.subr.mxu0 0.0
        %5333 = vmatpush1.msra.mxu0 0.0
        %5334 = vmatprep.subr.mxu0 0.0
        %5335 = vmatpush1.msra.mxu0 0.0
        %5336 = vmatprep.subr.mxu0 0.0
        %5337 = vmatpush1.msra.mxu0 0.0
        %5338 = vmatprep.subr.mxu0 0.0
        %5339 = vmatpush1.msra.mxu0 0.0
        %5340 = vmatprep.subr.mxu0 0.0
        %5341 = vmatpush1.msra.mxu0 0.0
        %5342 = vmatprep.subr.mxu0 0.0
        %5343 = vmatpush1.msra.mxu0 0.0
        %5344 = vmatprep.mubr.f32.mxu0 0.0
        %5345 = vmatmul.mubr.f32.gmra.mrb[0].mxu0 %v5275
        %v5346 = vpop.f32.mrb[0].mxu0
        %v5347 = vadd.f32 0.0, %v5346
        %v5348 = vpop.f32.mrb[0].mxu0
        %5349 = vmatprep.mubr.f32.mxu0 0.0
        %5350 = vmatmul.mubr.f32.gmra.mrb[0].mxu0 %v5278
        %v5351 = vpop.f32.mrb[0].mxu0
        %v5352 = vadd.f32 0.0, %v5351
        %v5353 = vpop.f32.mrb[0].mxu0
        %5354 = vdwg.mxu0
        %v5355 = vadd.f32 %v5096, %v5347
        %v5356 = vadd.f32 %v5097, %v5352
        %v5357 = vadd.f32 %v5355, %v1070
        %v5358 = vadd.f32 %v5356, %v1070
        %v5359 = vmul.f32 %v5357, 0.5
        %v5360 = vmul.f32 %v5358, 0.5
        %v5361 = vtanh.pop %v5359
        %v5362 = vtanh.pop %v5360
        %v5363 = vadd.f32 %v5361, 1.0
        %v5364 = vadd.f32 %v5362, 1.0
        %v5365 = vmul.f32 %v5363, 0.5
        %v5366 = vmul.f32 %v5364, 0.5
        %v5367 = vmul.f32 %v4958, %v5365
        %v5368 = vmul.f32 %v4959, %v5366
        %5371 = vrot.lane.b32.xlu0 %v5361, 96
        %v5372 = vpop.permute.xlu0 %5371
        %5373 = vrot.lane.b32.xlu0 %v5362, 96
        %v5374 = vpop.permute.xlu0 %5373
        %v5377 = vmul.f32 %v5365, %v5372
        %v5378 = vmul.f32 %v5366, %v5374
        %5381 = vrot.lane.b32.xlu0 %v5377, 64
        %v5382 = vpop.permute.xlu0 %5381
        %5383 = vrot.lane.b32.xlu0 %v5378, 64
        %v5384 = vpop.permute.xlu0 %5383
        %v5387 = vadd.f32 %v5367, %v5382
        %v5388 = vadd.f32 %v5368, %v5384
        %v5389 = vtanh.pop %v5387
        %v5390 = vtanh.pop %v5388
        %5393 = vrot.lane.b32.xlu0 %v5365, 96
        %v5394 = vpop.permute.xlu0 %5393
        %5395 = vrot.lane.b32.xlu0 %v5366, 96
        %v5396 = vpop.permute.xlu0 %5395
        %v5399 = vmul.f32 %v5389, %v5394
        %v5400 = vmul.f32 %v5390, %v5396
        %s5401 = scalar_lea.vmem [#allocation3], 320
        %v5402 = vld [vmem:[%s5401] sm:$0xff]
        %v5403 = vld [vmem:[%s5401 + $0x8] sm:$0xff]
        %v5404 = vld [vmem:[%s5401 + $0x10] sm:$0xff]
        %v5405 = vld [vmem:[%s5401 + $0x18] sm:$0xff]
        %5408 = vrot.lane.b32.xlu0 %v5399, 64
        %v5409 = vpop.permute.xlu0 %5408
        %5410 = vrot.lane.b32.xlu0 %v5400, 64
        %v5411 = vpop.permute.xlu0 %5410
        %v5412 = vsel %vm805, %v5409, 0
        %v5414 = vsel %vm805, %v5411, 0
        %5416 = vmatprep.subr.mxu0 0.0
        %5417 = vmatpush1.msra.mxu0 %v5402
        %5418 = vmatprep.subr.mxu0 0.0
        %5419 = vmatpush1.msra.mxu0 %v5403
        %5420 = vmatprep.subr.mxu0 0.0
        %5421 = vmatpush1.msra.mxu0 %v5404
        %5422 = vmatprep.subr.mxu0 0.0
        %5423 = vmatpush1.msra.mxu0 %v5405
        %5424 = vmatprep.subr.mxu0 0.0
        %5425 = vmatpush1.msra.mxu0 0.0
        %5426 = vmatprep.subr.mxu0 0.0
        %5427 = vmatpush1.msra.mxu0 0.0
        %5428 = vmatprep.subr.mxu0 0.0
        %5429 = vmatpush1.msra.mxu0 0.0
        %5430 = vmatprep.subr.mxu0 0.0
        %5431 = vmatpush1.msra.mxu0 0.0
        %5432 = vmatprep.subr.mxu0 0.0
        %5433 = vmatpush1.msra.mxu0 0.0
        %5434 = vmatprep.subr.mxu0 0.0
        %5435 = vmatpush1.msra.mxu0 0.0
        %5436 = vmatprep.subr.mxu0 0.0
        %5437 = vmatpush1.msra.mxu0 0.0
        %5438 = vmatprep.subr.mxu0 0.0
        %5439 = vmatpush1.msra.mxu0 0.0
        %5440 = vmatprep.subr.mxu0 0.0
        %5441 = vmatpush1.msra.mxu0 0.0
        %5442 = vmatprep.subr.mxu0 0.0
        %5443 = vmatpush1.msra.mxu0 0.0
        %5444 = vmatprep.subr.mxu0 0.0
        %5445 = vmatpush1.msra.mxu0 0.0
        %5446 = vmatprep.subr.mxu0 0.0
        %5447 = vmatpush1.msra.mxu0 0.0
        %5448 = vmatprep.subr.mxu0 0.0
        %5449 = vmatpush1.msra.mxu0 0.0
        %5450 = vmatprep.subr.mxu0 0.0
        %5451 = vmatpush1.msra.mxu0 0.0
        %5452 = vmatprep.subr.mxu0 0.0
        %5453 = vmatpush1.msra.mxu0 0.0
        %5454 = vmatprep.subr.mxu0 0.0
        %5455 = vmatpush1.msra.mxu0 0.0
        %5456 = vmatprep.subr.mxu0 0.0
        %5457 = vmatpush1.msra.mxu0 0.0
        %5458 = vmatprep.subr.mxu0 0.0
        %5459 = vmatpush1.msra.mxu0 0.0
        %5460 = vmatprep.subr.mxu0 0.0
        %5461 = vmatpush1.msra.mxu0 0.0
        %5462 = vmatprep.subr.mxu0 0.0
        %5463 = vmatpush1.msra.mxu0 0.0
        %5464 = vmatprep.subr.mxu0 0.0
        %5465 = vmatpush1.msra.mxu0 0.0
        %5466 = vmatprep.subr.mxu0 0.0
        %5467 = vmatpush1.msra.mxu0 0.0
        %5468 = vmatprep.subr.mxu0 0.0
        %5469 = vmatpush1.msra.mxu0 0.0
        %5470 = vmatprep.subr.mxu0 0.0
        %5471 = vmatpush1.msra.mxu0 0.0
        %5472 = vmatprep.subr.mxu0 0.0
        %5473 = vmatpush1.msra.mxu0 0.0
        %5474 = vmatprep.subr.mxu0 0.0
        %5475 = vmatpush1.msra.mxu0 0.0
        %5476 = vmatprep.subr.mxu0 0.0
        %5477 = vmatpush1.msra.mxu0 0.0
        %5478 = vmatprep.subr.mxu0 0.0
        %5479 = vmatpush1.msra.mxu0 0.0
        %5480 = vmatprep.mubr.f32.mxu0 0.0
        %5481 = vmatmul.mubr.f32.gmra.mrb[0].mxu0 %v5412
        %v5482 = vpop.f32.mrb[0].mxu0
        %v5483 = vadd.f32 0.0, %v5482
        %v5484 = vpop.f32.mrb[0].mxu0
        %5485 = vmatprep.mubr.f32.mxu0 0.0
        %5486 = vmatmul.mubr.f32.gmra.mrb[0].mxu0 %v5414
        %v5487 = vpop.f32.mrb[0].mxu0
        %v5488 = vadd.f32 0.0, %v5487
        %v5489 = vpop.f32.mrb[0].mxu0
        %5490 = vdwg.mxu0
        %v5491 = vadd.f32 %v5062, %v5483
        %v5492 = vadd.f32 %v5063, %v5488
        %5493 = vset.pattern.permute.xlu0 11
        %5494 = vperm.xlu0 %5493, %v581
        %v5495 = vpop.permute.xlu0 %5494
        %5497 = vset.pattern.permute.xlu0 11
        %5498 = vperm.xlu0 %5497, %v582
        %v5499 = vpop.permute.xlu0 %5498
        %v5501 = vmul.f32 %v5495, %v766
        %v5502 = vmul.f32 %v5499, %v766
        %5503 = vset.pattern.permute.xlu0 11
        %5504 = vperm.xlu0 %5503, %v650
        %v5505 = vpop.permute.xlu0 %5504
        %5507 = vset.pattern.permute.xlu0 11
        %5508 = vperm.xlu0 %5507, %v655
        %v5509 = vpop.permute.xlu0 %5508
        %v5511 = vmul.f32 %v5505, %v782
        %v5512 = vmul.f32 %v5509, %v782
        %v5513 = vadd.f32 %v5501, %v5511
        %v5514 = vadd.f32 %v5502, %v5512
        %5515 = vset.pattern.permute.xlu0 11
        %5516 = vperm.xlu0 %5515, %v731
        %v5517 = vpop.permute.xlu0 %5516
        %5519 = vset.pattern.permute.xlu0 11
        %5520 = vperm.xlu0 %5519, %v736
        %v5521 = vpop.permute.xlu0 %5520
        %v5523 = vmul.f32 %v5517, %v800
        %v5524 = vmul.f32 %v5521, %v800
        %v5525 = vadd.f32 %v5513, %v5523
        %v5526 = vadd.f32 %v5514, %v5524
        %5529 = vst.msk [vmem:[#allocation2] sm:$0xff] %vm805, %v5409
        %5530 = vst.msk [vmem:[#allocation2 + $0x8] sm:$0xff] %vm805, %v5411
        %5531 = vmatprep.subr.mxu0 0.0
        %5532 = vmatpush1.msra.mxu0 %v5409
        %5533 = vmatprep.subr.mxu0 0.0
        %5534 = vmatpush1.msra.mxu0 %v5411
        %5535 = vmatprep.subr.mxu0 0.0
        %5536 = vmatpush1.msra.mxu0 0.0
        %5537 = vmatprep.subr.mxu0 0.0
        %5538 = vmatpush1.msra.mxu0 0.0
        %5539 = vmatprep.subr.mxu0 0.0
        %5540 = vmatpush1.msra.mxu0 0.0
        %5541 = vmatprep.subr.mxu0 0.0
        %5542 = vmatpush1.msra.mxu0 0.0
        %5543 = vmatprep.subr.mxu0 0.0
        %5544 = vmatpush1.msra.mxu0 0.0
        %5545 = vmatprep.subr.mxu0 0.0
        %5546 = vmatpush1.msra.mxu0 0.0
        %5547 = vmatprep.subr.mxu0 0.0
        %5548 = vmatpush1.msra.mxu0 0.0
        %5549 = vmatprep.subr.mxu0 0.0
        %5550 = vmatpush1.msra.mxu0 0.0
        %5551 = vmatprep.subr.mxu0 0.0
        %5552 = vmatpush1.msra.mxu0 0.0
        %5553 = vmatprep.subr.mxu0 0.0
        %5554 = vmatpush1.msra.mxu0 0.0
        %5555 = vmatprep.subr.mxu0 0.0
        %5556 = vmatpush1.msra.mxu0 0.0
        %5557 = vmatprep.subr.mxu0 0.0
        %5558 = vmatpush1.msra.mxu0 0.0
        %5559 = vmatprep.subr.mxu0 0.0
        %5560 = vmatpush1.msra.mxu0 0.0
        %5561 = vmatprep.subr.mxu0 0.0
        %5562 = vmatpush1.msra.mxu0 0.0
        %5563 = vmatprep.subr.mxu0 0.0
        %5564 = vmatpush1.msra.mxu0 0.0
        %5565 = vmatprep.subr.mxu0 0.0
        %5566 = vmatpush1.msra.mxu0 0.0
        %5567 = vmatprep.subr.mxu0 0.0
        %5568 = vmatpush1.msra.mxu0 0.0
        %5569 = vmatprep.subr.mxu0 0.0
        %5570 = vmatpush1.msra.mxu0 0.0
        %5571 = vmatprep.subr.mxu0 0.0
        %5572 = vmatpush1.msra.mxu0 0.0
        %5573 = vmatprep.subr.mxu0 0.0
        %5574 = vmatpush1.msra.mxu0 0.0
        %5575 = vmatprep.subr.mxu0 0.0
        %5576 = vmatpush1.msra.mxu0 0.0
        %5577 = vmatprep.subr.mxu0 0.0
        %5578 = vmatpush1.msra.mxu0 0.0
        %5579 = vmatprep.subr.mxu0 0.0
        %5580 = vmatpush1.msra.mxu0 0.0
        %5581 = vmatprep.subr.mxu0 0.0
        %5582 = vmatpush1.msra.mxu0 0.0
        %5583 = vmatprep.subr.mxu0 0.0
        %5584 = vmatpush1.msra.mxu0 0.0
        %5585 = vmatprep.subr.mxu0 0.0
        %5586 = vmatpush1.msra.mxu0 0.0
        %5587 = vmatprep.subr.mxu0 0.0
        %5588 = vmatpush1.msra.mxu0 0.0
        %5589 = vmatprep.subr.mxu0 0.0
        %5590 = vmatpush1.msra.mxu0 0.0
        %5591 = vmatprep.subr.mxu0 0.0
        %5592 = vmatpush1.msra.mxu0 0.0
        %5593 = vmatprep.subr.mxu0 0.0
        %5594 = vmatpush1.msra.mxu0 0.0
        %5595 = vmatprep.mubr.f32.mxu0 0.0
        %5596 = vmatmul.mubr.f32.gmra.mrb[0].mxu0 %v501
        %v5597 = vpop.f32.mrb[0].mxu0
        %v5598 = vadd.f32 0.0, %v5597
        %v5599 = vpop.f32.mrb[0].mxu0
        %5600 = vmatprep.mubr.f32.mxu0 0.0
        %5601 = vmatmul.mubr.f32.gmra.mrb[0].mxu0 %v504
        %v5602 = vpop.f32.mrb[0].mxu0
        %v5603 = vadd.f32 0.0, %v5602
        %v5604 = vpop.f32.mrb[0].mxu0
        %5605 = vdwg.mxu0
        %5608 = vrot.lane.b32.xlu0 %v5598, 32
        %v5609 = vpop.permute.xlu0 %5608
        %5610 = vrot.lane.b32.xlu0 %v5603, 32
        %v5611 = vpop.permute.xlu0 %5610
        %5614 = vst.msk [vmem:[#allocation2] sm:$0xff] %vm891, %v5609
        %5615 = vst.msk [vmem:[#allocation2 + $0x8] sm:$0xff] %vm891, %v5611
        %5616 = vmatprep.subr.mxu0 0.0
        %5617 = vmatpush1.msra.mxu0 %v5409
        %5618 = vmatprep.subr.mxu0 0.0
        %5619 = vmatpush1.msra.mxu0 %v5411
        %5620 = vmatprep.subr.mxu0 0.0
        %5621 = vmatpush1.msra.mxu0 0.0
        %5622 = vmatprep.subr.mxu0 0.0
        %5623 = vmatpush1.msra.mxu0 0.0
        %5624 = vmatprep.subr.mxu0 0.0
        %5625 = vmatpush1.msra.mxu0 0.0
        %5626 = vmatprep.subr.mxu0 0.0
        %5627 = vmatpush1.msra.mxu0 0.0
        %5628 = vmatprep.subr.mxu0 0.0
        %5629 = vmatpush1.msra.mxu0 0.0
        %5630 = vmatprep.subr.mxu0 0.0
        %5631 = vmatpush1.msra.mxu0 0.0
        %5632 = vmatprep.subr.mxu0 0.0
        %5633 = vmatpush1.msra.mxu0 0.0
        %5634 = vmatprep.subr.mxu0 0.0
        %5635 = vmatpush1.msra.mxu0 0.0
        %5636 = vmatprep.subr.mxu0 0.0
        %5637 = vmatpush1.msra.mxu0 0.0
        %5638 = vmatprep.subr.mxu0 0.0
        %5639 = vmatpush1.msra.mxu0 0.0
        %5640 = vmatprep.subr.mxu0 0.0
        %5641 = vmatpush1.msra.mxu0 0.0
        %5642 = vmatprep.subr.mxu0 0.0
        %5643 = vmatpush1.msra.mxu0 0.0
        %5644 = vmatprep.subr.mxu0 0.0
        %5645 = vmatpush1.msra.mxu0 0.0
        %5646 = vmatprep.subr.mxu0 0.0
        %5647 = vmatpush1.msra.mxu0 0.0
        %5648 = vmatprep.subr.mxu0 0.0
        %5649 = vmatpush1.msra.mxu0 0.0
        %5650 = vmatprep.subr.mxu0 0.0
        %5651 = vmatpush1.msra.mxu0 0.0
        %5652 = vmatprep.subr.mxu0 0.0
        %5653 = vmatpush1.msra.mxu0 0.0
        %5654 = vmatprep.subr.mxu0 0.0
        %5655 = vmatpush1.msra.mxu0 0.0
        %5656 = vmatprep.subr.mxu0 0.0
        %5657 = vmatpush1.msra.mxu0 0.0
        %5658 = vmatprep.subr.mxu0 0.0
        %5659 = vmatpush1.msra.mxu0 0.0
        %5660 = vmatprep.subr.mxu0 0.0
        %5661 = vmatpush1.msra.mxu0 0.0
        %5662 = vmatprep.subr.mxu0 0.0
        %5663 = vmatpush1.msra.mxu0 0.0
        %5664 = vmatprep.subr.mxu0 0.0
        %5665 = vmatpush1.msra.mxu0 0.0
        %5666 = vmatprep.subr.mxu0 0.0
        %5667 = vmatpush1.msra.mxu0 0.0
        %5668 = vmatprep.subr.mxu0 0.0
        %5669 = vmatpush1.msra.mxu0 0.0
        %5670 = vmatprep.subr.mxu0 0.0
        %5671 = vmatpush1.msra.mxu0 0.0
        %5672 = vmatprep.subr.mxu0 0.0
        %5673 = vmatpush1.msra.mxu0 0.0
        %5674 = vmatprep.subr.mxu0 0.0
        %5675 = vmatpush1.msra.mxu0 0.0
        %5676 = vmatprep.subr.mxu0 0.0
        %5677 = vmatpush1.msra.mxu0 0.0
        %5678 = vmatprep.subr.mxu0 0.0
        %5679 = vmatpush1.msra.mxu0 0.0
        %5680 = vmatprep.mubr.f32.mxu0 0.0
        %5681 = vmatmul.mubr.f32.gmra.mrb[0].mxu0 %v659
        %v5682 = vpop.f32.mrb[0].mxu0
        %v5683 = vadd.f32 0.0, %v5682
        %v5684 = vpop.f32.mrb[0].mxu0
        %5685 = vmatprep.mubr.f32.mxu0 0.0
        %5686 = vmatmul.mubr.f32.gmra.mrb[0].mxu0 %v662
        %v5687 = vpop.f32.mrb[0].mxu0
        %v5688 = vadd.f32 0.0, %v5687
        %v5689 = vpop.f32.mrb[0].mxu0
        %5690 = vdwg.mxu0
        %5693 = vrot.lane.b32.xlu0 %v5683, 64
        %v5694 = vpop.permute.xlu0 %5693
        %5695 = vrot.lane.b32.xlu0 %v5688, 64
        %v5696 = vpop.permute.xlu0 %5695
        %5699 = vst.msk [vmem:[#allocation2] sm:$0xff] %vm977, %v5694
        %5700 = vst.msk [vmem:[#allocation2 + $0x8] sm:$0xff] %vm977, %v5696
        %v5701 = vld [vmem:[#allocation2] sm:$0xff]
        %v5702 = vld [vmem:[#allocation2 + $0x8] sm:$0xff]
        %v5704 = vsel %vm982, %v5701, 0
        %v5707 = vsel %vm982, %v5702, 0
        %5709 = vmatprep.subr.mxu0 0.0
        %5710 = vmatpush1.msra.mxu0 %v740
        %5711 = vmatprep.subr.mxu0 0.0
        %5712 = vmatpush1.msra.mxu0 %v741
        %5713 = vmatprep.subr.mxu0 0.0
        %5714 = vmatpush1.msra.mxu0 %v742
        %5715 = vmatprep.subr.mxu0 0.0
        %5716 = vmatpush1.msra.mxu0 %v743
        %5717 = vmatprep.subr.mxu0 0.0
        %5718 = vmatpush1.msra.mxu0 %v744
        %5719 = vmatprep.subr.mxu0 0.0
        %5720 = vmatpush1.msra.mxu0 %v745
        %5721 = vmatprep.subr.mxu0 0.0
        %5722 = vmatpush1.msra.mxu0 %v746
        %5723 = vmatprep.subr.mxu0 0.0
        %5724 = vmatpush1.msra.mxu0 %v747
        %5725 = vmatprep.subr.mxu0 0.0
        %5726 = vmatpush1.msra.mxu0 %v748
        %5727 = vmatprep.subr.mxu0 0.0
        %5728 = vmatpush1.msra.mxu0 %v749
        %5729 = vmatprep.subr.mxu0 0.0
        %5730 = vmatpush1.msra.mxu0 %v750
        %5731 = vmatprep.subr.mxu0 0.0
        %5732 = vmatpush1.msra.mxu0 %v751
        %5733 = vmatprep.subr.mxu0 0.0
        %5734 = vmatpush1.msra.mxu0 0.0
        %5735 = vmatprep.subr.mxu0 0.0
        %5736 = vmatpush1.msra.mxu0 0.0
        %5737 = vmatprep.subr.mxu0 0.0
        %5738 = vmatpush1.msra.mxu0 0.0
        %5739 = vmatprep.subr.mxu0 0.0
        %5740 = vmatpush1.msra.mxu0 0.0
        %5741 = vmatprep.subr.mxu0 0.0
        %5742 = vmatpush1.msra.mxu0 0.0
        %5743 = vmatprep.subr.mxu0 0.0
        %5744 = vmatpush1.msra.mxu0 0.0
        %5745 = vmatprep.subr.mxu0 0.0
        %5746 = vmatpush1.msra.mxu0 0.0
        %5747 = vmatprep.subr.mxu0 0.0
        %5748 = vmatpush1.msra.mxu0 0.0
        %5749 = vmatprep.subr.mxu0 0.0
        %5750 = vmatpush1.msra.mxu0 0.0
        %5751 = vmatprep.subr.mxu0 0.0
        %5752 = vmatpush1.msra.mxu0 0.0
        %5753 = vmatprep.subr.mxu0 0.0
        %5754 = vmatpush1.msra.mxu0 0.0
        %5755 = vmatprep.subr.mxu0 0.0
        %5756 = vmatpush1.msra.mxu0 0.0
        %5757 = vmatprep.subr.mxu0 0.0
        %5758 = vmatpush1.msra.mxu0 0.0
        %5759 = vmatprep.subr.mxu0 0.0
        %5760 = vmatpush1.msra.mxu0 0.0
        %5761 = vmatprep.subr.mxu0 0.0
        %5762 = vmatpush1.msra.mxu0 0.0
        %5763 = vmatprep.subr.mxu0 0.0
        %5764 = vmatpush1.msra.mxu0 0.0
        %5765 = vmatprep.subr.mxu0 0.0
        %5766 = vmatpush1.msra.mxu0 0.0
        %5767 = vmatprep.subr.mxu0 0.0
        %5768 = vmatpush1.msra.mxu0 0.0
        %5769 = vmatprep.subr.mxu0 0.0
        %5770 = vmatpush1.msra.mxu0 0.0
        %5771 = vmatprep.subr.mxu0 0.0
        %5772 = vmatpush1.msra.mxu0 0.0
        %5773 = vmatprep.mubr.f32.mxu0 0.0
        %5774 = vmatmul.mubr.f32.gmra.mrb[0].mxu0 %v5704
        %v5775 = vpop.f32.mrb[0].mxu0
        %v5776 = vadd.f32 0.0, %v5775
        %v5777 = vpop.f32.mrb[0].mxu0
        %5778 = vmatprep.mubr.f32.mxu0 0.0
        %5779 = vmatmul.mubr.f32.gmra.mrb[0].mxu0 %v5707
        %v5780 = vpop.f32.mrb[0].mxu0
        %v5781 = vadd.f32 0.0, %v5780
        %v5782 = vpop.f32.mrb[0].mxu0
        %5783 = vdwg.mxu0
        %v5784 = vadd.f32 %v5525, %v5776
        %v5785 = vadd.f32 %v5526, %v5781
        %v5786 = vadd.f32 %v5784, %v1070
        %v5787 = vadd.f32 %v5785, %v1070
        %v5788 = vmul.f32 %v5786, 0.5
        %v5789 = vmul.f32 %v5787, 0.5
        %v5790 = vtanh.pop %v5788
        %v5791 = vtanh.pop %v5789
        %v5792 = vadd.f32 %v5790, 1.0
        %v5793 = vadd.f32 %v5791, 1.0
        %v5794 = vmul.f32 %v5792, 0.5
        %v5795 = vmul.f32 %v5793, 0.5
        %v5796 = vmul.f32 %v5387, %v5794
        %v5797 = vmul.f32 %v5388, %v5795
        %5800 = vrot.lane.b32.xlu0 %v5790, 96
        %v5801 = vpop.permute.xlu0 %5800
        %5802 = vrot.lane.b32.xlu0 %v5791, 96
        %v5803 = vpop.permute.xlu0 %5802
        %v5806 = vmul.f32 %v5794, %v5801
        %v5807 = vmul.f32 %v5795, %v5803
        %5810 = vrot.lane.b32.xlu0 %v5806, 64
        %v5811 = vpop.permute.xlu0 %5810
        %5812 = vrot.lane.b32.xlu0 %v5807, 64
        %v5813 = vpop.permute.xlu0 %5812
        %v5816 = vadd.f32 %v5796, %v5811
        %v5817 = vadd.f32 %v5797, %v5813
        %v5818 = vtanh.pop %v5816
        %v5819 = vtanh.pop %v5817
        %5822 = vrot.lane.b32.xlu0 %v5794, 96
        %v5823 = vpop.permute.xlu0 %5822
        %5824 = vrot.lane.b32.xlu0 %v5795, 96
        %v5825 = vpop.permute.xlu0 %5824
        %v5828 = vmul.f32 %v5818, %v5823
        %v5829 = vmul.f32 %v5819, %v5825
        %s5830 = scalar_lea.vmem [#allocation3], 352
        %v5831 = vld [vmem:[%s5830] sm:$0xff]
        %v5832 = vld [vmem:[%s5830 + $0x8] sm:$0xff]
        %v5833 = vld [vmem:[%s5830 + $0x10] sm:$0xff]
        %v5834 = vld [vmem:[%s5830 + $0x18] sm:$0xff]
        %5837 = vrot.lane.b32.xlu0 %v5828, 64
        %v5838 = vpop.permute.xlu0 %5837
        %5839 = vrot.lane.b32.xlu0 %v5829, 64
        %v5840 = vpop.permute.xlu0 %5839
        %v5841 = vsel %vm805, %v5838, 0
        %v5843 = vsel %vm805, %v5840, 0
        %5845 = vmatprep.subr.mxu0 0.0
        %5846 = vmatpush1.msra.mxu0 %v5831
        %5847 = vmatprep.subr.mxu0 0.0
        %5848 = vmatpush1.msra.mxu0 %v5832
        %5849 = vmatprep.subr.mxu0 0.0
        %5850 = vmatpush1.msra.mxu0 %v5833
        %5851 = vmatprep.subr.mxu0 0.0
        %5852 = vmatpush1.msra.mxu0 %v5834
        %5853 = vmatprep.subr.mxu0 0.0
        %5854 = vmatpush1.msra.mxu0 0.0
        %5855 = vmatprep.subr.mxu0 0.0
        %5856 = vmatpush1.msra.mxu0 0.0
        %5857 = vmatprep.subr.mxu0 0.0
        %5858 = vmatpush1.msra.mxu0 0.0
        %5859 = vmatprep.subr.mxu0 0.0
        %5860 = vmatpush1.msra.mxu0 0.0
        %5861 = vmatprep.subr.mxu0 0.0
        %5862 = vmatpush1.msra.mxu0 0.0
        %5863 = vmatprep.subr.mxu0 0.0
        %5864 = vmatpush1.msra.mxu0 0.0
        %5865 = vmatprep.subr.mxu0 0.0
        %5866 = vmatpush1.msra.mxu0 0.0
        %5867 = vmatprep.subr.mxu0 0.0
        %5868 = vmatpush1.msra.mxu0 0.0
        %5869 = vmatprep.subr.mxu0 0.0
        %5870 = vmatpush1.msra.mxu0 0.0
        %5871 = vmatprep.subr.mxu0 0.0
        %5872 = vmatpush1.msra.mxu0 0.0
        %5873 = vmatprep.subr.mxu0 0.0
        %5874 = vmatpush1.msra.mxu0 0.0
        %5875 = vmatprep.subr.mxu0 0.0
        %5876 = vmatpush1.msra.mxu0 0.0
        %5877 = vmatprep.subr.mxu0 0.0
        %5878 = vmatpush1.msra.mxu0 0.0
        %5879 = vmatprep.subr.mxu0 0.0
        %5880 = vmatpush1.msra.mxu0 0.0
        %5881 = vmatprep.subr.mxu0 0.0
        %5882 = vmatpush1.msra.mxu0 0.0
        %5883 = vmatprep.subr.mxu0 0.0
        %5884 = vmatpush1.msra.mxu0 0.0
        %5885 = vmatprep.subr.mxu0 0.0
        %5886 = vmatpush1.msra.mxu0 0.0
        %5887 = vmatprep.subr.mxu0 0.0
        %5888 = vmatpush1.msra.mxu0 0.0
        %5889 = vmatprep.subr.mxu0 0.0
        %5890 = vmatpush1.msra.mxu0 0.0
        %5891 = vmatprep.subr.mxu0 0.0
        %5892 = vmatpush1.msra.mxu0 0.0
        %5893 = vmatprep.subr.mxu0 0.0
        %5894 = vmatpush1.msra.mxu0 0.0
        %5895 = vmatprep.subr.mxu0 0.0
        %5896 = vmatpush1.msra.mxu0 0.0
        %5897 = vmatprep.subr.mxu0 0.0
        %5898 = vmatpush1.msra.mxu0 0.0
        %5899 = vmatprep.subr.mxu0 0.0
        %5900 = vmatpush1.msra.mxu0 0.0
        %5901 = vmatprep.subr.mxu0 0.0
        %5902 = vmatpush1.msra.mxu0 0.0
        %5903 = vmatprep.subr.mxu0 0.0
        %5904 = vmatpush1.msra.mxu0 0.0
        %5905 = vmatprep.subr.mxu0 0.0
        %5906 = vmatpush1.msra.mxu0 0.0
        %5907 = vmatprep.subr.mxu0 0.0
        %5908 = vmatpush1.msra.mxu0 0.0
        %5909 = vmatprep.mubr.f32.mxu0 0.0
        %5910 = vmatmul.mubr.f32.gmra.mrb[0].mxu0 %v5841
        %v5911 = vpop.f32.mrb[0].mxu0
        %v5912 = vadd.f32 0.0, %v5911
        %v5913 = vpop.f32.mrb[0].mxu0
        %5914 = vmatprep.mubr.f32.mxu0 0.0
        %5915 = vmatmul.mubr.f32.gmra.mrb[0].mxu0 %v5843
        %v5916 = vpop.f32.mrb[0].mxu0
        %v5917 = vadd.f32 0.0, %v5916
        %v5918 = vpop.f32.mrb[0].mxu0
        %5919 = vdwg.mxu0
        %v5920 = vadd.f32 %v5491, %v5912
        %v5921 = vadd.f32 %v5492, %v5917
        %v5922 = vld [vmem:[%s7] sm:$0x1]
        %v5924 = vlaneseq
        %v5925 = vshrl.u32 %v5924, 7
        %v5926 = vsub.s32 0, %v5925
        %v5927 = vrot.slane %v5922, %v5926
        %v5929 = vadd.f32 %v5920, %v5927
        %v5930 = vadd.f32 %v5921, %v5927
        %v5931 = vld [vmem:[%s8] sm:$0xff]
        %v5932 = vld [vmem:[%s8 + $0x8] sm:$0xff]
        %v5933 = vld [vmem:[%s8 + $0x10] sm:$0xff]
        %v5934 = vld [vmem:[%s8 + $0x18] sm:$0xff]
        %v5936 = vsel %vm805, %v5929, 0
        %v5939 = vsel %vm805, %v5930, 0
        %5941 = vmatprep.subr.mxu0 0.0
        %5942 = vmatpush1.msra.mxu0 %v5931
        %5943 = vmatprep.subr.mxu0 0.0
        %5944 = vmatpush1.msra.mxu0 %v5932
        %5945 = vmatprep.subr.mxu0 0.0
        %5946 = vmatpush1.msra.mxu0 %v5933
        %5947 = vmatprep.subr.mxu0 0.0
        %5948 = vmatpush1.msra.mxu0 %v5934
        %5949 = vmatprep.subr.mxu0 0.0
        %5950 = vmatpush1.msra.mxu0 0.0
        %5951 = vmatprep.subr.mxu0 0.0
        %5952 = vmatpush1.msra.mxu0 0.0
        %5953 = vmatprep.subr.mxu0 0.0
        %5954 = vmatpush1.msra.mxu0 0.0
        %5955 = vmatprep.subr.mxu0 0.0
        %5956 = vmatpush1.msra.mxu0 0.0
        %5957 = vmatprep.subr.mxu0 0.0
        %5958 = vmatpush1.msra.mxu0 0.0
        %5959 = vmatprep.subr.mxu0 0.0
        %5960 = vmatpush1.msra.mxu0 0.0
        %5961 = vmatprep.subr.mxu0 0.0
        %5962 = vmatpush1.msra.mxu0 0.0
        %5963 = vmatprep.subr.mxu0 0.0
        %5964 = vmatpush1.msra.mxu0 0.0
        %5965 = vmatprep.subr.mxu0 0.0
        %5966 = vmatpush1.msra.mxu0 0.0
        %5967 = vmatprep.subr.mxu0 0.0
        %5968 = vmatpush1.msra.mxu0 0.0
        %5969 = vmatprep.subr.mxu0 0.0
        %5970 = vmatpush1.msra.mxu0 0.0
        %5971 = vmatprep.subr.mxu0 0.0
        %5972 = vmatpush1.msra.mxu0 0.0
        %5973 = vmatprep.subr.mxu0 0.0
        %5974 = vmatpush1.msra.mxu0 0.0
        %5975 = vmatprep.subr.mxu0 0.0
        %5976 = vmatpush1.msra.mxu0 0.0
        %5977 = vmatprep.subr.mxu0 0.0
        %5978 = vmatpush1.msra.mxu0 0.0
        %5979 = vmatprep.subr.mxu0 0.0
        %5980 = vmatpush1.msra.mxu0 0.0
        %5981 = vmatprep.subr.mxu0 0.0
        %5982 = vmatpush1.msra.mxu0 0.0
        %5983 = vmatprep.subr.mxu0 0.0
        %5984 = vmatpush1.msra.mxu0 0.0
        %5985 = vmatprep.subr.mxu0 0.0
        %5986 = vmatpush1.msra.mxu0 0.0
        %5987 = vmatprep.subr.mxu0 0.0
        %5988 = vmatpush1.msra.mxu0 0.0
        %5989 = vmatprep.subr.mxu0 0.0
        %5990 = vmatpush1.msra.mxu0 0.0
        %5991 = vmatprep.subr.mxu0 0.0
        %5992 = vmatpush1.msra.mxu0 0.0
        %5993 = vmatprep.subr.mxu0 0.0
        %5994 = vmatpush1.msra.mxu0 0.0
        %5995 = vmatprep.subr.mxu0 0.0
        %5996 = vmatpush1.msra.mxu0 0.0
        %5997 = vmatprep.subr.mxu0 0.0
        %5998 = vmatpush1.msra.mxu0 0.0
        %5999 = vmatprep.subr.mxu0 0.0
        %6000 = vmatpush1.msra.mxu0 0.0
        %6001 = vmatprep.subr.mxu0 0.0
        %6002 = vmatpush1.msra.mxu0 0.0
        %6003 = vmatprep.subr.mxu0 0.0
        %6004 = vmatpush1.msra.mxu0 0.0
        %6005 = vmatprep.mubr.f32.mxu0 0.0
        %6006 = vmatmul.mubr.f32.gmra.mrb[0].mxu0 %v5936
        %v6007 = vpop.f32.mrb[0].mxu0
        %v6008 = vadd.f32 0.0, %v6007
        %v6009 = vpop.f32.mrb[0].mxu0
        %6010 = vmatprep.mubr.f32.mxu0 0.0
        %6011 = vmatmul.mubr.f32.gmra.mrb[0].mxu0 %v5939
        %v6012 = vpop.f32.mrb[0].mxu0
        %v6013 = vadd.f32 0.0, %v6012
        %v6014 = vpop.f32.mrb[0].mxu0
        %6015 = vdwg.mxu0
        %v6016 = vmul.f32 %v6008, 0.17677669
        %v6017 = vmul.f32 %v6013, 0.17677669
        %vm6018 = vcmask 64512
        %v6019 = vsel %vm6018, %v6016, -inf
        %6020 = vmax.xlane.f32.xlu0 %v6019
        %v6021 = vpop.xlane.xlu0 %6020
        %v6022 = vsel %vm6018, %v6017, -inf
        %6023 = vmax.xlane.f32.xlu0 %v6022
        %v6024 = vpop.xlane.xlu0 %6023
        %v6025 = vsub.f32 %v6016, %v6021
        %v6026 = vsub.f32 %v6017, %v6024
        %v6027 = vmul.f32 %v6025, 1.442695
        %v6028 = vpow.pop %v6027
        %v6029 = vmul.f32 %v6026, 1.442695
        %v6030 = vpow.pop %v6029
        %v6031 = vsel %vm6018, %v6028, 0.0
        %6032 = vadd.xlane.f32.xlu0 %v6031
        %v6033 = vpop.xlane.xlu0 %6032
        %v6034 = vsel %vm6018, %v6030, 0.0
        %6035 = vadd.xlane.f32.xlu0 %v6034
        %v6036 = vpop.xlane.xlu0 %6035
        %v6037 = vrcp.pop %v6033
        %v6038 = vrcp.pop %v6036
        %v6039 = vmul.f32 %v6028, %v6037
        %v6040 = vmul.f32 %v6030, %v6038
        %v6041 = vld [vmem:[%s9] sm:$0xff]
        %v6042 = vld [vmem:[%s9 + $0x8] sm:$0xff]
        %v6043 = vmul.f32 %v6039, %v6041
        %v6044 = vmul.f32 %v6040, %v6042
        %v6045 = vsel %vm6018, %v6043, 0.0
        %6046 = vadd.xlane.f32.xlu0 %v6045
        %v6047 = vpop.xlane.xlu0 %6046
        %v6048 = vsel %vm6018, %v6044, 0.0
        %6049 = vadd.xlane.f32.xlu0 %v6048
        %v6050 = vpop.xlane.xlu0 %6049
        %v6051 = vmul.f32 %v6047, 0.5
        %v6052 = vmul.f32 %v6050, 0.5
        %v6053 = vtanh.pop %v6051
        %v6054 = vtanh.pop %v6052
        %v6055 = vadd.f32 %v6053, 1.0
        %v6056 = vadd.f32 %v6054, 1.0
        %v6057 = vmul.f32 %v6055, 0.5
        %v6058 = vmul.f32 %v6056, 0.5
        %v6059 = vadd.f32 %v6057, 1.0
        %v6060 = vadd.f32 %v6058, 1.0
        %v6061 = vmul.f32 %v5920, %v6059
        %v6062 = vmul.f32 %v5921, %v6060
        %v6063 = vld [vmem:[%s10] sm:$0x1]
        %v6065 = vlaneseq
        %v6066 = vshrl.u32 %v6065, 7
        %v6067 = vsub.s32 0, %v6066
        %v6068 = vrot.slane %v6063, %v6067
        %6069 = vrot.lane.b32.xlu0 %v6068, 32
        %v6070 = vpop.permute.xlu0 %6069
        %v6072 = vadd.f32 %v6061, %v6070
        %v6073 = vadd.f32 %v6062, %v6070
        %6076 = vrot.lane.b32.xlu0 %v6072, 96
        %v6077 = vpop.permute.xlu0 %6076
        %6078 = vrot.lane.b32.xlu0 %v6073, 96
        %v6079 = vpop.permute.xlu0 %6078
        %vm6082 = vcmask 97280
        %6083 = vst.msk [vmem:[%s470] sm:$0xff] %vm6082, %v6077
        %6084 = vst.msk [vmem:[%s470 + $0x8] sm:$0xff] %vm6082, %v6079
        %6085 = vst.msk [vmem:[%s475] sm:$0xff] %vm6018, %v6039
        %6086 = vst.msk [vmem:[%s475 + $0x8] sm:$0xff] %vm6018, %v6040
        %vm6087 = vcmask 7168
        %6088 = vst.msk [vmem:[%s480] sm:$0xff] %vm6087, %v6057
        %6089 = vst.msk [vmem:[%s480 + $0x8] sm:$0xff] %vm6087, %v6058
        %p6090 = scmp.lt.s32.totalorder %s26, 1
        %s6091 = scalar_select %p6090, %s26, 1
        %s6092 = smul.addr %s6091, 2
        %s6093 = smul.addr %s6092, 8
        %s6094 = scalar_lea.vmem %s11, %s6093
        %p6095 = scmp.lt.s32.totalorder %s26, 1
        %s6096 = scalar_select %p6095, %s26, 1
        %s6097 = smul.addr %s6096, 2
        %s6098 = smul.addr %s6097, 8
        %s6099 = scalar_lea.vmem %s12, %s6098
        %p6100 = scmp.lt.s32.totalorder %s26, 1
        %s6101 = scalar_select %p6100, %s26, 1
        %s6102 = smul.addr %s6101, 2
        %s6103 = smul.addr %s6102, 8
        %s6104 = scalar_lea.vmem %s13, %s6103
        // Predicated region
        $region69: #{pogcrnn_forward.1} parent=63 // pred_check
          %p6105 = pneg %p280
        $region70: #{pogcrnn_forward.1} parent=63 // pred_check_branch
          %6107 = sbr.rel (%p6105) target = $region72
        $region71: #{pogcrnn_forward.1} parent=63 // pred_region
          _
        $region72: #{pogcrnn_forward.1} parent=63 // pred_fallthru
          _
        // Predicated region
        $region73: #{pogcrnn_forward.1} parent=63 // pred_check
          %p6108 = pneg %p306
        $region74: #{pogcrnn_forward.1} parent=63 // pred_check_branch
          %6110 = sbr.rel (%p6108) target = $region76
        $region75: #{pogcrnn_forward.1} parent=63 // pred_region
          _
        $region76: #{pogcrnn_forward.1} parent=63 // pred_fallthru
          _
        // Predicated region
        $region77: #{pogcrnn_forward.1} parent=63 // pred_check
          %p6111 = pneg %p332
        $region78: #{pogcrnn_forward.1} parent=63 // pred_check_branch
          %6113 = sbr.rel (%p6111) target = $region80
        $region79: #{pogcrnn_forward.1} parent=63 // pred_region
          _
        $region80: #{pogcrnn_forward.1} parent=63 // pred_fallthru
          _
      $region64: #{pogcrnn_forward.1} parent=5 // pred_fallthru
        _
      %p6114 = scmp.le.s32.totalorder 2, %s21
      // Predicated region
      $region81: #{pogcrnn_forward.1} parent=5 // pred_check
        %p6115 = pneg %p6114
      $region82: #{pogcrnn_forward.1} parent=5 // pred_check_branch
        %6117 = sbr.rel (%p6115) target = $region84
      $region83: #{pogcrnn_forward.1} parent=5 // pred_region
        %s6118 = ssub.s32 %s21, 2
        // Predicated region
        $region85: #{pogcrnn_forward.1} parent=83 // pred_check
          %p6119 = pneg %p286
        $region86: #{pogcrnn_forward.1} parent=83 // pred_check_branch
          %6121 = sbr.rel (%p6119) target = $region88
        $region87: #{pogcrnn_forward.1} parent=83 // pred_region
          %p6122 = scmp.lt.s32.totalorder %s27, 1
          %s6123 = scalar_select %p6122, %s27, 1
          %s6124 = smul.addr %s6123, 2
          %s6125 = smul.addr %s6124, 8
          %s6126 = scalar_lea.vmem %s11, %s6125
        $region88: #{pogcrnn_forward.1} parent=83 // pred_fallthru
          _
        // Predicated region
        $region89: #{pogcrnn_forward.1} parent=83 // pred_check
          %p6127 = pneg %p312
        $region90: #{pogcrnn_forward.1} parent=83 // pred_check_branch
          %6129 = sbr.rel (%p6127) target = $region92
        $region91: #{pogcrnn_forward.1} parent=83 // pred_region
          %p6130 = scmp.lt.s32.totalorder %s27, 1
          %s6131 = scalar_select %p6130, %s27, 1
          %s6132 = smul.addr %s6131, 2
          %s6133 = smul.addr %s6132, 8
          %s6134 = scalar_lea.vmem %s12, %s6133
        $region92: #{pogcrnn_forward.1} parent=83 // pred_fallthru
          _
        // Predicated region
        $region93: #{pogcrnn_forward.1} parent=83 // pred_check
          %p6135 = pneg %p338
        $region94: #{pogcrnn_forward.1} parent=83 // pred_check_branch
          %6137 = sbr.rel (%p6135) target = $region96
        $region95: #{pogcrnn_forward.1} parent=83 // pred_region
          %p6138 = scmp.lt.s32.totalorder %s27, 1
          %s6139 = scalar_select %p6138, %s27, 1
          %s6140 = smul.addr %s6139, 2
          %s6141 = smul.addr %s6140, 8
          %s6142 = scalar_lea.vmem %s13, %s6141
        $region96: #{pogcrnn_forward.1} parent=83 // pred_fallthru
          _
      $region84: #{pogcrnn_forward.1} parent=5 // pred_fallthru
        _
    $region6: #{pogcrnn_forward.1} parent=1 // loop_footer
      %s25 = sadd.s32 1, %s21
    $region7: #{pogcrnn_forward.1} parent=1 // loop_footer_branch
      %20 = sbr.rel target = $region3
    $region8: #{pogcrnn_forward.1} parent=1 // loop_exit
      _
    %6143 = vsyncpa [#allocation4], 1
    %s6144 = scalar_lea.sflag [#allocation4], 1
    %6145 = vsyncpa %s6144, 1

</llo_original>
